<compile_context>
chip_gen: v6e
topology: v6e:2x2x1
jax: 0.10.0
libtpu: 0.0.40
codegen_flags: <defaults>
</compile_context>

<pallas_src>
import functools
import math

import jax
import jax.numpy as jnp
from jax import lax
from jax.experimental import pallas as pl
from jax.experimental.pallas import tpu as pltpu

BN_EPS = 1e-5
LN_EPS = 1e-6


def _gelu(x):
    c = math.sqrt(2.0 / math.pi)
    return 0.5 * x * (1.0 + jnp.tanh(c * (x + 0.044715 * x * x * x)))


def _pick_tm(m, *, max_tm=512, min_grid=4):
    """Largest row tile (<= max_tm) that still leaves >= min_grid grid steps.

    >=4 steps keeps both v7x TensorCores pipelined (>=2 steps/core); falls back to the
    largest divisor when M is small.
    """
    best = None
    for tm in (512, 256, 128, 64, 32, 16, 8):
        if tm <= max_tm and m % tm == 0:
            if best is None:
                best = tm
            if m // tm >= min_grid:
                return tm
    return best if best is not None else m


@functools.lru_cache(maxsize=None)
def _vmem_limit_bytes():
    try:
        cap = int(pltpu.get_tpu_info().vmem_capacity_bytes)
    except Exception:
        cap = 64 * 1024 * 1024          # conservative (v7x per-core) fallback
    return int(min(cap * 3 // 4, 96 * 1024 * 1024))


def _compiler_params():
    return pltpu.CompilerParams(dimension_semantics=("parallel",),
                                vmem_limit_bytes=_vmem_limit_bytes())


# ---------------------------------------------------------------------------
# Fused pointwise projection kernel (bf16 MXU, f32 accumulation):
#   y = x @ w + b  [+ GELU] [* mul] [res(*rscale) + ls*y]     (first output)
#   z = y @ w2 + b2                                           (optional second output)
# ---------------------------------------------------------------------------
def linear_pallas(x, w, b, *, act_gelu=False, mul=None, res=None, ls=None, rscale=None,
                  w2=None, b2=None):
    M, K = x.shape
    N = w.shape[1]
    TM = _pick_tm(M)
    has_mul = mul is not None
    has_res = res is not None
    has_rscale = rscale is not None
    has_second = w2 is not None
    N2 = w2.shape[1] if has_second else 0

    def kernel(*refs):
        it = iter(refs)
        x_ref = next(it)
        w_ref = next(it)
        b_ref = next(it)
        mul_ref = next(it) if has_mul else None
        res_ref = ls_ref = rs_ref = None
        if has_res:
            res_ref = next(it)
            ls_ref = next(it)
            if has_rscale:
                rs_ref = next(it)
        w2_ref = b2_ref = None
        if has_second:
            w2_ref = next(it)
            b2_ref = next(it)
        o_ref = next(it)
        o2_ref = next(it) if has_second else None

        y = jnp.dot(x_ref[...].astype(jnp.bfloat16), w_ref[...],
                    preferred_element_type=jnp.float32)
        y = y + b_ref[...]
        if act_gelu:
            y = _gelu(y)
        if has_mul:
            y = y * mul_ref[...]
        if has_res:
            r = res_ref[...]
            if has_rscale:
                r = r * rs_ref[...]
            y = r + ls_ref[...] * y
        o_ref[...] = y.astype(o_ref.dtype)
        if has_second:
            z = jnp.dot(y.astype(jnp.bfloat16), w2_ref[...],
                        preferred_element_type=jnp.float32)
            o2_ref[...] = (z + b2_ref[...]).astype(o2_ref.dtype)

    operands = [x, w.astype(jnp.bfloat16), b.reshape(1, N).astype(jnp.float32)]
    in_specs = [
        pl.BlockSpec((TM, K), lambda i: (i, 0)),
        pl.BlockSpec((K, N), lambda i: (0, 0)),
        pl.BlockSpec((1, N), lambda i: (0, 0)),
    ]
    if has_mul:
        operands.append(mul)
        in_specs.append(pl.BlockSpec((TM, N), lambda i: (i, 0)))
    if has_res:
        operands += [res, ls.reshape(1, N).astype(jnp.float32)]
        in_specs += [pl.BlockSpec((TM, N), lambda i: (i, 0)),
                     pl.BlockSpec((1, N), lambda i: (0, 0))]
        if has_rscale:
            operands.append(rscale.reshape(1, N).astype(jnp.float32))
            in_specs.append(pl.BlockSpec((1, N), lambda i: (0, 0)))
    if has_second:
        operands += [w2.astype(jnp.bfloat16), b2.reshape(1, N2).astype(jnp.float32)]
        in_specs += [pl.BlockSpec((N, N2), lambda i: (0, 0)),
                     pl.BlockSpec((1, N2), lambda i: (0, 0))]

    if has_second:
        out_shape = (jax.ShapeDtypeStruct((M, N), x.dtype),
                     jax.ShapeDtypeStruct((M, N2), x.dtype))
        out_specs = [pl.BlockSpec((TM, N), lambda i: (i, 0)),
                     pl.BlockSpec((TM, N2), lambda i: (i, 0))]
    else:
        out_shape = jax.ShapeDtypeStruct((M, N), x.dtype)
        out_specs = pl.BlockSpec((TM, N), lambda i: (i, 0))

    return pl.pallas_call(
        kernel,
        out_shape=out_shape,
        grid_spec=pltpu.PrefetchScalarGridSpec(
            num_scalar_prefetch=0,
            grid=(M // TM,),
            in_specs=in_specs,
            out_specs=out_specs),
        compiler_params=_compiler_params(),
    )(*operands)


# ---------------------------------------------------------------------------
# Fused DCNv3 offset + mask projection with grouped mask-softmax epilogue.
# One matmul on a concatenated weight padded to a 128-lane multiple (lane-dense store).
# Returns the padded (M, n_pad) array; slice [:, :G*18] (offsets) and
# [:, G*18:G*27] (softmaxed masks) outside.
# ---------------------------------------------------------------------------
def offmask_pallas(x, w_off, b_off, w_msk, b_msk, G):
    M, K = x.shape
    n_off = w_off.shape[1]          # G * 18
    n_msk = w_msk.shape[1]          # G * 9
    n_cat = n_off + n_msk
    n_pad = ((n_cat + 127) // 128) * 128
    wcat = jnp.zeros((K, n_pad), jnp.float32)
    wcat = wcat.at[:, :n_off].set(w_off).at[:, n_off:n_cat].set(w_msk)
    bcat = jnp.zeros((n_pad,), jnp.float32)
    bcat = bcat.at[:n_off].set(b_off).at[n_off:n_cat].set(b_msk)
    TM = _pick_tm(M)

    def kernel(x_ref, w_ref, b_ref, o_ref):
        y = jnp.dot(x_ref[...].astype(jnp.bfloat16), w_ref[...],
                    preferred_element_type=jnp.float32)
        y = y + b_ref[...]
        o_ref[...] = y.astype(o_ref.dtype)
        # grouped softmax over each group's 9 mask logits, fused into the epilogue
        for g in range(G):
            s = n_off + g * 9
            m = y[:, s:s + 9]
            m = m - jnp.max(m, axis=-1, keepdims=True)
            e = jnp.exp(m)
            m = e * pl.reciprocal(jnp.sum(e, axis=-1, keepdims=True), approx=True)
            o_ref[:, s:s + 9] = m.astype(o_ref.dtype)

    return pl.pallas_call(
        kernel,
        out_shape=jax.ShapeDtypeStruct((M, n_pad), x.dtype),
        grid_spec=pltpu.PrefetchScalarGridSpec(
            num_scalar_prefetch=0,
            grid=(M // TM,),
            in_specs=[pl.BlockSpec((TM, K), lambda i: (i, 0)),
                      pl.BlockSpec((K, n_pad), lambda i: (0, 0)),
                      pl.BlockSpec((1, n_pad), lambda i: (0, 0))],
            out_specs=pl.BlockSpec((TM, n_pad), lambda i: (i, 0))),
        compiler_params=_compiler_params(),
    )(x, wcat.astype(jnp.bfloat16), bcat.reshape(1, n_pad))


# ---------------------------------------------------------------------------
# Depthwise 3x3 conv (stride 1, pad 1) in NHWC, optional fused LayerNorm(+affine) and GELU.
# Zero padding lives in a VMEM scratch; only the 1-px halo is zeroed each step, the conv
# is strip-mined over rows to bound live vregs, and each ky uses one row-band load with
# value slices for the three kx taps.
# ---------------------------------------------------------------------------
def dwconv3x3_pallas(x, w, b, *, ln_g=None, ln_b=None, ln_eps=LN_EPS, act_gelu=False):
    B, H, W, C = x.shape
    has_ln = ln_g is not None
    RH = 8 if H % 8 == 0 else H          # row-strip height

    def kernel(*refs):
        if has_ln:
            x_ref, w_ref, b_ref, lg_ref, lb_ref, o_ref, pad_ref = refs
        else:
            x_ref, w_ref, b_ref, o_ref, pad_ref = refs

        # Halo-only zeroing (interior is fully overwritten); redone each grid step so it
        # stays correct under megacore "parallel" scheduling.
        zrow = jnp.zeros((W + 2, C), jnp.float32)
        pad_ref[0] = zrow
        pad_ref[H + 1] = zrow
        zcol = jnp.zeros((H, 1, C), jnp.float32)
        pad_ref[1:H + 1, 0:1, :] = zcol
        pad_ref[1:H + 1, W + 1:W + 2, :] = zcol
        pad_ref[1:H + 1, 1:W + 1, :] = x_ref[0].astype(jnp.float32)

        wv = w_ref[...].astype(jnp.float32)            # (3, 3, C)
        bv = b_ref[...].astype(jnp.float32)            # (1, C)

        for s in range(H // RH):
            r0 = s * RH
            acc = jnp.zeros((RH, W, C), jnp.float32)
            for ky in range(3):
                band = pad_ref[r0 + ky:r0 + ky + RH, :, :]     # one row-band load per ky
                for kx in range(3):
                    acc = acc + band[:, kx:kx + W, :] * wv[ky, kx].reshape(1, 1, C)
            acc = acc + bv
            if has_ln:
                mu = jnp.mean(acc, axis=-1, keepdims=True)
                var = jnp.mean(jnp.square(acc - mu), axis=-1, keepdims=True)
                acc = (acc - mu) * jax.lax.rsqrt(var + ln_eps)
                acc = acc * lg_ref[...].astype(jnp.float32) + lb_ref[...].astype(jnp.float32)
            if act_gelu:
                acc = _gelu(acc)
            o_ref[0, r0:r0 + RH, :, :] = acc.astype(o_ref.dtype)

    operands = [x, w, b.reshape(1, C)]
    in_specs = [
        pl.BlockSpec((1, H, W, C), lambda n: (n, 0, 0, 0)),
        pl.BlockSpec((3, 3, C), lambda n: (0, 0, 0)),
        pl.BlockSpec((1, C), lambda n: (0, 0)),
    ]
    if has_ln:
        operands += [ln_g.reshape(1, C), ln_b.reshape(1, C)]
        in_specs += [pl.BlockSpec((1, C), lambda n: (0, 0)),
                     pl.BlockSpec((1, C), lambda n: (0, 0))]

    return pl.pallas_call(
        kernel,
        out_shape=jax.ShapeDtypeStruct((B, H, W, C), x.dtype),
        grid_spec=pltpu.PrefetchScalarGridSpec(
            num_scalar_prefetch=0,
            grid=(B,),
            in_specs=in_specs,
            out_specs=pl.BlockSpec((1, H, W, C), lambda n: (n, 0, 0, 0)),
            scratch_shapes=[pltpu.VMEM((H + 2, W + 2, C), jnp.float32)]),
        compiler_params=_compiler_params(),
    )(*operands)


# ---------------------------------------------------------------------------
# DCNv3 deformable sampling core (3x3, stride 1, pad 1, dilation 1) — plain JAX (gather).
# Zero-padded value, normalized sampling locations, bilinear grid_sample with zeros padding /
# align_corners=False, mask folded into the bilinear weights, per-(batch,group) channel-
# vectorized gathers (indices carry no group-channel dim).
# ---------------------------------------------------------------------------
def _dcnv3_sample(v, offset, mask, group, offset_scale=1.0):
    B, H, W, C = v.shape
    G = group
    Gc = C // G
    P = 9
    vp = jnp.pad(v, ((0, 0), (1, 1), (1, 1), (0, 0)))
    Hin, Win = H + 2, W + 2
    L = Hin * Win

    ref_x = (jnp.arange(W, dtype=jnp.float32) + 1.5) / Win
    ref_y = (jnp.arange(H, dtype=jnp.float32) + 1.5) / Hin
    base = jnp.array([-1.0, 0.0, 1.0], dtype=jnp.float32)
    gx = jnp.repeat(base, 3) / Win          # x slow, y fast (matches DCNv3 grid ordering)
    gy = jnp.tile(base, 3) / Hin

    loc_x = (ref_x[None, None, :, None, None] + gx[None, None, None, None, :] * offset_scale
             + offset[..., 0] * offset_scale / Win)
    loc_y = (ref_y[None, :, None, None, None] + gy[None, None, None, None, :] * offset_scale
             + offset[..., 1] * offset_scale / Hin)
    px = loc_x * Win - 0.5                  # grid_sample align_corners=False unnormalization
    py = loc_y * Hin - 0.5

    x0 = jnp.floor(px)
    y0 = jnp.floor(py)
    wx = px - x0
    wy = py - y0
    x0i = x0.astype(jnp.int32)
    y0i = y0.astype(jnp.int32)

    # (B*G, L, Gc) value table: one gather per corner, no index broadcast over Gc.
    vg = vp.reshape(B, L, G, Gc).transpose(0, 2, 1, 3).reshape(B * G, L, Gc)

    def corner(yi, xi):
        valid = ((xi >= 0) & (xi < Win) & (yi >= 0) & (yi < Hin)).astype(jnp.float32)
        idx = jnp.clip(yi, 0, Hin - 1) * Win + jnp.clip(xi, 0, Win - 1)
        idx = idx.reshape(B, H * W, G, P).transpose(0, 2, 1, 3).reshape(B * G, H * W * P)
        vals = jax.vmap(lambda tbl, i: jnp.take(tbl, i, axis=0))(vg, idx)
        vals = vals.reshape(B, G, H * W, P, Gc).transpose(0, 2, 1, 3, 4)
        return vals, valid.reshape(B, H * W, G, P, 1)

    v00, m00 = corner(y0i, x0i)
    v01, m01 = corner(y0i, x0i + 1)
    v10, m10 = corner(y0i + 1, x0i)
    v11, m11 = corner(y0i + 1, x0i + 1)

    wxr = wx.reshape(B, H * W, G, P, 1)
    wyr = wy.reshape(B, H * W, G, P, 1)
    mr = mask.reshape(B, H * W, G, P, 1)
    w00 = (1 - wyr) * (1 - wxr) * mr * m00
    w01 = (1 - wyr) * wxr * mr * m01
    w10 = wyr * (1 - wxr) * mr * m10
    w11 = wyr * wxr * mr * m11
    out = (v00 * w00 + v01 * w01 + v10 * w10 + v11 * w11).sum(axis=3)
    return out.reshape(B, H, W, C)


# ---------------------------------------------------------------------------
# Block.forward
# ---------------------------------------------------------------------------
def block_forward(x, p, group):
    B, C, H, W = x.shape
    M = B * H * W
    G = group
    Ch = p['fc1_w'].shape[1]

    x_cl = jnp.transpose(x, (0, 2, 3, 1)).reshape(M, C)   # channels-last, rows = B*H*W

    # Fold BN1 (inference affine) into proj_1 / the proj_2 epilogue.
    s1 = p['bn1_g'] * jax.lax.rsqrt(p['bn1_v'] + BN_EPS)
    t1 = p['bn1_b'] - p['bn1_m'] * s1
    w_p1 = p['proj1_w'] * s1[:, None]
    b_p1 = p['proj1_b'] + t1 @ p['proj1_w']

    # Attention: proj_1 + GELU, fused with DCNv3 input_proj (two outputs).
    a, v = linear_pallas(x_cl, w_p1, b_p1, act_gelu=True,
                         w2=p['dcn_in_w'], b2=p['dcn_in_b'])            # (M, C), (M, C)

    # DCNv3 dw branch: depthwise 3x3 + LayerNorm + GELU fused.
    x1 = dwconv3x3_pallas(a.reshape(B, H, W, C), p['dcn_dw_w'], p['dcn_dw_b'],
                          ln_g=p['dcn_ln_g'], ln_b=p['dcn_ln_b'],
                          ln_eps=LN_EPS, act_gelu=True)
    x1f = x1.reshape(M, C)

    # Offset + mask projections + grouped softmax, one fused lane-dense kernel.
    om = offmask_pallas(x1f, p['dcn_off_w'], p['dcn_off_b'],
                        p['dcn_msk_w'], p['dcn_msk_b'], G)              # (M, 128)
    off = om[:, :G * 18]
    msk = om[:, G * 18:G * 27]

    samp = _dcnv3_sample(v.reshape(B, H, W, C),
                         off.reshape(B, H, W, G, 9, 2),
                         msk.reshape(B, H, W, G, 9), G, 1.0)

    # output_proj fused with the DCA gating multiply (u * dcn(u)).
    dca = linear_pallas(samp.reshape(M, C), p['dcn_out_w'], p['dcn_out_b'], mul=a)

    # proj_2 + attention shortcut (BN1 folded) + layer_scale_1 + block residual,
    # fused with Mlp.fc1 (BN2 folded) as a second output.
    s2 = p['bn2_g'] * jax.lax.rsqrt(p['bn2_v'] + BN_EPS)
    t2 = p['bn2_b'] - p['bn2_m'] * s2
    w_f1 = p['fc1_w'] * s2[:, None]
    b_f1 = p['fc1_b'] + t2 @ p['fc1_w']
    rscale1 = 1.0 + p['ls1'] * s1
    x2, m1 = linear_pallas(dca, p['proj2_w'], p['proj2_b'] + t1,
                           res=x_cl, ls=p['ls1'], rscale=rscale1,
                           w2=w_f1, b2=b_f1)                            # (M, C), (M, Ch)

    # Mlp DWConv + GELU.
    md = dwconv3x3_pallas(m1.reshape(B, H, W, Ch), p['dw2_w'], p['dw2_b'], act_gelu=True)

    # fc2 + block residual + layer_scale_2 (rscale-free fast path).
    out_cl = linear_pallas(md.reshape(M, Ch), p['fc2_w'], p['fc2_b'],
                           res=x2, ls=p['ls2'])
    return jnp.transpose(out_cl.reshape(B, H, W, C), (0, 3, 1, 2))


# ---------------------------------------------------------------------------
# Parameters + pure-JAX reference
# ---------------------------------------------------------------------------
def init_params(key, C, Ch, G):
    keys = iter(jax.random.split(key, 40))

    def nrm(shape, scale):
        return scale * jax.random.normal(next(keys), shape, jnp.float32)

    def uni(shape, lo, hi):
        return jax.random.uniform(next(keys), shape, jnp.float32, lo, hi)

    p = {}
    for name in ('bn1', 'bn2'):
        p[name + '_g'] = uni((C,), 0.8, 1.2)
        p[name + '_b'] = nrm((C,), 0.1)
        p[name + '_m'] = nrm((C,), 0.1)
        p[name + '_v'] = uni((C,), 0.5, 1.5)
    p['proj1_w'] = nrm((C, C), 1.0 / math.sqrt(C)); p['proj1_b'] = nrm((C,), 0.02)
    p['proj2_w'] = nrm((C, C), 1.0 / math.sqrt(C)); p['proj2_b'] = nrm((C,), 0.02)
    p['dcn_in_w'] = nrm((C, C), 1.0 / math.sqrt(C)); p['dcn_in_b'] = nrm((C,), 0.02)
    p['dcn_out_w'] = nrm((C, C), 1.0 / math.sqrt(C)); p['dcn_out_b'] = nrm((C,), 0.02)
    p['dcn_dw_w'] = nrm((3, 3, C), 1.0 / 3.0); p['dcn_dw_b'] = nrm((C,), 0.02)
    p['dcn_ln_g'] = uni((C,), 0.8, 1.2); p['dcn_ln_b'] = nrm((C,), 0.1)
    p['dcn_off_w'] = nrm((C, G * 18), 0.05); p['dcn_off_b'] = nrm((G * 18,), 0.05)
    p['dcn_msk_w'] = nrm((C, G * 9), 0.1); p['dcn_msk_b'] = nrm((G * 9,), 0.1)
    p['fc1_w'] = nrm((C, Ch), 1.0 / math.sqrt(C)); p['fc1_b'] = nrm((Ch,), 0.02)
    p['dw2_w'] = nrm((3, 3, Ch), 1.0 / 3.0); p['dw2_b'] = nrm((Ch,), 0.02)
    p['fc2_w'] = nrm((Ch, C), 1.0 / math.sqrt(Ch)); p['fc2_b'] = nrm((C,), 0.02)
    # layer_scale_* initialized at 0.01 in the module; perturbed so branches matter.
    p['ls1'] = 0.01 + jnp.abs(nrm((C,), 0.05))
    p['ls2'] = 0.01 + jnp.abs(nrm((C,), 0.05))
    return p


def reference_block(x, p, group):
    """Pure-JAX/XLA f32 reference of Block.forward (no folding, exact softmax)."""
    B, C, H, W = x.shape
    G = group
    hp = jax.lax.Precision.HIGHEST

    def bn(y, pre):
        s = p[pre + '_g'] / jnp.sqrt(p[pre + '_v'] + BN_EPS)
        t = p[pre + '_b'] - p[pre + '_m'] * s
        return y * s[None, :, None, None] + t[None, :, None, None]

    def conv1x1(y, w, b):
        return jnp.einsum('bchw,cd->bdhw', y, w, precision=hp) + b[None, :, None, None]

    def dwconv(y, w, b):
        Cn = y.shape[1]
        wt = jnp.transpose(w, (2, 0, 1))[:, None, :, :]
        out = lax.conv_general_dilated(y, wt, (1, 1), ((1, 1), (1, 1)),
                                       dimension_numbers=('NCHW', 'OIHW', 'NCHW'),
                                       feature_group_count=Cn, precision=hp)
        return out + b[None, :, None, None]

    def dcnv3(inp):  # NHWC in/out
        v = jnp.einsum('bhwc,cd->bhwd', inp, p['dcn_in_w'], precision=hp) + p['dcn_in_b']
        x1 = dwconv(jnp.transpose(inp, (0, 3, 1, 2)), p['dcn_dw_w'], p['dcn_dw_b'])
        x1 = jnp.transpose(x1, (0, 2, 3, 1))
        mu = x1.mean(-1, keepdims=True)
        var = ((x1 - mu) ** 2).mean(-1, keepdims=True)
        x1 = (x1 - mu) / jnp.sqrt(var + LN_EPS) * p['dcn_ln_g'] + p['dcn_ln_b']
        x1 = _gelu(x1)
        off = jnp.einsum('bhwc,cd->bhwd', x1, p['dcn_off_w'], precision=hp) + p['dcn_off_b']
        mskl = jnp.einsum('bhwc,cd->bhwd', x1, p['dcn_msk_w'], precision=hp) + p['dcn_msk_b']
        msk = jax.nn.softmax(mskl.reshape(B, H, W, G, 9), axis=-1)
        samp = _dcnv3_sample(v, off.reshape(B, H, W, G, 9, 2), msk, G, 1.0)
        return jnp.einsum('bhwc,cd->bhwd', samp, p['dcn_out_w'], precision=hp) + p['dcn_out_b']

    def attention(y):  # NCHW
        shortcut = y
        z = _gelu(conv1x1(y, p['proj1_w'], p['proj1_b']))
        zl = jnp.transpose(z, (0, 2, 3, 1))
        zl = zl * dcnv3(zl)                              # DCA: u * dcn(u)
        z = jnp.transpose(zl, (0, 3, 1, 2))
        z = conv1x1(z, p['proj2_w'], p['proj2_b'])
        return z + shortcut

    def mlp(y):  # NCHW
        z = conv1x1(y, p['fc1_w'], p['fc1_b'])
        z = dwconv(z, p['dw2_w'], p['dw2_b'])
        z = _gelu(z)
        return conv1x1(z, p['fc2_w'], p['fc2_b'])

    y = x + p['ls1'][None, :, None, None] * attention(bn(x, 'bn1'))
    out = y + p['ls2'][None, :, None, None] * mlp(bn(y, 'bn2'))
    return out


if __name__ == "__main__":
    B, C, H, W = 2, 32, 16, 16          # DCNv3 requires channels divisible by 16 (group = C//16)
    G = C // 16
    Ch = int(C * 4.0)                   # mlp_ratio = 4.0

    key = jax.random.PRNGKey(0)
    kx, kp = jax.random.split(key)
    x = jax.random.normal(kx, (B, C, H, W), jnp.float32)
    params = init_params(kp, C, Ch, G)

    fwd = jax.jit(lambda xx, pp: block_forward(xx, pp, G))
    out = jax.block_until_ready(fwd(x, params))
    assert out.shape == (B, C, H, W), out.shape

    ref = reference_block(x, params, G)
    max_err = float(jnp.max(jnp.abs(out - ref)))
    # bf16 MXU inputs + approx reciprocal introduce ~1e-3-level drift vs the f32 reference.
    assert jnp.allclose(out, ref, atol=2e-2, rtol=2e-2), f"max abs diff {max_err}"

    print("KERNEL_OK")
</pallas_src>

<mosaic_0001>
module attributes {stable_mosaic.version = 11 : i64} {
  func.func @kernel(%arg0: i32, %arg1: memref<128x32xf32, #tpu.memory_space<vmem>>, %arg2: memref<32x32xbf16, #tpu.memory_space<vmem>>, %arg3: memref<1x32xf32, #tpu.memory_space<vmem>>, %arg4: memref<32x32xbf16, #tpu.memory_space<vmem>>, %arg5: memref<1x32xf32, #tpu.memory_space<vmem>>, %arg6: memref<128x32xf32, #tpu.memory_space<vmem>>, %arg7: memref<128x32xf32, #tpu.memory_space<vmem>>) attributes {dimension_semantics = [#tpu.dimension_semantics<parallel>], iteration_bounds = array<i64: 4>, scalar_prefetch = 0 : i64, scratch_operands = 0 : i64, tpu.core_type = #tpu.core_type<tc>, window_params = [{transform_indices = @transform_0, window_bounds = array<i64: 128, 32>}, {pipeline_mode = #tpu.pipeline_mode<synchronous>, transform_indices = @transform_1, window_bounds = array<i64: 32, 32>}, {pipeline_mode = #tpu.pipeline_mode<synchronous>, transform_indices = @transform_2, window_bounds = array<i64: 1, 32>}, {pipeline_mode = #tpu.pipeline_mode<synchronous>, transform_indices = @transform_3, window_bounds = array<i64: 32, 32>}, {pipeline_mode = #tpu.pipeline_mode<synchronous>, transform_indices = @transform_4, window_bounds = array<i64: 1, 32>}, {transform_indices = @transform_5, window_bounds = array<i64: 128, 32>}, {transform_indices = @transform_6, window_bounds = array<i64: 128, 32>}]} {
    %c0 = arith.constant 0 : index
    %c0_0 = arith.constant 0 : index
    %0 = vector.load %arg1[%c0, %c0_0] : memref<128x32xf32, #tpu.memory_space<vmem>>, vector<128x32xf32>
    %1 = arith.truncf %0 : vector<128x32xf32> to vector<128x32xbf16>
    %c0_1 = arith.constant 0 : index
    %c0_2 = arith.constant 0 : index
    %2 = vector.load %arg2[%c0_1, %c0_2] : memref<32x32xbf16, #tpu.memory_space<vmem>>, vector<32x32xbf16>
    %cst = arith.constant dense<0.000000e+00> : vector<128x32xf32>
    %3 = tpu.matmul %1, %2, %cst {dimension_numbers = #tpu.dot_dimension_numbers<[1], [0], [0], [1], [0, 0, 1, 1], [], []>} : vector<128x32xbf16>, vector<32x32xbf16>, vector<128x32xf32> -> vector<128x32xf32>
    %c0_3 = arith.constant 0 : index
    %c0_4 = arith.constant 0 : index
    %4 = vector.load %arg3[%c0_3, %c0_4] : memref<1x32xf32, #tpu.memory_space<vmem>>, vector<1x32xf32>
    %5 = vector.broadcast %4 : vector<1x32xf32> to vector<128x32xf32>
    %6 = arith.addf %3, %5 : vector<128x32xf32>
    %cst_5 = arith.constant 5.000000e-01 : f32
    %7 = vector.broadcast %cst_5 : f32 to vector<128x32xf32>
    %8 = arith.mulf %7, %6 : vector<128x32xf32>
    %cst_6 = arith.constant 4.471500e-02 : f32
    %9 = vector.broadcast %cst_6 : f32 to vector<128x32xf32>
    %10 = arith.mulf %9, %6 : vector<128x32xf32>
    %11 = arith.mulf %10, %6 : vector<128x32xf32>
    %12 = arith.mulf %11, %6 : vector<128x32xf32>
    %13 = arith.addf %6, %12 : vector<128x32xf32>
    %cst_7 = arith.constant 0.797884583 : f32
    %14 = vector.broadcast %cst_7 : f32 to vector<128x32xf32>
    %15 = arith.mulf %14, %13 : vector<128x32xf32>
    %16 = math.tanh %15 : vector<128x32xf32>
    %cst_8 = arith.constant 1.000000e+00 : f32
    %17 = vector.broadcast %cst_8 : f32 to vector<128x32xf32>
    %18 = arith.addf %17, %16 : vector<128x32xf32>
    %19 = arith.mulf %8, %18 : vector<128x32xf32>
    %c0_9 = arith.constant 0 : index
    %c0_10 = arith.constant 0 : index
    %20 = vector.load %arg6[%c0_9, %c0_10] : memref<128x32xf32, #tpu.memory_space<vmem>>, vector<128x32xf32>
    tpu.vector_store %arg6[%c0_9, %c0_10], %19 {strides = array<i32>} : memref<128x32xf32, #tpu.memory_space<vmem>>, vector<128x32xf32>,
    %21 = arith.truncf %19 : vector<128x32xf32> to vector<128x32xbf16>
    %c0_11 = arith.constant 0 : index
    %c0_12 = arith.constant 0 : index
    %22 = vector.load %arg4[%c0_11, %c0_12] : memref<32x32xbf16, #tpu.memory_space<vmem>>, vector<32x32xbf16>
    %cst_13 = arith.constant dense<0.000000e+00> : vector<128x32xf32>
    %23 = tpu.matmul %21, %22, %cst_13 {dimension_numbers = #tpu.dot_dimension_numbers<[1], [0], [0], [1], [0, 0, 1, 1], [], []>} : vector<128x32xbf16>, vector<32x32xbf16>, vector<128x32xf32> -> vector<128x32xf32>
    %c0_14 = arith.constant 0 : index
    %c0_15 = arith.constant 0 : index
    %24 = vector.load %arg5[%c0_14, %c0_15] : memref<1x32xf32, #tpu.memory_space<vmem>>, vector<1x32xf32>
    %25 = vector.broadcast %24 : vector<1x32xf32> to vector<128x32xf32>
    %26 = arith.addf %23, %25 : vector<128x32xf32>
    %c0_16 = arith.constant 0 : index
    %c0_17 = arith.constant 0 : index
    %27 = vector.load %arg7[%c0_16, %c0_17] : memref<128x32xf32, #tpu.memory_space<vmem>>, vector<128x32xf32>
    tpu.vector_store %arg7[%c0_16, %c0_17], %26 {strides = array<i32>} : memref<128x32xf32, #tpu.memory_space<vmem>>, vector<128x32xf32>,
    return
  }
  func.func @transform_0(%arg0: i32) -> (i32, i32) {
    %c0_i32 = arith.constant 0 : i32
    %c0_i32_0 = arith.constant 0 : i32
    return %arg0, %c0_i32 : i32, i32
  }
  func.func @transform_1(%arg0: i32) -> (i32, i32) {
    %c0_i32 = arith.constant 0 : i32
    %c0_i32_0 = arith.constant 0 : i32
    %c0_i32_1 = arith.constant 0 : i32
    return %c0_i32, %c0_i32_0 : i32, i32
  }
  func.func @transform_2(%arg0: i32) -> (i32, i32) {
    %c0_i32 = arith.constant 0 : i32
    %c0_i32_0 = arith.constant 0 : i32
    %c0_i32_1 = arith.constant 0 : i32
    return %c0_i32, %c0_i32_0 : i32, i32
  }
  func.func @transform_3(%arg0: i32) -> (i32, i32) {
    %c0_i32 = arith.constant 0 : i32
    %c0_i32_0 = arith.constant 0 : i32
    %c0_i32_1 = arith.constant 0 : i32
    return %c0_i32, %c0_i32_0 : i32, i32
  }
  func.func @transform_4(%arg0: i32) -> (i32, i32) {
    %c0_i32 = arith.constant 0 : i32
    %c0_i32_0 = arith.constant 0 : i32
    %c0_i32_1 = arith.constant 0 : i32
    return %c0_i32, %c0_i32_0 : i32, i32
  }
  func.func @transform_5(%arg0: i32) -> (i32, i32) {
    %c0_i32 = arith.constant 0 : i32
    %c0_i32_0 = arith.constant 0 : i32
    return %arg0, %c0_i32 : i32, i32
  }
  func.func @transform_6(%arg0: i32) -> (i32, i32) {
    %c0_i32 = arith.constant 0 : i32
    %c0_i32_0 = arith.constant 0 : i32
    return %arg0, %c0_i32 : i32, i32
  }
}

module attributes {stable_mosaic.version = 11 : i64} {
  func.func @kernel(%arg0: i32, %arg1: memref<1x16x16x32xf32, #tpu.memory_space<vmem>>, %arg2: memref<3x3x32xf32, #tpu.memory_space<vmem>>, %arg3: memref<1x32xf32, #tpu.memory_space<vmem>>, %arg4: memref<1x32xf32, #tpu.memory_space<vmem>>, %arg5: memref<1x32xf32, #tpu.memory_space<vmem>>, %arg6: memref<1x16x16x32xf32, #tpu.memory_space<vmem>>, %arg7: memref<18x18x32xf32, #tpu.memory_space<vmem>>) attributes {dimension_semantics = [#tpu.dimension_semantics<parallel>], iteration_bounds = array<i64: 2>, scalar_prefetch = 0 : i64, scratch_operands = 1 : i64, tpu.core_type = #tpu.core_type<tc>, window_params = [{transform_indices = @transform_0, window_bounds = array<i64: 1, 16, 16, 32>}, {pipeline_mode = #tpu.pipeline_mode<synchronous>, transform_indices = @transform_1, window_bounds = array<i64: 3, 3, 32>}, {pipeline_mode = #tpu.pipeline_mode<synchronous>, transform_indices = @transform_2, window_bounds = array<i64: 1, 32>}, {pipeline_mode = #tpu.pipeline_mode<synchronous>, transform_indices = @transform_3, window_bounds = array<i64: 1, 32>}, {pipeline_mode = #tpu.pipeline_mode<synchronous>, transform_indices = @transform_4, window_bounds = array<i64: 1, 32>}, {transform_indices = @transform_5, window_bounds = array<i64: 1, 16, 16, 32>}]} {
    %cst = arith.constant 0.000000e+00 : f32
    %0 = vector.broadcast %cst : f32 to vector<18x32xf32>
    %c0 = arith.constant 0 : index
    %c0_0 = arith.constant 0 : index
    %c0_1 = arith.constant 0 : index
    %1 = vector.load %arg7[%c0, %c0_0, %c0_1] : memref<18x18x32xf32, #tpu.memory_space<vmem>>, vector<1x18x32xf32>
    %2 = vector.shape_cast %1 : vector<1x18x32xf32> to vector<18x32xf32>
    %3 = vector.shape_cast %0 : vector<18x32xf32> to vector<1x18x32xf32>
    tpu.vector_store %arg7[%c0, %c0_0, %c0_1], %3 {strides = array<i32>} : memref<18x18x32xf32, #tpu.memory_space<vmem>>, vector<1x18x32xf32>,
    %c17 = arith.constant 17 : index
    %c0_2 = arith.constant 0 : index
    %c0_3 = arith.constant 0 : index
    %4 = vector.load %arg7[%c17, %c0_2, %c0_3] : memref<18x18x32xf32, #tpu.memory_space<vmem>>, vector<1x18x32xf32>
    %5 = vector.shape_cast %4 : vector<1x18x32xf32> to vector<18x32xf32>
    %6 = vector.shape_cast %0 : vector<18x32xf32> to vector<1x18x32xf32>
    tpu.vector_store %arg7[%c17, %c0_2, %c0_3], %6 {strides = array<i32>} : memref<18x18x32xf32, #tpu.memory_space<vmem>>, vector<1x18x32xf32>,
    %cst_4 = arith.constant 0.000000e+00 : f32
    %7 = vector.broadcast %cst_4 : f32 to vector<16x1x32xf32>
    %c1 = arith.constant 1 : index
    %c0_5 = arith.constant 0 : index
    %c0_6 = arith.constant 0 : index
    %8 = vector.load %arg7[%c1, %c0_5, %c0_6] : memref<18x18x32xf32, #tpu.memory_space<vmem>>, vector<16x1x32xf32>
    tpu.vector_store %arg7[%c1, %c0_5, %c0_6], %7 {strides = array<i32>} : memref<18x18x32xf32, #tpu.memory_space<vmem>>, vector<16x1x32xf32>,
    %c1_7 = arith.constant 1 : index
    %c17_8 = arith.constant 17 : index
    %c0_9 = arith.constant 0 : index
    %9 = vector.load %arg7[%c1_7, %c17_8, %c0_9] : memref<18x18x32xf32, #tpu.memory_space<vmem>>, vector<16x1x32xf32>
    tpu.vector_store %arg7[%c1_7, %c17_8, %c0_9], %7 {strides = array<i32>} : memref<18x18x32xf32, #tpu.memory_space<vmem>>, vector<16x1x32xf32>,
    %c0_10 = arith.constant 0 : index
    %c0_11 = arith.constant 0 : index
    %c0_12 = arith.constant 0 : index
    %c0_13 = arith.constant 0 : index
    %10 = vector.load %arg1[%c0_10, %c0_11, %c0_12, %c0_13] : memref<1x16x16x32xf32, #tpu.memory_space<vmem>>, vector<1x16x16x32xf32>
    %11 = vector.shape_cast %10 : vector<1x16x16x32xf32> to vector<16x16x32xf32>
    %c1_14 = arith.constant 1 : index
    %c1_15 = arith.constant 1 : index
    %c0_16 = arith.constant 0 : index
    %12 = vector.load %arg7[%c1_14, %c1_15, %c0_16] : memref<18x18x32xf32, #tpu.memory_space<vmem>>, vector<16x16x32xf32>
    tpu.vector_store %arg7[%c1_14, %c1_15, %c0_16], %11 {strides = array<i32>} : memref<18x18x32xf32, #tpu.memory_space<vmem>>, vector<16x16x32xf32>,
    %c0_17 = arith.constant 0 : index
    %c0_18 = arith.constant 0 : index
    %c0_19 = arith.constant 0 : index
    %13 = vector.load %arg2[%c0_17, %c0_18, %c0_19] : memref<3x3x32xf32, #tpu.memory_space<vmem>>, vector<3x3x32xf32>
    %c0_20 = arith.constant 0 : index
    %c0_21 = arith.constant 0 : index
    %14 = vector.load %arg3[%c0_20, %c0_21] : memref<1x32xf32, #tpu.memory_space<vmem>>, vector<1x32xf32>
    %cst_22 = arith.constant 0.000000e+00 : f32
    %15 = vector.broadcast %cst_22 : f32 to vector<8x16x32xf32>
    %c0_23 = arith.constant 0 : index
    %c0_24 = arith.constant 0 : index
    %c0_25 = arith.constant 0 : index
    %16 = vector.load %arg7[%c0_23, %c0_24, %c0_25] : memref<18x18x32xf32, #tpu.memory_space<vmem>>, vector<8x18x32xf32>
    %17 = vector.extract_strided_slice %16 {offsets = [0, 0, 0], sizes = [8, 16, 32], strides = [1, 1, 1]} : vector<8x18x32xf32> to vector<8x16x32xf32>
    %18 = vector.extract_strided_slice %13 {offsets = [0, 0, 0], sizes = [1, 1, 32], strides = [1, 1, 1]} : vector<3x3x32xf32> to vector<1x1x32xf32>
    %19 = vector.shape_cast %18 : vector<1x1x32xf32> to vector<32xf32>
    %20 = vector.shape_cast %19 : vector<32xf32> to vector<1x1x32xf32>
    %21 = vector.broadcast %20 : vector<1x1x32xf32> to vector<8x16x32xf32>
    %22 = arith.mulf %17, %21 : vector<8x16x32xf32>
    %23 = arith.addf %15, %22 : vector<8x16x32xf32>
    %24 = vector.extract_strided_slice %16 {offsets = [0, 1, 0], sizes = [8, 16, 32], strides = [1, 1, 1]} : vector<8x18x32xf32> to vector<8x16x32xf32>
    %25 = vector.extract_strided_slice %13 {offsets = [0, 1, 0], sizes = [1, 1, 32], strides = [1, 1, 1]} : vector<3x3x32xf32> to vector<1x1x32xf32>
    %26 = vector.shape_cast %25 : vector<1x1x32xf32> to vector<32xf32>
    %27 = vector.shape_cast %26 : vector<32xf32> to vector<1x1x32xf32>
    %28 = vector.broadcast %27 : vector<1x1x32xf32> to vector<8x16x32xf32>
    %29 = arith.mulf %24, %28 : vector<8x16x32xf32>
    %30 = arith.addf %23, %29 : vector<8x16x32xf32>
    %31 = vector.extract_strided_slice %16 {offsets = [0, 2, 0], sizes = [8, 16, 32], strides = [1, 1, 1]} : vector<8x18x32xf32> to vector<8x16x32xf32>
    %32 = vector.extract_strided_slice %13 {offsets = [0, 2, 0], sizes = [1, 1, 32], strides = [1, 1, 1]} : vector<3x3x32xf32> to vector<1x1x32xf32>
    %33 = vector.shape_cast %32 : vector<1x1x32xf32> to vector<32xf32>
    %34 = vector.shape_cast %33 : vector<32xf32> to vector<1x1x32xf32>
    %35 = vector.broadcast %34 : vector<1x1x32xf32> to vector<8x16x32xf32>
    %36 = arith.mulf %31, %35 : vector<8x16x32xf32>
    %37 = arith.addf %30, %36 : vector<8x16x32xf32>
    %c1_26 = arith.constant 1 : index
    %c0_27 = arith.constant 0 : index
    %c0_28 = arith.constant 0 : index
    %38 = vector.load %arg7[%c1_26, %c0_27, %c0_28] : memref<18x18x32xf32, #tpu.memory_space<vmem>>, vector<8x18x32xf32>
    %39 = vector.extract_strided_slice %38 {offsets = [0, 0, 0], sizes = [8, 16, 32], strides = [1, 1, 1]} : vector<8x18x32xf32> to vector<8x16x32xf32>
    %40 = vector.extract_strided_slice %13 {offsets = [1, 0, 0], sizes = [1, 1, 32], strides = [1, 1, 1]} : vector<3x3x32xf32> to vector<1x1x32xf32>
    %41 = vector.shape_cast %40 : vector<1x1x32xf32> to vector<32xf32>
    %42 = vector.shape_cast %41 : vector<32xf32> to vector<1x1x32xf32>
    %43 = vector.broadcast %42 : vector<1x1x32xf32> to vector<8x16x32xf32>
    %44 = arith.mulf %39, %43 : vector<8x16x32xf32>
    %45 = arith.addf %37, %44 : vector<8x16x32xf32>
    %46 = vector.extract_strided_slice %38 {offsets = [0, 1, 0], sizes = [8, 16, 32], strides = [1, 1, 1]} : vector<8x18x32xf32> to vector<8x16x32xf32>
    %47 = vector.extract_strided_slice %13 {offsets = [1, 1, 0], sizes = [1, 1, 32], strides = [1, 1, 1]} : vector<3x3x32xf32> to vector<1x1x32xf32>
    %48 = vector.shape_cast %47 : vector<1x1x32xf32> to vector<32xf32>
    %49 = vector.shape_cast %48 : vector<32xf32> to vector<1x1x32xf32>
    %50 = vector.broadcast %49 : vector<1x1x32xf32> to vector<8x16x32xf32>
    %51 = arith.mulf %46, %50 : vector<8x16x32xf32>
    %52 = arith.addf %45, %51 : vector<8x16x32xf32>
    %53 = vector.extract_strided_slice %38 {offsets = [0, 2, 0], sizes = [8, 16, 32], strides = [1, 1, 1]} : vector<8x18x32xf32> to vector<8x16x32xf32>
    %54 = vector.extract_strided_slice %13 {offsets = [1, 2, 0], sizes = [1, 1, 32], strides = [1, 1, 1]} : vector<3x3x32xf32> to vector<1x1x32xf32>
    %55 = vector.shape_cast %54 : vector<1x1x32xf32> to vector<32xf32>
    %56 = vector.shape_cast %55 : vector<32xf32> to vector<1x1x32xf32>
    %57 = vector.broadcast %56 : vector<1x1x32xf32> to vector<8x16x32xf32>
    %58 = arith.mulf %53, %57 : vector<8x16x32xf32>
    %59 = arith.addf %52, %58 : vector<8x16x32xf32>
    %c2 = arith.constant 2 : index
    %c0_29 = arith.constant 0 : index
    %c0_30 = arith.constant 0 : index
    %60 = vector.load %arg7[%c2, %c0_29, %c0_30] : memref<18x18x32xf32, #tpu.memory_space<vmem>>, vector<8x18x32xf32>
    %61 = vector.extract_strided_slice %60 {offsets = [0, 0, 0], sizes = [8, 16, 32], strides = [1, 1, 1]} : vector<8x18x32xf32> to vector<8x16x32xf32>
    %62 = vector.extract_strided_slice %13 {offsets = [2, 0, 0], sizes = [1, 1, 32], strides = [1, 1, 1]} : vector<3x3x32xf32> to vector<1x1x32xf32>
    %63 = vector.shape_cast %62 : vector<1x1x32xf32> to vector<32xf32>
    %64 = vector.shape_cast %63 : vector<32xf32> to vector<1x1x32xf32>
    %65 = vector.broadcast %64 : vector<1x1x32xf32> to vector<8x16x32xf32>
    %66 = arith.mulf %61, %65 : vector<8x16x32xf32>
    %67 = arith.addf %59, %66 : vector<8x16x32xf32>
    %68 = vector.extract_strided_slice %60 {offsets = [0, 1, 0], sizes = [8, 16, 32], strides = [1, 1, 1]} : vector<8x18x32xf32> to vector<8x16x32xf32>
    %69 = vector.extract_strided_slice %13 {offsets = [2, 1, 0], sizes = [1, 1, 32], strides = [1, 1, 1]} : vector<3x3x32xf32> to vector<1x1x32xf32>
    %70 = vector.shape_cast %69 : vector<1x1x32xf32> to vector<32xf32>
    %71 = vector.shape_cast %70 : vector<32xf32> to vector<1x1x32xf32>
    %72 = vector.broadcast %71 : vector<1x1x32xf32> to vector<8x16x32xf32>
    %73 = arith.mulf %68, %72 : vector<8x16x32xf32>
    %74 = arith.addf %67, %73 : vector<8x16x32xf32>
    %75 = vector.extract_strided_slice %60 {offsets = [0, 2, 0], sizes = [8, 16, 32], strides = [1, 1, 1]} : vector<8x18x32xf32> to vector<8x16x32xf32>
    %76 = vector.extract_strided_slice %13 {offsets = [2, 2, 0], sizes = [1, 1, 32], strides = [1, 1, 1]} : vector<3x3x32xf32> to vector<1x1x32xf32>
    %77 = vector.shape_cast %76 : vector<1x1x32xf32> to vector<32xf32>
    %78 = vector.shape_cast %77 : vector<32xf32> to vector<1x1x32xf32>
    %79 = vector.broadcast %78 : vector<1x1x32xf32> to vector<8x16x32xf32>
    %80 = arith.mulf %75, %79 : vector<8x16x32xf32>
    %81 = arith.addf %74, %80 : vector<8x16x32xf32>
    %82 = vector.shape_cast %14 : vector<1x32xf32> to vector<1x1x32xf32>
    %83 = vector.broadcast %82 : vector<1x1x32xf32> to vector<8x16x32xf32>
    %84 = arith.addf %81, %83 : vector<8x16x32xf32>
    %cst_31 = arith.constant dense<0.000000e+00> : vector<8x16xf32>
    %85 = vector.multi_reduction <add>, %84, %cst_31 [2] : vector<8x16x32xf32> to vector<8x16xf32>
    %86 = vector.shape_cast %85 : vector<8x16xf32> to vector<8x16x1xf32>
    %cst_32 = arith.constant 3.200000e+01 : f32
    %87 = vector.broadcast %cst_32 : f32 to vector<8x16x1xf32>
    %88 = arith.divf %86, %87 : vector<8x16x1xf32>
    %89 = vector.broadcast %88 : vector<8x16x1xf32> to vector<8x16x32xf32>
    %90 = arith.subf %84, %89 : vector<8x16x32xf32>
    %91 = arith.mulf %90, %90 : vector<8x16x32xf32>
    %cst_33 = arith.constant dense<0.000000e+00> : vector<8x16xf32>
    %92 = vector.multi_reduction <add>, %91, %cst_33 [2] : vector<8x16x32xf32> to vector<8x16xf32>
    %93 = vector.shape_cast %92 : vector<8x16xf32> to vector<8x16x1xf32>
    %cst_34 = arith.constant 3.200000e+01 : f32
    %94 = vector.broadcast %cst_34 : f32 to vector<8x16x1xf32>
    %95 = arith.divf %93, %94 : vector<8x16x1xf32>
    %96 = vector.broadcast %88 : vector<8x16x1xf32> to vector<8x16x32xf32>
    %97 = arith.subf %84, %96 : vector<8x16x32xf32>
    %cst_35 = arith.constant 9.99999997E-7 : f32
    %98 = vector.broadcast %cst_35 : f32 to vector<8x16x1xf32>
    %99 = arith.addf %95, %98 : vector<8x16x1xf32>
    %100 = math.rsqrt %99 : vector<8x16x1xf32>
    %101 = vector.broadcast %100 : vector<8x16x1xf32> to vector<8x16x32xf32>
    %102 = arith.mulf %97, %101 : vector<8x16x32xf32>
    %c0_36 = arith.constant 0 : index
    %c0_37 = arith.constant 0 : index
    %103 = vector.load %arg4[%c0_36, %c0_37] : memref<1x32xf32, #tpu.memory_space<vmem>>, vector<1x32xf32>
    %104 = vector.shape_cast %103 : vector<1x32xf32> to vector<1x1x32xf32>
    %105 = vector.broadcast %104 : vector<1x1x32xf32> to vector<8x16x32xf32>
    %106 = arith.mulf %102, %105 : vector<8x16x32xf32>
    %c0_38 = arith.constant 0 : index
    %c0_39 = arith.constant 0 : index
    %107 = vector.load %arg5[%c0_38, %c0_39] : memref<1x32xf32, #tpu.memory_space<vmem>>, vector<1x32xf32>
    %108 = vector.shape_cast %107 : vector<1x32xf32> to vector<1x1x32xf32>
    %109 = vector.broadcast %108 : vector<1x1x32xf32> to vector<8x16x32xf32>
    %110 = arith.addf %106, %109 : vector<8x16x32xf32>
    %cst_40 = arith.constant 5.000000e-01 : f32
    %111 = vector.broadcast %cst_40 : f32 to vector<8x16x32xf32>
    %112 = arith.mulf %111, %110 : vector<8x16x32xf32>
    %cst_41 = arith.constant 4.471500e-02 : f32
    %113 = vector.broadcast %cst_41 : f32 to vector<8x16x32xf32>
    %114 = arith.mulf %113, %110 : vector<8x16x32xf32>
    %115 = arith.mulf %114, %110 : vector<8x16x32xf32>
    %116 = arith.mulf %115, %110 : vector<8x16x32xf32>
    %117 = arith.addf %110, %116 : vector<8x16x32xf32>
    %cst_42 = arith.constant 0.797884583 : f32
    %118 = vector.broadcast %cst_42 : f32 to vector<8x16x32xf32>
    %119 = arith.mulf %118, %117 : vector<8x16x32xf32>
    %120 = math.tanh %119 : vector<8x16x32xf32>
    %cst_43 = arith.constant 1.000000e+00 : f32
    %121 = vector.broadcast %cst_43 : f32 to vector<8x16x32xf32>
    %122 = arith.addf %121, %120 : vector<8x16x32xf32>
    %123 = arith.mulf %112, %122 : vector<8x16x32xf32>
    %c0_44 = arith.constant 0 : index
    %c0_45 = arith.constant 0 : index
    %c0_46 = arith.constant 0 : index
    %c0_47 = arith.constant 0 : index
    %124 = vector.load %arg6[%c0_44, %c0_45, %c0_46, %c0_47] : memref<1x16x16x32xf32, #tpu.memory_space<vmem>>, vector<1x8x16x32xf32>
    %125 = vector.shape_cast %124 : vector<1x8x16x32xf32> to vector<8x16x32xf32>
    %126 = vector.shape_cast %123 : vector<8x16x32xf32> to vector<1x8x16x32xf32>
    tpu.vector_store %arg6[%c0_44, %c0_45, %c0_46, %c0_47], %126 {strides = array<i32>} : memref<1x16x16x32xf32, #tpu.memory_space<vmem>>, vector<1x8x16x32xf32>,
    %cst_48 = arith.constant 0.000000e+00 : f32
    %127 = vector.broadcast %cst_48 : f32 to vector<8x16x32xf32>
    %c8 = arith.constant 8 : index
    %c0_49 = arith.constant 0 : index
    %c0_50 = arith.constant 0 : index
    %128 = vector.load %arg7[%c8, %c0_49, %c0_50] : memref<18x18x32xf32, #tpu.memory_space<vmem>>, vector<8x18x32xf32>
    %129 = vector.extract_strided_slice %128 {offsets = [0, 0, 0], sizes = [8, 16, 32], strides = [1, 1, 1]} : vector<8x18x32xf32> to vector<8x16x32xf32>
    %130 = vector.extract_strided_slice %13 {offsets = [0, 0, 0], sizes = [1, 1, 32], strides = [1, 1, 1]} : vector<3x3x32xf32> to vector<1x1x32xf32>
    %131 = vector.shape_cast %130 : vector<1x1x32xf32> to vector<32xf32>
    %132 = vector.shape_cast %131 : vector<32xf32> to vector<1x1x32xf32>
    %133 = vector.broadcast %132 : vector<1x1x32xf32> to vector<8x16x32xf32>
    %134 = arith.mulf %129, %133 : vector<8x16x32xf32>
    %135 = arith.addf %127, %134 : vector<8x16x32xf32>
    %136 = vector.extract_strided_slice %128 {offsets = [0, 1, 0], sizes = [8, 16, 32], strides = [1, 1, 1]} : vector<8x18x32xf32> to vector<8x16x32xf32>
    %137 = vector.extract_strided_slice %13 {offsets = [0, 1, 0], sizes = [1, 1, 32], strides = [1, 1, 1]} : vector<3x3x32xf32> to vector<1x1x32xf32>
    %138 = vector.shape_cast %137 : vector<1x1x32xf32> to vector<32xf32>
    %139 = vector.shape_cast %138 : vector<32xf32> to vector<1x1x32xf32>
    %140 = vector.broadcast %139 : vector<1x1x32xf32> to vector<8x16x32xf32>
    %141 = arith.mulf %136, %140 : vector<8x16x32xf32>
    %142 = arith.addf %135, %141 : vector<8x16x32xf32>
    %143 = vector.extract_strided_slice %128 {offsets = [0, 2, 0], sizes = [8, 16, 32], strides = [1, 1, 1]} : vector<8x18x32xf32> to vector<8x16x32xf32>
    %144 = vector.extract_strided_slice %13 {offsets = [0, 2, 0], sizes = [1, 1, 32], strides = [1, 1, 1]} : vector<3x3x32xf32> to vector<1x1x32xf32>
    %145 = vector.shape_cast %144 : vector<1x1x32xf32> to vector<32xf32>
    %146 = vector.shape_cast %145 : vector<32xf32> to vector<1x1x32xf32>
    %147 = vector.broadcast %146 : vector<1x1x32xf32> to vector<8x16x32xf32>
    %148 = arith.mulf %143, %147 : vector<8x16x32xf32>
    %149 = arith.addf %142, %148 : vector<8x16x32xf32>
    %c9 = arith.constant 9 : index
    %c0_51 = arith.constant 0 : index
    %c0_52 = arith.constant 0 : index
    %150 = vector.load %arg7[%c9, %c0_51, %c0_52] : memref<18x18x32xf32, #tpu.memory_space<vmem>>, vector<8x18x32xf32>
    %151 = vector.extract_strided_slice %150 {offsets = [0, 0, 0], sizes = [8, 16, 32], strides = [1, 1, 1]} : vector<8x18x32xf32> to vector<8x16x32xf32>
    %152 = vector.extract_strided_slice %13 {offsets = [1, 0, 0], sizes = [1, 1, 32], strides = [1, 1, 1]} : vector<3x3x32xf32> to vector<1x1x32xf32>
    %153 = vector.shape_cast %152 : vector<1x1x32xf32> to vector<32xf32>
    %154 = vector.shape_cast %153 : vector<32xf32> to vector<1x1x32xf32>
    %155 = vector.broadcast %154 : vector<1x1x32xf32> to vector<8x16x32xf32>
    %156 = arith.mulf %151, %155 : vector<8x16x32xf32>
    %157 = arith.addf %149, %156 : vector<8x16x32xf32>
    %158 = vector.extract_strided_slice %150 {offsets = [0, 1, 0], sizes = [8, 16, 32], strides = [1, 1, 1]} : vector<8x18x32xf32> to vector<8x16x32xf32>
    %159 = vector.extract_strided_slice %13 {offsets = [1, 1, 0], sizes = [1, 1, 32], strides = [1, 1, 1]} : vector<3x3x32xf32> to vector<1x1x32xf32>
    %160 = vector.shape_cast %159 : vector<1x1x32xf32> to vector<32xf32>
    %161 = vector.shape_cast %160 : vector<32xf32> to vector<1x1x32xf32>
    %162 = vector.broadcast %161 : vector<1x1x32xf32> to vector<8x16x32xf32>
    %163 = arith.mulf %158, %162 : vector<8x16x32xf32>
    %164 = arith.addf %157, %163 : vector<8x16x32xf32>
    %165 = vector.extract_strided_slice %150 {offsets = [0, 2, 0], sizes = [8, 16, 32], strides = [1, 1, 1]} : vector<8x18x32xf32> to vector<8x16x32xf32>
    %166 = vector.extract_strided_slice %13 {offsets = [1, 2, 0], sizes = [1, 1, 32], strides = [1, 1, 1]} : vector<3x3x32xf32> to vector<1x1x32xf32>
    %167 = vector.shape_cast %166 : vector<1x1x32xf32> to vector<32xf32>
    %168 = vector.shape_cast %167 : vector<32xf32> to vector<1x1x32xf32>
    %169 = vector.broadcast %168 : vector<1x1x32xf32> to vector<8x16x32xf32>
    %170 = arith.mulf %165, %169 : vector<8x16x32xf32>
    %171 = arith.addf %164, %170 : vector<8x16x32xf32>
    %c10 = arith.constant 10 : index
    %c0_53 = arith.constant 0 : index
    %c0_54 = arith.constant 0 : index
    %172 = vector.load %arg7[%c10, %c0_53, %c0_54] : memref<18x18x32xf32, #tpu.memory_space<vmem>>, vector<8x18x32xf32>
    %173 = vector.extract_strided_slice %172 {offsets = [0, 0, 0], sizes = [8, 16, 32], strides = [1, 1, 1]} : vector<8x18x32xf32> to vector<8x16x32xf32>
    %174 = vector.extract_strided_slice %13 {offsets = [2, 0, 0], sizes = [1, 1, 32], strides = [1, 1, 1]} : vector<3x3x32xf32> to vector<1x1x32xf32>
    %175 = vector.shape_cast %174 : vector<1x1x32xf32> to vector<32xf32>
    %176 = vector.shape_cast %175 : vector<32xf32> to vector<1x1x32xf32>
    %177 = vector.broadcast %176 : vector<1x1x32xf32> to vector<8x16x32xf32>
    %178 = arith.mulf %173, %177 : vector<8x16x32xf32>
    %179 = arith.addf %171, %178 : vector<8x16x32xf32>
    %180 = vector.extract_strided_slice %172 {offsets = [0, 1, 0], sizes = [8, 16, 32], strides = [1, 1, 1]} : vector<8x18x32xf32> to vector<8x16x32xf32>
    %181 = vector.extract_strided_slice %13 {offsets = [2, 1, 0], sizes = [1, 1, 32], strides = [1, 1, 1]} : vector<3x3x32xf32> to vector<1x1x32xf32>
    %182 = vector.shape_cast %181 : vector<1x1x32xf32> to vector<32xf32>
    %183 = vector.shape_cast %182 : vector<32xf32> to vector<1x1x32xf32>
    %184 = vector.broadcast %183 : vector<1x1x32xf32> to vector<8x16x32xf32>
    %185 = arith.mulf %180, %184 : vector<8x16x32xf32>
    %186 = arith.addf %179, %185 : vector<8x16x32xf32>
    %187 = vector.extract_strided_slice %172 {offsets = [0, 2, 0], sizes = [8, 16, 32], strides = [1, 1, 1]} : vector<8x18x32xf32> to vector<8x16x32xf32>
    %188 = vector.extract_strided_slice %13 {offsets = [2, 2, 0], sizes = [1, 1, 32], strides = [1, 1, 1]} : vector<3x3x32xf32> to vector<1x1x32xf32>
    %189 = vector.shape_cast %188 : vector<1x1x32xf32> to vector<32xf32>
    %190 = vector.shape_cast %189 : vector<32xf32> to vector<1x1x32xf32>
    %191 = vector.broadcast %190 : vector<1x1x32xf32> to vector<8x16x32xf32>
    %192 = arith.mulf %187, %191 : vector<8x16x32xf32>
    %193 = arith.addf %186, %192 : vector<8x16x32xf32>
    %194 = vector.shape_cast %14 : vector<1x32xf32> to vector<1x1x32xf32>
    %195 = vector.broadcast %194 : vector<1x1x32xf32> to vector<8x16x32xf32>
    %196 = arith.addf %193, %195 : vector<8x16x32xf32>
    %cst_55 = arith.constant dense<0.000000e+00> : vector<8x16xf32>
    %197 = vector.multi_reduction <add>, %196, %cst_55 [2] : vector<8x16x32xf32> to vector<8x16xf32>
    %198 = vector.shape_cast %197 : vector<8x16xf32> to vector<8x16x1xf32>
    %cst_56 = arith.constant 3.200000e+01 : f32
    %199 = vector.broadcast %cst_56 : f32 to vector<8x16x1xf32>
    %200 = arith.divf %198, %199 : vector<8x16x1xf32>
    %201 = vector.broadcast %200 : vector<8x16x1xf32> to vector<8x16x32xf32>
    %202 = arith.subf %196, %201 : vector<8x16x32xf32>
    %203 = arith.mulf %202, %202 : vector<8x16x32xf32>
    %cst_57 = arith.constant dense<0.000000e+00> : vector<8x16xf32>
    %204 = vector.multi_reduction <add>, %203, %cst_57 [2] : vector<8x16x32xf32> to vector<8x16xf32>
    %205 = vector.shape_cast %204 : vector<8x16xf32> to vector<8x16x1xf32>
    %cst_58 = arith.constant 3.200000e+01 : f32
    %206 = vector.broadcast %cst_58 : f32 to vector<8x16x1xf32>
    %207 = arith.divf %205, %206 : vector<8x16x1xf32>
    %208 = vector.broadcast %200 : vector<8x16x1xf32> to vector<8x16x32xf32>
    %209 = arith.subf %196, %208 : vector<8x16x32xf32>
    %cst_59 = arith.constant 9.99999997E-7 : f32
    %210 = vector.broadcast %cst_59 : f32 to vector<8x16x1xf32>
    %211 = arith.addf %207, %210 : vector<8x16x1xf32>
    %212 = math.rsqrt %211 : vector<8x16x1xf32>
    %213 = vector.broadcast %212 : vector<8x16x1xf32> to vector<8x16x32xf32>
    %214 = arith.mulf %209, %213 : vector<8x16x32xf32>
    %c0_60 = arith.constant 0 : index
    %c0_61 = arith.constant 0 : index
    %215 = vector.load %arg4[%c0_60, %c0_61] : memref<1x32xf32, #tpu.memory_space<vmem>>, vector<1x32xf32>
    %216 = vector.shape_cast %215 : vector<1x32xf32> to vector<1x1x32xf32>
    %217 = vector.broadcast %216 : vector<1x1x32xf32> to vector<8x16x32xf32>
    %218 = arith.mulf %214, %217 : vector<8x16x32xf32>
    %c0_62 = arith.constant 0 : index
    %c0_63 = arith.constant 0 : index
    %219 = vector.load %arg5[%c0_62, %c0_63] : memref<1x32xf32, #tpu.memory_space<vmem>>, vector<1x32xf32>
    %220 = vector.shape_cast %219 : vector<1x32xf32> to vector<1x1x32xf32>
    %221 = vector.broadcast %220 : vector<1x1x32xf32> to vector<8x16x32xf32>
    %222 = arith.addf %218, %221 : vector<8x16x32xf32>
    %cst_64 = arith.constant 5.000000e-01 : f32
    %223 = vector.broadcast %cst_64 : f32 to vector<8x16x32xf32>
    %224 = arith.mulf %223, %222 : vector<8x16x32xf32>
    %cst_65 = arith.constant 4.471500e-02 : f32
    %225 = vector.broadcast %cst_65 : f32 to vector<8x16x32xf32>
    %226 = arith.mulf %225, %222 : vector<8x16x32xf32>
    %227 = arith.mulf %226, %222 : vector<8x16x32xf32>
    %228 = arith.mulf %227, %222 : vector<8x16x32xf32>
    %229 = arith.addf %222, %228 : vector<8x16x32xf32>
    %cst_66 = arith.constant 0.797884583 : f32
    %230 = vector.broadcast %cst_66 : f32 to vector<8x16x32xf32>
    %231 = arith.mulf %230, %229 : vector<8x16x32xf32>
    %232 = math.tanh %231 : vector<8x16x32xf32>
    %cst_67 = arith.constant 1.000000e+00 : f32
    %233 = vector.broadcast %cst_67 : f32 to vector<8x16x32xf32>
    %234 = arith.addf %233, %232 : vector<8x16x32xf32>
    %235 = arith.mulf %224, %234 : vector<8x16x32xf32>
    %c0_68 = arith.constant 0 : index
    %c8_69 = arith.constant 8 : index
    %c0_70 = arith.constant 0 : index
    %c0_71 = arith.constant 0 : index
    %236 = vector.load %arg6[%c0_68, %c8_69, %c0_70, %c0_71] : memref<1x16x16x32xf32, #tpu.memory_space<vmem>>, vector<1x8x16x32xf32>
    %237 = vector.shape_cast %236 : vector<1x8x16x32xf32> to vector<8x16x32xf32>
    %238 = vector.shape_cast %235 : vector<8x16x32xf32> to vector<1x8x16x32xf32>
    tpu.vector_store %arg6[%c0_68, %c8_69, %c0_70, %c0_71], %238 {strides = array<i32>} : memref<1x16x16x32xf32, #tpu.memory_space<vmem>>, vector<1x8x16x32xf32>,
    return
  }
  func.func @transform_0(%arg0: i32) -> (i32, i32, i32, i32) {
    %c0_i32 = arith.constant 0 : i32
    %c0_i32_0 = arith.constant 0 : i32
    %c0_i32_1 = arith.constant 0 : i32
    %c0_i32_2 = arith.constant 0 : i32
    return %arg0, %c0_i32, %c0_i32_0, %c0_i32_1 : i32, i32, i32, i32
  }
  func.func @transform_1(%arg0: i32) -> (i32, i32, i32) {
    %c0_i32 = arith.constant 0 : i32
    %c0_i32_0 = arith.constant 0 : i32
    %c0_i32_1 = arith.constant 0 : i32
    %c0_i32_2 = arith.constant 0 : i32
    return %c0_i32, %c0_i32_0, %c0_i32_1 : i32, i32, i32
  }
  func.func @transform_2(%arg0: i32) -> (i32, i32) {
    %c0_i32 = arith.constant 0 : i32
    %c0_i32_0 = arith.constant 0 : i32
    %c0_i32_1 = arith.constant 0 : i32
    return %c0_i32, %c0_i32_0 : i32, i32
  }
  func.func @transform_3(%arg0: i32) -> (i32, i32) {
    %c0_i32 = arith.constant 0 : i32
    %c0_i32_0 = arith.constant 0 : i32
    %c0_i32_1 = arith.constant 0 : i32
    return %c0_i32, %c0_i32_0 : i32, i32
  }
  func.func @transform_4(%arg0: i32) -> (i32, i32) {
    %c0_i32 = arith.constant 0 : i32
    %c0_i32_0 = arith.constant 0 : i32
    %c0_i32_1 = arith.constant 0 : i32
    return %c0_i32, %c0_i32_0 : i32, i32
  }
  func.func @transform_5(%arg0: i32) -> (i32, i32, i32, i32) {
    %c0_i32 = arith.constant 0 : i32
    %c0_i32_0 = arith.constant 0 : i32
    %c0_i32_1 = arith.constant 0 : i32
    %c0_i32_2 = arith.constant 0 : i32
    return %arg0, %c0_i32, %c0_i32_0, %c0_i32_1 : i32, i32, i32, i32
  }
}

module attributes {stable_mosaic.version = 11 : i64} {
  func.func @kernel(%arg0: i32, %arg1: memref<128x32xf32, #tpu.memory_space<vmem>>, %arg2: memref<32x128xbf16, #tpu.memory_space<vmem>>, %arg3: memref<1x128xf32, #tpu.memory_space<vmem>>, %arg4: memref<128x128xf32, #tpu.memory_space<vmem>>) attributes {dimension_semantics = [#tpu.dimension_semantics<parallel>], iteration_bounds = array<i64: 4>, scalar_prefetch = 0 : i64, scratch_operands = 0 : i64, tpu.core_type = #tpu.core_type<tc>, window_params = [{transform_indices = @transform_0, window_bounds = array<i64: 128, 32>}, {pipeline_mode = #tpu.pipeline_mode<synchronous>, transform_indices = @transform_1, window_bounds = array<i64: 32, 128>}, {pipeline_mode = #tpu.pipeline_mode<synchronous>, transform_indices = @transform_2, window_bounds = array<i64: 1, 128>}, {transform_indices = @transform_3, window_bounds = array<i64: 128, 128>}]} {
    %c0 = arith.constant 0 : index
    %c0_0 = arith.constant 0 : index
    %0 = vector.load %arg1[%c0, %c0_0] : memref<128x32xf32, #tpu.memory_space<vmem>>, vector<128x32xf32>
    %1 = arith.truncf %0 : vector<128x32xf32> to vector<128x32xbf16>
    %c0_1 = arith.constant 0 : index
    %c0_2 = arith.constant 0 : index
    %2 = vector.load %arg2[%c0_1, %c0_2] : memref<32x128xbf16, #tpu.memory_space<vmem>>, vector<32x128xbf16>
    %cst = arith.constant dense<0.000000e+00> : vector<128x128xf32>
    %3 = tpu.matmul %1, %2, %cst {dimension_numbers = #tpu.dot_dimension_numbers<[1], [0], [0], [1], [0, 0, 1, 1], [], []>} : vector<128x32xbf16>, vector<32x128xbf16>, vector<128x128xf32> -> vector<128x128xf32>
    %c0_3 = arith.constant 0 : index
    %c0_4 = arith.constant 0 : index
    %4 = vector.load %arg3[%c0_3, %c0_4] : memref<1x128xf32, #tpu.memory_space<vmem>>, vector<1x128xf32>
    %5 = vector.broadcast %4 : vector<1x128xf32> to vector<128x128xf32>
    %6 = arith.addf %3, %5 : vector<128x128xf32>
    %c0_5 = arith.constant 0 : index
    %c0_6 = arith.constant 0 : index
    %7 = vector.load %arg4[%c0_5, %c0_6] : memref<128x128xf32, #tpu.memory_space<vmem>>, vector<128x128xf32>
    tpu.vector_store %arg4[%c0_5, %c0_6], %6 {strides = array<i32>} : memref<128x128xf32, #tpu.memory_space<vmem>>, vector<128x128xf32>,
    %8 = vector.extract_strided_slice %6 {offsets = [0, 36], sizes = [128, 9], strides = [1, 1]} : vector<128x128xf32> to vector<128x9xf32>
    %cst_7 = arith.constant dense<0xFF800000> : vector<128xf32>
    %9 = vector.multi_reduction <maximumf>, %8, %cst_7 [1] : vector<128x9xf32> to vector<128xf32>
    %10 = vector.shape_cast %9 : vector<128xf32> to vector<128x1xf32>
    %11 = vector.broadcast %10 : vector<128x1xf32> to vector<128x9xf32>
    %12 = arith.subf %8, %11 : vector<128x9xf32>
    %13 = math.exp %12 : vector<128x9xf32>
    %cst_8 = arith.constant dense<0.000000e+00> : vector<128xf32>
    %14 = vector.multi_reduction <add>, %13, %cst_8 [1] : vector<128x9xf32> to vector<128xf32>
    %15 = vector.shape_cast %14 : vector<128xf32> to vector<128x1xf32>
    %16 = tpu.reciprocal %15 {approx = true} : vector<128x1xf32> -> vector<128x1xf32>
    %17 = vector.broadcast %16 : vector<128x1xf32> to vector<128x9xf32>
    %18 = arith.mulf %13, %17 : vector<128x9xf32>
    %c0_9 = arith.constant 0 : index
    %c36 = arith.constant 36 : index
    %19 = vector.load %arg4[%c0_9, %c36] : memref<128x128xf32, #tpu.memory_space<vmem>>, vector<128x9xf32>
    tpu.vector_store %arg4[%c0_9, %c36], %18 {strides = array<i32>} : memref<128x128xf32, #tpu.memory_space<vmem>>, vector<128x9xf32>,
    %20 = vector.extract_strided_slice %6 {offsets = [0, 45], sizes = [128, 9], strides = [1, 1]} : vector<128x128xf32> to vector<128x9xf32>
    %cst_10 = arith.constant dense<0xFF800000> : vector<128xf32>
    %21 = vector.multi_reduction <maximumf>, %20, %cst_10 [1] : vector<128x9xf32> to vector<128xf32>
    %22 = vector.shape_cast %21 : vector<128xf32> to vector<128x1xf32>
    %23 = vector.broadcast %22 : vector<128x1xf32> to vector<128x9xf32>
    %24 = arith.subf %20, %23 : vector<128x9xf32>
    %25 = math.exp %24 : vector<128x9xf32>
    %cst_11 = arith.constant dense<0.000000e+00> : vector<128xf32>
    %26 = vector.multi_reduction <add>, %25, %cst_11 [1] : vector<128x9xf32> to vector<128xf32>
    %27 = vector.shape_cast %26 : vector<128xf32> to vector<128x1xf32>
    %28 = tpu.reciprocal %27 {approx = true} : vector<128x1xf32> -> vector<128x1xf32>
    %29 = vector.broadcast %28 : vector<128x1xf32> to vector<128x9xf32>
    %30 = arith.mulf %25, %29 : vector<128x9xf32>
    %c0_12 = arith.constant 0 : index
    %c45 = arith.constant 45 : index
    %31 = vector.load %arg4[%c0_12, %c45] : memref<128x128xf32, #tpu.memory_space<vmem>>, vector<128x9xf32>
    tpu.vector_store %arg4[%c0_12, %c45], %30 {strides = array<i32>} : memref<128x128xf32, #tpu.memory_space<vmem>>, vector<128x9xf32>,
    return
  }
  func.func @transform_0(%arg0: i32) -> (i32, i32) {
    %c0_i32 = arith.constant 0 : i32
    %c0_i32_0 = arith.constant 0 : i32
    return %arg0, %c0_i32 : i32, i32
  }
  func.func @transform_1(%arg0: i32) -> (i32, i32) {
    %c0_i32 = arith.constant 0 : i32
    %c0_i32_0 = arith.constant 0 : i32
    %c0_i32_1 = arith.constant 0 : i32
    return %c0_i32, %c0_i32_0 : i32, i32
  }
  func.func @transform_2(%arg0: i32) -> (i32, i32) {
    %c0_i32 = arith.constant 0 : i32
    %c0_i32_0 = arith.constant 0 : i32
    %c0_i32_1 = arith.constant 0 : i32
    return %c0_i32, %c0_i32_0 : i32, i32
  }
  func.func @transform_3(%arg0: i32) -> (i32, i32) {
    %c0_i32 = arith.constant 0 : i32
    %c0_i32_0 = arith.constant 0 : i32
    return %arg0, %c0_i32 : i32, i32
  }
}

module attributes {stable_mosaic.version = 11 : i64} {
  func.func @kernel(%arg0: i32, %arg1: memref<128x32xf32, #tpu.memory_space<vmem>>, %arg2: memref<32x32xbf16, #tpu.memory_space<vmem>>, %arg3: memref<1x32xf32, #tpu.memory_space<vmem>>, %arg4: memref<128x32xf32, #tpu.memory_space<vmem>>, %arg5: memref<128x32xf32, #tpu.memory_space<vmem>>) attributes {dimension_semantics = [#tpu.dimension_semantics<parallel>], iteration_bounds = array<i64: 4>, scalar_prefetch = 0 : i64, scratch_operands = 0 : i64, tpu.core_type = #tpu.core_type<tc>, window_params = [{transform_indices = @transform_0, window_bounds = array<i64: 128, 32>}, {pipeline_mode = #tpu.pipeline_mode<synchronous>, transform_indices = @transform_1, window_bounds = array<i64: 32, 32>}, {pipeline_mode = #tpu.pipeline_mode<synchronous>, transform_indices = @transform_2, window_bounds = array<i64: 1, 32>}, {transform_indices = @transform_3, window_bounds = array<i64: 128, 32>}, {transform_indices = @transform_4, window_bounds = array<i64: 128, 32>}]} {
    %c0 = arith.constant 0 : index
    %c0_0 = arith.constant 0 : index
    %0 = vector.load %arg1[%c0, %c0_0] : memref<128x32xf32, #tpu.memory_space<vmem>>, vector<128x32xf32>
    %1 = arith.truncf %0 : vector<128x32xf32> to vector<128x32xbf16>
    %c0_1 = arith.constant 0 : index
    %c0_2 = arith.constant 0 : index
    %2 = vector.load %arg2[%c0_1, %c0_2] : memref<32x32xbf16, #tpu.memory_space<vmem>>, vector<32x32xbf16>
    %cst = arith.constant dense<0.000000e+00> : vector<128x32xf32>
    %3 = tpu.matmul %1, %2, %cst {dimension_numbers = #tpu.dot_dimension_numbers<[1], [0], [0], [1], [0, 0, 1, 1], [], []>} : vector<128x32xbf16>, vector<32x32xbf16>, vector<128x32xf32> -> vector<128x32xf32>
    %c0_3 = arith.constant 0 : index
    %c0_4 = arith.constant 0 : index
    %4 = vector.load %arg3[%c0_3, %c0_4] : memref<1x32xf32, #tpu.memory_space<vmem>>, vector<1x32xf32>
    %5 = vector.broadcast %4 : vector<1x32xf32> to vector<128x32xf32>
    %6 = arith.addf %3, %5 : vector<128x32xf32>
    %c0_5 = arith.constant 0 : index
    %c0_6 = arith.constant 0 : index
    %7 = vector.load %arg4[%c0_5, %c0_6] : memref<128x32xf32, #tpu.memory_space<vmem>>, vector<128x32xf32>
    %8 = arith.mulf %6, %7 : vector<128x32xf32>
    %c0_7 = arith.constant 0 : index
    %c0_8 = arith.constant 0 : index
    %9 = vector.load %arg5[%c0_7, %c0_8] : memref<128x32xf32, #tpu.memory_space<vmem>>, vector<128x32xf32>
    tpu.vector_store %arg5[%c0_7, %c0_8], %8 {strides = array<i32>} : memref<128x32xf32, #tpu.memory_space<vmem>>, vector<128x32xf32>,
    return
  }
  func.func @transform_0(%arg0: i32) -> (i32, i32) {
    %c0_i32 = arith.constant 0 : i32
    %c0_i32_0 = arith.constant 0 : i32
    return %arg0, %c0_i32 : i32, i32
  }
  func.func @transform_1(%arg0: i32) -> (i32, i32) {
    %c0_i32 = arith.constant 0 : i32
    %c0_i32_0 = arith.constant 0 : i32
    %c0_i32_1 = arith.constant 0 : i32
    return %c0_i32, %c0_i32_0 : i32, i32
  }
  func.func @transform_2(%arg0: i32) -> (i32, i32) {
    %c0_i32 = arith.constant 0 : i32
    %c0_i32_0 = arith.constant 0 : i32
    %c0_i32_1 = arith.constant 0 : i32
    return %c0_i32, %c0_i32_0 : i32, i32
  }
  func.func @transform_3(%arg0: i32) -> (i32, i32) {
    %c0_i32 = arith.constant 0 : i32
    %c0_i32_0 = arith.constant 0 : i32
    return %arg0, %c0_i32 : i32, i32
  }
  func.func @transform_4(%arg0: i32) -> (i32, i32) {
    %c0_i32 = arith.constant 0 : i32
    %c0_i32_0 = arith.constant 0 : i32
    return %arg0, %c0_i32 : i32, i32
  }
}

module attributes {stable_mosaic.version = 11 : i64} {
  func.func @kernel(%arg0: i32, %arg1: memref<128x32xf32, #tpu.memory_space<vmem>>, %arg2: memref<32x32xbf16, #tpu.memory_space<vmem>>, %arg3: memref<1x32xf32, #tpu.memory_space<vmem>>, %arg4: memref<128x32xf32, #tpu.memory_space<vmem>>, %arg5: memref<1x32xf32, #tpu.memory_space<vmem>>, %arg6: memref<1x32xf32, #tpu.memory_space<vmem>>, %arg7: memref<32x128xbf16, #tpu.memory_space<vmem>>, %arg8: memref<1x128xf32, #tpu.memory_space<vmem>>, %arg9: memref<128x32xf32, #tpu.memory_space<vmem>>, %arg10: memref<128x128xf32, #tpu.memory_space<vmem>>) attributes {dimension_semantics = [#tpu.dimension_semantics<parallel>], iteration_bounds = array<i64: 4>, scalar_prefetch = 0 : i64, scratch_operands = 0 : i64, tpu.core_type = #tpu.core_type<tc>, window_params = [{transform_indices = @transform_0, window_bounds = array<i64: 128, 32>}, {pipeline_mode = #tpu.pipeline_mode<synchronous>, transform_indices = @transform_1, window_bounds = array<i64: 32, 32>}, {pipeline_mode = #tpu.pipeline_mode<synchronous>, transform_indices = @transform_2, window_bounds = array<i64: 1, 32>}, {transform_indices = @transform_3, window_bounds = array<i64: 128, 32>}, {pipeline_mode = #tpu.pipeline_mode<synchronous>, transform_indices = @transform_4, window_bounds = array<i64: 1, 32>}, {pipeline_mode = #tpu.pipeline_mode<synchronous>, transform_indices = @transform_5, window_bounds = array<i64: 1, 32>}, {pipeline_mode = #tpu.pipeline_mode<synchronous>, transform_indices = @transform_6, window_bounds = array<i64: 32, 128>}, {pipeline_mode = #tpu.pipeline_mode<synchronous>, transform_indices = @transform_7, window_bounds = array<i64: 1, 128>}, {transform_indices = @transform_8, window_bounds = array<i64: 128, 32>}, {transform_indices = @transform_9, window_bounds = array<i64: 128, 128>}]} {
    %c0 = arith.constant 0 : index
    %c0_0 = arith.constant 0 : index
    %0 = vector.load %arg1[%c0, %c0_0] : memref<128x32xf32, #tpu.memory_space<vmem>>, vector<128x32xf32>
    %1 = arith.truncf %0 : vector<128x32xf32> to vector<128x32xbf16>
    %c0_1 = arith.constant 0 : index
    %c0_2 = arith.constant 0 : index
    %2 = vector.load %arg2[%c0_1, %c0_2] : memref<32x32xbf16, #tpu.memory_space<vmem>>, vector<32x32xbf16>
    %cst = arith.constant dense<0.000000e+00> : vector<128x32xf32>
    %3 = tpu.matmul %1, %2, %cst {dimension_numbers = #tpu.dot_dimension_numbers<[1], [0], [0], [1], [0, 0, 1, 1], [], []>} : vector<128x32xbf16>, vector<32x32xbf16>, vector<128x32xf32> -> vector<128x32xf32>
    %c0_3 = arith.constant 0 : index
    %c0_4 = arith.constant 0 : index
    %4 = vector.load %arg3[%c0_3, %c0_4] : memref<1x32xf32, #tpu.memory_space<vmem>>, vector<1x32xf32>
    %5 = vector.broadcast %4 : vector<1x32xf32> to vector<128x32xf32>
    %6 = arith.addf %3, %5 : vector<128x32xf32>
    %c0_5 = arith.constant 0 : index
    %c0_6 = arith.constant 0 : index
    %7 = vector.load %arg4[%c0_5, %c0_6] : memref<128x32xf32, #tpu.memory_space<vmem>>, vector<128x32xf32>
    %c0_7 = arith.constant 0 : index
    %c0_8 = arith.constant 0 : index
    %8 = vector.load %arg6[%c0_7, %c0_8] : memref<1x32xf32, #tpu.memory_space<vmem>>, vector<1x32xf32>
    %9 = vector.broadcast %8 : vector<1x32xf32> to vector<128x32xf32>
    %10 = arith.mulf %7, %9 : vector<128x32xf32>
    %c0_9 = arith.constant 0 : index
    %c0_10 = arith.constant 0 : index
    %11 = vector.load %arg5[%c0_9, %c0_10] : memref<1x32xf32, #tpu.memory_space<vmem>>, vector<1x32xf32>
    %12 = vector.broadcast %11 : vector<1x32xf32> to vector<128x32xf32>
    %13 = arith.mulf %12, %6 : vector<128x32xf32>
    %14 = arith.addf %10, %13 : vector<128x32xf32>
    %c0_11 = arith.constant 0 : index
    %c0_12 = arith.constant 0 : index
    %15 = vector.load %arg9[%c0_11, %c0_12] : memref<128x32xf32, #tpu.memory_space<vmem>>, vector<128x32xf32>
    tpu.vector_store %arg9[%c0_11, %c0_12], %14 {strides = array<i32>} : memref<128x32xf32, #tpu.memory_space<vmem>>, vector<128x32xf32>,
    %16 = arith.truncf %14 : vector<128x32xf32> to vector<128x32xbf16>
    %c0_13 = arith.constant 0 : index
    %c0_14 = arith.constant 0 : index
    %17 = vector.load %arg7[%c0_13, %c0_14] : memref<32x128xbf16, #tpu.memory_space<vmem>>, vector<32x128xbf16>
    %cst_15 = arith.constant dense<0.000000e+00> : vector<128x128xf32>
    %18 = tpu.matmul %16, %17, %cst_15 {dimension_numbers = #tpu.dot_dimension_numbers<[1], [0], [0], [1], [0, 0, 1, 1], [], []>} : vector<128x32xbf16>, vector<32x128xbf16>, vector<128x128xf32> -> vector<128x128xf32>
    %c0_16 = arith.constant 0 : index
    %c0_17 = arith.constant 0 : index
    %19 = vector.load %arg8[%c0_16, %c0_17] : memref<1x128xf32, #tpu.memory_space<vmem>>, vector<1x128xf32>
    %20 = vector.broadcast %19 : vector<1x128xf32> to vector<128x128xf32>
    %21 = arith.addf %18, %20 : vector<128x128xf32>
    %c0_18 = arith.constant 0 : index
    %c0_19 = arith.constant 0 : index
    %22 = vector.load %arg10[%c0_18, %c0_19] : memref<128x128xf32, #tpu.memory_space<vmem>>, vector<128x128xf32>
    tpu.vector_store %arg10[%c0_18, %c0_19], %21 {strides = array<i32>} : memref<128x128xf32, #tpu.memory_space<vmem>>, vector<128x128xf32>,
    return
  }
  func.func @transform_0(%arg0: i32) -> (i32, i32) {
    %c0_i32 = arith.constant 0 : i32
    %c0_i32_0 = arith.constant 0 : i32
    return %arg0, %c0_i32 : i32, i32
  }
  func.func @transform_1(%arg0: i32) -> (i32, i32) {
    %c0_i32 = arith.constant 0 : i32
    %c0_i32_0 = arith.constant 0 : i32
    %c0_i32_1 = arith.constant 0 : i32
    return %c0_i32, %c0_i32_0 : i32, i32
  }
  func.func @transform_2(%arg0: i32) -> (i32, i32) {
    %c0_i32 = arith.constant 0 : i32
    %c0_i32_0 = arith.constant 0 : i32
    %c0_i32_1 = arith.constant 0 : i32
    return %c0_i32, %c0_i32_0 : i32, i32
  }
  func.func @transform_3(%arg0: i32) -> (i32, i32) {
    %c0_i32 = arith.constant 0 : i32
    %c0_i32_0 = arith.constant 0 : i32
    return %arg0, %c0_i32 : i32, i32
  }
  func.func @transform_4(%arg0: i32) -> (i32, i32) {
    %c0_i32 = arith.constant 0 : i32
    %c0_i32_0 = arith.constant 0 : i32
    %c0_i32_1 = arith.constant 0 : i32
    return %c0_i32, %c0_i32_0 : i32, i32
  }
  func.func @transform_5(%arg0: i32) -> (i32, i32) {
    %c0_i32 = arith.constant 0 : i32
    %c0_i32_0 = arith.constant 0 : i32
    %c0_i32_1 = arith.constant 0 : i32
    return %c0_i32, %c0_i32_0 : i32, i32
  }
  func.func @transform_6(%arg0: i32) -> (i32, i32) {
    %c0_i32 = arith.constant 0 : i32
    %c0_i32_0 = arith.constant 0 : i32
    %c0_i32_1 = arith.constant 0 : i32
    return %c0_i32, %c0_i32_0 : i32, i32
  }
  func.func @transform_7(%arg0: i32) -> (i32, i32) {
    %c0_i32 = arith.constant 0 : i32
    %c0_i32_0 = arith.constant 0 : i32
    %c0_i32_1 = arith.constant 0 : i32
    return %c0_i32, %c0_i32_0 : i32, i32
  }
  func.func @transform_8(%arg0: i32) -> (i32, i32) {
    %c0_i32 = arith.constant 0 : i32
    %c0_i32_0 = arith.constant 0 : i32
    return %arg0, %c0_i32 : i32, i32
  }
  func.func @transform_9(%arg0: i32) -> (i32, i32) {
    %c0_i32 = arith.constant 0 : i32
    %c0_i32_0 = arith.constant 0 : i32
    return %arg0, %c0_i32 : i32, i32
  }
}

module attributes {stable_mosaic.version = 11 : i64} {
  func.func @kernel(%arg0: i32, %arg1: memref<1x16x16x128xf32, #tpu.memory_space<vmem>>, %arg2: memref<3x3x128xf32, #tpu.memory_space<vmem>>, %arg3: memref<1x128xf32, #tpu.memory_space<vmem>>, %arg4: memref<1x16x16x128xf32, #tpu.memory_space<vmem>>, %arg5: memref<18x18x128xf32, #tpu.memory_space<vmem>>) attributes {dimension_semantics = [#tpu.dimension_semantics<parallel>], iteration_bounds = array<i64: 2>, scalar_prefetch = 0 : i64, scratch_operands = 1 : i64, tpu.core_type = #tpu.core_type<tc>, window_params = [{transform_indices = @transform_0, window_bounds = array<i64: 1, 16, 16, 128>}, {pipeline_mode = #tpu.pipeline_mode<synchronous>, transform_indices = @transform_1, window_bounds = array<i64: 3, 3, 128>}, {pipeline_mode = #tpu.pipeline_mode<synchronous>, transform_indices = @transform_2, window_bounds = array<i64: 1, 128>}, {transform_indices = @transform_3, window_bounds = array<i64: 1, 16, 16, 128>}]} {
    %cst = arith.constant 0.000000e+00 : f32
    %0 = vector.broadcast %cst : f32 to vector<18x128xf32>
    %c0 = arith.constant 0 : index
    %c0_0 = arith.constant 0 : index
    %c0_1 = arith.constant 0 : index
    %1 = vector.load %arg5[%c0, %c0_0, %c0_1] : memref<18x18x128xf32, #tpu.memory_space<vmem>>, vector<1x18x128xf32>
    %2 = vector.shape_cast %1 : vector<1x18x128xf32> to vector<18x128xf32>
    %3 = vector.shape_cast %0 : vector<18x128xf32> to vector<1x18x128xf32>
    tpu.vector_store %arg5[%c0, %c0_0, %c0_1], %3 {strides = array<i32>} : memref<18x18x128xf32, #tpu.memory_space<vmem>>, vector<1x18x128xf32>,
    %c17 = arith.constant 17 : index
    %c0_2 = arith.constant 0 : index
    %c0_3 = arith.constant 0 : index
    %4 = vector.load %arg5[%c17, %c0_2, %c0_3] : memref<18x18x128xf32, #tpu.memory_space<vmem>>, vector<1x18x128xf32>
    %5 = vector.shape_cast %4 : vector<1x18x128xf32> to vector<18x128xf32>
    %6 = vector.shape_cast %0 : vector<18x128xf32> to vector<1x18x128xf32>
    tpu.vector_store %arg5[%c17, %c0_2, %c0_3], %6 {strides = array<i32>} : memref<18x18x128xf32, #tpu.memory_space<vmem>>, vector<1x18x128xf32>,
    %cst_4 = arith.constant 0.000000e+00 : f32
    %7 = vector.broadcast %cst_4 : f32 to vector<16x1x128xf32>
    %c1 = arith.constant 1 : index
    %c0_5 = arith.constant 0 : index
    %c0_6 = arith.constant 0 : index
    %8 = vector.load %arg5[%c1, %c0_5, %c0_6] : memref<18x18x128xf32, #tpu.memory_space<vmem>>, vector<16x1x128xf32>
    tpu.vector_store %arg5[%c1, %c0_5, %c0_6], %7 {strides = array<i32>} : memref<18x18x128xf32, #tpu.memory_space<vmem>>, vector<16x1x128xf32>,
    %c1_7 = arith.constant 1 : index
    %c17_8 = arith.constant 17 : index
    %c0_9 = arith.constant 0 : index
    %9 = vector.load %arg5[%c1_7, %c17_8, %c0_9] : memref<18x18x128xf32, #tpu.memory_space<vmem>>, vector<16x1x128xf32>
    tpu.vector_store %arg5[%c1_7, %c17_8, %c0_9], %7 {strides = array<i32>} : memref<18x18x128xf32, #tpu.memory_space<vmem>>, vector<16x1x128xf32>,
    %c0_10 = arith.constant 0 : index
    %c0_11 = arith.constant 0 : index
    %c0_12 = arith.constant 0 : index
    %c0_13 = arith.constant 0 : index
    %10 = vector.load %arg1[%c0_10, %c0_11, %c0_12, %c0_13] : memref<1x16x16x128xf32, #tpu.memory_space<vmem>>, vector<1x16x16x128xf32>
    %11 = vector.shape_cast %10 : vector<1x16x16x128xf32> to vector<16x16x128xf32>
    %c1_14 = arith.constant 1 : index
    %c1_15 = arith.constant 1 : index
    %c0_16 = arith.constant 0 : index
    %12 = vector.load %arg5[%c1_14, %c1_15, %c0_16] : memref<18x18x128xf32, #tpu.memory_space<vmem>>, vector<16x16x128xf32>
    tpu.vector_store %arg5[%c1_14, %c1_15, %c0_16], %11 {strides = array<i32>} : memref<18x18x128xf32, #tpu.memory_space<vmem>>, vector<16x16x128xf32>,
    %c0_17 = arith.constant 0 : index
    %c0_18 = arith.constant 0 : index
    %c0_19 = arith.constant 0 : index
    %13 = vector.load %arg2[%c0_17, %c0_18, %c0_19] : memref<3x3x128xf32, #tpu.memory_space<vmem>>, vector<3x3x128xf32>
    %c0_20 = arith.constant 0 : index
    %c0_21 = arith.constant 0 : index
    %14 = vector.load %arg3[%c0_20, %c0_21] : memref<1x128xf32, #tpu.memory_space<vmem>>, vector<1x128xf32>
    %cst_22 = arith.constant 0.000000e+00 : f32
    %15 = vector.broadcast %cst_22 : f32 to vector<8x16x128xf32>
    %c0_23 = arith.constant 0 : index
    %c0_24 = arith.constant 0 : index
    %c0_25 = arith.constant 0 : index
    %16 = vector.load %arg5[%c0_23, %c0_24, %c0_25] : memref<18x18x128xf32, #tpu.memory_space<vmem>>, vector<8x18x128xf32>
    %17 = vector.extract_strided_slice %16 {offsets = [0, 0, 0], sizes = [8, 16, 128], strides = [1, 1, 1]} : vector<8x18x128xf32> to vector<8x16x128xf32>
    %18 = vector.extract_strided_slice %13 {offsets = [0, 0, 0], sizes = [1, 1, 128], strides = [1, 1, 1]} : vector<3x3x128xf32> to vector<1x1x128xf32>
    %19 = vector.shape_cast %18 : vector<1x1x128xf32> to vector<128xf32>
    %20 = vector.shape_cast %19 : vector<128xf32> to vector<1x1x128xf32>
    %21 = vector.broadcast %20 : vector<1x1x128xf32> to vector<8x16x128xf32>
    %22 = arith.mulf %17, %21 : vector<8x16x128xf32>
    %23 = arith.addf %15, %22 : vector<8x16x128xf32>
    %24 = vector.extract_strided_slice %16 {offsets = [0, 1, 0], sizes = [8, 16, 128], strides = [1, 1, 1]} : vector<8x18x128xf32> to vector<8x16x128xf32>
    %25 = vector.extract_strided_slice %13 {offsets = [0, 1, 0], sizes = [1, 1, 128], strides = [1, 1, 1]} : vector<3x3x128xf32> to vector<1x1x128xf32>
    %26 = vector.shape_cast %25 : vector<1x1x128xf32> to vector<128xf32>
    %27 = vector.shape_cast %26 : vector<128xf32> to vector<1x1x128xf32>
    %28 = vector.broadcast %27 : vector<1x1x128xf32> to vector<8x16x128xf32>
    %29 = arith.mulf %24, %28 : vector<8x16x128xf32>
    %30 = arith.addf %23, %29 : vector<8x16x128xf32>
    %31 = vector.extract_strided_slice %16 {offsets = [0, 2, 0], sizes = [8, 16, 128], strides = [1, 1, 1]} : vector<8x18x128xf32> to vector<8x16x128xf32>
    %32 = vector.extract_strided_slice %13 {offsets = [0, 2, 0], sizes = [1, 1, 128], strides = [1, 1, 1]} : vector<3x3x128xf32> to vector<1x1x128xf32>
    %33 = vector.shape_cast %32 : vector<1x1x128xf32> to vector<128xf32>
    %34 = vector.shape_cast %33 : vector<128xf32> to vector<1x1x128xf32>
    %35 = vector.broadcast %34 : vector<1x1x128xf32> to vector<8x16x128xf32>
    %36 = arith.mulf %31, %35 : vector<8x16x128xf32>
    %37 = arith.addf %30, %36 : vector<8x16x128xf32>
    %c1_26 = arith.constant 1 : index
    %c0_27 = arith.constant 0 : index
    %c0_28 = arith.constant 0 : index
    %38 = vector.load %arg5[%c1_26, %c0_27, %c0_28] : memref<18x18x128xf32, #tpu.memory_space<vmem>>, vector<8x18x128xf32>
    %39 = vector.extract_strided_slice %38 {offsets = [0, 0, 0], sizes = [8, 16, 128], strides = [1, 1, 1]} : vector<8x18x128xf32> to vector<8x16x128xf32>
    %40 = vector.extract_strided_slice %13 {offsets = [1, 0, 0], sizes = [1, 1, 128], strides = [1, 1, 1]} : vector<3x3x128xf32> to vector<1x1x128xf32>
    %41 = vector.shape_cast %40 : vector<1x1x128xf32> to vector<128xf32>
    %42 = vector.shape_cast %41 : vector<128xf32> to vector<1x1x128xf32>
    %43 = vector.broadcast %42 : vector<1x1x128xf32> to vector<8x16x128xf32>
    %44 = arith.mulf %39, %43 : vector<8x16x128xf32>
    %45 = arith.addf %37, %44 : vector<8x16x128xf32>
    %46 = vector.extract_strided_slice %38 {offsets = [0, 1, 0], sizes = [8, 16, 128], strides = [1, 1, 1]} : vector<8x18x128xf32> to vector<8x16x128xf32>
    %47 = vector.extract_strided_slice %13 {offsets = [1, 1, 0], sizes = [1, 1, 128], strides = [1, 1, 1]} : vector<3x3x128xf32> to vector<1x1x128xf32>
    %48 = vector.shape_cast %47 : vector<1x1x128xf32> to vector<128xf32>
    %49 = vector.shape_cast %48 : vector<128xf32> to vector<1x1x128xf32>
    %50 = vector.broadcast %49 : vector<1x1x128xf32> to vector<8x16x128xf32>
    %51 = arith.mulf %46, %50 : vector<8x16x128xf32>
    %52 = arith.addf %45, %51 : vector<8x16x128xf32>
    %53 = vector.extract_strided_slice %38 {offsets = [0, 2, 0], sizes = [8, 16, 128], strides = [1, 1, 1]} : vector<8x18x128xf32> to vector<8x16x128xf32>
    %54 = vector.extract_strided_slice %13 {offsets = [1, 2, 0], sizes = [1, 1, 128], strides = [1, 1, 1]} : vector<3x3x128xf32> to vector<1x1x128xf32>
    %55 = vector.shape_cast %54 : vector<1x1x128xf32> to vector<128xf32>
    %56 = vector.shape_cast %55 : vector<128xf32> to vector<1x1x128xf32>
    %57 = vector.broadcast %56 : vector<1x1x128xf32> to vector<8x16x128xf32>
    %58 = arith.mulf %53, %57 : vector<8x16x128xf32>
    %59 = arith.addf %52, %58 : vector<8x16x128xf32>
    %c2 = arith.constant 2 : index
    %c0_29 = arith.constant 0 : index
    %c0_30 = arith.constant 0 : index
    %60 = vector.load %arg5[%c2, %c0_29, %c0_30] : memref<18x18x128xf32, #tpu.memory_space<vmem>>, vector<8x18x128xf32>
    %61 = vector.extract_strided_slice %60 {offsets = [0, 0, 0], sizes = [8, 16, 128], strides = [1, 1, 1]} : vector<8x18x128xf32> to vector<8x16x128xf32>
    %62 = vector.extract_strided_slice %13 {offsets = [2, 0, 0], sizes = [1, 1, 128], strides = [1, 1, 1]} : vector<3x3x128xf32> to vector<1x1x128xf32>
    %63 = vector.shape_cast %62 : vector<1x1x128xf32> to vector<128xf32>
    %64 = vector.shape_cast %63 : vector<128xf32> to vector<1x1x128xf32>
    %65 = vector.broadcast %64 : vector<1x1x128xf32> to vector<8x16x128xf32>
    %66 = arith.mulf %61, %65 : vector<8x16x128xf32>
    %67 = arith.addf %59, %66 : vector<8x16x128xf32>
    %68 = vector.extract_strided_slice %60 {offsets = [0, 1, 0], sizes = [8, 16, 128], strides = [1, 1, 1]} : vector<8x18x128xf32> to vector<8x16x128xf32>
    %69 = vector.extract_strided_slice %13 {offsets = [2, 1, 0], sizes = [1, 1, 128], strides = [1, 1, 1]} : vector<3x3x128xf32> to vector<1x1x128xf32>
    %70 = vector.shape_cast %69 : vector<1x1x128xf32> to vector<128xf32>
    %71 = vector.shape_cast %70 : vector<128xf32> to vector<1x1x128xf32>
    %72 = vector.broadcast %71 : vector<1x1x128xf32> to vector<8x16x128xf32>
    %73 = arith.mulf %68, %72 : vector<8x16x128xf32>
    %74 = arith.addf %67, %73 : vector<8x16x128xf32>
    %75 = vector.extract_strided_slice %60 {offsets = [0, 2, 0], sizes = [8, 16, 128], strides = [1, 1, 1]} : vector<8x18x128xf32> to vector<8x16x128xf32>
    %76 = vector.extract_strided_slice %13 {offsets = [2, 2, 0], sizes = [1, 1, 128], strides = [1, 1, 1]} : vector<3x3x128xf32> to vector<1x1x128xf32>
    %77 = vector.shape_cast %76 : vector<1x1x128xf32> to vector<128xf32>
    %78 = vector.shape_cast %77 : vector<128xf32> to vector<1x1x128xf32>
    %79 = vector.broadcast %78 : vector<1x1x128xf32> to vector<8x16x128xf32>
    %80 = arith.mulf %75, %79 : vector<8x16x128xf32>
    %81 = arith.addf %74, %80 : vector<8x16x128xf32>
    %82 = vector.shape_cast %14 : vector<1x128xf32> to vector<1x1x128xf32>
    %83 = vector.broadcast %82 : vector<1x1x128xf32> to vector<8x16x128xf32>
    %84 = arith.addf %81, %83 : vector<8x16x128xf32>
    %cst_31 = arith.constant 5.000000e-01 : f32
    %85 = vector.broadcast %cst_31 : f32 to vector<8x16x128xf32>
    %86 = arith.mulf %85, %84 : vector<8x16x128xf32>
    %cst_32 = arith.constant 4.471500e-02 : f32
    %87 = vector.broadcast %cst_32 : f32 to vector<8x16x128xf32>
    %88 = arith.mulf %87, %84 : vector<8x16x128xf32>
    %89 = arith.mulf %88, %84 : vector<8x16x128xf32>
    %90 = arith.mulf %89, %84 : vector<8x16x128xf32>
    %91 = arith.addf %84, %90 : vector<8x16x128xf32>
    %cst_33 = arith.constant 0.797884583 : f32
    %92 = vector.broadcast %cst_33 : f32 to vector<8x16x128xf32>
    %93 = arith.mulf %92, %91 : vector<8x16x128xf32>
    %94 = math.tanh %93 : vector<8x16x128xf32>
    %cst_34 = arith.constant 1.000000e+00 : f32
    %95 = vector.broadcast %cst_34 : f32 to vector<8x16x128xf32>
    %96 = arith.addf %95, %94 : vector<8x16x128xf32>
    %97 = arith.mulf %86, %96 : vector<8x16x128xf32>
    %c0_35 = arith.constant 0 : index
    %c0_36 = arith.constant 0 : index
    %c0_37 = arith.constant 0 : index
    %c0_38 = arith.constant 0 : index
    %98 = vector.load %arg4[%c0_35, %c0_36, %c0_37, %c0_38] : memref<1x16x16x128xf32, #tpu.memory_space<vmem>>, vector<1x8x16x128xf32>
    %99 = vector.shape_cast %98 : vector<1x8x16x128xf32> to vector<8x16x128xf32>
    %100 = vector.shape_cast %97 : vector<8x16x128xf32> to vector<1x8x16x128xf32>
    tpu.vector_store %arg4[%c0_35, %c0_36, %c0_37, %c0_38], %100 {strides = array<i32>} : memref<1x16x16x128xf32, #tpu.memory_space<vmem>>, vector<1x8x16x128xf32>,
    %cst_39 = arith.constant 0.000000e+00 : f32
    %101 = vector.broadcast %cst_39 : f32 to vector<8x16x128xf32>
    %c8 = arith.constant 8 : index
    %c0_40 = arith.constant 0 : index
    %c0_41 = arith.constant 0 : index
    %102 = vector.load %arg5[%c8, %c0_40, %c0_41] : memref<18x18x128xf32, #tpu.memory_space<vmem>>, vector<8x18x128xf32>
    %103 = vector.extract_strided_slice %102 {offsets = [0, 0, 0], sizes = [8, 16, 128], strides = [1, 1, 1]} : vector<8x18x128xf32> to vector<8x16x128xf32>
    %104 = vector.extract_strided_slice %13 {offsets = [0, 0, 0], sizes = [1, 1, 128], strides = [1, 1, 1]} : vector<3x3x128xf32> to vector<1x1x128xf32>
    %105 = vector.shape_cast %104 : vector<1x1x128xf32> to vector<128xf32>
    %106 = vector.shape_cast %105 : vector<128xf32> to vector<1x1x128xf32>
    %107 = vector.broadcast %106 : vector<1x1x128xf32> to vector<8x16x128xf32>
    %108 = arith.mulf %103, %107 : vector<8x16x128xf32>
    %109 = arith.addf %101, %108 : vector<8x16x128xf32>
    %110 = vector.extract_strided_slice %102 {offsets = [0, 1, 0], sizes = [8, 16, 128], strides = [1, 1, 1]} : vector<8x18x128xf32> to vector<8x16x128xf32>
    %111 = vector.extract_strided_slice %13 {offsets = [0, 1, 0], sizes = [1, 1, 128], strides = [1, 1, 1]} : vector<3x3x128xf32> to vector<1x1x128xf32>
    %112 = vector.shape_cast %111 : vector<1x1x128xf32> to vector<128xf32>
    %113 = vector.shape_cast %112 : vector<128xf32> to vector<1x1x128xf32>
    %114 = vector.broadcast %113 : vector<1x1x128xf32> to vector<8x16x128xf32>
    %115 = arith.mulf %110, %114 : vector<8x16x128xf32>
    %116 = arith.addf %109, %115 : vector<8x16x128xf32>
    %117 = vector.extract_strided_slice %102 {offsets = [0, 2, 0], sizes = [8, 16, 128], strides = [1, 1, 1]} : vector<8x18x128xf32> to vector<8x16x128xf32>
    %118 = vector.extract_strided_slice %13 {offsets = [0, 2, 0], sizes = [1, 1, 128], strides = [1, 1, 1]} : vector<3x3x128xf32> to vector<1x1x128xf32>
    %119 = vector.shape_cast %118 : vector<1x1x128xf32> to vector<128xf32>
    %120 = vector.shape_cast %119 : vector<128xf32> to vector<1x1x128xf32>
    %121 = vector.broadcast %120 : vector<1x1x128xf32> to vector<8x16x128xf32>
    %122 = arith.mulf %117, %121 : vector<8x16x128xf32>
    %123 = arith.addf %116, %122 : vector<8x16x128xf32>
    %c9 = arith.constant 9 : index
    %c0_42 = arith.constant 0 : index
    %c0_43 = arith.constant 0 : index
    %124 = vector.load %arg5[%c9, %c0_42, %c0_43] : memref<18x18x128xf32, #tpu.memory_space<vmem>>, vector<8x18x128xf32>
    %125 = vector.extract_strided_slice %124 {offsets = [0, 0, 0], sizes = [8, 16, 128], strides = [1, 1, 1]} : vector<8x18x128xf32> to vector<8x16x128xf32>
    %126 = vector.extract_strided_slice %13 {offsets = [1, 0, 0], sizes = [1, 1, 128], strides = [1, 1, 1]} : vector<3x3x128xf32> to vector<1x1x128xf32>
    %127 = vector.shape_cast %126 : vector<1x1x128xf32> to vector<128xf32>
    %128 = vector.shape_cast %127 : vector<128xf32> to vector<1x1x128xf32>
    %129 = vector.broadcast %128 : vector<1x1x128xf32> to vector<8x16x128xf32>
    %130 = arith.mulf %125, %129 : vector<8x16x128xf32>
    %131 = arith.addf %123, %130 : vector<8x16x128xf32>
    %132 = vector.extract_strided_slice %124 {offsets = [0, 1, 0], sizes = [8, 16, 128], strides = [1, 1, 1]} : vector<8x18x128xf32> to vector<8x16x128xf32>
    %133 = vector.extract_strided_slice %13 {offsets = [1, 1, 0], sizes = [1, 1, 128], strides = [1, 1, 1]} : vector<3x3x128xf32> to vector<1x1x128xf32>
    %134 = vector.shape_cast %133 : vector<1x1x128xf32> to vector<128xf32>
    %135 = vector.shape_cast %134 : vector<128xf32> to vector<1x1x128xf32>
    %136 = vector.broadcast %135 : vector<1x1x128xf32> to vector<8x16x128xf32>
    %137 = arith.mulf %132, %136 : vector<8x16x128xf32>
    %138 = arith.addf %131, %137 : vector<8x16x128xf32>
    %139 = vector.extract_strided_slice %124 {offsets = [0, 2, 0], sizes = [8, 16, 128], strides = [1, 1, 1]} : vector<8x18x128xf32> to vector<8x16x128xf32>
    %140 = vector.extract_strided_slice %13 {offsets = [1, 2, 0], sizes = [1, 1, 128], strides = [1, 1, 1]} : vector<3x3x128xf32> to vector<1x1x128xf32>
    %141 = vector.shape_cast %140 : vector<1x1x128xf32> to vector<128xf32>
    %142 = vector.shape_cast %141 : vector<128xf32> to vector<1x1x128xf32>
    %143 = vector.broadcast %142 : vector<1x1x128xf32> to vector<8x16x128xf32>
    %144 = arith.mulf %139, %143 : vector<8x16x128xf32>
    %145 = arith.addf %138, %144 : vector<8x16x128xf32>
    %c10 = arith.constant 10 : index
    %c0_44 = arith.constant 0 : index
    %c0_45 = arith.constant 0 : index
    %146 = vector.load %arg5[%c10, %c0_44, %c0_45] : memref<18x18x128xf32, #tpu.memory_space<vmem>>, vector<8x18x128xf32>
    %147 = vector.extract_strided_slice %146 {offsets = [0, 0, 0], sizes = [8, 16, 128], strides = [1, 1, 1]} : vector<8x18x128xf32> to vector<8x16x128xf32>
    %148 = vector.extract_strided_slice %13 {offsets = [2, 0, 0], sizes = [1, 1, 128], strides = [1, 1, 1]} : vector<3x3x128xf32> to vector<1x1x128xf32>
    %149 = vector.shape_cast %148 : vector<1x1x128xf32> to vector<128xf32>
    %150 = vector.shape_cast %149 : vector<128xf32> to vector<1x1x128xf32>
    %151 = vector.broadcast %150 : vector<1x1x128xf32> to vector<8x16x128xf32>
    %152 = arith.mulf %147, %151 : vector<8x16x128xf32>
    %153 = arith.addf %145, %152 : vector<8x16x128xf32>
    %154 = vector.extract_strided_slice %146 {offsets = [0, 1, 0], sizes = [8, 16, 128], strides = [1, 1, 1]} : vector<8x18x128xf32> to vector<8x16x128xf32>
    %155 = vector.extract_strided_slice %13 {offsets = [2, 1, 0], sizes = [1, 1, 128], strides = [1, 1, 1]} : vector<3x3x128xf32> to vector<1x1x128xf32>
    %156 = vector.shape_cast %155 : vector<1x1x128xf32> to vector<128xf32>
    %157 = vector.shape_cast %156 : vector<128xf32> to vector<1x1x128xf32>
    %158 = vector.broadcast %157 : vector<1x1x128xf32> to vector<8x16x128xf32>
    %159 = arith.mulf %154, %158 : vector<8x16x128xf32>
    %160 = arith.addf %153, %159 : vector<8x16x128xf32>
    %161 = vector.extract_strided_slice %146 {offsets = [0, 2, 0], sizes = [8, 16, 128], strides = [1, 1, 1]} : vector<8x18x128xf32> to vector<8x16x128xf32>
    %162 = vector.extract_strided_slice %13 {offsets = [2, 2, 0], sizes = [1, 1, 128], strides = [1, 1, 1]} : vector<3x3x128xf32> to vector<1x1x128xf32>
    %163 = vector.shape_cast %162 : vector<1x1x128xf32> to vector<128xf32>
    %164 = vector.shape_cast %163 : vector<128xf32> to vector<1x1x128xf32>
    %165 = vector.broadcast %164 : vector<1x1x128xf32> to vector<8x16x128xf32>
    %166 = arith.mulf %161, %165 : vector<8x16x128xf32>
    %167 = arith.addf %160, %166 : vector<8x16x128xf32>
    %168 = vector.shape_cast %14 : vector<1x128xf32> to vector<1x1x128xf32>
    %169 = vector.broadcast %168 : vector<1x1x128xf32> to vector<8x16x128xf32>
    %170 = arith.addf %167, %169 : vector<8x16x128xf32>
    %cst_46 = arith.constant 5.000000e-01 : f32
    %171 = vector.broadcast %cst_46 : f32 to vector<8x16x128xf32>
    %172 = arith.mulf %171, %170 : vector<8x16x128xf32>
    %cst_47 = arith.constant 4.471500e-02 : f32
    %173 = vector.broadcast %cst_47 : f32 to vector<8x16x128xf32>
    %174 = arith.mulf %173, %170 : vector<8x16x128xf32>
    %175 = arith.mulf %174, %170 : vector<8x16x128xf32>
    %176 = arith.mulf %175, %170 : vector<8x16x128xf32>
    %177 = arith.addf %170, %176 : vector<8x16x128xf32>
    %cst_48 = arith.constant 0.797884583 : f32
    %178 = vector.broadcast %cst_48 : f32 to vector<8x16x128xf32>
    %179 = arith.mulf %178, %177 : vector<8x16x128xf32>
    %180 = math.tanh %179 : vector<8x16x128xf32>
    %cst_49 = arith.constant 1.000000e+00 : f32
    %181 = vector.broadcast %cst_49 : f32 to vector<8x16x128xf32>
    %182 = arith.addf %181, %180 : vector<8x16x128xf32>
    %183 = arith.mulf %172, %182 : vector<8x16x128xf32>
    %c0_50 = arith.constant 0 : index
    %c8_51 = arith.constant 8 : index
    %c0_52 = arith.constant 0 : index
    %c0_53 = arith.constant 0 : index
    %184 = vector.load %arg4[%c0_50, %c8_51, %c0_52, %c0_53] : memref<1x16x16x128xf32, #tpu.memory_space<vmem>>, vector<1x8x16x128xf32>
    %185 = vector.shape_cast %184 : vector<1x8x16x128xf32> to vector<8x16x128xf32>
    %186 = vector.shape_cast %183 : vector<8x16x128xf32> to vector<1x8x16x128xf32>
    tpu.vector_store %arg4[%c0_50, %c8_51, %c0_52, %c0_53], %186 {strides = array<i32>} : memref<1x16x16x128xf32, #tpu.memory_space<vmem>>, vector<1x8x16x128xf32>,
    return
  }
  func.func @transform_0(%arg0: i32) -> (i32, i32, i32, i32) {
    %c0_i32 = arith.constant 0 : i32
    %c0_i32_0 = arith.constant 0 : i32
    %c0_i32_1 = arith.constant 0 : i32
    %c0_i32_2 = arith.constant 0 : i32
    return %arg0, %c0_i32, %c0_i32_0, %c0_i32_1 : i32, i32, i32, i32
  }
  func.func @transform_1(%arg0: i32) -> (i32, i32, i32) {
    %c0_i32 = arith.constant 0 : i32
    %c0_i32_0 = arith.constant 0 : i32
    %c0_i32_1 = arith.constant 0 : i32
    %c0_i32_2 = arith.constant 0 : i32
    return %c0_i32, %c0_i32_0, %c0_i32_1 : i32, i32, i32
  }
  func.func @transform_2(%arg0: i32) -> (i32, i32) {
    %c0_i32 = arith.constant 0 : i32
    %c0_i32_0 = arith.constant 0 : i32
    %c0_i32_1 = arith.constant 0 : i32
    return %c0_i32, %c0_i32_0 : i32, i32
  }
  func.func @transform_3(%arg0: i32) -> (i32, i32, i32, i32) {
    %c0_i32 = arith.constant 0 : i32
    %c0_i32_0 = arith.constant 0 : i32
    %c0_i32_1 = arith.constant 0 : i32
    %c0_i32_2 = arith.constant 0 : i32
    return %arg0, %c0_i32, %c0_i32_0, %c0_i32_1 : i32, i32, i32, i32
  }
}

module attributes {stable_mosaic.version = 11 : i64} {
  func.func @kernel(%arg0: i32, %arg1: memref<128x128xf32, #tpu.memory_space<vmem>>, %arg2: memref<128x32xbf16, #tpu.memory_space<vmem>>, %arg3: memref<1x32xf32, #tpu.memory_space<vmem>>, %arg4: memref<128x32xf32, #tpu.memory_space<vmem>>, %arg5: memref<1x32xf32, #tpu.memory_space<vmem>>, %arg6: memref<128x32xf32, #tpu.memory_space<vmem>>) attributes {dimension_semantics = [#tpu.dimension_semantics<parallel>], iteration_bounds = array<i64: 4>, scalar_prefetch = 0 : i64, scratch_operands = 0 : i64, tpu.core_type = #tpu.core_type<tc>, window_params = [{transform_indices = @transform_0, window_bounds = array<i64: 128, 128>}, {pipeline_mode = #tpu.pipeline_mode<synchronous>, transform_indices = @transform_1, window_bounds = array<i64: 128, 32>}, {pipeline_mode = #tpu.pipeline_mode<synchronous>, transform_indices = @transform_2, window_bounds = array<i64: 1, 32>}, {transform_indices = @transform_3, window_bounds = array<i64: 128, 32>}, {pipeline_mode = #tpu.pipeline_mode<synchronous>, transform_indices = @transform_4, window_bounds = array<i64: 1, 32>}, {transform_indices = @transform_5, window_bounds = array<i64: 128, 32>}]} {
    %c0 = arith.constant 0 : index
    %c0_0 = arith.constant 0 : index
    %0 = vector.load %arg1[%c0, %c0_0] : memref<128x128xf32, #tpu.memory_space<vmem>>, vector<128x128xf32>
    %1 = arith.truncf %0 : vector<128x128xf32> to vector<128x128xbf16>
    %c0_1 = arith.constant 0 : index
    %c0_2 = arith.constant 0 : index
    %2 = vector.load %arg2[%c0_1, %c0_2] : memref<128x32xbf16, #tpu.memory_space<vmem>>, vector<128x32xbf16>
    %cst = arith.constant dense<0.000000e+00> : vector<128x32xf32>
    %3 = tpu.matmul %1, %2, %cst {dimension_numbers = #tpu.dot_dimension_numbers<[1], [0], [0], [1], [0, 0, 1, 1], [], []>} : vector<128x128xbf16>, vector<128x32xbf16>, vector<128x32xf32> -> vector<128x32xf32>
    %c0_3 = arith.constant 0 : index
    %c0_4 = arith.constant 0 : index
    %4 = vector.load %arg3[%c0_3, %c0_4] : memref<1x32xf32, #tpu.memory_space<vmem>>, vector<1x32xf32>
    %5 = vector.broadcast %4 : vector<1x32xf32> to vector<128x32xf32>
    %6 = arith.addf %3, %5 : vector<128x32xf32>
    %c0_5 = arith.constant 0 : index
    %c0_6 = arith.constant 0 : index
    %7 = vector.load %arg4[%c0_5, %c0_6] : memref<128x32xf32, #tpu.memory_space<vmem>>, vector<128x32xf32>
    %c0_7 = arith.constant 0 : index
    %c0_8 = arith.constant 0 : index
    %8 = vector.load %arg5[%c0_7, %c0_8] : memref<1x32xf32, #tpu.memory_space<vmem>>, vector<1x32xf32>
    %9 = vector.broadcast %8 : vector<1x32xf32> to vector<128x32xf32>
    %10 = arith.mulf %9, %6 : vector<128x32xf32>
    %11 = arith.addf %7, %10 : vector<128x32xf32>
    %c0_9 = arith.constant 0 : index
    %c0_10 = arith.constant 0 : index
    %12 = vector.load %arg6[%c0_9, %c0_10] : memref<128x32xf32, #tpu.memory_space<vmem>>, vector<128x32xf32>
    tpu.vector_store %arg6[%c0_9, %c0_10], %11 {strides = array<i32>} : memref<128x32xf32, #tpu.memory_space<vmem>>, vector<128x32xf32>,
    return
  }
  func.func @transform_0(%arg0: i32) -> (i32, i32) {
    %c0_i32 = arith.constant 0 : i32
    %c0_i32_0 = arith.constant 0 : i32
    return %arg0, %c0_i32 : i32, i32
  }
  func.func @transform_1(%arg0: i32) -> (i32, i32) {
    %c0_i32 = arith.constant 0 : i32
    %c0_i32_0 = arith.constant 0 : i32
    %c0_i32_1 = arith.constant 0 : i32
    return %c0_i32, %c0_i32_0 : i32, i32
  }
  func.func @transform_2(%arg0: i32) -> (i32, i32) {
    %c0_i32 = arith.constant 0 : i32
    %c0_i32_0 = arith.constant 0 : i32
    %c0_i32_1 = arith.constant 0 : i32
    return %c0_i32, %c0_i32_0 : i32, i32
  }
  func.func @transform_3(%arg0: i32) -> (i32, i32) {
    %c0_i32 = arith.constant 0 : i32
    %c0_i32_0 = arith.constant 0 : i32
    return %arg0, %c0_i32 : i32, i32
  }
  func.func @transform_4(%arg0: i32) -> (i32, i32) {
    %c0_i32 = arith.constant 0 : i32
    %c0_i32_0 = arith.constant 0 : i32
    %c0_i32_1 = arith.constant 0 : i32
    return %c0_i32, %c0_i32_0 : i32, i32
  }
  func.func @transform_5(%arg0: i32) -> (i32, i32) {
    %c0_i32 = arith.constant 0 : i32
    %c0_i32_0 = arith.constant 0 : i32
    return %arg0, %c0_i32 : i32, i32
  }
}

</mosaic_0001>

<llo_original>
// kernel: _lambda_.7
$region0: #{_lambda_.7}
  #allocation0 [shape = 'u32[]', space=smem, size = 0x4, offset = 0x4, fixed_abs, tag = 'smem constant byte address 0x4 - core index']
  #allocation1 [shape = 'u32[144,128]{1,0:T(1,128)}', space=vmem, size = 0x12000, scoped, tag = 'internal scratch']
  %s0 = inlined_call_operand.hbm [shape: f32[512,32], index: 0, kind: input, shape index: {}]
  %s1 = inlined_call_operand.vmem [shape: bf16[32,32], index: 1, kind: input, shape index: {}]
  %s2 = inlined_call_operand.vmem [shape: f32[1,32], index: 2, kind: input, shape index: {}]
  %s3 = inlined_call_operand.vmem [shape: bf16[32,32], index: 3, kind: input, shape index: {}]
  %s4 = inlined_call_operand.hbm [shape: f32[1,32], index: 4, kind: input, shape index: {}]
  %s5 = inlined_call_operand.vmem [shape: f32[512,32], index: 5, kind: output, shape index: {0}]
  %s6 = inlined_call_operand.vmem [shape: f32[512,32], index: 6, kind: output, shape index: {1}]
  %7 = xla_tuple %s5, %s6
  %s8 = sld [smem:[#allocation0]]
  $region69: #{_lambda_.7} parent=0
    _
  %s10 = ssub.s32 1, %s8
  %s11 = scalar_select 0, %s10, %s8
  $region1: #{_lambda_.7} parent=0
    #allocation2 [shape = 'u8[131072]{0}', space=vmem, size = 0x20000, scoped, tag = 'input window, operand 0']
    #allocation3 [shape = 's32[2]{0}', space=sflag, size = 0x8, scoped, tag = 'scoped memory for _lambda_.7']
    #allocation4 [shape = 'u8[512]{0}', space=vmem, size = 0x400, scoped, tag = 'input window, operand 4, single buffered']
    #allocation5 [shape = 's32[1]{0}', space=sflag, size = 0x4, scoped, tag = 'scoped memory for _lambda_.7']
    %12 = vsyncpa [#allocation3], 0
    %s13 = scalar_lea.sflag [#allocation3], 1
    %14 = vsyncpa %s13, 0
    %15 = vsyncpa [#allocation5], 0
    loop: start=0, step=1, limit=6
    $region2: #{_lambda_.7} parent=1 // loop_pre_header
      _
    $region3: #{_lambda_.7} parent=1 // loop_header
      %s17 = sphi 0, %s21
      %p18 = scmp.ge.s32.totalorder %s17, 6
      %s27 = sphi 0, %s29
      %s30 = sphi 0, %s27
      %s31 = sphi 0, %s30
      %s47 = sphi 0, %s31
      %s51 = sphi 0, %s51
      %s53 = sphi 0, %s51
      %s54 = sphi 0, %s53
      %s68 = sphi 0, %s54
      %s72 = sphi 0, %s72
      %s74 = sphi 0, %s72
      %s75 = sphi 0, %s74
      %s89 = sphi 0, %s75
      %s93 = sphi 0, %s93
      %s95 = sphi 0, %s93
      %s96 = sphi 0, %s95
      %s110 = sphi 0, %s96
      %s114 = sphi 0, %s114
      %s116 = sphi 0, %s114
      %s117 = sphi 0, %s116
      %s131 = sphi 0, %s117
      %s137 = sphi 0, %s139
      %s140 = sphi 0, %s137
      %s141 = sphi 0, %s140
      %s157 = sphi 0, %s141
      %s163 = sphi 0, %s165
      %s166 = sphi 0, %s163
      %s167 = sphi 0, %s166
      %s183 = sphi 0, %s167
    $region4: #{_lambda_.7} parent=1 // loop_header_branch
      %20 = sbr.rel (%p18) target = $region8
    $region5: #{_lambda_.7} parent=1 // loop_body
      %s22 = ssub.s32 %s17, 1
      %s23 = ssub.s32 %s17, 2
      %s24 = sadd.s32 %s17, 1
      %s25 = ssub.s32 %s17, %s24
      %p26 = scmp.eq.s32.totalorder %s25, 0
      %s28 = sadd.s32 %s27, 1
      %s29 = scalar_select %p26, %s27, %s28
      %p32 = pneg %p26
      %p33 = scmp.eq.s32.totalorder %s17, 3
      %p34 = por %p32, %p33
      %p35 = scmp.ne.s32.totalorder %s27, %s30
      %p36 = scmp.eq.s32.totalorder %s17, 0
      %p37 = por %p35, %p36
      %p38 = scmp.ne.s32.totalorder %s27, %s30
      %p39 = scmp.eq.s32.totalorder %s22, 3
      %p40 = por %p38, %p39
      %p41 = scmp.ne.s32.totalorder %s30, %s31
      %p42 = scmp.eq.s32.totalorder %s22, 0
      %p43 = por %p41, %p42
      %p44 = scmp.ne.s32.totalorder %s30, %s31
      %p45 = scmp.eq.s32.totalorder %s23, 3
      %p46 = por %p44, %p45
      %p48 = scmp.ne.s32.totalorder %s31, %s47
      %p49 = scmp.eq.s32.totalorder %s23, 0
      %p50 = por %p48, %p49
      %s52 = sadd.s32 %s51, 1
      %p55 = scmp.eq.s32.totalorder %s17, 3
      %p56 = scmp.ne.s32.totalorder %s51, %s53
      %p57 = scmp.eq.s32.totalorder %s17, 0
      %p58 = por %p56, %p57
      %p59 = scmp.ne.s32.totalorder %s51, %s53
      %p60 = scmp.eq.s32.totalorder %s22, 3
      %p61 = por %p59, %p60
      %p62 = scmp.ne.s32.totalorder %s53, %s54
      %p63 = scmp.eq.s32.totalorder %s22, 0
      %p64 = por %p62, %p63
      %p65 = scmp.ne.s32.totalorder %s53, %s54
      %p66 = scmp.eq.s32.totalorder %s23, 3
      %p67 = por %p65, %p66
      %p69 = scmp.ne.s32.totalorder %s54, %s68
      %p70 = scmp.eq.s32.totalorder %s23, 0
      %p71 = por %p69, %p70
      %s73 = sadd.s32 %s72, 1
      %p76 = scmp.eq.s32.totalorder %s17, 3
      %p77 = scmp.ne.s32.totalorder %s72, %s74
      %p78 = scmp.eq.s32.totalorder %s17, 0
      %p79 = por %p77, %p78
      %p80 = scmp.ne.s32.totalorder %s72, %s74
      %p81 = scmp.eq.s32.totalorder %s22, 3
      %p82 = por %p80, %p81
      %p83 = scmp.ne.s32.totalorder %s74, %s75
      %p84 = scmp.eq.s32.totalorder %s22, 0
      %p85 = por %p83, %p84
      %p86 = scmp.ne.s32.totalorder %s74, %s75
      %p87 = scmp.eq.s32.totalorder %s23, 3
      %p88 = por %p86, %p87
      %p90 = scmp.ne.s32.totalorder %s75, %s89
      %p91 = scmp.eq.s32.totalorder %s23, 0
      %p92 = por %p90, %p91
      %s94 = sadd.s32 %s93, 1
      %p97 = scmp.eq.s32.totalorder %s17, 3
      %p98 = scmp.ne.s32.totalorder %s93, %s95
      %p99 = scmp.eq.s32.totalorder %s17, 0
      %p100 = por %p98, %p99
      %p101 = scmp.ne.s32.totalorder %s93, %s95
      %p102 = scmp.eq.s32.totalorder %s22, 3
      %p103 = por %p101, %p102
      %p104 = scmp.ne.s32.totalorder %s95, %s96
      %p105 = scmp.eq.s32.totalorder %s22, 0
      %p106 = por %p104, %p105
      %p107 = scmp.ne.s32.totalorder %s95, %s96
      %p108 = scmp.eq.s32.totalorder %s23, 3
      %p109 = por %p107, %p108
      %p111 = scmp.ne.s32.totalorder %s96, %s110
      %p112 = scmp.eq.s32.totalorder %s23, 0
      %p113 = por %p111, %p112
      %s115 = sadd.s32 %s114, 1
      %p118 = scmp.eq.s32.totalorder %s17, 3
      %p119 = scmp.ne.s32.totalorder %s114, %s116
      %p120 = scmp.eq.s32.totalorder %s17, 0
      %p121 = por %p119, %p120
      %p122 = scmp.ne.s32.totalorder %s114, %s116
      %p123 = scmp.eq.s32.totalorder %s22, 3
      %p124 = por %p122, %p123
      %p125 = scmp.ne.s32.totalorder %s116, %s117
      %p126 = scmp.eq.s32.totalorder %s22, 0
      %p127 = por %p125, %p126
      %p128 = scmp.ne.s32.totalorder %s116, %s117
      %p129 = scmp.eq.s32.totalorder %s23, 3
      %p130 = por %p128, %p129
      %p132 = scmp.ne.s32.totalorder %s117, %s131
      %p133 = scmp.eq.s32.totalorder %s23, 0
      %p134 = por %p132, %p133
      %s135 = ssub.s32 %s17, %s24
      %p136 = scmp.eq.s32.totalorder %s135, 0
      %s138 = sadd.s32 %s137, 1
      %s139 = scalar_select %p136, %s137, %s138
      %p142 = pneg %p136
      %p143 = scmp.eq.s32.totalorder %s17, 3
      %p144 = por %p142, %p143
      %p145 = scmp.ne.s32.totalorder %s137, %s140
      %p146 = scmp.eq.s32.totalorder %s17, 0
      %p147 = por %p145, %p146
      %p148 = scmp.ne.s32.totalorder %s137, %s140
      %p149 = scmp.eq.s32.totalorder %s22, 3
      %p150 = por %p148, %p149
      %p151 = scmp.ne.s32.totalorder %s140, %s141
      %p152 = scmp.eq.s32.totalorder %s22, 0
      %p153 = por %p151, %p152
      %p154 = scmp.ne.s32.totalorder %s140, %s141
      %p155 = scmp.eq.s32.totalorder %s23, 3
      %p156 = por %p154, %p155
      %p158 = scmp.ne.s32.totalorder %s141, %s157
      %p159 = scmp.eq.s32.totalorder %s23, 0
      %p160 = por %p158, %p159
      %s161 = ssub.s32 %s17, %s24
      %p162 = scmp.eq.s32.totalorder %s161, 0
      %s164 = sadd.s32 %s163, 1
      %s165 = scalar_select %p162, %s163, %s164
      %p168 = pneg %p162
      %p169 = scmp.eq.s32.totalorder %s17, 3
      %p170 = por %p168, %p169
      %p171 = scmp.ne.s32.totalorder %s163, %s166
      %p172 = scmp.eq.s32.totalorder %s17, 0
      %p173 = por %p171, %p172
      %p174 = scmp.ne.s32.totalorder %s163, %s166
      %p175 = scmp.eq.s32.totalorder %s22, 3
      %p176 = por %p174, %p175
      %p177 = scmp.ne.s32.totalorder %s166, %s167
      %p178 = scmp.eq.s32.totalorder %s22, 0
      %p179 = por %p177, %p178
      %p180 = scmp.ne.s32.totalorder %s166, %s167
      %p181 = scmp.eq.s32.totalorder %s23, 3
      %p182 = por %p180, %p181
      %p184 = scmp.ne.s32.totalorder %s167, %s183
      %p185 = scmp.eq.s32.totalorder %s23, 0
      %p186 = por %p184, %p185
      %p187 = scmp.le.s32.totalorder 1, %s17
      %p188 = scmp.lt.s32.totalorder %s17, 5
      %p189 = pnand %p187, %p188
      %p190 = pneg %p189
      // Predicated region
      $region9: #{_lambda_.7} parent=5 // pred_check
        _
      $region10: #{_lambda_.7} parent=5 // pred_check_branch
        %192 = sbr.rel (%p189) target = $region12
      $region11: #{_lambda_.7} parent=5 // pred_region
        %s193 = ssub.s32 %s17, 1
        // Predicated region
        $region13: #{_lambda_.7} parent=11 // pred_check
          %p194 = pneg %p64
        $region14: #{_lambda_.7} parent=11 // pred_check_branch
          %196 = sbr.rel (%p194) target = $region16
        $region15: #{_lambda_.7} parent=11 // pred_region
          _
        $region16: #{_lambda_.7} parent=11 // pred_fallthru
          _
        // Predicated region
        $region17: #{_lambda_.7} parent=11 // pred_check
          %p197 = pneg %p85
        $region18: #{_lambda_.7} parent=11 // pred_check_branch
          %199 = sbr.rel (%p197) target = $region20
        $region19: #{_lambda_.7} parent=11 // pred_region
          _
        $region20: #{_lambda_.7} parent=11 // pred_fallthru
          _
        // Predicated region
        $region21: #{_lambda_.7} parent=11 // pred_check
          %p200 = pneg %p106
        $region22: #{_lambda_.7} parent=11 // pred_check_branch
          %202 = sbr.rel (%p200) target = $region24
        $region23: #{_lambda_.7} parent=11 // pred_region
          _
        $region24: #{_lambda_.7} parent=11 // pred_fallthru
          _
        // Predicated region
        $region25: #{_lambda_.7} parent=11 // pred_check
          %p203 = pneg %p127
        $region26: #{_lambda_.7} parent=11 // pred_check_branch
          %205 = sbr.rel (%p203) target = $region28
        $region27: #{_lambda_.7} parent=11 // pred_region
          %s207 = ssub.s32 16, 16
          %208 = vsyncadd [#allocation5], %s207
          %s210 = sshll.u32 [#allocation4], 4
          %s211 = int_to_ptr.vmem [resolvable:$true] %s210
          %213 = dma.hbm_to_vmem [thread:$0]  %s4, 16, %s211, [#allocation5]
        $region28: #{_lambda_.7} parent=11 // pred_fallthru
          _
      $region12: #{_lambda_.7} parent=5 // pred_fallthru
        _
      %p214 = scmp.lt.s32.totalorder %s17, 4
      // Predicated region
      $region29: #{_lambda_.7} parent=5 // pred_check
        %p215 = pneg %p214
      $region30: #{_lambda_.7} parent=5 // pred_check_branch
        %217 = sbr.rel (%p215) target = $region32
      $region31: #{_lambda_.7} parent=5 // pred_region
        // Predicated region
        $region33: #{_lambda_.7} parent=31 // pred_check
          %p218 = pneg %p37
        $region34: #{_lambda_.7} parent=31 // pred_check_branch
          %220 = sbr.rel (%p218) target = $region36
        $region35: #{_lambda_.7} parent=31 // pred_region
          %s221 = sand.u32 %s27, 1
          %s222 = scalar_lea.sflag [#allocation3], %s221
          %s223 = sand.u32 %s27, 1
          %s224 = smul.addr %s223, 128
          %s225 = scalar_lea.vmem [#allocation2], %s224
          %s226 = smul.u32 16, %s17
          %s228 = ssub.s32 2048, 2048
          %229 = vsyncadd %s222, %s228
          %s230 = smul.addr %s226, 128
          %s231 = scalar_lea.hbm %s0, %s230
          %s232 = sshll.u32 %s225, 4
          %s233 = int_to_ptr.vmem [resolvable:$true] %s232
          %238 = dma.hbm_to_vmem [thread:$0]  %s231, 2048, %s233, %s222, 128, 128, 8
        $region36: #{_lambda_.7} parent=31 // pred_fallthru
          _
      $region32: #{_lambda_.7} parent=5 // pred_fallthru
        _
      %p239 = scmp.le.s32.totalorder 1, %s17
      %p240 = scmp.lt.s32.totalorder %s17, 5
      %p241 = pnand %p239, %p240
      %p242 = pneg %p241
      // Predicated region
      $region37: #{_lambda_.7} parent=5 // pred_check
        _
      $region38: #{_lambda_.7} parent=5 // pred_check_branch
        %244 = sbr.rel (%p241) target = $region40
      $region39: #{_lambda_.7} parent=5 // pred_region
        %s245 = ssub.s32 %s17, 1
        %s246 = sand.u32 %s30, 1
        %s247 = scalar_lea.sflag [#allocation3], %s246
        %s248 = sand.u32 %s30, 1
        %s249 = smul.addr %s248, 128
        %s250 = scalar_lea.vmem [#allocation2], %s249
        // Predicated region
        $region41: #{_lambda_.7} parent=39 // pred_check
          %p251 = pneg %p43
        $region42: #{_lambda_.7} parent=39 // pred_check_branch
          %253 = sbr.rel (%p251) target = $region44
        $region43: #{_lambda_.7} parent=39 // pred_region
          %254 = dma.done %s247, 2048
        $region44: #{_lambda_.7} parent=39 // pred_fallthru
          _
        // Predicated region
        $region45: #{_lambda_.7} parent=39 // pred_check
          %p255 = pneg %p127
        $region46: #{_lambda_.7} parent=39 // pred_check_branch
          %257 = sbr.rel (%p255) target = $region48
        $region47: #{_lambda_.7} parent=39 // pred_region
          %258 = dma.done [#allocation5], 16
        $region48: #{_lambda_.7} parent=39 // pred_fallthru
          _
        %s259 = sand.u32 %s30, 1
        %s260 = scalar_lea.sflag [#allocation3], %s259
        %s261 = sand.u32 %s30, 1
        %s262 = smul.addr %s261, 128
        %s263 = scalar_lea.vmem [#allocation2], %s262
        %p264 = pneg %p43
        %p265 = pneg %p40
        %p266 = pneg %p64
        %p267 = pneg %p61
        %p268 = pneg %p85
        %p269 = pneg %p82
        %p270 = pneg %p106
        %p271 = pneg %p103
        %p272 = pneg %p127
        %p273 = pneg %p124
        %p274 = pneg %p153
        %p275 = pneg %p150
        %s276 = smul.u32 16, %s22
        %p277 = scmp.lt.s32.totalorder %s276, 63
        %s278 = scalar_select %p277, %s276, 63
        %s279 = smul.addr %s278, 8
        %s280 = scalar_lea.vmem %s5, %s279
        %p281 = pneg %p179
        %p282 = pneg %p176
        %s283 = smul.u32 16, %s22
        %p284 = scmp.lt.s32.totalorder %s283, 63
        %s285 = scalar_select %p284, %s283, 63
        %s286 = smul.addr %s285, 8
        %s287 = scalar_lea.vmem %s6, %s286
        %s288 = smul.u32 16, %s22
        %s289 = smul.u32 16, %s22
        %p290 = scmp.lt.s32.totalorder %s289, 63
        %s291 = scalar_select %p290, %s289, 63
        %s292 = smul.addr %s291, 8
        %s293 = scalar_lea.vmem %s5, %s292
        %s294 = smul.u32 16, %s22
        %s295 = smul.u32 16, %s22
        %p296 = scmp.lt.s32.totalorder %s295, 63
        %s297 = scalar_select %p296, %s295, 63
        %s298 = smul.addr %s297, 8
        %s299 = scalar_lea.vmem %s6, %s298
        %s300 = smul.u32 16, %s22
        %v302 = vld [vmem:[%s250] sm:$0xff]
        %v303 = vld [vmem:[%s250 + $0x8] sm:$0xff]
        %v304 = vld [vmem:[%s250 + $0x10] sm:$0xff]
        %v305 = vld [vmem:[%s250 + $0x18] sm:$0xff]
        %v306 = vld [vmem:[%s250 + $0x20] sm:$0xff]
        %v307 = vld [vmem:[%s250 + $0x28] sm:$0xff]
        %v308 = vld [vmem:[%s250 + $0x30] sm:$0xff]
        %v309 = vld [vmem:[%s250 + $0x38] sm:$0xff]
        %v310 = vld [vmem:[%s250 + $0x40] sm:$0xff]
        %v311 = vld [vmem:[%s250 + $0x48] sm:$0xff]
        %v312 = vld [vmem:[%s250 + $0x50] sm:$0xff]
        %v313 = vld [vmem:[%s250 + $0x58] sm:$0xff]
        %v314 = vld [vmem:[%s250 + $0x60] sm:$0xff]
        %v315 = vld [vmem:[%s250 + $0x68] sm:$0xff]
        %v316 = vld [vmem:[%s250 + $0x70] sm:$0xff]
        %v317 = vld [vmem:[%s250 + $0x78] sm:$0xff]
        %v318 = vpack.c.bf16 %v303, %v302
        %v319 = vpack.c.bf16 %v305, %v304
        %v320 = vpack.c.bf16 %v307, %v306
        %v321 = vpack.c.bf16 %v309, %v308
        %v322 = vpack.c.bf16 %v311, %v310
        %v323 = vpack.c.bf16 %v313, %v312
        %v324 = vpack.c.bf16 %v315, %v314
        %v325 = vpack.c.bf16 %v317, %v316
        %v326 = vld [vmem:[%s1] sm:$0xf]
        %v327 = vld [vmem:[%s1 + $0x4] sm:$0xf]
        %v328 = vld [vmem:[%s1 + $0x8] sm:$0xf]
        %v329 = vld [vmem:[%s1 + $0xc] sm:$0xf]
        %v330 = vld [vmem:[%s2] sm:$0x1]
        %v332 = vlaneseq
        %v333 = vshrl.u32 %v332, 7
        %v334 = vsub.s32 0, %v333
        %v335 = vrot.slane %v330, %v334
        %v341 = vunpack.c.l.b16 %v326
        %v342 = vunpack.c.l.b16 %v327
        %v343 = vunpack.c.l.b16 %v328
        %v344 = vunpack.c.l.b16 %v329
        %v345 = vpack.c.b16 %v342, %v341
        %v346 = vpack.c.b16 %v344, %v343
        %vm349 = vcmask 261120
        %v351 = vsel %vm349, %v318, 0
        %v354 = vsel %vm349, %v319, 0
        %v357 = vsel %vm349, %v320, 0
        %v360 = vsel %vm349, %v321, 0
        %v363 = vsel %vm349, %v322, 0
        %v366 = vsel %vm349, %v323, 0
        %v369 = vsel %vm349, %v324, 0
        %v372 = vsel %vm349, %v325, 0
        %374 = vmatprep.subr.bf16.mxu0 0
        %375 = vmatpush1.bf16.msra.mxu0 0
        %376 = vmatprep.subr.bf16.mxu0 0
        %377 = vmatpush1.bf16.msra.mxu0 0
        %378 = vmatprep.subr.bf16.mxu0 0
        %379 = vmatpush1.bf16.msra.mxu0 0
        %380 = vmatprep.subr.bf16.mxu0 0
        %381 = vmatpush1.bf16.msra.mxu0 0
        %382 = vmatprep.subr.bf16.mxu0 0
        %383 = vmatpush1.bf16.msra.mxu0 0
        %384 = vmatprep.subr.bf16.mxu0 0
        %385 = vmatpush1.bf16.msra.mxu0 0
        %386 = vmatprep.subr.bf16.mxu0 0
        %387 = vmatpush1.bf16.msra.mxu0 %v346
        %388 = vmatprep.subr.bf16.mxu0 0
        %389 = vmatpush1.bf16.msra.mxu0 %v345
        %390 = vmatprep.subr.bf16.mxu0 0
        %391 = vmatpush2.bf16.msra.mxu0 0
        %392 = vmatprep.subr.bf16.mxu0 0
        %393 = vmatpush2.bf16.msra.mxu0 0
        %394 = vmatprep.subr.bf16.mxu0 0
        %395 = vmatpush2.bf16.msra.mxu0 0
        %396 = vmatprep.subr.bf16.mxu0 0
        %397 = vmatpush2.bf16.msra.mxu0 0
        %398 = vmatprep.subr.bf16.mxu0 0
        %399 = vmatpush2.bf16.msra.mxu0 0
        %400 = vmatprep.subr.bf16.mxu0 0
        %401 = vmatpush2.bf16.msra.mxu0 0
        %402 = vmatprep.subr.bf16.mxu0 0
        %403 = vmatpush2.bf16.msra.mxu0 0
        %404 = vmatprep.subr.bf16.mxu0 0
        %405 = vmatpush2.bf16.msra.mxu0 0
        %406 = vmatprep.mubr.bf16.mxu0 0
        %407 = vmatmul.mubr.bf16.gmra.mxu0 %v351
        %v408 = vpop.f32.mrf.mxu0
        %v409 = vadd.f32 %v335, %v408
        %v410 = vpop.f32.mrf.mxu0
        %v411 = vpop.f32.mrf.mxu0
        %v412 = vadd.f32 %v335, %v411
        %v413 = vpop.f32.mrf.mxu0
        %414 = vmatprep.mubr.bf16.mxu0 0
        %415 = vmatmul.mubr.bf16.gmra.mxu0 %v354
        %v416 = vpop.f32.mrf.mxu0
        %v417 = vadd.f32 %v335, %v416
        %v418 = vpop.f32.mrf.mxu0
        %v419 = vpop.f32.mrf.mxu0
        %v420 = vadd.f32 %v335, %v419
        %v421 = vpop.f32.mrf.mxu0
        %422 = vmatprep.mubr.bf16.mxu0 0
        %423 = vmatmul.mubr.bf16.gmra.mxu0 %v357
        %v424 = vpop.f32.mrf.mxu0
        %v425 = vadd.f32 %v335, %v424
        %v426 = vpop.f32.mrf.mxu0
        %v427 = vpop.f32.mrf.mxu0
        %v428 = vadd.f32 %v335, %v427
        %v429 = vpop.f32.mrf.mxu0
        %430 = vmatprep.mubr.bf16.mxu0 0
        %431 = vmatmul.mubr.bf16.gmra.mxu0 %v360
        %v432 = vpop.f32.mrf.mxu0
        %v433 = vadd.f32 %v335, %v432
        %v434 = vpop.f32.mrf.mxu0
        %v435 = vpop.f32.mrf.mxu0
        %v436 = vadd.f32 %v335, %v435
        %v437 = vpop.f32.mrf.mxu0
        %438 = vmatprep.mubr.bf16.mxu0 0
        %439 = vmatmul.mubr.bf16.gmra.mxu0 %v363
        %v440 = vpop.f32.mrf.mxu0
        %v441 = vadd.f32 %v335, %v440
        %v442 = vpop.f32.mrf.mxu0
        %v443 = vpop.f32.mrf.mxu0
        %v444 = vadd.f32 %v335, %v443
        %v445 = vpop.f32.mrf.mxu0
        %446 = vmatprep.mubr.bf16.mxu0 0
        %447 = vmatmul.mubr.bf16.gmra.mxu0 %v366
        %v448 = vpop.f32.mrf.mxu0
        %v449 = vadd.f32 %v335, %v448
        %v450 = vpop.f32.mrf.mxu0
        %v451 = vpop.f32.mrf.mxu0
        %v452 = vadd.f32 %v335, %v451
        %v453 = vpop.f32.mrf.mxu0
        %454 = vmatprep.mubr.bf16.mxu0 0
        %455 = vmatmul.mubr.bf16.gmra.mxu0 %v369
        %v456 = vpop.f32.mrf.mxu0
        %v457 = vadd.f32 %v335, %v456
        %v458 = vpop.f32.mrf.mxu0
        %v459 = vpop.f32.mrf.mxu0
        %v460 = vadd.f32 %v335, %v459
        %v461 = vpop.f32.mrf.mxu0
        %462 = vmatprep.mubr.bf16.mxu0 0
        %463 = vmatmul.mubr.bf16.gmra.mxu0 %v372
        %v464 = vpop.f32.mrf.mxu0
        %v465 = vadd.f32 %v335, %v464
        %v466 = vpop.f32.mrf.mxu0
        %v467 = vpop.f32.mrf.mxu0
        %v468 = vadd.f32 %v335, %v467
        %v469 = vpop.f32.mrf.mxu0
        %470 = vdwg.mxu0
        %v471 = vmul.f32 %v409, 0.5
        %v472 = vmul.f32 %v412, 0.5
        %v473 = vmul.f32 %v417, 0.5
        %v474 = vmul.f32 %v420, 0.5
        %v475 = vmul.f32 %v425, 0.5
        %v476 = vmul.f32 %v428, 0.5
        %v477 = vmul.f32 %v433, 0.5
        %v478 = vmul.f32 %v436, 0.5
        %v479 = vmul.f32 %v441, 0.5
        %v480 = vmul.f32 %v444, 0.5
        %v481 = vmul.f32 %v449, 0.5
        %v482 = vmul.f32 %v452, 0.5
        %v483 = vmul.f32 %v457, 0.5
        %v484 = vmul.f32 %v460, 0.5
        %v485 = vmul.f32 %v465, 0.5
        %v486 = vmul.f32 %v468, 0.5
        %v487 = vmul.f32 %v409, 0.044715
        %v488 = vmul.f32 %v412, 0.044715
        %v489 = vmul.f32 %v417, 0.044715
        %v490 = vmul.f32 %v420, 0.044715
        %v491 = vmul.f32 %v425, 0.044715
        %v492 = vmul.f32 %v428, 0.044715
        %v493 = vmul.f32 %v433, 0.044715
        %v494 = vmul.f32 %v436, 0.044715
        %v495 = vmul.f32 %v441, 0.044715
        %v496 = vmul.f32 %v444, 0.044715
        %v497 = vmul.f32 %v449, 0.044715
        %v498 = vmul.f32 %v452, 0.044715
        %v499 = vmul.f32 %v457, 0.044715
        %v500 = vmul.f32 %v460, 0.044715
        %v501 = vmul.f32 %v465, 0.044715
        %v502 = vmul.f32 %v468, 0.044715
        %v503 = vmul.f32 %v487, %v409
        %v504 = vmul.f32 %v488, %v412
        %v505 = vmul.f32 %v489, %v417
        %v506 = vmul.f32 %v490, %v420
        %v507 = vmul.f32 %v491, %v425
        %v508 = vmul.f32 %v492, %v428
        %v509 = vmul.f32 %v493, %v433
        %v510 = vmul.f32 %v494, %v436
        %v511 = vmul.f32 %v495, %v441
        %v512 = vmul.f32 %v496, %v444
        %v513 = vmul.f32 %v497, %v449
        %v514 = vmul.f32 %v498, %v452
        %v515 = vmul.f32 %v499, %v457
        %v516 = vmul.f32 %v500, %v460
        %v517 = vmul.f32 %v501, %v465
        %v518 = vmul.f32 %v502, %v468
        %v519 = vmul.f32 %v503, %v409
        %v520 = vmul.f32 %v504, %v412
        %v521 = vmul.f32 %v505, %v417
        %v522 = vmul.f32 %v506, %v420
        %v523 = vmul.f32 %v507, %v425
        %v524 = vmul.f32 %v508, %v428
        %v525 = vmul.f32 %v509, %v433
        %v526 = vmul.f32 %v510, %v436
        %v527 = vmul.f32 %v511, %v441
        %v528 = vmul.f32 %v512, %v444
        %v529 = vmul.f32 %v513, %v449
        %v530 = vmul.f32 %v514, %v452
        %v531 = vmul.f32 %v515, %v457
        %v532 = vmul.f32 %v516, %v460
        %v533 = vmul.f32 %v517, %v465
        %v534 = vmul.f32 %v518, %v468
        %v535 = vadd.f32 %v409, %v519
        %v536 = vadd.f32 %v412, %v520
        %v537 = vadd.f32 %v417, %v521
        %v538 = vadd.f32 %v420, %v522
        %v539 = vadd.f32 %v425, %v523
        %v540 = vadd.f32 %v428, %v524
        %v541 = vadd.f32 %v433, %v525
        %v542 = vadd.f32 %v436, %v526
        %v543 = vadd.f32 %v441, %v527
        %v544 = vadd.f32 %v444, %v528
        %v545 = vadd.f32 %v449, %v529
        %v546 = vadd.f32 %v452, %v530
        %v547 = vadd.f32 %v457, %v531
        %v548 = vadd.f32 %v460, %v532
        %v549 = vadd.f32 %v465, %v533
        %v550 = vadd.f32 %v468, %v534
        %v551 = vmul.f32 %v535, 0.7978846
        %v552 = vmul.f32 %v536, 0.7978846
        %v553 = vmul.f32 %v537, 0.7978846
        %v554 = vmul.f32 %v538, 0.7978846
        %v555 = vmul.f32 %v539, 0.7978846
        %v556 = vmul.f32 %v540, 0.7978846
        %v557 = vmul.f32 %v541, 0.7978846
        %v558 = vmul.f32 %v542, 0.7978846
        %v559 = vmul.f32 %v543, 0.7978846
        %v560 = vmul.f32 %v544, 0.7978846
        %v561 = vmul.f32 %v545, 0.7978846
        %v562 = vmul.f32 %v546, 0.7978846
        %v563 = vmul.f32 %v547, 0.7978846
        %v564 = vmul.f32 %v548, 0.7978846
        %v565 = vmul.f32 %v549, 0.7978846
        %v566 = vmul.f32 %v550, 0.7978846
        %v567 = vtanh.pop %v551
        %v568 = vtanh.pop %v552
        %v569 = vtanh.pop %v553
        %v570 = vtanh.pop %v554
        %v571 = vtanh.pop %v555
        %v572 = vtanh.pop %v556
        %v573 = vtanh.pop %v557
        %v574 = vtanh.pop %v558
        %v575 = vtanh.pop %v559
        %v576 = vtanh.pop %v560
        %v577 = vtanh.pop %v561
        %v578 = vtanh.pop %v562
        %v579 = vtanh.pop %v563
        %v580 = vtanh.pop %v564
        %v581 = vtanh.pop %v565
        %v582 = vtanh.pop %v566
        %v583 = vadd.f32 %v567, 1.0
        %v584 = vadd.f32 %v568, 1.0
        %v585 = vadd.f32 %v569, 1.0
        %v586 = vadd.f32 %v570, 1.0
        %v587 = vadd.f32 %v571, 1.0
        %v588 = vadd.f32 %v572, 1.0
        %v589 = vadd.f32 %v573, 1.0
        %v590 = vadd.f32 %v574, 1.0
        %v591 = vadd.f32 %v575, 1.0
        %v592 = vadd.f32 %v576, 1.0
        %v593 = vadd.f32 %v577, 1.0
        %v594 = vadd.f32 %v578, 1.0
        %v595 = vadd.f32 %v579, 1.0
        %v596 = vadd.f32 %v580, 1.0
        %v597 = vadd.f32 %v581, 1.0
        %v598 = vadd.f32 %v582, 1.0
        %v599 = vmul.f32 %v471, %v583
        %v600 = vmul.f32 %v472, %v584
        %v601 = vmul.f32 %v473, %v585
        %v602 = vmul.f32 %v474, %v586
        %v603 = vmul.f32 %v475, %v587
        %v604 = vmul.f32 %v476, %v588
        %v605 = vmul.f32 %v477, %v589
        %v606 = vmul.f32 %v478, %v590
        %v607 = vmul.f32 %v479, %v591
        %v608 = vmul.f32 %v480, %v592
        %v609 = vmul.f32 %v481, %v593
        %v610 = vmul.f32 %v482, %v594
        %v611 = vmul.f32 %v483, %v595
        %v612 = vmul.f32 %v484, %v596
        %v613 = vmul.f32 %v485, %v597
        %v614 = vmul.f32 %v486, %v598
        %615 = vst.msk [vmem:[%s293] sm:$0xff] %vm349, %v599
        %616 = vst.msk [vmem:[%s293 + $0x8] sm:$0xff] %vm349, %v600
        %617 = vst.msk [vmem:[%s293 + $0x10] sm:$0xff] %vm349, %v601
        %618 = vst.msk [vmem:[%s293 + $0x18] sm:$0xff] %vm349, %v602
        %619 = vst.msk [vmem:[%s293 + $0x20] sm:$0xff] %vm349, %v603
        %620 = vst.msk [vmem:[%s293 + $0x28] sm:$0xff] %vm349, %v604
        %621 = vst.msk [vmem:[%s293 + $0x30] sm:$0xff] %vm349, %v605
        %622 = vst.msk [vmem:[%s293 + $0x38] sm:$0xff] %vm349, %v606
        %623 = vst.msk [vmem:[%s293 + $0x40] sm:$0xff] %vm349, %v607
        %624 = vst.msk [vmem:[%s293 + $0x48] sm:$0xff] %vm349, %v608
        %625 = vst.msk [vmem:[%s293 + $0x50] sm:$0xff] %vm349, %v609
        %626 = vst.msk [vmem:[%s293 + $0x58] sm:$0xff] %vm349, %v610
        %627 = vst.msk [vmem:[%s293 + $0x60] sm:$0xff] %vm349, %v611
        %628 = vst.msk [vmem:[%s293 + $0x68] sm:$0xff] %vm349, %v612
        %629 = vst.msk [vmem:[%s293 + $0x70] sm:$0xff] %vm349, %v613
        %630 = vst.msk [vmem:[%s293 + $0x78] sm:$0xff] %vm349, %v614
        %v631 = vpack.c.bf16 %v600, %v599
        %v632 = vpack.c.bf16 %v602, %v601
        %v633 = vpack.c.bf16 %v604, %v603
        %v634 = vpack.c.bf16 %v606, %v605
        %v635 = vpack.c.bf16 %v608, %v607
        %v636 = vpack.c.bf16 %v610, %v609
        %v637 = vpack.c.bf16 %v612, %v611
        %v638 = vpack.c.bf16 %v614, %v613
        %v639 = vld [vmem:[%s3] sm:$0xf]
        %v640 = vld [vmem:[%s3 + $0x4] sm:$0xf]
        %v641 = vld [vmem:[%s3 + $0x8] sm:$0xf]
        %v642 = vld [vmem:[%s3 + $0xc] sm:$0xf]
        %v643 = vld [vmem:[#allocation4] sm:$0x1]
        %v645 = vlaneseq
        %v646 = vshrl.u32 %v645, 7
        %v647 = vsub.s32 0, %v646
        %v648 = vrot.slane %v643, %v647
        %v654 = vunpack.c.l.b16 %v639
        %v655 = vunpack.c.l.b16 %v640
        %v656 = vunpack.c.l.b16 %v641
        %v657 = vunpack.c.l.b16 %v642
        %v658 = vpack.c.b16 %v655, %v654
        %v659 = vpack.c.b16 %v657, %v656
        %v663 = vsel %vm349, %v631, 0
        %v666 = vsel %vm349, %v632, 0
        %v669 = vsel %vm349, %v633, 0
        %v672 = vsel %vm349, %v634, 0
        %v675 = vsel %vm349, %v635, 0
        %v678 = vsel %vm349, %v636, 0
        %v681 = vsel %vm349, %v637, 0
        %v684 = vsel %vm349, %v638, 0
        %686 = vmatprep.subr.bf16.mxu0 0
        %687 = vmatpush1.bf16.msra.mxu0 0
        %688 = vmatprep.subr.bf16.mxu0 0
        %689 = vmatpush1.bf16.msra.mxu0 0
        %690 = vmatprep.subr.bf16.mxu0 0
        %691 = vmatpush1.bf16.msra.mxu0 0
        %692 = vmatprep.subr.bf16.mxu0 0
        %693 = vmatpush1.bf16.msra.mxu0 0
        %694 = vmatprep.subr.bf16.mxu0 0
        %695 = vmatpush1.bf16.msra.mxu0 0
        %696 = vmatprep.subr.bf16.mxu0 0
        %697 = vmatpush1.bf16.msra.mxu0 0
        %698 = vmatprep.subr.bf16.mxu0 0
        %699 = vmatpush1.bf16.msra.mxu0 %v659
        %700 = vmatprep.subr.bf16.mxu0 0
        %701 = vmatpush1.bf16.msra.mxu0 %v658
        %702 = vmatprep.subr.bf16.mxu0 0
        %703 = vmatpush2.bf16.msra.mxu0 0
        %704 = vmatprep.subr.bf16.mxu0 0
        %705 = vmatpush2.bf16.msra.mxu0 0
        %706 = vmatprep.subr.bf16.mxu0 0
        %707 = vmatpush2.bf16.msra.mxu0 0
        %708 = vmatprep.subr.bf16.mxu0 0
        %709 = vmatpush2.bf16.msra.mxu0 0
        %710 = vmatprep.subr.bf16.mxu0 0
        %711 = vmatpush2.bf16.msra.mxu0 0
        %712 = vmatprep.subr.bf16.mxu0 0
        %713 = vmatpush2.bf16.msra.mxu0 0
        %714 = vmatprep.subr.bf16.mxu0 0
        %715 = vmatpush2.bf16.msra.mxu0 0
        %716 = vmatprep.subr.bf16.mxu0 0
        %717 = vmatpush2.bf16.msra.mxu0 0
        %718 = vmatprep.mubr.bf16.mxu0 0
        %719 = vmatmul.mubr.bf16.gmra.mxu0 %v663
        %v720 = vpop.f32.mrf.mxu0
        %v721 = vadd.f32 %v648, %v720
        %v722 = vpop.f32.mrf.mxu0
        %v723 = vpop.f32.mrf.mxu0
        %v724 = vadd.f32 %v648, %v723
        %v725 = vpop.f32.mrf.mxu0
        %726 = vmatprep.mubr.bf16.mxu0 0
        %727 = vmatmul.mubr.bf16.gmra.mxu0 %v666
        %v728 = vpop.f32.mrf.mxu0
        %v729 = vadd.f32 %v648, %v728
        %v730 = vpop.f32.mrf.mxu0
        %v731 = vpop.f32.mrf.mxu0
        %v732 = vadd.f32 %v648, %v731
        %v733 = vpop.f32.mrf.mxu0
        %734 = vmatprep.mubr.bf16.mxu0 0
        %735 = vmatmul.mubr.bf16.gmra.mxu0 %v669
        %v736 = vpop.f32.mrf.mxu0
        %v737 = vadd.f32 %v648, %v736
        %v738 = vpop.f32.mrf.mxu0
        %v739 = vpop.f32.mrf.mxu0
        %v740 = vadd.f32 %v648, %v739
        %v741 = vpop.f32.mrf.mxu0
        %742 = vmatprep.mubr.bf16.mxu0 0
        %743 = vmatmul.mubr.bf16.gmra.mxu0 %v672
        %v744 = vpop.f32.mrf.mxu0
        %v745 = vadd.f32 %v648, %v744
        %v746 = vpop.f32.mrf.mxu0
        %v747 = vpop.f32.mrf.mxu0
        %v748 = vadd.f32 %v648, %v747
        %v749 = vpop.f32.mrf.mxu0
        %750 = vmatprep.mubr.bf16.mxu0 0
        %751 = vmatmul.mubr.bf16.gmra.mxu0 %v675
        %v752 = vpop.f32.mrf.mxu0
        %v753 = vadd.f32 %v648, %v752
        %v754 = vpop.f32.mrf.mxu0
        %v755 = vpop.f32.mrf.mxu0
        %v756 = vadd.f32 %v648, %v755
        %v757 = vpop.f32.mrf.mxu0
        %758 = vmatprep.mubr.bf16.mxu0 0
        %759 = vmatmul.mubr.bf16.gmra.mxu0 %v678
        %v760 = vpop.f32.mrf.mxu0
        %v761 = vadd.f32 %v648, %v760
        %v762 = vpop.f32.mrf.mxu0
        %v763 = vpop.f32.mrf.mxu0
        %v764 = vadd.f32 %v648, %v763
        %v765 = vpop.f32.mrf.mxu0
        %766 = vmatprep.mubr.bf16.mxu0 0
        %767 = vmatmul.mubr.bf16.gmra.mxu0 %v681
        %v768 = vpop.f32.mrf.mxu0
        %v769 = vadd.f32 %v648, %v768
        %v770 = vpop.f32.mrf.mxu0
        %v771 = vpop.f32.mrf.mxu0
        %v772 = vadd.f32 %v648, %v771
        %v773 = vpop.f32.mrf.mxu0
        %774 = vmatprep.mubr.bf16.mxu0 0
        %775 = vmatmul.mubr.bf16.gmra.mxu0 %v684
        %v776 = vpop.f32.mrf.mxu0
        %v777 = vadd.f32 %v648, %v776
        %v778 = vpop.f32.mrf.mxu0
        %v779 = vpop.f32.mrf.mxu0
        %v780 = vadd.f32 %v648, %v779
        %v781 = vpop.f32.mrf.mxu0
        %782 = vdwg.mxu0
        %783 = vst.msk [vmem:[%s299] sm:$0xff] %vm349, %v721
        %784 = vst.msk [vmem:[%s299 + $0x8] sm:$0xff] %vm349, %v724
        %785 = vst.msk [vmem:[%s299 + $0x10] sm:$0xff] %vm349, %v729
        %786 = vst.msk [vmem:[%s299 + $0x18] sm:$0xff] %vm349, %v732
        %787 = vst.msk [vmem:[%s299 + $0x20] sm:$0xff] %vm349, %v737
        %788 = vst.msk [vmem:[%s299 + $0x28] sm:$0xff] %vm349, %v740
        %789 = vst.msk [vmem:[%s299 + $0x30] sm:$0xff] %vm349, %v745
        %790 = vst.msk [vmem:[%s299 + $0x38] sm:$0xff] %vm349, %v748
        %791 = vst.msk [vmem:[%s299 + $0x40] sm:$0xff] %vm349, %v753
        %792 = vst.msk [vmem:[%s299 + $0x48] sm:$0xff] %vm349, %v756
        %793 = vst.msk [vmem:[%s299 + $0x50] sm:$0xff] %vm349, %v761
        %794 = vst.msk [vmem:[%s299 + $0x58] sm:$0xff] %vm349, %v764
        %795 = vst.msk [vmem:[%s299 + $0x60] sm:$0xff] %vm349, %v769
        %796 = vst.msk [vmem:[%s299 + $0x68] sm:$0xff] %vm349, %v772
        %797 = vst.msk [vmem:[%s299 + $0x70] sm:$0xff] %vm349, %v777
        %798 = vst.msk [vmem:[%s299 + $0x78] sm:$0xff] %vm349, %v780
        %s799 = smul.u32 16, %s22
        %p800 = scmp.lt.s32.totalorder %s799, 63
        %s801 = scalar_select %p800, %s799, 63
        %s802 = smul.addr %s801, 8
        %s803 = scalar_lea.vmem %s5, %s802
        %s804 = smul.u32 16, %s22
        %p805 = scmp.lt.s32.totalorder %s804, 63
        %s806 = scalar_select %p805, %s804, 63
        %s807 = smul.addr %s806, 8
        %s808 = scalar_lea.vmem %s6, %s807
        // Predicated region
        $region49: #{_lambda_.7} parent=39 // pred_check
          %p809 = pneg %p150
        $region50: #{_lambda_.7} parent=39 // pred_check_branch
          %811 = sbr.rel (%p809) target = $region52
        $region51: #{_lambda_.7} parent=39 // pred_region
          %s812 = smul.u32 16, %s22
        $region52: #{_lambda_.7} parent=39 // pred_fallthru
          _
        // Predicated region
        $region53: #{_lambda_.7} parent=39 // pred_check
          %p813 = pneg %p176
        $region54: #{_lambda_.7} parent=39 // pred_check_branch
          %815 = sbr.rel (%p813) target = $region56
        $region55: #{_lambda_.7} parent=39 // pred_region
          %s816 = smul.u32 16, %s22
        $region56: #{_lambda_.7} parent=39 // pred_fallthru
          _
      $region40: #{_lambda_.7} parent=5 // pred_fallthru
        _
      %p817 = scmp.le.s32.totalorder 2, %s17
      // Predicated region
      $region57: #{_lambda_.7} parent=5 // pred_check
        %p818 = pneg %p817
      $region58: #{_lambda_.7} parent=5 // pred_check_branch
        %820 = sbr.rel (%p818) target = $region60
      $region59: #{_lambda_.7} parent=5 // pred_region
        %s821 = ssub.s32 %s17, 2
        // Predicated region
        $region61: #{_lambda_.7} parent=59 // pred_check
          %p822 = pneg %p156
        $region62: #{_lambda_.7} parent=59 // pred_check_branch
          %824 = sbr.rel (%p822) target = $region64
        $region63: #{_lambda_.7} parent=59 // pred_region
          %s825 = smul.u32 16, %s23
          %p826 = scmp.lt.s32.totalorder %s825, 63
          %s827 = scalar_select %p826, %s825, 63
          %s828 = smul.addr %s827, 8
          %s829 = scalar_lea.vmem %s5, %s828
        $region64: #{_lambda_.7} parent=59 // pred_fallthru
          _
        // Predicated region
        $region65: #{_lambda_.7} parent=59 // pred_check
          %p830 = pneg %p182
        $region66: #{_lambda_.7} parent=59 // pred_check_branch
          %832 = sbr.rel (%p830) target = $region68
        $region67: #{_lambda_.7} parent=59 // pred_region
          %s833 = smul.u32 16, %s23
          %p834 = scmp.lt.s32.totalorder %s833, 63
          %s835 = scalar_select %p834, %s833, 63
          %s836 = smul.addr %s835, 8
          %s837 = scalar_lea.vmem %s6, %s836
        $region68: #{_lambda_.7} parent=59 // pred_fallthru
          _
      $region60: #{_lambda_.7} parent=5 // pred_fallthru
        _
    $region6: #{_lambda_.7} parent=1 // loop_footer
      %s21 = sadd.s32 1, %s17
    $region7: #{_lambda_.7} parent=1 // loop_footer_branch
      %16 = sbr.rel target = $region3
    $region8: #{_lambda_.7} parent=1 // loop_exit
      _
    %838 = vsyncpa [#allocation3], 1
    %s839 = scalar_lea.sflag [#allocation3], 1
    %840 = vsyncpa %s839, 1
    %841 = vsyncpa [#allocation5], 1

// kernel: _lambda_.9
$region0: #{_lambda_.9}
  #allocation0 [shape = 'u32[]', space=smem, size = 0x4, offset = 0x4, fixed_abs, tag = 'smem constant byte address 0x4 - core index']
  #allocation1 [shape = 'u32[144,128]{1,0:T(1,128)}', space=vmem, size = 0x12000, scoped, tag = 'internal scratch']
  %s0 = inlined_call_operand.vmem [shape: f32[512,32], index: 0, kind: input, shape index: {}]
  %s1 = inlined_call_operand.vmem [shape: bf16[32,128], index: 1, kind: input, shape index: {}]
  %s2 = inlined_call_operand.vmem [shape: f32[1,128], index: 2, kind: input, shape index: {}]
  %s3 = inlined_call_operand.vmem [shape: f32[512,128], index: 3, kind: output, shape index: {}]
  %s4 = sld [smem:[#allocation0]]
  $region45: #{_lambda_.9} parent=0
    _
  %s6 = ssub.s32 1, %s4
  %s7 = scalar_select 0, %s6, %s4
  loop: start=0, step=1, limit=6
  $region2: #{_lambda_.9} parent=0 // loop_pre_header
    _
  $region3: #{_lambda_.9} parent=0 // loop_header
    %s9 = sphi 0, %s13
    %p10 = scmp.ge.s32.totalorder %s9, 6
    %s19 = sphi 0, %s21
    %s22 = sphi 0, %s19
    %s23 = sphi 0, %s22
    %s39 = sphi 0, %s23
    %s43 = sphi 0, %s43
    %s45 = sphi 0, %s43
    %s46 = sphi 0, %s45
    %s60 = sphi 0, %s46
    %s64 = sphi 0, %s64
    %s66 = sphi 0, %s64
    %s67 = sphi 0, %s66
    %s81 = sphi 0, %s67
    %s87 = sphi 0, %s89
    %s90 = sphi 0, %s87
    %s91 = sphi 0, %s90
    %s107 = sphi 0, %s91
  $region4: #{_lambda_.9} parent=0 // loop_header_branch
    %12 = sbr.rel (%p10) target = $region8
  $region5: #{_lambda_.9} parent=0 // loop_body
    %s14 = ssub.s32 %s9, 1
    %s15 = ssub.s32 %s9, 2
    %s16 = sadd.s32 %s9, 1
    %s17 = ssub.s32 %s9, %s16
    %p18 = scmp.eq.s32.totalorder %s17, 0
    %s20 = sadd.s32 %s19, 1
    %s21 = scalar_select %p18, %s19, %s20
    %p24 = pneg %p18
    %p25 = scmp.eq.s32.totalorder %s9, 3
    %p26 = por %p24, %p25
    %p27 = scmp.ne.s32.totalorder %s19, %s22
    %p28 = scmp.eq.s32.totalorder %s9, 0
    %p29 = por %p27, %p28
    %p30 = scmp.ne.s32.totalorder %s19, %s22
    %p31 = scmp.eq.s32.totalorder %s14, 3
    %p32 = por %p30, %p31
    %p33 = scmp.ne.s32.totalorder %s22, %s23
    %p34 = scmp.eq.s32.totalorder %s14, 0
    %p35 = por %p33, %p34
    %p36 = scmp.ne.s32.totalorder %s22, %s23
    %p37 = scmp.eq.s32.totalorder %s15, 3
    %p38 = por %p36, %p37
    %p40 = scmp.ne.s32.totalorder %s23, %s39
    %p41 = scmp.eq.s32.totalorder %s15, 0
    %p42 = por %p40, %p41
    %s44 = sadd.s32 %s43, 1
    %p47 = scmp.eq.s32.totalorder %s9, 3
    %p48 = scmp.ne.s32.totalorder %s43, %s45
    %p49 = scmp.eq.s32.totalorder %s9, 0
    %p50 = por %p48, %p49
    %p51 = scmp.ne.s32.totalorder %s43, %s45
    %p52 = scmp.eq.s32.totalorder %s14, 3
    %p53 = por %p51, %p52
    %p54 = scmp.ne.s32.totalorder %s45, %s46
    %p55 = scmp.eq.s32.totalorder %s14, 0
    %p56 = por %p54, %p55
    %p57 = scmp.ne.s32.totalorder %s45, %s46
    %p58 = scmp.eq.s32.totalorder %s15, 3
    %p59 = por %p57, %p58
    %p61 = scmp.ne.s32.totalorder %s46, %s60
    %p62 = scmp.eq.s32.totalorder %s15, 0
    %p63 = por %p61, %p62
    %s65 = sadd.s32 %s64, 1
    %p68 = scmp.eq.s32.totalorder %s9, 3
    %p69 = scmp.ne.s32.totalorder %s64, %s66
    %p70 = scmp.eq.s32.totalorder %s9, 0
    %p71 = por %p69, %p70
    %p72 = scmp.ne.s32.totalorder %s64, %s66
    %p73 = scmp.eq.s32.totalorder %s14, 3
    %p74 = por %p72, %p73
    %p75 = scmp.ne.s32.totalorder %s66, %s67
    %p76 = scmp.eq.s32.totalorder %s14, 0
    %p77 = por %p75, %p76
    %p78 = scmp.ne.s32.totalorder %s66, %s67
    %p79 = scmp.eq.s32.totalorder %s15, 3
    %p80 = por %p78, %p79
    %p82 = scmp.ne.s32.totalorder %s67, %s81
    %p83 = scmp.eq.s32.totalorder %s15, 0
    %p84 = por %p82, %p83
    %s85 = ssub.s32 %s9, %s16
    %p86 = scmp.eq.s32.totalorder %s85, 0
    %s88 = sadd.s32 %s87, 1
    %s89 = scalar_select %p86, %s87, %s88
    %p92 = pneg %p86
    %p93 = scmp.eq.s32.totalorder %s9, 3
    %p94 = por %p92, %p93
    %p95 = scmp.ne.s32.totalorder %s87, %s90
    %p96 = scmp.eq.s32.totalorder %s9, 0
    %p97 = por %p95, %p96
    %p98 = scmp.ne.s32.totalorder %s87, %s90
    %p99 = scmp.eq.s32.totalorder %s14, 3
    %p100 = por %p98, %p99
    %p101 = scmp.ne.s32.totalorder %s90, %s91
    %p102 = scmp.eq.s32.totalorder %s14, 0
    %p103 = por %p101, %p102
    %p104 = scmp.ne.s32.totalorder %s90, %s91
    %p105 = scmp.eq.s32.totalorder %s15, 3
    %p106 = por %p104, %p105
    %p108 = scmp.ne.s32.totalorder %s91, %s107
    %p109 = scmp.eq.s32.totalorder %s15, 0
    %p110 = por %p108, %p109
    %p111 = scmp.le.s32.totalorder 1, %s9
    %p112 = scmp.lt.s32.totalorder %s9, 5
    %p113 = pnand %p111, %p112
    %p114 = pneg %p113
    // Predicated region
    $region9: #{_lambda_.9} parent=5 // pred_check
      _
    $region10: #{_lambda_.9} parent=5 // pred_check_branch
      %116 = sbr.rel (%p113) target = $region12
    $region11: #{_lambda_.9} parent=5 // pred_region
      %s117 = ssub.s32 %s9, 1
      // Predicated region
      $region13: #{_lambda_.9} parent=11 // pred_check
        %p118 = pneg %p56
      $region14: #{_lambda_.9} parent=11 // pred_check_branch
        %120 = sbr.rel (%p118) target = $region16
      $region15: #{_lambda_.9} parent=11 // pred_region
        _
      $region16: #{_lambda_.9} parent=11 // pred_fallthru
        _
      // Predicated region
      $region17: #{_lambda_.9} parent=11 // pred_check
        %p121 = pneg %p77
      $region18: #{_lambda_.9} parent=11 // pred_check_branch
        %123 = sbr.rel (%p121) target = $region20
      $region19: #{_lambda_.9} parent=11 // pred_region
        _
      $region20: #{_lambda_.9} parent=11 // pred_fallthru
        _
    $region12: #{_lambda_.9} parent=5 // pred_fallthru
      _
    %p124 = scmp.lt.s32.totalorder %s9, 4
    // Predicated region
    $region21: #{_lambda_.9} parent=5 // pred_check
      %p125 = pneg %p124
    $region22: #{_lambda_.9} parent=5 // pred_check_branch
      %127 = sbr.rel (%p125) target = $region24
    $region23: #{_lambda_.9} parent=5 // pred_region
      // Predicated region
      $region25: #{_lambda_.9} parent=23 // pred_check
        %p128 = pneg %p29
      $region26: #{_lambda_.9} parent=23 // pred_check_branch
        %130 = sbr.rel (%p128) target = $region28
      $region27: #{_lambda_.9} parent=23 // pred_region
        %s131 = smul.u32 16, %s9
        %p132 = scmp.lt.s32.totalorder %s131, 63
        %s133 = scalar_select %p132, %s131, 63
        %s134 = smul.addr %s133, 8
        %s135 = scalar_lea.vmem %s0, %s134
        %s136 = smul.u32 16, %s9
      $region28: #{_lambda_.9} parent=23 // pred_fallthru
        _
    $region24: #{_lambda_.9} parent=5 // pred_fallthru
      _
    %p137 = scmp.le.s32.totalorder 1, %s9
    %p138 = scmp.lt.s32.totalorder %s9, 5
    %p139 = pnand %p137, %p138
    %p140 = pneg %p139
    // Predicated region
    $region29: #{_lambda_.9} parent=5 // pred_check
      _
    $region30: #{_lambda_.9} parent=5 // pred_check_branch
      %142 = sbr.rel (%p139) target = $region32
    $region31: #{_lambda_.9} parent=5 // pred_region
      %s143 = ssub.s32 %s9, 1
      %s144 = smul.u32 16, %s14
      %p145 = scmp.lt.s32.totalorder %s144, 63
      %s146 = scalar_select %p145, %s144, 63
      %s147 = smul.addr %s146, 8
      %s148 = scalar_lea.vmem %s0, %s147
      %p149 = pneg %p35
      %p150 = pneg %p32
      %p151 = pneg %p56
      %p152 = pneg %p53
      %p153 = pneg %p77
      %p154 = pneg %p74
      %p155 = pneg %p103
      %p156 = pneg %p100
      %s157 = smul.u32 16, %s14
      %p158 = scmp.lt.s32.totalorder %s157, 63
      %s159 = scalar_select %p158, %s157, 63
      %s160 = smul.addr %s159, 8
      %s161 = scalar_lea.vmem %s3, %s160
      %s162 = smul.u32 16, %s14
      %p163 = scmp.lt.s32.totalorder %s162, 63
      %s164 = scalar_select %p163, %s162, 63
      %s165 = smul.addr %s164, 8
      %s166 = scalar_lea.vmem %s0, %s165
      %s167 = smul.u32 16, %s14
      %s168 = smul.u32 16, %s14
      %p169 = scmp.lt.s32.totalorder %s168, 63
      %s170 = scalar_select %p169, %s168, 63
      %s171 = smul.addr %s170, 8
      %s172 = scalar_lea.vmem %s3, %s171
      %s173 = smul.u32 16, %s14
      %v175 = vld [vmem:[%s166] sm:$0xff]
      %v176 = vld [vmem:[%s166 + $0x8] sm:$0xff]
      %v177 = vld [vmem:[%s166 + $0x10] sm:$0xff]
      %v178 = vld [vmem:[%s166 + $0x18] sm:$0xff]
      %v179 = vld [vmem:[%s166 + $0x20] sm:$0xff]
      %v180 = vld [vmem:[%s166 + $0x28] sm:$0xff]
      %v181 = vld [vmem:[%s166 + $0x30] sm:$0xff]
      %v182 = vld [vmem:[%s166 + $0x38] sm:$0xff]
      %v183 = vld [vmem:[%s166 + $0x40] sm:$0xff]
      %v184 = vld [vmem:[%s166 + $0x48] sm:$0xff]
      %v185 = vld [vmem:[%s166 + $0x50] sm:$0xff]
      %v186 = vld [vmem:[%s166 + $0x58] sm:$0xff]
      %v187 = vld [vmem:[%s166 + $0x60] sm:$0xff]
      %v188 = vld [vmem:[%s166 + $0x68] sm:$0xff]
      %v189 = vld [vmem:[%s166 + $0x70] sm:$0xff]
      %v190 = vld [vmem:[%s166 + $0x78] sm:$0xff]
      %v191 = vpack.c.bf16 %v176, %v175
      %v192 = vpack.c.bf16 %v178, %v177
      %v193 = vpack.c.bf16 %v180, %v179
      %v194 = vpack.c.bf16 %v182, %v181
      %v195 = vpack.c.bf16 %v184, %v183
      %v196 = vpack.c.bf16 %v186, %v185
      %v197 = vpack.c.bf16 %v188, %v187
      %v198 = vpack.c.bf16 %v190, %v189
      %v199 = vld [vmem:[%s1] sm:$0xf]
      %v200 = vld [vmem:[%s1 + $0x4] sm:$0xf]
      %v201 = vld [vmem:[%s1 + $0x8] sm:$0xf]
      %v202 = vld [vmem:[%s1 + $0xc] sm:$0xf]
      %v203 = vld [vmem:[%s2] sm:$0x1]
      %v205 = vlaneseq
      %v206 = vshrl.u32 %v205, 7
      %v207 = vsub.s32 0, %v206
      %v208 = vrot.slane %v203, %v207
      %v214 = vunpack.c.l.b16 %v199
      %v215 = vunpack.c.l.b16 %v200
      %v216 = vunpack.c.l.b16 %v201
      %v217 = vunpack.c.l.b16 %v202
      %v218 = vpack.c.b16 %v215, %v214
      %v219 = vpack.c.b16 %v217, %v216
      %vm222 = vcmask 261120
      %v224 = vsel %vm222, %v191, 0
      %v227 = vsel %vm222, %v192, 0
      %v230 = vsel %vm222, %v193, 0
      %v233 = vsel %vm222, %v194, 0
      %v236 = vsel %vm222, %v195, 0
      %v239 = vsel %vm222, %v196, 0
      %v242 = vsel %vm222, %v197, 0
      %v245 = vsel %vm222, %v198, 0
      %247 = vmatprep.subr.bf16.mxu0 0
      %248 = vmatpush1.bf16.msra.mxu0 0
      %249 = vmatprep.subr.bf16.mxu0 0
      %250 = vmatpush1.bf16.msra.mxu0 0
      %251 = vmatprep.subr.bf16.mxu0 0
      %252 = vmatpush1.bf16.msra.mxu0 0
      %253 = vmatprep.subr.bf16.mxu0 0
      %254 = vmatpush1.bf16.msra.mxu0 0
      %255 = vmatprep.subr.bf16.mxu0 0
      %256 = vmatpush1.bf16.msra.mxu0 0
      %257 = vmatprep.subr.bf16.mxu0 0
      %258 = vmatpush1.bf16.msra.mxu0 0
      %259 = vmatprep.subr.bf16.mxu0 0
      %260 = vmatpush1.bf16.msra.mxu0 %v219
      %261 = vmatprep.subr.bf16.mxu0 0
      %262 = vmatpush1.bf16.msra.mxu0 %v218
      %263 = vmatprep.subr.bf16.mxu0 0
      %264 = vmatpush2.bf16.msra.mxu0 0
      %265 = vmatprep.subr.bf16.mxu0 0
      %266 = vmatpush2.bf16.msra.mxu0 0
      %267 = vmatprep.subr.bf16.mxu0 0
      %268 = vmatpush2.bf16.msra.mxu0 0
      %269 = vmatprep.subr.bf16.mxu0 0
      %270 = vmatpush2.bf16.msra.mxu0 0
      %271 = vmatprep.subr.bf16.mxu0 0
      %272 = vmatpush2.bf16.msra.mxu0 0
      %273 = vmatprep.subr.bf16.mxu0 0
      %274 = vmatpush2.bf16.msra.mxu0 0
      %275 = vmatprep.subr.bf16.mxu0 0
      %276 = vmatpush2.bf16.msra.mxu0 0
      %277 = vmatprep.subr.bf16.mxu0 0
      %278 = vmatpush2.bf16.msra.mxu0 0
      %279 = vmatprep.mubr.bf16.mxu0 0
      %280 = vmatmul.mubr.bf16.gmra.mxu0 %v224
      %v281 = vpop.f32.mrf.mxu0
      %v282 = vadd.f32 %v208, %v281
      %v283 = vpop.f32.mrf.mxu0
      %v284 = vpop.f32.mrf.mxu0
      %v285 = vadd.f32 %v208, %v284
      %v286 = vpop.f32.mrf.mxu0
      %287 = vmatprep.mubr.bf16.mxu0 0
      %288 = vmatmul.mubr.bf16.gmra.mxu0 %v227
      %v289 = vpop.f32.mrf.mxu0
      %v290 = vadd.f32 %v208, %v289
      %v291 = vpop.f32.mrf.mxu0
      %v292 = vpop.f32.mrf.mxu0
      %v293 = vadd.f32 %v208, %v292
      %v294 = vpop.f32.mrf.mxu0
      %295 = vmatprep.mubr.bf16.mxu0 0
      %296 = vmatmul.mubr.bf16.gmra.mxu0 %v230
      %v297 = vpop.f32.mrf.mxu0
      %v298 = vadd.f32 %v208, %v297
      %v299 = vpop.f32.mrf.mxu0
      %v300 = vpop.f32.mrf.mxu0
      %v301 = vadd.f32 %v208, %v300
      %v302 = vpop.f32.mrf.mxu0
      %303 = vmatprep.mubr.bf16.mxu0 0
      %304 = vmatmul.mubr.bf16.gmra.mxu0 %v233
      %v305 = vpop.f32.mrf.mxu0
      %v306 = vadd.f32 %v208, %v305
      %v307 = vpop.f32.mrf.mxu0
      %v308 = vpop.f32.mrf.mxu0
      %v309 = vadd.f32 %v208, %v308
      %v310 = vpop.f32.mrf.mxu0
      %311 = vmatprep.mubr.bf16.mxu0 0
      %312 = vmatmul.mubr.bf16.gmra.mxu0 %v236
      %v313 = vpop.f32.mrf.mxu0
      %v314 = vadd.f32 %v208, %v313
      %v315 = vpop.f32.mrf.mxu0
      %v316 = vpop.f32.mrf.mxu0
      %v317 = vadd.f32 %v208, %v316
      %v318 = vpop.f32.mrf.mxu0
      %319 = vmatprep.mubr.bf16.mxu0 0
      %320 = vmatmul.mubr.bf16.gmra.mxu0 %v239
      %v321 = vpop.f32.mrf.mxu0
      %v322 = vadd.f32 %v208, %v321
      %v323 = vpop.f32.mrf.mxu0
      %v324 = vpop.f32.mrf.mxu0
      %v325 = vadd.f32 %v208, %v324
      %v326 = vpop.f32.mrf.mxu0
      %327 = vmatprep.mubr.bf16.mxu0 0
      %328 = vmatmul.mubr.bf16.gmra.mxu0 %v242
      %v329 = vpop.f32.mrf.mxu0
      %v330 = vadd.f32 %v208, %v329
      %v331 = vpop.f32.mrf.mxu0
      %v332 = vpop.f32.mrf.mxu0
      %v333 = vadd.f32 %v208, %v332
      %v334 = vpop.f32.mrf.mxu0
      %335 = vmatprep.mubr.bf16.mxu0 0
      %336 = vmatmul.mubr.bf16.gmra.mxu0 %v245
      %v337 = vpop.f32.mrf.mxu0
      %v338 = vadd.f32 %v208, %v337
      %v339 = vpop.f32.mrf.mxu0
      %v340 = vpop.f32.mrf.mxu0
      %v341 = vadd.f32 %v208, %v340
      %v342 = vpop.f32.mrf.mxu0
      %343 = vdwg.mxu0
      %344 = vst [vmem:[%s172] sm:$0xff] %v282
      %345 = vst [vmem:[%s172 + $0x8] sm:$0xff] %v285
      %346 = vst [vmem:[%s172 + $0x10] sm:$0xff] %v290
      %347 = vst [vmem:[%s172 + $0x18] sm:$0xff] %v293
      %348 = vst [vmem:[%s172 + $0x20] sm:$0xff] %v298
      %349 = vst [vmem:[%s172 + $0x28] sm:$0xff] %v301
      %350 = vst [vmem:[%s172 + $0x30] sm:$0xff] %v306
      %351 = vst [vmem:[%s172 + $0x38] sm:$0xff] %v309
      %352 = vst [vmem:[%s172 + $0x40] sm:$0xff] %v314
      %353 = vst [vmem:[%s172 + $0x48] sm:$0xff] %v317
      %354 = vst [vmem:[%s172 + $0x50] sm:$0xff] %v322
      %355 = vst [vmem:[%s172 + $0x58] sm:$0xff] %v325
      %356 = vst [vmem:[%s172 + $0x60] sm:$0xff] %v330
      %357 = vst [vmem:[%s172 + $0x68] sm:$0xff] %v333
      %358 = vst [vmem:[%s172 + $0x70] sm:$0xff] %v338
      %359 = vst [vmem:[%s172 + $0x78] sm:$0xff] %v341
      %vm360 = vcmask 367904
      %v361 = vsel %vm360, %v282, -inf
      %362 = vmax.xlane.f32.xlu0 %v361
      %v363 = vpop.xlane.xlu0 %362
      %v364 = vsel %vm360, %v285, -inf
      %365 = vmax.xlane.f32.xlu0 %v364
      %v366 = vpop.xlane.xlu0 %365
      %v367 = vsel %vm360, %v290, -inf
      %368 = vmax.xlane.f32.xlu0 %v367
      %v369 = vpop.xlane.xlu0 %368
      %v370 = vsel %vm360, %v293, -inf
      %371 = vmax.xlane.f32.xlu0 %v370
      %v372 = vpop.xlane.xlu0 %371
      %v373 = vsel %vm360, %v298, -inf
      %374 = vmax.xlane.f32.xlu0 %v373
      %v375 = vpop.xlane.xlu0 %374
      %v376 = vsel %vm360, %v301, -inf
      %377 = vmax.xlane.f32.xlu0 %v376
      %v378 = vpop.xlane.xlu0 %377
      %v379 = vsel %vm360, %v306, -inf
      %380 = vmax.xlane.f32.xlu0 %v379
      %v381 = vpop.xlane.xlu0 %380
      %v382 = vsel %vm360, %v309, -inf
      %383 = vmax.xlane.f32.xlu0 %v382
      %v384 = vpop.xlane.xlu0 %383
      %v385 = vsel %vm360, %v314, -inf
      %386 = vmax.xlane.f32.xlu0 %v385
      %v387 = vpop.xlane.xlu0 %386
      %v388 = vsel %vm360, %v317, -inf
      %389 = vmax.xlane.f32.xlu0 %v388
      %v390 = vpop.xlane.xlu0 %389
      %v391 = vsel %vm360, %v322, -inf
      %392 = vmax.xlane.f32.xlu0 %v391
      %v393 = vpop.xlane.xlu0 %392
      %v394 = vsel %vm360, %v325, -inf
      %395 = vmax.xlane.f32.xlu0 %v394
      %v396 = vpop.xlane.xlu0 %395
      %v397 = vsel %vm360, %v330, -inf
      %398 = vmax.xlane.f32.xlu0 %v397
      %v399 = vpop.xlane.xlu0 %398
      %v400 = vsel %vm360, %v333, -inf
      %401 = vmax.xlane.f32.xlu0 %v400
      %v402 = vpop.xlane.xlu0 %401
      %v403 = vsel %vm360, %v338, -inf
      %404 = vmax.xlane.f32.xlu0 %v403
      %v405 = vpop.xlane.xlu0 %404
      %v406 = vsel %vm360, %v341, -inf
      %407 = vmax.xlane.f32.xlu0 %v406
      %v408 = vpop.xlane.xlu0 %407
      %v409 = vsub.f32 %v282, %v363
      %v410 = vsub.f32 %v285, %v366
      %v411 = vsub.f32 %v290, %v369
      %v412 = vsub.f32 %v293, %v372
      %v413 = vsub.f32 %v298, %v375
      %v414 = vsub.f32 %v301, %v378
      %v415 = vsub.f32 %v306, %v381
      %v416 = vsub.f32 %v309, %v384
      %v417 = vsub.f32 %v314, %v387
      %v418 = vsub.f32 %v317, %v390
      %v419 = vsub.f32 %v322, %v393
      %v420 = vsub.f32 %v325, %v396
      %v421 = vsub.f32 %v330, %v399
      %v422 = vsub.f32 %v333, %v402
      %v423 = vsub.f32 %v338, %v405
      %v424 = vsub.f32 %v341, %v408
      %v425 = vmul.f32 %v409, 1.442695
      %v426 = vpow.pop %v425
      %v427 = vmul.f32 %v410, 1.442695
      %v428 = vpow.pop %v427
      %v429 = vmul.f32 %v411, 1.442695
      %v430 = vpow.pop %v429
      %v431 = vmul.f32 %v412, 1.442695
      %v432 = vpow.pop %v431
      %v433 = vmul.f32 %v413, 1.442695
      %v434 = vpow.pop %v433
      %v435 = vmul.f32 %v414, 1.442695
      %v436 = vpow.pop %v435
      %v437 = vmul.f32 %v415, 1.442695
      %v438 = vpow.pop %v437
      %v439 = vmul.f32 %v416, 1.442695
      %v440 = vpow.pop %v439
      %v441 = vmul.f32 %v417, 1.442695
      %v442 = vpow.pop %v441
      %v443 = vmul.f32 %v418, 1.442695
      %v444 = vpow.pop %v443
      %v445 = vmul.f32 %v419, 1.442695
      %v446 = vpow.pop %v445
      %v447 = vmul.f32 %v420, 1.442695
      %v448 = vpow.pop %v447
      %v449 = vmul.f32 %v421, 1.442695
      %v450 = vpow.pop %v449
      %v451 = vmul.f32 %v422, 1.442695
      %v452 = vpow.pop %v451
      %v453 = vmul.f32 %v423, 1.442695
      %v454 = vpow.pop %v453
      %v455 = vmul.f32 %v424, 1.442695
      %v456 = vpow.pop %v455
      %473 = vrot.lane.b32.xlu0 %v426, 92
      %v474 = vpop.permute.xlu0 %473
      %475 = vrot.lane.b32.xlu0 %v428, 92
      %v476 = vpop.permute.xlu0 %475
      %477 = vrot.lane.b32.xlu0 %v430, 92
      %v478 = vpop.permute.xlu0 %477
      %479 = vrot.lane.b32.xlu0 %v432, 92
      %v480 = vpop.permute.xlu0 %479
      %481 = vrot.lane.b32.xlu0 %v434, 92
      %v482 = vpop.permute.xlu0 %481
      %483 = vrot.lane.b32.xlu0 %v436, 92
      %v484 = vpop.permute.xlu0 %483
      %485 = vrot.lane.b32.xlu0 %v438, 92
      %v486 = vpop.permute.xlu0 %485
      %487 = vrot.lane.b32.xlu0 %v440, 92
      %v488 = vpop.permute.xlu0 %487
      %489 = vrot.lane.b32.xlu0 %v442, 92
      %v490 = vpop.permute.xlu0 %489
      %491 = vrot.lane.b32.xlu0 %v444, 92
      %v492 = vpop.permute.xlu0 %491
      %493 = vrot.lane.b32.xlu0 %v446, 92
      %v494 = vpop.permute.xlu0 %493
      %495 = vrot.lane.b32.xlu0 %v448, 92
      %v496 = vpop.permute.xlu0 %495
      %497 = vrot.lane.b32.xlu0 %v450, 92
      %v498 = vpop.permute.xlu0 %497
      %499 = vrot.lane.b32.xlu0 %v452, 92
      %v500 = vpop.permute.xlu0 %499
      %501 = vrot.lane.b32.xlu0 %v454, 92
      %v502 = vpop.permute.xlu0 %501
      %503 = vrot.lane.b32.xlu0 %v456, 92
      %v504 = vpop.permute.xlu0 %503
      %vm521 = vcmask 72704
      %v522 = vsel %vm521, %v474, 0.0
      %523 = vadd.xlane.f32.xlu0 %v522
      %v524 = vpop.xlane.xlu0 %523
      %v525 = vsel %vm521, %v476, 0.0
      %526 = vadd.xlane.f32.xlu0 %v525
      %v527 = vpop.xlane.xlu0 %526
      %v528 = vsel %vm521, %v478, 0.0
      %529 = vadd.xlane.f32.xlu0 %v528
      %v530 = vpop.xlane.xlu0 %529
      %v531 = vsel %vm521, %v480, 0.0
      %532 = vadd.xlane.f32.xlu0 %v531
      %v533 = vpop.xlane.xlu0 %532
      %v534 = vsel %vm521, %v482, 0.0
      %535 = vadd.xlane.f32.xlu0 %v534
      %v536 = vpop.xlane.xlu0 %535
      %v537 = vsel %vm521, %v484, 0.0
      %538 = vadd.xlane.f32.xlu0 %v537
      %v539 = vpop.xlane.xlu0 %538
      %v540 = vsel %vm521, %v486, 0.0
      %541 = vadd.xlane.f32.xlu0 %v540
      %v542 = vpop.xlane.xlu0 %541
      %v543 = vsel %vm521, %v488, 0.0
      %544 = vadd.xlane.f32.xlu0 %v543
      %v545 = vpop.xlane.xlu0 %544
      %v546 = vsel %vm521, %v490, 0.0
      %547 = vadd.xlane.f32.xlu0 %v546
      %v548 = vpop.xlane.xlu0 %547
      %v549 = vsel %vm521, %v492, 0.0
      %550 = vadd.xlane.f32.xlu0 %v549
      %v551 = vpop.xlane.xlu0 %550
      %v552 = vsel %vm521, %v494, 0.0
      %553 = vadd.xlane.f32.xlu0 %v552
      %v554 = vpop.xlane.xlu0 %553
      %v555 = vsel %vm521, %v496, 0.0
      %556 = vadd.xlane.f32.xlu0 %v555
      %v557 = vpop.xlane.xlu0 %556
      %v558 = vsel %vm521, %v498, 0.0
      %559 = vadd.xlane.f32.xlu0 %v558
      %v560 = vpop.xlane.xlu0 %559
      %v561 = vsel %vm521, %v500, 0.0
      %562 = vadd.xlane.f32.xlu0 %v561
      %v563 = vpop.xlane.xlu0 %562
      %v564 = vsel %vm521, %v502, 0.0
      %565 = vadd.xlane.f32.xlu0 %v564
      %v566 = vpop.xlane.xlu0 %565
      %v567 = vsel %vm521, %v504, 0.0
      %568 = vadd.xlane.f32.xlu0 %v567
      %v569 = vpop.xlane.xlu0 %568
      %v570 = vrcp.pop %v524
      %v571 = vrcp.pop %v527
      %v572 = vrcp.pop %v530
      %v573 = vrcp.pop %v533
      %v574 = vrcp.pop %v536
      %v575 = vrcp.pop %v539
      %v576 = vrcp.pop %v542
      %v577 = vrcp.pop %v545
      %v578 = vrcp.pop %v548
      %v579 = vrcp.pop %v551
      %v580 = vrcp.pop %v554
      %v581 = vrcp.pop %v557
      %v582 = vrcp.pop %v560
      %v583 = vrcp.pop %v563
      %v584 = vrcp.pop %v566
      %v585 = vrcp.pop %v569
      %v586 = vmul.f32 %v426, %v570
      %v587 = vmul.f32 %v428, %v571
      %v588 = vmul.f32 %v430, %v572
      %v589 = vmul.f32 %v432, %v573
      %v590 = vmul.f32 %v434, %v574
      %v591 = vmul.f32 %v436, %v575
      %v592 = vmul.f32 %v438, %v576
      %v593 = vmul.f32 %v440, %v577
      %v594 = vmul.f32 %v442, %v578
      %v595 = vmul.f32 %v444, %v579
      %v596 = vmul.f32 %v446, %v580
      %v597 = vmul.f32 %v448, %v581
      %v598 = vmul.f32 %v450, %v582
      %v599 = vmul.f32 %v452, %v583
      %v600 = vmul.f32 %v454, %v584
      %v601 = vmul.f32 %v456, %v585
      %602 = vst.msk [vmem:[%s172] sm:$0xff] %vm360, %v586
      %603 = vst.msk [vmem:[%s172 + $0x8] sm:$0xff] %vm360, %v587
      %604 = vst.msk [vmem:[%s172 + $0x10] sm:$0xff] %vm360, %v588
      %605 = vst.msk [vmem:[%s172 + $0x18] sm:$0xff] %vm360, %v589
      %606 = vst.msk [vmem:[%s172 + $0x20] sm:$0xff] %vm360, %v590
      %607 = vst.msk [vmem:[%s172 + $0x28] sm:$0xff] %vm360, %v591
      %608 = vst.msk [vmem:[%s172 + $0x30] sm:$0xff] %vm360, %v592
      %609 = vst.msk [vmem:[%s172 + $0x38] sm:$0xff] %vm360, %v593
      %610 = vst.msk [vmem:[%s172 + $0x40] sm:$0xff] %vm360, %v594
      %611 = vst.msk [vmem:[%s172 + $0x48] sm:$0xff] %vm360, %v595
      %612 = vst.msk [vmem:[%s172 + $0x50] sm:$0xff] %vm360, %v596
      %613 = vst.msk [vmem:[%s172 + $0x58] sm:$0xff] %vm360, %v597
      %614 = vst.msk [vmem:[%s172 + $0x60] sm:$0xff] %vm360, %v598
      %615 = vst.msk [vmem:[%s172 + $0x68] sm:$0xff] %vm360, %v599
      %616 = vst.msk [vmem:[%s172 + $0x70] sm:$0xff] %vm360, %v600
      %617 = vst.msk [vmem:[%s172 + $0x78] sm:$0xff] %vm360, %v601
      %vm618 = vcmask 441704
      %v619 = vsel %vm618, %v282, -inf
      %620 = vmax.xlane.f32.xlu0 %v619
      %v621 = vpop.xlane.xlu0 %620
      %v622 = vsel %vm618, %v285, -inf
      %623 = vmax.xlane.f32.xlu0 %v622
      %v624 = vpop.xlane.xlu0 %623
      %v625 = vsel %vm618, %v290, -inf
      %626 = vmax.xlane.f32.xlu0 %v625
      %v627 = vpop.xlane.xlu0 %626
      %v628 = vsel %vm618, %v293, -inf
      %629 = vmax.xlane.f32.xlu0 %v628
      %v630 = vpop.xlane.xlu0 %629
      %v631 = vsel %vm618, %v298, -inf
      %632 = vmax.xlane.f32.xlu0 %v631
      %v633 = vpop.xlane.xlu0 %632
      %v634 = vsel %vm618, %v301, -inf
      %635 = vmax.xlane.f32.xlu0 %v634
      %v636 = vpop.xlane.xlu0 %635
      %v637 = vsel %vm618, %v306, -inf
      %638 = vmax.xlane.f32.xlu0 %v637
      %v639 = vpop.xlane.xlu0 %638
      %v640 = vsel %vm618, %v309, -inf
      %641 = vmax.xlane.f32.xlu0 %v640
      %v642 = vpop.xlane.xlu0 %641
      %v643 = vsel %vm618, %v314, -inf
      %644 = vmax.xlane.f32.xlu0 %v643
      %v645 = vpop.xlane.xlu0 %644
      %v646 = vsel %vm618, %v317, -inf
      %647 = vmax.xlane.f32.xlu0 %v646
      %v648 = vpop.xlane.xlu0 %647
      %v649 = vsel %vm618, %v322, -inf
      %650 = vmax.xlane.f32.xlu0 %v649
      %v651 = vpop.xlane.xlu0 %650
      %v652 = vsel %vm618, %v325, -inf
      %653 = vmax.xlane.f32.xlu0 %v652
      %v654 = vpop.xlane.xlu0 %653
      %v655 = vsel %vm618, %v330, -inf
      %656 = vmax.xlane.f32.xlu0 %v655
      %v657 = vpop.xlane.xlu0 %656
      %v658 = vsel %vm618, %v333, -inf
      %659 = vmax.xlane.f32.xlu0 %v658
      %v660 = vpop.xlane.xlu0 %659
      %v661 = vsel %vm618, %v338, -inf
      %662 = vmax.xlane.f32.xlu0 %v661
      %v663 = vpop.xlane.xlu0 %662
      %v664 = vsel %vm618, %v341, -inf
      %665 = vmax.xlane.f32.xlu0 %v664
      %v666 = vpop.xlane.xlu0 %665
      %v667 = vsub.f32 %v282, %v621
      %v668 = vsub.f32 %v285, %v624
      %v669 = vsub.f32 %v290, %v627
      %v670 = vsub.f32 %v293, %v630
      %v671 = vsub.f32 %v298, %v633
      %v672 = vsub.f32 %v301, %v636
      %v673 = vsub.f32 %v306, %v639
      %v674 = vsub.f32 %v309, %v642
      %v675 = vsub.f32 %v314, %v645
      %v676 = vsub.f32 %v317, %v648
      %v677 = vsub.f32 %v322, %v651
      %v678 = vsub.f32 %v325, %v654
      %v679 = vsub.f32 %v330, %v657
      %v680 = vsub.f32 %v333, %v660
      %v681 = vsub.f32 %v338, %v663
      %v682 = vsub.f32 %v341, %v666
      %v683 = vmul.f32 %v667, 1.442695
      %v684 = vpow.pop %v683
      %v685 = vmul.f32 %v668, 1.442695
      %v686 = vpow.pop %v685
      %v687 = vmul.f32 %v669, 1.442695
      %v688 = vpow.pop %v687
      %v689 = vmul.f32 %v670, 1.442695
      %v690 = vpow.pop %v689
      %v691 = vmul.f32 %v671, 1.442695
      %v692 = vpow.pop %v691
      %v693 = vmul.f32 %v672, 1.442695
      %v694 = vpow.pop %v693
      %v695 = vmul.f32 %v673, 1.442695
      %v696 = vpow.pop %v695
      %v697 = vmul.f32 %v674, 1.442695
      %v698 = vpow.pop %v697
      %v699 = vmul.f32 %v675, 1.442695
      %v700 = vpow.pop %v699
      %v701 = vmul.f32 %v676, 1.442695
      %v702 = vpow.pop %v701
      %v703 = vmul.f32 %v677, 1.442695
      %v704 = vpow.pop %v703
      %v705 = vmul.f32 %v678, 1.442695
      %v706 = vpow.pop %v705
      %v707 = vmul.f32 %v679, 1.442695
      %v708 = vpow.pop %v707
      %v709 = vmul.f32 %v680, 1.442695
      %v710 = vpow.pop %v709
      %v711 = vmul.f32 %v681, 1.442695
      %v712 = vpow.pop %v711
      %v713 = vmul.f32 %v682, 1.442695
      %v714 = vpow.pop %v713
      %731 = vrot.lane.b32.xlu0 %v684, 83
      %v732 = vpop.permute.xlu0 %731
      %733 = vrot.lane.b32.xlu0 %v686, 83
      %v734 = vpop.permute.xlu0 %733
      %735 = vrot.lane.b32.xlu0 %v688, 83
      %v736 = vpop.permute.xlu0 %735
      %737 = vrot.lane.b32.xlu0 %v690, 83
      %v738 = vpop.permute.xlu0 %737
      %739 = vrot.lane.b32.xlu0 %v692, 83
      %v740 = vpop.permute.xlu0 %739
      %741 = vrot.lane.b32.xlu0 %v694, 83
      %v742 = vpop.permute.xlu0 %741
      %743 = vrot.lane.b32.xlu0 %v696, 83
      %v744 = vpop.permute.xlu0 %743
      %745 = vrot.lane.b32.xlu0 %v698, 83
      %v746 = vpop.permute.xlu0 %745
      %747 = vrot.lane.b32.xlu0 %v700, 83
      %v748 = vpop.permute.xlu0 %747
      %749 = vrot.lane.b32.xlu0 %v702, 83
      %v750 = vpop.permute.xlu0 %749
      %751 = vrot.lane.b32.xlu0 %v704, 83
      %v752 = vpop.permute.xlu0 %751
      %753 = vrot.lane.b32.xlu0 %v706, 83
      %v754 = vpop.permute.xlu0 %753
      %755 = vrot.lane.b32.xlu0 %v708, 83
      %v756 = vpop.permute.xlu0 %755
      %757 = vrot.lane.b32.xlu0 %v710, 83
      %v758 = vpop.permute.xlu0 %757
      %759 = vrot.lane.b32.xlu0 %v712, 83
      %v760 = vpop.permute.xlu0 %759
      %761 = vrot.lane.b32.xlu0 %v714, 83
      %v762 = vpop.permute.xlu0 %761
      %v779 = vsel %vm521, %v732, 0.0
      %780 = vadd.xlane.f32.xlu0 %v779
      %v781 = vpop.xlane.xlu0 %780
      %v782 = vsel %vm521, %v734, 0.0
      %783 = vadd.xlane.f32.xlu0 %v782
      %v784 = vpop.xlane.xlu0 %783
      %v785 = vsel %vm521, %v736, 0.0
      %786 = vadd.xlane.f32.xlu0 %v785
      %v787 = vpop.xlane.xlu0 %786
      %v788 = vsel %vm521, %v738, 0.0
      %789 = vadd.xlane.f32.xlu0 %v788
      %v790 = vpop.xlane.xlu0 %789
      %v791 = vsel %vm521, %v740, 0.0
      %792 = vadd.xlane.f32.xlu0 %v791
      %v793 = vpop.xlane.xlu0 %792
      %v794 = vsel %vm521, %v742, 0.0
      %795 = vadd.xlane.f32.xlu0 %v794
      %v796 = vpop.xlane.xlu0 %795
      %v797 = vsel %vm521, %v744, 0.0
      %798 = vadd.xlane.f32.xlu0 %v797
      %v799 = vpop.xlane.xlu0 %798
      %v800 = vsel %vm521, %v746, 0.0
      %801 = vadd.xlane.f32.xlu0 %v800
      %v802 = vpop.xlane.xlu0 %801
      %v803 = vsel %vm521, %v748, 0.0
      %804 = vadd.xlane.f32.xlu0 %v803
      %v805 = vpop.xlane.xlu0 %804
      %v806 = vsel %vm521, %v750, 0.0
      %807 = vadd.xlane.f32.xlu0 %v806
      %v808 = vpop.xlane.xlu0 %807
      %v809 = vsel %vm521, %v752, 0.0
      %810 = vadd.xlane.f32.xlu0 %v809
      %v811 = vpop.xlane.xlu0 %810
      %v812 = vsel %vm521, %v754, 0.0
      %813 = vadd.xlane.f32.xlu0 %v812
      %v814 = vpop.xlane.xlu0 %813
      %v815 = vsel %vm521, %v756, 0.0
      %816 = vadd.xlane.f32.xlu0 %v815
      %v817 = vpop.xlane.xlu0 %816
      %v818 = vsel %vm521, %v758, 0.0
      %819 = vadd.xlane.f32.xlu0 %v818
      %v820 = vpop.xlane.xlu0 %819
      %v821 = vsel %vm521, %v760, 0.0
      %822 = vadd.xlane.f32.xlu0 %v821
      %v823 = vpop.xlane.xlu0 %822
      %v824 = vsel %vm521, %v762, 0.0
      %825 = vadd.xlane.f32.xlu0 %v824
      %v826 = vpop.xlane.xlu0 %825
      %v827 = vrcp.pop %v781
      %v828 = vrcp.pop %v784
      %v829 = vrcp.pop %v787
      %v830 = vrcp.pop %v790
      %v831 = vrcp.pop %v793
      %v832 = vrcp.pop %v796
      %v833 = vrcp.pop %v799
      %v834 = vrcp.pop %v802
      %v835 = vrcp.pop %v805
      %v836 = vrcp.pop %v808
      %v837 = vrcp.pop %v811
      %v838 = vrcp.pop %v814
      %v839 = vrcp.pop %v817
      %v840 = vrcp.pop %v820
      %v841 = vrcp.pop %v823
      %v842 = vrcp.pop %v826
      %v843 = vmul.f32 %v684, %v827
      %v844 = vmul.f32 %v686, %v828
      %v845 = vmul.f32 %v688, %v829
      %v846 = vmul.f32 %v690, %v830
      %v847 = vmul.f32 %v692, %v831
      %v848 = vmul.f32 %v694, %v832
      %v849 = vmul.f32 %v696, %v833
      %v850 = vmul.f32 %v698, %v834
      %v851 = vmul.f32 %v700, %v835
      %v852 = vmul.f32 %v702, %v836
      %v853 = vmul.f32 %v704, %v837
      %v854 = vmul.f32 %v706, %v838
      %v855 = vmul.f32 %v708, %v839
      %v856 = vmul.f32 %v710, %v840
      %v857 = vmul.f32 %v712, %v841
      %v858 = vmul.f32 %v714, %v842
      %859 = vst.msk [vmem:[%s172] sm:$0xff] %vm618, %v843
      %860 = vst.msk [vmem:[%s172 + $0x8] sm:$0xff] %vm618, %v844
      %861 = vst.msk [vmem:[%s172 + $0x10] sm:$0xff] %vm618, %v845
      %862 = vst.msk [vmem:[%s172 + $0x18] sm:$0xff] %vm618, %v846
      %863 = vst.msk [vmem:[%s172 + $0x20] sm:$0xff] %vm618, %v847
      %864 = vst.msk [vmem:[%s172 + $0x28] sm:$0xff] %vm618, %v848
      %865 = vst.msk [vmem:[%s172 + $0x30] sm:$0xff] %vm618, %v849
      %866 = vst.msk [vmem:[%s172 + $0x38] sm:$0xff] %vm618, %v850
      %867 = vst.msk [vmem:[%s172 + $0x40] sm:$0xff] %vm618, %v851
      %868 = vst.msk [vmem:[%s172 + $0x48] sm:$0xff] %vm618, %v852
      %869 = vst.msk [vmem:[%s172 + $0x50] sm:$0xff] %vm618, %v853
      %870 = vst.msk [vmem:[%s172 + $0x58] sm:$0xff] %vm618, %v854
      %871 = vst.msk [vmem:[%s172 + $0x60] sm:$0xff] %vm618, %v855
      %872 = vst.msk [vmem:[%s172 + $0x68] sm:$0xff] %vm618, %v856
      %873 = vst.msk [vmem:[%s172 + $0x70] sm:$0xff] %vm618, %v857
      %874 = vst.msk [vmem:[%s172 + $0x78] sm:$0xff] %vm618, %v858
      %s875 = smul.u32 16, %s14
      %p876 = scmp.lt.s32.totalorder %s875, 63
      %s877 = scalar_select %p876, %s875, 63
      %s878 = smul.addr %s877, 8
      %s879 = scalar_lea.vmem %s3, %s878
      // Predicated region
      $region33: #{_lambda_.9} parent=31 // pred_check
        %p880 = pneg %p100
      $region34: #{_lambda_.9} parent=31 // pred_check_branch
        %882 = sbr.rel (%p880) target = $region36
      $region35: #{_lambda_.9} parent=31 // pred_region
        %s883 = smul.u32 16, %s14
      $region36: #{_lambda_.9} parent=31 // pred_fallthru
        _
    $region32: #{_lambda_.9} parent=5 // pred_fallthru
      _
    %p884 = scmp.le.s32.totalorder 2, %s9
    // Predicated region
    $region37: #{_lambda_.9} parent=5 // pred_check
      %p885 = pneg %p884
    $region38: #{_lambda_.9} parent=5 // pred_check_branch
      %887 = sbr.rel (%p885) target = $region40
    $region39: #{_lambda_.9} parent=5 // pred_region
      %s888 = ssub.s32 %s9, 2
      // Predicated region
      $region41: #{_lambda_.9} parent=39 // pred_check
        %p889 = pneg %p106
      $region42: #{_lambda_.9} parent=39 // pred_check_branch
        %891 = sbr.rel (%p889) target = $region44
      $region43: #{_lambda_.9} parent=39 // pred_region
        %s892 = smul.u32 16, %s15
        %p893 = scmp.lt.s32.totalorder %s892, 63
        %s894 = scalar_select %p893, %s892, 63
        %s895 = smul.addr %s894, 8
        %s896 = scalar_lea.vmem %s3, %s895
      $region44: #{_lambda_.9} parent=39 // pred_fallthru
        _
    $region40: #{_lambda_.9} parent=5 // pred_fallthru
      _
  $region6: #{_lambda_.9} parent=0 // loop_footer
    %s13 = sadd.s32 1, %s9
  $region7: #{_lambda_.9} parent=0 // loop_footer_branch
    %8 = sbr.rel target = $region3
  $region8: #{_lambda_.9} parent=0 // loop_exit
    _

// kernel: _lambda_.8
$region0: #{_lambda_.8}
  #allocation0 [shape = 'u32[]', space=smem, size = 0x4, offset = 0x4, fixed_abs, tag = 'smem constant byte address 0x4 - core index']
  #allocation1 [shape = 'u32[144,128]{1,0:T(1,128)}', space=vmem, size = 0x12000, scoped, tag = 'internal scratch']
  #allocation2 [shape = 'f32[18,18,32]{2,1,0:T(8,128)}', space=vmem, size = 0x36000, scoped, tag = 'scratch operand']
  %s0 = inlined_call_operand.vmem [shape: f32[2,16,16,32], index: 0, kind: input, shape index: {}]
  %s1 = inlined_call_operand.hbm [shape: f32[3,3,32], index: 1, kind: input, shape index: {}]
  %s2 = inlined_call_operand.hbm [shape: f32[1,32], index: 2, kind: input, shape index: {}]
  %s3 = inlined_call_operand.hbm [shape: f32[1,32], index: 3, kind: input, shape index: {}]
  %s4 = inlined_call_operand.hbm [shape: f32[1,32], index: 4, kind: input, shape index: {}]
  %s5 = inlined_call_operand.vmem [shape: f32[2,16,16,32], index: 5, kind: output, shape index: {}]
  %s6 = sld [smem:[#allocation0]]
  $region69: #{_lambda_.8} parent=0
    _
  %s8 = ssub.s32 1, %s6
  %s9 = scalar_select 0, %s8, %s6
  $region1: #{_lambda_.8} parent=0
    #allocation3 [shape = 'u8[6144]{0}', space=vmem, size = 0x1800, scoped, tag = 'input window, operand 1, single buffered']
    #allocation4 [shape = 's32[2]{0}', space=sflag, size = 0x8, scoped, tag = 'scoped memory for _lambda_.8']
    #allocation5 [shape = 'u8[512]{0}', space=vmem, size = 0x400, scoped, tag = 'input window, operand 2, single buffered']
    #allocation6 [shape = 's32[1]{0}', space=sflag, size = 0x4, scoped, tag = 'scoped memory for _lambda_.8']
    #allocation7 [shape = 'u8[512]{0}', space=vmem, size = 0x400, scoped, tag = 'input window, operand 3, single buffered']
    #allocation8 [shape = 'u8[512]{0}', space=vmem, size = 0x400, scoped, tag = 'input window, operand 4, single buffered']
    #allocation9 [shape = 's32[1]{0}', space=sflag, size = 0x4, scoped, tag = 'scoped memory for _lambda_.8']
    %10 = vsyncpa [#allocation4], 0
    %11 = vsyncpa [#allocation6], 0
    %12 = vsyncpa [#allocation9], 0
    loop: start=0, step=1, limit=4
    $region2: #{_lambda_.8} parent=1 // loop_pre_header
      _
    $region3: #{_lambda_.8} parent=1 // loop_header
      %s14 = sphi 0, %s18
      %p15 = scmp.ge.s32.totalorder %s14, 4
      %s24 = sphi 0, %s26
      %s27 = sphi 0, %s24
      %s28 = sphi 0, %s27
      %s44 = sphi 0, %s28
      %s48 = sphi 0, %s48
      %s50 = sphi 0, %s48
      %s51 = sphi 0, %s50
      %s65 = sphi 0, %s51
      %s69 = sphi 0, %s69
      %s71 = sphi 0, %s69
      %s72 = sphi 0, %s71
      %s86 = sphi 0, %s72
      %s90 = sphi 0, %s90
      %s92 = sphi 0, %s90
      %s93 = sphi 0, %s92
      %s107 = sphi 0, %s93
      %s111 = sphi 0, %s111
      %s113 = sphi 0, %s111
      %s114 = sphi 0, %s113
      %s128 = sphi 0, %s114
      %s134 = sphi 0, %s136
      %s137 = sphi 0, %s134
      %s138 = sphi 0, %s137
      %s154 = sphi 0, %s138
    $region4: #{_lambda_.8} parent=1 // loop_header_branch
      %17 = sbr.rel (%p15) target = $region8
    $region5: #{_lambda_.8} parent=1 // loop_body
      %s19 = ssub.s32 %s14, 1
      %s20 = ssub.s32 %s14, 2
      %s21 = sadd.s32 %s14, 1
      %s22 = ssub.s32 %s14, %s21
      %p23 = scmp.eq.s32.totalorder %s22, 0
      %s25 = sadd.s32 %s24, 1
      %s26 = scalar_select %p23, %s24, %s25
      %p29 = pneg %p23
      %p30 = scmp.eq.s32.totalorder %s14, 1
      %p31 = por %p29, %p30
      %p32 = scmp.ne.s32.totalorder %s24, %s27
      %p33 = scmp.eq.s32.totalorder %s14, 0
      %p34 = por %p32, %p33
      %p35 = scmp.ne.s32.totalorder %s24, %s27
      %p36 = scmp.eq.s32.totalorder %s19, 1
      %p37 = por %p35, %p36
      %p38 = scmp.ne.s32.totalorder %s27, %s28
      %p39 = scmp.eq.s32.totalorder %s19, 0
      %p40 = por %p38, %p39
      %p41 = scmp.ne.s32.totalorder %s27, %s28
      %p42 = scmp.eq.s32.totalorder %s20, 1
      %p43 = por %p41, %p42
      %p45 = scmp.ne.s32.totalorder %s28, %s44
      %p46 = scmp.eq.s32.totalorder %s20, 0
      %p47 = por %p45, %p46
      %s49 = sadd.s32 %s48, 1
      %p52 = scmp.eq.s32.totalorder %s14, 1
      %p53 = scmp.ne.s32.totalorder %s48, %s50
      %p54 = scmp.eq.s32.totalorder %s14, 0
      %p55 = por %p53, %p54
      %p56 = scmp.ne.s32.totalorder %s48, %s50
      %p57 = scmp.eq.s32.totalorder %s19, 1
      %p58 = por %p56, %p57
      %p59 = scmp.ne.s32.totalorder %s50, %s51
      %p60 = scmp.eq.s32.totalorder %s19, 0
      %p61 = por %p59, %p60
      %p62 = scmp.ne.s32.totalorder %s50, %s51
      %p63 = scmp.eq.s32.totalorder %s20, 1
      %p64 = por %p62, %p63
      %p66 = scmp.ne.s32.totalorder %s51, %s65
      %p67 = scmp.eq.s32.totalorder %s20, 0
      %p68 = por %p66, %p67
      %s70 = sadd.s32 %s69, 1
      %p73 = scmp.eq.s32.totalorder %s14, 1
      %p74 = scmp.ne.s32.totalorder %s69, %s71
      %p75 = scmp.eq.s32.totalorder %s14, 0
      %p76 = por %p74, %p75
      %p77 = scmp.ne.s32.totalorder %s69, %s71
      %p78 = scmp.eq.s32.totalorder %s19, 1
      %p79 = por %p77, %p78
      %p80 = scmp.ne.s32.totalorder %s71, %s72
      %p81 = scmp.eq.s32.totalorder %s19, 0
      %p82 = por %p80, %p81
      %p83 = scmp.ne.s32.totalorder %s71, %s72
      %p84 = scmp.eq.s32.totalorder %s20, 1
      %p85 = por %p83, %p84
      %p87 = scmp.ne.s32.totalorder %s72, %s86
      %p88 = scmp.eq.s32.totalorder %s20, 0
      %p89 = por %p87, %p88
      %s91 = sadd.s32 %s90, 1
      %p94 = scmp.eq.s32.totalorder %s14, 1
      %p95 = scmp.ne.s32.totalorder %s90, %s92
      %p96 = scmp.eq.s32.totalorder %s14, 0
      %p97 = por %p95, %p96
      %p98 = scmp.ne.s32.totalorder %s90, %s92
      %p99 = scmp.eq.s32.totalorder %s19, 1
      %p100 = por %p98, %p99
      %p101 = scmp.ne.s32.totalorder %s92, %s93
      %p102 = scmp.eq.s32.totalorder %s19, 0
      %p103 = por %p101, %p102
      %p104 = scmp.ne.s32.totalorder %s92, %s93
      %p105 = scmp.eq.s32.totalorder %s20, 1
      %p106 = por %p104, %p105
      %p108 = scmp.ne.s32.totalorder %s93, %s107
      %p109 = scmp.eq.s32.totalorder %s20, 0
      %p110 = por %p108, %p109
      %s112 = sadd.s32 %s111, 1
      %p115 = scmp.eq.s32.totalorder %s14, 1
      %p116 = scmp.ne.s32.totalorder %s111, %s113
      %p117 = scmp.eq.s32.totalorder %s14, 0
      %p118 = por %p116, %p117
      %p119 = scmp.ne.s32.totalorder %s111, %s113
      %p120 = scmp.eq.s32.totalorder %s19, 1
      %p121 = por %p119, %p120
      %p122 = scmp.ne.s32.totalorder %s113, %s114
      %p123 = scmp.eq.s32.totalorder %s19, 0
      %p124 = por %p122, %p123
      %p125 = scmp.ne.s32.totalorder %s113, %s114
      %p126 = scmp.eq.s32.totalorder %s20, 1
      %p127 = por %p125, %p126
      %p129 = scmp.ne.s32.totalorder %s114, %s128
      %p130 = scmp.eq.s32.totalorder %s20, 0
      %p131 = por %p129, %p130
      %s132 = ssub.s32 %s14, %s21
      %p133 = scmp.eq.s32.totalorder %s132, 0
      %s135 = sadd.s32 %s134, 1
      %s136 = scalar_select %p133, %s134, %s135
      %p139 = pneg %p133
      %p140 = scmp.eq.s32.totalorder %s14, 1
      %p141 = por %p139, %p140
      %p142 = scmp.ne.s32.totalorder %s134, %s137
      %p143 = scmp.eq.s32.totalorder %s14, 0
      %p144 = por %p142, %p143
      %p145 = scmp.ne.s32.totalorder %s134, %s137
      %p146 = scmp.eq.s32.totalorder %s19, 1
      %p147 = por %p145, %p146
      %p148 = scmp.ne.s32.totalorder %s137, %s138
      %p149 = scmp.eq.s32.totalorder %s19, 0
      %p150 = por %p148, %p149
      %p151 = scmp.ne.s32.totalorder %s137, %s138
      %p152 = scmp.eq.s32.totalorder %s20, 1
      %p153 = por %p151, %p152
      %p155 = scmp.ne.s32.totalorder %s138, %s154
      %p156 = scmp.eq.s32.totalorder %s20, 0
      %p157 = por %p155, %p156
      %p158 = scmp.le.s32.totalorder 1, %s14
      %p159 = scmp.lt.s32.totalorder %s14, 3
      %p160 = pnand %p158, %p159
      %p161 = pneg %p160
      // Predicated region
      $region9: #{_lambda_.8} parent=5 // pred_check
        _
      $region10: #{_lambda_.8} parent=5 // pred_check_branch
        %163 = sbr.rel (%p160) target = $region12
      $region11: #{_lambda_.8} parent=5 // pred_region
        %s164 = ssub.s32 %s14, 1
        // Predicated region
        $region13: #{_lambda_.8} parent=11 // pred_check
          %p165 = pneg %p61
        $region14: #{_lambda_.8} parent=11 // pred_check_branch
          %167 = sbr.rel (%p165) target = $region16
        $region15: #{_lambda_.8} parent=11 // pred_region
          %s169 = ssub.s32 192, 192
          %170 = vsyncadd [#allocation4], %s169
          %s171 = sshll.u32 [#allocation3], 4
          %s172 = int_to_ptr.vmem [resolvable:$true] %s171
          %177 = dma.hbm_to_vmem [thread:$0]  %s1, 192, %s172, [#allocation4], 64, 64, 4
        $region16: #{_lambda_.8} parent=11 // pred_fallthru
          _
        // Predicated region
        $region17: #{_lambda_.8} parent=11 // pred_check
          %p178 = pneg %p82
        $region18: #{_lambda_.8} parent=11 // pred_check_branch
          %180 = sbr.rel (%p178) target = $region20
        $region19: #{_lambda_.8} parent=11 // pred_region
          %s182 = ssub.s32 16, 16
          %183 = vsyncadd [#allocation6], %s182
          %s185 = sshll.u32 [#allocation5], 4
          %s186 = int_to_ptr.vmem [resolvable:$true] %s185
          %188 = dma.hbm_to_vmem [thread:$0]  %s2, 16, %s186, [#allocation6]
        $region20: #{_lambda_.8} parent=11 // pred_fallthru
          _
        // Predicated region
        $region21: #{_lambda_.8} parent=11 // pred_check
          %p189 = pneg %p103
        $region22: #{_lambda_.8} parent=11 // pred_check_branch
          %191 = sbr.rel (%p189) target = $region24
        $region23: #{_lambda_.8} parent=11 // pred_region
          %s193 = ssub.s32 16, 16
          %194 = vsyncadd [#allocation6], %s193
          %s196 = sshll.u32 [#allocation7], 4
          %s197 = int_to_ptr.vmem [resolvable:$true] %s196
          %199 = dma.hbm_to_vmem [thread:$0]  %s3, 16, %s197, [#allocation6]
        $region24: #{_lambda_.8} parent=11 // pred_fallthru
          _
        // Predicated region
        $region25: #{_lambda_.8} parent=11 // pred_check
          %p200 = pneg %p124
        $region26: #{_lambda_.8} parent=11 // pred_check_branch
          %202 = sbr.rel (%p200) target = $region28
        $region27: #{_lambda_.8} parent=11 // pred_region
          %s204 = ssub.s32 16, 16
          %205 = vsyncadd [#allocation9], %s204
          %s207 = sshll.u32 [#allocation8], 4
          %s208 = int_to_ptr.vmem [resolvable:$true] %s207
          %210 = dma.hbm_to_vmem [thread:$0]  %s4, 16, %s208, [#allocation9]
        $region28: #{_lambda_.8} parent=11 // pred_fallthru
          _
      $region12: #{_lambda_.8} parent=5 // pred_fallthru
        _
      %p211 = scmp.lt.s32.totalorder %s14, 2
      // Predicated region
      $region29: #{_lambda_.8} parent=5 // pred_check
        %p212 = pneg %p211
      $region30: #{_lambda_.8} parent=5 // pred_check_branch
        %214 = sbr.rel (%p212) target = $region32
      $region31: #{_lambda_.8} parent=5 // pred_region
        // Predicated region
        $region33: #{_lambda_.8} parent=31 // pred_check
          %p215 = pneg %p34
        $region34: #{_lambda_.8} parent=31 // pred_check_branch
          %217 = sbr.rel (%p215) target = $region36
        $region35: #{_lambda_.8} parent=31 // pred_region
          %p218 = scmp.lt.s32.totalorder %s14, 1
          %s219 = scalar_select %p218, %s14, 1
          %s220 = smul.addr %s219, 32
          %s221 = smul.addr %s220, 8
          %s222 = scalar_lea.vmem %s0, %s221
        $region36: #{_lambda_.8} parent=31 // pred_fallthru
          _
      $region32: #{_lambda_.8} parent=5 // pred_fallthru
        _
      %p223 = scmp.le.s32.totalorder 1, %s14
      %p224 = scmp.lt.s32.totalorder %s14, 3
      %p225 = pnand %p223, %p224
      %p226 = pneg %p225
      // Predicated region
      $region37: #{_lambda_.8} parent=5 // pred_check
        _
      $region38: #{_lambda_.8} parent=5 // pred_check_branch
        %228 = sbr.rel (%p225) target = $region40
      $region39: #{_lambda_.8} parent=5 // pred_region
        %s229 = ssub.s32 %s14, 1
        // Predicated region
        $region41: #{_lambda_.8} parent=39 // pred_check
          %p230 = pneg %p61
        $region42: #{_lambda_.8} parent=39 // pred_check_branch
          %232 = sbr.rel (%p230) target = $region44
        $region43: #{_lambda_.8} parent=39 // pred_region
          %233 = dma.done [#allocation4], 192
        $region44: #{_lambda_.8} parent=39 // pred_fallthru
          _
        // Predicated region
        $region45: #{_lambda_.8} parent=39 // pred_check
          %p234 = pneg %p82
        $region46: #{_lambda_.8} parent=39 // pred_check_branch
          %236 = sbr.rel (%p234) target = $region48
        $region47: #{_lambda_.8} parent=39 // pred_region
          %237 = dma.done [#allocation6], 16
        $region48: #{_lambda_.8} parent=39 // pred_fallthru
          _
        // Predicated region
        $region49: #{_lambda_.8} parent=39 // pred_check
          %p238 = pneg %p103
        $region50: #{_lambda_.8} parent=39 // pred_check_branch
          %240 = sbr.rel (%p238) target = $region52
        $region51: #{_lambda_.8} parent=39 // pred_region
          %241 = dma.done [#allocation6], 16
        $region52: #{_lambda_.8} parent=39 // pred_fallthru
          _
        // Predicated region
        $region53: #{_lambda_.8} parent=39 // pred_check
          %p242 = pneg %p124
        $region54: #{_lambda_.8} parent=39 // pred_check_branch
          %244 = sbr.rel (%p242) target = $region56
        $region55: #{_lambda_.8} parent=39 // pred_region
          %245 = dma.done [#allocation9], 16
        $region56: #{_lambda_.8} parent=39 // pred_fallthru
          _
        %p246 = scmp.lt.s32.totalorder %s19, 1
        %s247 = scalar_select %p246, %s19, 1
        %s248 = smul.addr %s247, 32
        %s249 = smul.addr %s248, 8
        %s250 = scalar_lea.vmem %s0, %s249
        %p251 = pneg %p40
        %p252 = pneg %p37
        %p253 = pneg %p61
        %p254 = pneg %p58
        %p255 = pneg %p82
        %p256 = pneg %p79
        %p257 = pneg %p103
        %p258 = pneg %p100
        %p259 = pneg %p124
        %p260 = pneg %p121
        %p261 = pneg %p150
        %p262 = pneg %p147
        %p263 = scmp.lt.s32.totalorder %s19, 1
        %s264 = scalar_select %p263, %s19, 1
        %s265 = smul.addr %s264, 32
        %s266 = smul.addr %s265, 8
        %s267 = scalar_lea.vmem %s5, %s266
        %p268 = scmp.lt.s32.totalorder %s19, 1
        %s269 = scalar_select %p268, %s19, 1
        %s270 = smul.addr %s269, 32
        %s271 = smul.addr %s270, 8
        %s272 = scalar_lea.vmem %s0, %s271
        %p273 = scmp.lt.s32.totalorder %s19, 1
        %s274 = scalar_select %p273, %s19, 1
        %s275 = smul.addr %s274, 32
        %s276 = smul.addr %s275, 8
        %s277 = scalar_lea.vmem %s5, %s276
        %vm278 = vcmask 261120
        %279 = vst.msk [vmem:[#allocation2] sm:$0xff] %vm278, 0.0
        %280 = vst.msk [vmem:[#allocation2 + $0x8] sm:$0xff] %vm278, 0.0
        %vm281 = vcmask 254976
        %282 = vst.msk [vmem:[#allocation2 + $0x10] sm:$0x3] %vm281, 0.0
        %s283 = scalar_lea.vmem [#allocation2], 408
        %284 = vst.msk [vmem:[%s283] sm:$0xff] %vm278, 0.0
        %285 = vst.msk [vmem:[%s283 + $0x8] sm:$0xff] %vm278, 0.0
        %286 = vst.msk [vmem:[%s283 + $0x10] sm:$0x3] %vm281, 0.0
        %s287 = scalar_lea.vmem [#allocation2], 24
        %vm288 = vcmask 253952
        %289 = vst.msk [vmem:[%s287] sm:$0x1] %vm288, 0.0
        %290 = vst.msk [vmem:[%s287 + $0x18] sm:$0x1] %vm288, 0.0
        %291 = vst.msk [vmem:[%s287 + $0x30] sm:$0x1] %vm288, 0.0
        %292 = vst.msk [vmem:[%s287 + $0x48] sm:$0x1] %vm288, 0.0
        %293 = vst.msk [vmem:[%s287 + $0x60] sm:$0x1] %vm288, 0.0
        %294 = vst.msk [vmem:[%s287 + $0x78] sm:$0x1] %vm288, 0.0
        %295 = vst.msk [vmem:[%s287 + $0x90] sm:$0x1] %vm288, 0.0
        %296 = vst.msk [vmem:[%s287 + $0xa8] sm:$0x1] %vm288, 0.0
        %297 = vst.msk [vmem:[%s287 + $0xc0] sm:$0x1] %vm288, 0.0
        %298 = vst.msk [vmem:[%s287 + $0xd8] sm:$0x1] %vm288, 0.0
        %299 = vst.msk [vmem:[%s287 + $0xf0] sm:$0x1] %vm288, 0.0
        %300 = vst.msk [vmem:[%s287 + $0x108] sm:$0x1] %vm288, 0.0
        %301 = vst.msk [vmem:[%s287 + $0x120] sm:$0x1] %vm288, 0.0
        %302 = vst.msk [vmem:[%s287 + $0x138] sm:$0x1] %vm288, 0.0
        %303 = vst.msk [vmem:[%s287 + $0x150] sm:$0x1] %vm288, 0.0
        %304 = vst.msk [vmem:[%s287 + $0x168] sm:$0x1] %vm288, 0.0
        %305 = vst.msk [vmem:[%s287 + $0x11] sm:$0x1] %vm288, 0.0
        %306 = vst.msk [vmem:[%s287 + $0x29] sm:$0x1] %vm288, 0.0
        %307 = vst.msk [vmem:[%s287 + $0x41] sm:$0x1] %vm288, 0.0
        %308 = vst.msk [vmem:[%s287 + $0x59] sm:$0x1] %vm288, 0.0
        %309 = vst.msk [vmem:[%s287 + $0x71] sm:$0x1] %vm288, 0.0
        %310 = vst.msk [vmem:[%s287 + $0x89] sm:$0x1] %vm288, 0.0
        %311 = vst.msk [vmem:[%s287 + $0xa1] sm:$0x1] %vm288, 0.0
        %312 = vst.msk [vmem:[%s287 + $0xb9] sm:$0x1] %vm288, 0.0
        %313 = vst.msk [vmem:[%s287 + $0xd1] sm:$0x1] %vm288, 0.0
        %314 = vst.msk [vmem:[%s287 + $0xe9] sm:$0x1] %vm288, 0.0
        %315 = vst.msk [vmem:[%s287 + $0x101] sm:$0x1] %vm288, 0.0
        %316 = vst.msk [vmem:[%s287 + $0x119] sm:$0x1] %vm288, 0.0
        %317 = vst.msk [vmem:[%s287 + $0x131] sm:$0x1] %vm288, 0.0
        %318 = vst.msk [vmem:[%s287 + $0x149] sm:$0x1] %vm288, 0.0
        %319 = vst.msk [vmem:[%s287 + $0x161] sm:$0x1] %vm288, 0.0
        %320 = vst.msk [vmem:[%s287 + $0x179] sm:$0x1] %vm288, 0.0
        %v321 = vld [vmem:[%s272] sm:$0xff]
        %v322 = vld [vmem:[%s272 + $0x8] sm:$0xff]
        %v323 = vld [vmem:[%s272 + $0x10] sm:$0xff]
        %v324 = vld [vmem:[%s272 + $0x18] sm:$0xff]
        %v325 = vld [vmem:[%s272 + $0x20] sm:$0xff]
        %v326 = vld [vmem:[%s272 + $0x28] sm:$0xff]
        %v327 = vld [vmem:[%s272 + $0x30] sm:$0xff]
        %v328 = vld [vmem:[%s272 + $0x38] sm:$0xff]
        %v329 = vld [vmem:[%s272 + $0x40] sm:$0xff]
        %v330 = vld [vmem:[%s272 + $0x48] sm:$0xff]
        %v331 = vld [vmem:[%s272 + $0x50] sm:$0xff]
        %v332 = vld [vmem:[%s272 + $0x58] sm:$0xff]
        %v333 = vld [vmem:[%s272 + $0x60] sm:$0xff]
        %v334 = vld [vmem:[%s272 + $0x68] sm:$0xff]
        %v335 = vld [vmem:[%s272 + $0x70] sm:$0xff]
        %v336 = vld [vmem:[%s272 + $0x78] sm:$0xff]
        %v337 = vld [vmem:[%s272 + $0x80] sm:$0xff]
        %v338 = vld [vmem:[%s272 + $0x88] sm:$0xff]
        %v339 = vld [vmem:[%s272 + $0x90] sm:$0xff]
        %v340 = vld [vmem:[%s272 + $0x98] sm:$0xff]
        %v341 = vld [vmem:[%s272 + $0xa0] sm:$0xff]
        %v342 = vld [vmem:[%s272 + $0xa8] sm:$0xff]
        %v343 = vld [vmem:[%s272 + $0xb0] sm:$0xff]
        %v344 = vld [vmem:[%s272 + $0xb8] sm:$0xff]
        %v345 = vld [vmem:[%s272 + $0xc0] sm:$0xff]
        %v346 = vld [vmem:[%s272 + $0xc8] sm:$0xff]
        %v347 = vld [vmem:[%s272 + $0xd0] sm:$0xff]
        %v348 = vld [vmem:[%s272 + $0xd8] sm:$0xff]
        %v349 = vld [vmem:[%s272 + $0xe0] sm:$0xff]
        %v350 = vld [vmem:[%s272 + $0xe8] sm:$0xff]
        %v351 = vld [vmem:[%s272 + $0xf0] sm:$0xff]
        %v352 = vld [vmem:[%s272 + $0xf8] sm:$0xff]
        %353 = vst.msk [vmem:[%s287 + $0x1] sm:$0xff] %vm278, %v321
        %354 = vst.msk [vmem:[%s287 + $0x9] sm:$0xff] %vm278, %v322
        %355 = vst.msk [vmem:[%s287 + $0x19] sm:$0xff] %vm278, %v323
        %356 = vst.msk [vmem:[%s287 + $0x21] sm:$0xff] %vm278, %v324
        %357 = vst.msk [vmem:[%s287 + $0x31] sm:$0xff] %vm278, %v325
        %358 = vst.msk [vmem:[%s287 + $0x39] sm:$0xff] %vm278, %v326
        %359 = vst.msk [vmem:[%s287 + $0x49] sm:$0xff] %vm278, %v327
        %360 = vst.msk [vmem:[%s287 + $0x51] sm:$0xff] %vm278, %v328
        %361 = vst.msk [vmem:[%s287 + $0x61] sm:$0xff] %vm278, %v329
        %362 = vst.msk [vmem:[%s287 + $0x69] sm:$0xff] %vm278, %v330
        %363 = vst.msk [vmem:[%s287 + $0x79] sm:$0xff] %vm278, %v331
        %364 = vst.msk [vmem:[%s287 + $0x81] sm:$0xff] %vm278, %v332
        %365 = vst.msk [vmem:[%s287 + $0x91] sm:$0xff] %vm278, %v333
        %366 = vst.msk [vmem:[%s287 + $0x99] sm:$0xff] %vm278, %v334
        %367 = vst.msk [vmem:[%s287 + $0xa9] sm:$0xff] %vm278, %v335
        %368 = vst.msk [vmem:[%s287 + $0xb1] sm:$0xff] %vm278, %v336
        %369 = vst.msk [vmem:[%s287 + $0xc1] sm:$0xff] %vm278, %v337
        %370 = vst.msk [vmem:[%s287 + $0xc9] sm:$0xff] %vm278, %v338
        %371 = vst.msk [vmem:[%s287 + $0xd9] sm:$0xff] %vm278, %v339
        %372 = vst.msk [vmem:[%s287 + $0xe1] sm:$0xff] %vm278, %v340
        %373 = vst.msk [vmem:[%s287 + $0xf1] sm:$0xff] %vm278, %v341
        %374 = vst.msk [vmem:[%s287 + $0xf9] sm:$0xff] %vm278, %v342
        %375 = vst.msk [vmem:[%s287 + $0x109] sm:$0xff] %vm278, %v343
        %376 = vst.msk [vmem:[%s287 + $0x111] sm:$0xff] %vm278, %v344
        %377 = vst.msk [vmem:[%s287 + $0x121] sm:$0xff] %vm278, %v345
        %378 = vst.msk [vmem:[%s287 + $0x129] sm:$0xff] %vm278, %v346
        %379 = vst.msk [vmem:[%s287 + $0x139] sm:$0xff] %vm278, %v347
        %380 = vst.msk [vmem:[%s287 + $0x141] sm:$0xff] %vm278, %v348
        %381 = vst.msk [vmem:[%s287 + $0x151] sm:$0xff] %vm278, %v349
        %382 = vst.msk [vmem:[%s287 + $0x159] sm:$0xff] %vm278, %v350
        %383 = vst.msk [vmem:[%s287 + $0x169] sm:$0xff] %vm278, %v351
        %384 = vst.msk [vmem:[%s287 + $0x171] sm:$0xff] %vm278, %v352
        %v385 = vld [vmem:[#allocation3] sm:$0x7]
        %v386 = vld [vmem:[#allocation3 + $0x4] sm:$0x7]
        %v387 = vld [vmem:[#allocation3 + $0x8] sm:$0x7]
        %v388 = vld [vmem:[#allocation5] sm:$0x1]
        %v389 = vld [vmem:[#allocation2] sm:$0xff]
        %v390 = vld [vmem:[#allocation2 + $0x8] sm:$0xff]
        %v391 = vld [vmem:[#allocation2 + $0x10] sm:$0x3]
        %v392 = vld [vmem:[#allocation2 + $0x18] sm:$0xff]
        %v393 = vld [vmem:[#allocation2 + $0x20] sm:$0xff]
        %v394 = vld [vmem:[#allocation2 + $0x28] sm:$0x3]
        %v395 = vld [vmem:[#allocation2 + $0x30] sm:$0xff]
        %v396 = vld [vmem:[#allocation2 + $0x38] sm:$0xff]
        %v397 = vld [vmem:[#allocation2 + $0x40] sm:$0x3]
        %v398 = vld [vmem:[#allocation2 + $0x48] sm:$0xff]
        %v399 = vld [vmem:[#allocation2 + $0x50] sm:$0xff]
        %v400 = vld [vmem:[#allocation2 + $0x58] sm:$0x3]
        %v401 = vld [vmem:[#allocation2 + $0x60] sm:$0xff]
        %v402 = vld [vmem:[#allocation2 + $0x68] sm:$0xff]
        %v403 = vld [vmem:[#allocation2 + $0x70] sm:$0x3]
        %v404 = vld [vmem:[#allocation2 + $0x78] sm:$0xff]
        %v405 = vld [vmem:[#allocation2 + $0x80] sm:$0xff]
        %v406 = vld [vmem:[#allocation2 + $0x88] sm:$0x3]
        %v407 = vld [vmem:[#allocation2 + $0x90] sm:$0xff]
        %v408 = vld [vmem:[#allocation2 + $0x98] sm:$0xff]
        %v409 = vld [vmem:[#allocation2 + $0xa0] sm:$0x3]
        %v410 = vld [vmem:[#allocation2 + $0xa8] sm:$0xff]
        %v411 = vld [vmem:[#allocation2 + $0xb0] sm:$0xff]
        %v412 = vld [vmem:[#allocation2 + $0xb8] sm:$0x3]
        %v413 = vlaneseq
        %v414 = vshrl.u32 %v413, 7
        %v415 = vsub.s32 0, %v414
        %v416 = vrot.slane %v385, %v415
        %v417 = vmul.f32 %v389, %v416
        %v418 = vmul.f32 %v390, %v416
        %v419 = vmul.f32 %v392, %v416
        %v420 = vmul.f32 %v393, %v416
        %v421 = vmul.f32 %v395, %v416
        %v422 = vmul.f32 %v396, %v416
        %v423 = vmul.f32 %v398, %v416
        %v424 = vmul.f32 %v399, %v416
        %v425 = vmul.f32 %v401, %v416
        %v426 = vmul.f32 %v402, %v416
        %v427 = vmul.f32 %v404, %v416
        %v428 = vmul.f32 %v405, %v416
        %v429 = vmul.f32 %v407, %v416
        %v430 = vmul.f32 %v408, %v416
        %v431 = vmul.f32 %v410, %v416
        %v432 = vmul.f32 %v411, %v416
        %v433 = vadd.f32 %v417, 0.0
        %v434 = vadd.f32 %v418, 0.0
        %v435 = vadd.f32 %v419, 0.0
        %v436 = vadd.f32 %v420, 0.0
        %v437 = vadd.f32 %v421, 0.0
        %v438 = vadd.f32 %v422, 0.0
        %v439 = vadd.f32 %v423, 0.0
        %v440 = vadd.f32 %v424, 0.0
        %v441 = vadd.f32 %v425, 0.0
        %v442 = vadd.f32 %v426, 0.0
        %v443 = vadd.f32 %v427, 0.0
        %v444 = vadd.f32 %v428, 0.0
        %v445 = vadd.f32 %v429, 0.0
        %v446 = vadd.f32 %v430, 0.0
        %v447 = vadd.f32 %v431, 0.0
        %v448 = vadd.f32 %v432, 0.0
        %v449 = vlaneseq
        %v450 = vshrl.u32 %v449, 7
        %v451 = vsub.s32 1, %v450
        %v452 = vrot.slane %v385, %v451
        %v453 = vmul.f32 %v389, %v452
        %v454 = vmul.f32 %v390, %v452
        %v455 = vmul.f32 %v391, %v452
        %v456 = vmul.f32 %v392, %v452
        %v457 = vmul.f32 %v393, %v452
        %v458 = vmul.f32 %v394, %v452
        %v459 = vmul.f32 %v395, %v452
        %v460 = vmul.f32 %v396, %v452
        %v461 = vmul.f32 %v397, %v452
        %v462 = vmul.f32 %v398, %v452
        %v463 = vmul.f32 %v399, %v452
        %v464 = vmul.f32 %v400, %v452
        %v465 = vmul.f32 %v401, %v452
        %v466 = vmul.f32 %v402, %v452
        %v467 = vmul.f32 %v403, %v452
        %v468 = vmul.f32 %v404, %v452
        %v469 = vmul.f32 %v405, %v452
        %v470 = vmul.f32 %v406, %v452
        %v471 = vmul.f32 %v407, %v452
        %v472 = vmul.f32 %v408, %v452
        %v473 = vmul.f32 %v409, %v452
        %v474 = vmul.f32 %v410, %v452
        %v475 = vmul.f32 %v411, %v452
        %v476 = vmul.f32 %v412, %v452
        %vm501 = vcmask 1046528
        %v502 = vrot.slane %v453, 1
        %v503 = vrot.slane %v454, 1
        %v504 = vsel %vm501, %v502, %v503
        %v505 = vrot.slane %v455, 1
        %v506 = vsel %vm501, %v503, %v505
        %v507 = vrot.slane %v456, 1
        %v508 = vrot.slane %v457, 1
        %v509 = vsel %vm501, %v507, %v508
        %v510 = vrot.slane %v458, 1
        %v511 = vsel %vm501, %v508, %v510
        %v512 = vrot.slane %v459, 1
        %v513 = vrot.slane %v460, 1
        %v514 = vsel %vm501, %v512, %v513
        %v515 = vrot.slane %v461, 1
        %v516 = vsel %vm501, %v513, %v515
        %v517 = vrot.slane %v462, 1
        %v518 = vrot.slane %v463, 1
        %v519 = vsel %vm501, %v517, %v518
        %v520 = vrot.slane %v464, 1
        %v521 = vsel %vm501, %v518, %v520
        %v522 = vrot.slane %v465, 1
        %v523 = vrot.slane %v466, 1
        %v524 = vsel %vm501, %v522, %v523
        %v525 = vrot.slane %v467, 1
        %v526 = vsel %vm501, %v523, %v525
        %v527 = vrot.slane %v468, 1
        %v528 = vrot.slane %v469, 1
        %v529 = vsel %vm501, %v527, %v528
        %v530 = vrot.slane %v470, 1
        %v531 = vsel %vm501, %v528, %v530
        %v532 = vrot.slane %v471, 1
        %v533 = vrot.slane %v472, 1
        %v534 = vsel %vm501, %v532, %v533
        %v535 = vrot.slane %v473, 1
        %v536 = vsel %vm501, %v533, %v535
        %v537 = vrot.slane %v474, 1
        %v538 = vrot.slane %v475, 1
        %v539 = vsel %vm501, %v537, %v538
        %v540 = vrot.slane %v476, 1
        %v541 = vsel %vm501, %v538, %v540
        %v558 = vadd.f32 %v433, %v504
        %v559 = vadd.f32 %v434, %v506
        %v560 = vadd.f32 %v435, %v509
        %v561 = vadd.f32 %v436, %v511
        %v562 = vadd.f32 %v437, %v514
        %v563 = vadd.f32 %v438, %v516
        %v564 = vadd.f32 %v439, %v519
        %v565 = vadd.f32 %v440, %v521
        %v566 = vadd.f32 %v441, %v524
        %v567 = vadd.f32 %v442, %v526
        %v568 = vadd.f32 %v443, %v529
        %v569 = vadd.f32 %v444, %v531
        %v570 = vadd.f32 %v445, %v534
        %v571 = vadd.f32 %v446, %v536
        %v572 = vadd.f32 %v447, %v539
        %v573 = vadd.f32 %v448, %v541
        %v574 = vlaneseq
        %v575 = vshrl.u32 %v574, 7
        %v576 = vsub.s32 2, %v575
        %v577 = vrot.slane %v385, %v576
        %v578 = vmul.f32 %v389, %v577
        %v579 = vmul.f32 %v390, %v577
        %v580 = vmul.f32 %v391, %v577
        %v581 = vmul.f32 %v392, %v577
        %v582 = vmul.f32 %v393, %v577
        %v583 = vmul.f32 %v394, %v577
        %v584 = vmul.f32 %v395, %v577
        %v585 = vmul.f32 %v396, %v577
        %v586 = vmul.f32 %v397, %v577
        %v587 = vmul.f32 %v398, %v577
        %v588 = vmul.f32 %v399, %v577
        %v589 = vmul.f32 %v400, %v577
        %v590 = vmul.f32 %v401, %v577
        %v591 = vmul.f32 %v402, %v577
        %v592 = vmul.f32 %v403, %v577
        %v593 = vmul.f32 %v404, %v577
        %v594 = vmul.f32 %v405, %v577
        %v595 = vmul.f32 %v406, %v577
        %v596 = vmul.f32 %v407, %v577
        %v597 = vmul.f32 %v408, %v577
        %v598 = vmul.f32 %v409, %v577
        %v599 = vmul.f32 %v410, %v577
        %v600 = vmul.f32 %v411, %v577
        %v601 = vmul.f32 %v412, %v577
        %vm626 = vcmask 1045504
        %v627 = vrot.slane %v578, 2
        %v628 = vrot.slane %v579, 2
        %v629 = vsel %vm626, %v627, %v628
        %v630 = vrot.slane %v580, 2
        %v631 = vsel %vm626, %v628, %v630
        %v632 = vrot.slane %v581, 2
        %v633 = vrot.slane %v582, 2
        %v634 = vsel %vm626, %v632, %v633
        %v635 = vrot.slane %v583, 2
        %v636 = vsel %vm626, %v633, %v635
        %v637 = vrot.slane %v584, 2
        %v638 = vrot.slane %v585, 2
        %v639 = vsel %vm626, %v637, %v638
        %v640 = vrot.slane %v586, 2
        %v641 = vsel %vm626, %v638, %v640
        %v642 = vrot.slane %v587, 2
        %v643 = vrot.slane %v588, 2
        %v644 = vsel %vm626, %v642, %v643
        %v645 = vrot.slane %v589, 2
        %v646 = vsel %vm626, %v643, %v645
        %v647 = vrot.slane %v590, 2
        %v648 = vrot.slane %v591, 2
        %v649 = vsel %vm626, %v647, %v648
        %v650 = vrot.slane %v592, 2
        %v651 = vsel %vm626, %v648, %v650
        %v652 = vrot.slane %v593, 2
        %v653 = vrot.slane %v594, 2
        %v654 = vsel %vm626, %v652, %v653
        %v655 = vrot.slane %v595, 2
        %v656 = vsel %vm626, %v653, %v655
        %v657 = vrot.slane %v596, 2
        %v658 = vrot.slane %v597, 2
        %v659 = vsel %vm626, %v657, %v658
        %v660 = vrot.slane %v598, 2
        %v661 = vsel %vm626, %v658, %v660
        %v662 = vrot.slane %v599, 2
        %v663 = vrot.slane %v600, 2
        %v664 = vsel %vm626, %v662, %v663
        %v665 = vrot.slane %v601, 2
        %v666 = vsel %vm626, %v663, %v665
        %v683 = vadd.f32 %v558, %v629
        %v684 = vadd.f32 %v559, %v631
        %v685 = vadd.f32 %v560, %v634
        %v686 = vadd.f32 %v561, %v636
        %v687 = vadd.f32 %v562, %v639
        %v688 = vadd.f32 %v563, %v641
        %v689 = vadd.f32 %v564, %v644
        %v690 = vadd.f32 %v565, %v646
        %v691 = vadd.f32 %v566, %v649
        %v692 = vadd.f32 %v567, %v651
        %v693 = vadd.f32 %v568, %v654
        %v694 = vadd.f32 %v569, %v656
        %v695 = vadd.f32 %v570, %v659
        %v696 = vadd.f32 %v571, %v661
        %v697 = vadd.f32 %v572, %v664
        %v698 = vadd.f32 %v573, %v666
        %v699 = vld [vmem:[%s287] sm:$0xff]
        %v700 = vld [vmem:[%s287 + $0x8] sm:$0xff]
        %v701 = vld [vmem:[%s287 + $0x10] sm:$0x3]
        %v702 = vld [vmem:[%s287 + $0x18] sm:$0xff]
        %v703 = vld [vmem:[%s287 + $0x20] sm:$0xff]
        %v704 = vld [vmem:[%s287 + $0x28] sm:$0x3]
        %v705 = vld [vmem:[%s287 + $0x30] sm:$0xff]
        %v706 = vld [vmem:[%s287 + $0x38] sm:$0xff]
        %v707 = vld [vmem:[%s287 + $0x40] sm:$0x3]
        %v708 = vld [vmem:[%s287 + $0x48] sm:$0xff]
        %v709 = vld [vmem:[%s287 + $0x50] sm:$0xff]
        %v710 = vld [vmem:[%s287 + $0x58] sm:$0x3]
        %v711 = vld [vmem:[%s287 + $0x60] sm:$0xff]
        %v712 = vld [vmem:[%s287 + $0x68] sm:$0xff]
        %v713 = vld [vmem:[%s287 + $0x70] sm:$0x3]
        %v714 = vld [vmem:[%s287 + $0x78] sm:$0xff]
        %v715 = vld [vmem:[%s287 + $0x80] sm:$0xff]
        %v716 = vld [vmem:[%s287 + $0x88] sm:$0x3]
        %v717 = vld [vmem:[%s287 + $0x90] sm:$0xff]
        %v718 = vld [vmem:[%s287 + $0x98] sm:$0xff]
        %v719 = vld [vmem:[%s287 + $0xa0] sm:$0x3]
        %v720 = vld [vmem:[%s287 + $0xa8] sm:$0xff]
        %v721 = vld [vmem:[%s287 + $0xb0] sm:$0xff]
        %v722 = vld [vmem:[%s287 + $0xb8] sm:$0x3]
        %v723 = vlaneseq
        %v724 = vshrl.u32 %v723, 7
        %v725 = vsub.s32 0, %v724
        %v726 = vrot.slane %v386, %v725
        %v727 = vmul.f32 %v699, %v726
        %v728 = vmul.f32 %v700, %v726
        %v729 = vmul.f32 %v702, %v726
        %v730 = vmul.f32 %v703, %v726
        %v731 = vmul.f32 %v705, %v726
        %v732 = vmul.f32 %v706, %v726
        %v733 = vmul.f32 %v708, %v726
        %v734 = vmul.f32 %v709, %v726
        %v735 = vmul.f32 %v711, %v726
        %v736 = vmul.f32 %v712, %v726
        %v737 = vmul.f32 %v714, %v726
        %v738 = vmul.f32 %v715, %v726
        %v739 = vmul.f32 %v717, %v726
        %v740 = vmul.f32 %v718, %v726
        %v741 = vmul.f32 %v720, %v726
        %v742 = vmul.f32 %v721, %v726
        %v743 = vadd.f32 %v683, %v727
        %v744 = vadd.f32 %v684, %v728
        %v745 = vadd.f32 %v685, %v729
        %v746 = vadd.f32 %v686, %v730
        %v747 = vadd.f32 %v687, %v731
        %v748 = vadd.f32 %v688, %v732
        %v749 = vadd.f32 %v689, %v733
        %v750 = vadd.f32 %v690, %v734
        %v751 = vadd.f32 %v691, %v735
        %v752 = vadd.f32 %v692, %v736
        %v753 = vadd.f32 %v693, %v737
        %v754 = vadd.f32 %v694, %v738
        %v755 = vadd.f32 %v695, %v739
        %v756 = vadd.f32 %v696, %v740
        %v757 = vadd.f32 %v697, %v741
        %v758 = vadd.f32 %v698, %v742
        %v759 = vlaneseq
        %v760 = vshrl.u32 %v759, 7
        %v761 = vsub.s32 1, %v760
        %v762 = vrot.slane %v386, %v761
        %v763 = vmul.f32 %v699, %v762
        %v764 = vmul.f32 %v700, %v762
        %v765 = vmul.f32 %v701, %v762
        %v766 = vmul.f32 %v702, %v762
        %v767 = vmul.f32 %v703, %v762
        %v768 = vmul.f32 %v704, %v762
        %v769 = vmul.f32 %v705, %v762
        %v770 = vmul.f32 %v706, %v762
        %v771 = vmul.f32 %v707, %v762
        %v772 = vmul.f32 %v708, %v762
        %v773 = vmul.f32 %v709, %v762
        %v774 = vmul.f32 %v710, %v762
        %v775 = vmul.f32 %v711, %v762
        %v776 = vmul.f32 %v712, %v762
        %v777 = vmul.f32 %v713, %v762
        %v778 = vmul.f32 %v714, %v762
        %v779 = vmul.f32 %v715, %v762
        %v780 = vmul.f32 %v716, %v762
        %v781 = vmul.f32 %v717, %v762
        %v782 = vmul.f32 %v718, %v762
        %v783 = vmul.f32 %v719, %v762
        %v784 = vmul.f32 %v720, %v762
        %v785 = vmul.f32 %v721, %v762
        %v786 = vmul.f32 %v722, %v762
        %v811 = vrot.slane %v763, 1
        %v812 = vrot.slane %v764, 1
        %v813 = vsel %vm501, %v811, %v812
        %v814 = vrot.slane %v765, 1
        %v815 = vsel %vm501, %v812, %v814
        %v816 = vrot.slane %v766, 1
        %v817 = vrot.slane %v767, 1
        %v818 = vsel %vm501, %v816, %v817
        %v819 = vrot.slane %v768, 1
        %v820 = vsel %vm501, %v817, %v819
        %v821 = vrot.slane %v769, 1
        %v822 = vrot.slane %v770, 1
        %v823 = vsel %vm501, %v821, %v822
        %v824 = vrot.slane %v771, 1
        %v825 = vsel %vm501, %v822, %v824
        %v826 = vrot.slane %v772, 1
        %v827 = vrot.slane %v773, 1
        %v828 = vsel %vm501, %v826, %v827
        %v829 = vrot.slane %v774, 1
        %v830 = vsel %vm501, %v827, %v829
        %v831 = vrot.slane %v775, 1
        %v832 = vrot.slane %v776, 1
        %v833 = vsel %vm501, %v831, %v832
        %v834 = vrot.slane %v777, 1
        %v835 = vsel %vm501, %v832, %v834
        %v836 = vrot.slane %v778, 1
        %v837 = vrot.slane %v779, 1
        %v838 = vsel %vm501, %v836, %v837
        %v839 = vrot.slane %v780, 1
        %v840 = vsel %vm501, %v837, %v839
        %v841 = vrot.slane %v781, 1
        %v842 = vrot.slane %v782, 1
        %v843 = vsel %vm501, %v841, %v842
        %v844 = vrot.slane %v783, 1
        %v845 = vsel %vm501, %v842, %v844
        %v846 = vrot.slane %v784, 1
        %v847 = vrot.slane %v785, 1
        %v848 = vsel %vm501, %v846, %v847
        %v849 = vrot.slane %v786, 1
        %v850 = vsel %vm501, %v847, %v849
        %v867 = vadd.f32 %v743, %v813
        %v868 = vadd.f32 %v744, %v815
        %v869 = vadd.f32 %v745, %v818
        %v870 = vadd.f32 %v746, %v820
        %v871 = vadd.f32 %v747, %v823
        %v872 = vadd.f32 %v748, %v825
        %v873 = vadd.f32 %v749, %v828
        %v874 = vadd.f32 %v750, %v830
        %v875 = vadd.f32 %v751, %v833
        %v876 = vadd.f32 %v752, %v835
        %v877 = vadd.f32 %v753, %v838
        %v878 = vadd.f32 %v754, %v840
        %v879 = vadd.f32 %v755, %v843
        %v880 = vadd.f32 %v756, %v845
        %v881 = vadd.f32 %v757, %v848
        %v882 = vadd.f32 %v758, %v850
        %v883 = vlaneseq
        %v884 = vshrl.u32 %v883, 7
        %v885 = vsub.s32 2, %v884
        %v886 = vrot.slane %v386, %v885
        %v887 = vmul.f32 %v699, %v886
        %v888 = vmul.f32 %v700, %v886
        %v889 = vmul.f32 %v701, %v886
        %v890 = vmul.f32 %v702, %v886
        %v891 = vmul.f32 %v703, %v886
        %v892 = vmul.f32 %v704, %v886
        %v893 = vmul.f32 %v705, %v886
        %v894 = vmul.f32 %v706, %v886
        %v895 = vmul.f32 %v707, %v886
        %v896 = vmul.f32 %v708, %v886
        %v897 = vmul.f32 %v709, %v886
        %v898 = vmul.f32 %v710, %v886
        %v899 = vmul.f32 %v711, %v886
        %v900 = vmul.f32 %v712, %v886
        %v901 = vmul.f32 %v713, %v886
        %v902 = vmul.f32 %v714, %v886
        %v903 = vmul.f32 %v715, %v886
        %v904 = vmul.f32 %v716, %v886
        %v905 = vmul.f32 %v717, %v886
        %v906 = vmul.f32 %v718, %v886
        %v907 = vmul.f32 %v719, %v886
        %v908 = vmul.f32 %v720, %v886
        %v909 = vmul.f32 %v721, %v886
        %v910 = vmul.f32 %v722, %v886
        %v935 = vrot.slane %v887, 2
        %v936 = vrot.slane %v888, 2
        %v937 = vsel %vm626, %v935, %v936
        %v938 = vrot.slane %v889, 2
        %v939 = vsel %vm626, %v936, %v938
        %v940 = vrot.slane %v890, 2
        %v941 = vrot.slane %v891, 2
        %v942 = vsel %vm626, %v940, %v941
        %v943 = vrot.slane %v892, 2
        %v944 = vsel %vm626, %v941, %v943
        %v945 = vrot.slane %v893, 2
        %v946 = vrot.slane %v894, 2
        %v947 = vsel %vm626, %v945, %v946
        %v948 = vrot.slane %v895, 2
        %v949 = vsel %vm626, %v946, %v948
        %v950 = vrot.slane %v896, 2
        %v951 = vrot.slane %v897, 2
        %v952 = vsel %vm626, %v950, %v951
        %v953 = vrot.slane %v898, 2
        %v954 = vsel %vm626, %v951, %v953
        %v955 = vrot.slane %v899, 2
        %v956 = vrot.slane %v900, 2
        %v957 = vsel %vm626, %v955, %v956
        %v958 = vrot.slane %v901, 2
        %v959 = vsel %vm626, %v956, %v958
        %v960 = vrot.slane %v902, 2
        %v961 = vrot.slane %v903, 2
        %v962 = vsel %vm626, %v960, %v961
        %v963 = vrot.slane %v904, 2
        %v964 = vsel %vm626, %v961, %v963
        %v965 = vrot.slane %v905, 2
        %v966 = vrot.slane %v906, 2
        %v967 = vsel %vm626, %v965, %v966
        %v968 = vrot.slane %v907, 2
        %v969 = vsel %vm626, %v966, %v968
        %v970 = vrot.slane %v908, 2
        %v971 = vrot.slane %v909, 2
        %v972 = vsel %vm626, %v970, %v971
        %v973 = vrot.slane %v910, 2
        %v974 = vsel %vm626, %v971, %v973
        %v991 = vadd.f32 %v867, %v937
        %v992 = vadd.f32 %v868, %v939
        %v993 = vadd.f32 %v869, %v942
        %v994 = vadd.f32 %v870, %v944
        %v995 = vadd.f32 %v871, %v947
        %v996 = vadd.f32 %v872, %v949
        %v997 = vadd.f32 %v873, %v952
        %v998 = vadd.f32 %v874, %v954
        %v999 = vadd.f32 %v875, %v957
        %v1000 = vadd.f32 %v876, %v959
        %v1001 = vadd.f32 %v877, %v962
        %v1002 = vadd.f32 %v878, %v964
        %v1003 = vadd.f32 %v879, %v967
        %v1004 = vadd.f32 %v880, %v969
        %v1005 = vadd.f32 %v881, %v972
        %v1006 = vadd.f32 %v882, %v974
        %s1007 = scalar_lea.vmem [#allocation2], 48
        %v1008 = vld [vmem:[%s1007] sm:$0xff]
        %v1009 = vld [vmem:[%s1007 + $0x8] sm:$0xff]
        %v1010 = vld [vmem:[%s1007 + $0x10] sm:$0x3]
        %v1011 = vld [vmem:[%s1007 + $0x18] sm:$0xff]
        %v1012 = vld [vmem:[%s1007 + $0x20] sm:$0xff]
        %v1013 = vld [vmem:[%s1007 + $0x28] sm:$0x3]
        %v1014 = vld [vmem:[%s1007 + $0x30] sm:$0xff]
        %v1015 = vld [vmem:[%s1007 + $0x38] sm:$0xff]
        %v1016 = vld [vmem:[%s1007 + $0x40] sm:$0x3]
        %v1017 = vld [vmem:[%s1007 + $0x48] sm:$0xff]
        %v1018 = vld [vmem:[%s1007 + $0x50] sm:$0xff]
        %v1019 = vld [vmem:[%s1007 + $0x58] sm:$0x3]
        %v1020 = vld [vmem:[%s1007 + $0x60] sm:$0xff]
        %v1021 = vld [vmem:[%s1007 + $0x68] sm:$0xff]
        %v1022 = vld [vmem:[%s1007 + $0x70] sm:$0x3]
        %v1023 = vld [vmem:[%s1007 + $0x78] sm:$0xff]
        %v1024 = vld [vmem:[%s1007 + $0x80] sm:$0xff]
        %v1025 = vld [vmem:[%s1007 + $0x88] sm:$0x3]
        %v1026 = vld [vmem:[%s1007 + $0x90] sm:$0xff]
        %v1027 = vld [vmem:[%s1007 + $0x98] sm:$0xff]
        %v1028 = vld [vmem:[%s1007 + $0xa0] sm:$0x3]
        %v1029 = vld [vmem:[%s1007 + $0xa8] sm:$0xff]
        %v1030 = vld [vmem:[%s1007 + $0xb0] sm:$0xff]
        %v1031 = vld [vmem:[%s1007 + $0xb8] sm:$0x3]
        %v1032 = vlaneseq
        %v1033 = vshrl.u32 %v1032, 7
        %v1034 = vsub.s32 0, %v1033
        %v1035 = vrot.slane %v387, %v1034
        %v1036 = vmul.f32 %v1008, %v1035
        %v1037 = vmul.f32 %v1009, %v1035
        %v1038 = vmul.f32 %v1011, %v1035
        %v1039 = vmul.f32 %v1012, %v1035
        %v1040 = vmul.f32 %v1014, %v1035
        %v1041 = vmul.f32 %v1015, %v1035
        %v1042 = vmul.f32 %v1017, %v1035
        %v1043 = vmul.f32 %v1018, %v1035
        %v1044 = vmul.f32 %v1020, %v1035
        %v1045 = vmul.f32 %v1021, %v1035
        %v1046 = vmul.f32 %v1023, %v1035
        %v1047 = vmul.f32 %v1024, %v1035
        %v1048 = vmul.f32 %v1026, %v1035
        %v1049 = vmul.f32 %v1027, %v1035
        %v1050 = vmul.f32 %v1029, %v1035
        %v1051 = vmul.f32 %v1030, %v1035
        %v1052 = vadd.f32 %v991, %v1036
        %v1053 = vadd.f32 %v992, %v1037
        %v1054 = vadd.f32 %v993, %v1038
        %v1055 = vadd.f32 %v994, %v1039
        %v1056 = vadd.f32 %v995, %v1040
        %v1057 = vadd.f32 %v996, %v1041
        %v1058 = vadd.f32 %v997, %v1042
        %v1059 = vadd.f32 %v998, %v1043
        %v1060 = vadd.f32 %v999, %v1044
        %v1061 = vadd.f32 %v1000, %v1045
        %v1062 = vadd.f32 %v1001, %v1046
        %v1063 = vadd.f32 %v1002, %v1047
        %v1064 = vadd.f32 %v1003, %v1048
        %v1065 = vadd.f32 %v1004, %v1049
        %v1066 = vadd.f32 %v1005, %v1050
        %v1067 = vadd.f32 %v1006, %v1051
        %v1068 = vlaneseq
        %v1069 = vshrl.u32 %v1068, 7
        %v1070 = vsub.s32 1, %v1069
        %v1071 = vrot.slane %v387, %v1070
        %v1072 = vmul.f32 %v1008, %v1071
        %v1073 = vmul.f32 %v1009, %v1071
        %v1074 = vmul.f32 %v1010, %v1071
        %v1075 = vmul.f32 %v1011, %v1071
        %v1076 = vmul.f32 %v1012, %v1071
        %v1077 = vmul.f32 %v1013, %v1071
        %v1078 = vmul.f32 %v1014, %v1071
        %v1079 = vmul.f32 %v1015, %v1071
        %v1080 = vmul.f32 %v1016, %v1071
        %v1081 = vmul.f32 %v1017, %v1071
        %v1082 = vmul.f32 %v1018, %v1071
        %v1083 = vmul.f32 %v1019, %v1071
        %v1084 = vmul.f32 %v1020, %v1071
        %v1085 = vmul.f32 %v1021, %v1071
        %v1086 = vmul.f32 %v1022, %v1071
        %v1087 = vmul.f32 %v1023, %v1071
        %v1088 = vmul.f32 %v1024, %v1071
        %v1089 = vmul.f32 %v1025, %v1071
        %v1090 = vmul.f32 %v1026, %v1071
        %v1091 = vmul.f32 %v1027, %v1071
        %v1092 = vmul.f32 %v1028, %v1071
        %v1093 = vmul.f32 %v1029, %v1071
        %v1094 = vmul.f32 %v1030, %v1071
        %v1095 = vmul.f32 %v1031, %v1071
        %v1120 = vrot.slane %v1072, 1
        %v1121 = vrot.slane %v1073, 1
        %v1122 = vsel %vm501, %v1120, %v1121
        %v1123 = vrot.slane %v1074, 1
        %v1124 = vsel %vm501, %v1121, %v1123
        %v1125 = vrot.slane %v1075, 1
        %v1126 = vrot.slane %v1076, 1
        %v1127 = vsel %vm501, %v1125, %v1126
        %v1128 = vrot.slane %v1077, 1
        %v1129 = vsel %vm501, %v1126, %v1128
        %v1130 = vrot.slane %v1078, 1
        %v1131 = vrot.slane %v1079, 1
        %v1132 = vsel %vm501, %v1130, %v1131
        %v1133 = vrot.slane %v1080, 1
        %v1134 = vsel %vm501, %v1131, %v1133
        %v1135 = vrot.slane %v1081, 1
        %v1136 = vrot.slane %v1082, 1
        %v1137 = vsel %vm501, %v1135, %v1136
        %v1138 = vrot.slane %v1083, 1
        %v1139 = vsel %vm501, %v1136, %v1138
        %v1140 = vrot.slane %v1084, 1
        %v1141 = vrot.slane %v1085, 1
        %v1142 = vsel %vm501, %v1140, %v1141
        %v1143 = vrot.slane %v1086, 1
        %v1144 = vsel %vm501, %v1141, %v1143
        %v1145 = vrot.slane %v1087, 1
        %v1146 = vrot.slane %v1088, 1
        %v1147 = vsel %vm501, %v1145, %v1146
        %v1148 = vrot.slane %v1089, 1
        %v1149 = vsel %vm501, %v1146, %v1148
        %v1150 = vrot.slane %v1090, 1
        %v1151 = vrot.slane %v1091, 1
        %v1152 = vsel %vm501, %v1150, %v1151
        %v1153 = vrot.slane %v1092, 1
        %v1154 = vsel %vm501, %v1151, %v1153
        %v1155 = vrot.slane %v1093, 1
        %v1156 = vrot.slane %v1094, 1
        %v1157 = vsel %vm501, %v1155, %v1156
        %v1158 = vrot.slane %v1095, 1
        %v1159 = vsel %vm501, %v1156, %v1158
        %v1176 = vadd.f32 %v1052, %v1122
        %v1177 = vadd.f32 %v1053, %v1124
        %v1178 = vadd.f32 %v1054, %v1127
        %v1179 = vadd.f32 %v1055, %v1129
        %v1180 = vadd.f32 %v1056, %v1132
        %v1181 = vadd.f32 %v1057, %v1134
        %v1182 = vadd.f32 %v1058, %v1137
        %v1183 = vadd.f32 %v1059, %v1139
        %v1184 = vadd.f32 %v1060, %v1142
        %v1185 = vadd.f32 %v1061, %v1144
        %v1186 = vadd.f32 %v1062, %v1147
        %v1187 = vadd.f32 %v1063, %v1149
        %v1188 = vadd.f32 %v1064, %v1152
        %v1189 = vadd.f32 %v1065, %v1154
        %v1190 = vadd.f32 %v1066, %v1157
        %v1191 = vadd.f32 %v1067, %v1159
        %v1192 = vlaneseq
        %v1193 = vshrl.u32 %v1192, 7
        %v1194 = vsub.s32 2, %v1193
        %v1195 = vrot.slane %v387, %v1194
        %v1196 = vmul.f32 %v1008, %v1195
        %v1197 = vmul.f32 %v1009, %v1195
        %v1198 = vmul.f32 %v1010, %v1195
        %v1199 = vmul.f32 %v1011, %v1195
        %v1200 = vmul.f32 %v1012, %v1195
        %v1201 = vmul.f32 %v1013, %v1195
        %v1202 = vmul.f32 %v1014, %v1195
        %v1203 = vmul.f32 %v1015, %v1195
        %v1204 = vmul.f32 %v1016, %v1195
        %v1205 = vmul.f32 %v1017, %v1195
        %v1206 = vmul.f32 %v1018, %v1195
        %v1207 = vmul.f32 %v1019, %v1195
        %v1208 = vmul.f32 %v1020, %v1195
        %v1209 = vmul.f32 %v1021, %v1195
        %v1210 = vmul.f32 %v1022, %v1195
        %v1211 = vmul.f32 %v1023, %v1195
        %v1212 = vmul.f32 %v1024, %v1195
        %v1213 = vmul.f32 %v1025, %v1195
        %v1214 = vmul.f32 %v1026, %v1195
        %v1215 = vmul.f32 %v1027, %v1195
        %v1216 = vmul.f32 %v1028, %v1195
        %v1217 = vmul.f32 %v1029, %v1195
        %v1218 = vmul.f32 %v1030, %v1195
        %v1219 = vmul.f32 %v1031, %v1195
        %v1244 = vrot.slane %v1196, 2
        %v1245 = vrot.slane %v1197, 2
        %v1246 = vsel %vm626, %v1244, %v1245
        %v1247 = vrot.slane %v1198, 2
        %v1248 = vsel %vm626, %v1245, %v1247
        %v1249 = vrot.slane %v1199, 2
        %v1250 = vrot.slane %v1200, 2
        %v1251 = vsel %vm626, %v1249, %v1250
        %v1252 = vrot.slane %v1201, 2
        %v1253 = vsel %vm626, %v1250, %v1252
        %v1254 = vrot.slane %v1202, 2
        %v1255 = vrot.slane %v1203, 2
        %v1256 = vsel %vm626, %v1254, %v1255
        %v1257 = vrot.slane %v1204, 2
        %v1258 = vsel %vm626, %v1255, %v1257
        %v1259 = vrot.slane %v1205, 2
        %v1260 = vrot.slane %v1206, 2
        %v1261 = vsel %vm626, %v1259, %v1260
        %v1262 = vrot.slane %v1207, 2
        %v1263 = vsel %vm626, %v1260, %v1262
        %v1264 = vrot.slane %v1208, 2
        %v1265 = vrot.slane %v1209, 2
        %v1266 = vsel %vm626, %v1264, %v1265
        %v1267 = vrot.slane %v1210, 2
        %v1268 = vsel %vm626, %v1265, %v1267
        %v1269 = vrot.slane %v1211, 2
        %v1270 = vrot.slane %v1212, 2
        %v1271 = vsel %vm626, %v1269, %v1270
        %v1272 = vrot.slane %v1213, 2
        %v1273 = vsel %vm626, %v1270, %v1272
        %v1274 = vrot.slane %v1214, 2
        %v1275 = vrot.slane %v1215, 2
        %v1276 = vsel %vm626, %v1274, %v1275
        %v1277 = vrot.slane %v1216, 2
        %v1278 = vsel %vm626, %v1275, %v1277
        %v1279 = vrot.slane %v1217, 2
        %v1280 = vrot.slane %v1218, 2
        %v1281 = vsel %vm626, %v1279, %v1280
        %v1282 = vrot.slane %v1219, 2
        %v1283 = vsel %vm626, %v1280, %v1282
        %v1300 = vadd.f32 %v1176, %v1246
        %v1301 = vadd.f32 %v1177, %v1248
        %v1302 = vadd.f32 %v1178, %v1251
        %v1303 = vadd.f32 %v1179, %v1253
        %v1304 = vadd.f32 %v1180, %v1256
        %v1305 = vadd.f32 %v1181, %v1258
        %v1306 = vadd.f32 %v1182, %v1261
        %v1307 = vadd.f32 %v1183, %v1263
        %v1308 = vadd.f32 %v1184, %v1266
        %v1309 = vadd.f32 %v1185, %v1268
        %v1310 = vadd.f32 %v1186, %v1271
        %v1311 = vadd.f32 %v1187, %v1273
        %v1312 = vadd.f32 %v1188, %v1276
        %v1313 = vadd.f32 %v1189, %v1278
        %v1314 = vadd.f32 %v1190, %v1281
        %v1315 = vadd.f32 %v1191, %v1283
        %v1317 = vlaneseq
        %v1318 = vshrl.u32 %v1317, 7
        %v1319 = vsub.s32 0, %v1318
        %v1320 = vrot.slane %v388, %v1319
        %v1322 = vadd.f32 %v1300, %v1320
        %v1323 = vadd.f32 %v1301, %v1320
        %v1324 = vadd.f32 %v1302, %v1320
        %v1325 = vadd.f32 %v1303, %v1320
        %v1326 = vadd.f32 %v1304, %v1320
        %v1327 = vadd.f32 %v1305, %v1320
        %v1328 = vadd.f32 %v1306, %v1320
        %v1329 = vadd.f32 %v1307, %v1320
        %v1330 = vadd.f32 %v1308, %v1320
        %v1331 = vadd.f32 %v1309, %v1320
        %v1332 = vadd.f32 %v1310, %v1320
        %v1333 = vadd.f32 %v1311, %v1320
        %v1334 = vadd.f32 %v1312, %v1320
        %v1335 = vadd.f32 %v1313, %v1320
        %v1336 = vadd.f32 %v1314, %v1320
        %v1337 = vadd.f32 %v1315, %v1320
        %v1338 = vsel %vm278, %v1322, 0.0
        %1339 = vadd.xlane.f32.xlu0 %v1338
        %v1340 = vpop.xlane.xlu0 %1339
        %v1341 = vsel %vm278, %v1323, 0.0
        %1342 = vadd.xlane.f32.xlu0 %v1341
        %v1343 = vpop.xlane.xlu0 %1342
        %v1344 = vsel %vm278, %v1324, 0.0
        %1345 = vadd.xlane.f32.xlu0 %v1344
        %v1346 = vpop.xlane.xlu0 %1345
        %v1347 = vsel %vm278, %v1325, 0.0
        %1348 = vadd.xlane.f32.xlu0 %v1347
        %v1349 = vpop.xlane.xlu0 %1348
        %v1350 = vsel %vm278, %v1326, 0.0
        %1351 = vadd.xlane.f32.xlu0 %v1350
        %v1352 = vpop.xlane.xlu0 %1351
        %v1353 = vsel %vm278, %v1327, 0.0
        %1354 = vadd.xlane.f32.xlu0 %v1353
        %v1355 = vpop.xlane.xlu0 %1354
        %v1356 = vsel %vm278, %v1328, 0.0
        %1357 = vadd.xlane.f32.xlu0 %v1356
        %v1358 = vpop.xlane.xlu0 %1357
        %v1359 = vsel %vm278, %v1329, 0.0
        %1360 = vadd.xlane.f32.xlu0 %v1359
        %v1361 = vpop.xlane.xlu0 %1360
        %v1362 = vsel %vm278, %v1330, 0.0
        %1363 = vadd.xlane.f32.xlu0 %v1362
        %v1364 = vpop.xlane.xlu0 %1363
        %v1365 = vsel %vm278, %v1331, 0.0
        %1366 = vadd.xlane.f32.xlu0 %v1365
        %v1367 = vpop.xlane.xlu0 %1366
        %v1368 = vsel %vm278, %v1332, 0.0
        %1369 = vadd.xlane.f32.xlu0 %v1368
        %v1370 = vpop.xlane.xlu0 %1369
        %v1371 = vsel %vm278, %v1333, 0.0
        %1372 = vadd.xlane.f32.xlu0 %v1371
        %v1373 = vpop.xlane.xlu0 %1372
        %v1374 = vsel %vm278, %v1334, 0.0
        %1375 = vadd.xlane.f32.xlu0 %v1374
        %v1376 = vpop.xlane.xlu0 %1375
        %v1377 = vsel %vm278, %v1335, 0.0
        %1378 = vadd.xlane.f32.xlu0 %v1377
        %v1379 = vpop.xlane.xlu0 %1378
        %v1380 = vsel %vm278, %v1336, 0.0
        %1381 = vadd.xlane.f32.xlu0 %v1380
        %v1382 = vpop.xlane.xlu0 %1381
        %v1383 = vsel %vm278, %v1337, 0.0
        %1384 = vadd.xlane.f32.xlu0 %v1383
        %v1385 = vpop.xlane.xlu0 %1384
        %v1386 = vrcp.pop 32.0
        %v1387 = vmul.f32 %v1340, %v1386
        %v1388 = vmul.f32 %v1343, %v1386
        %v1389 = vmul.f32 %v1346, %v1386
        %v1390 = vmul.f32 %v1349, %v1386
        %v1391 = vmul.f32 %v1352, %v1386
        %v1392 = vmul.f32 %v1355, %v1386
        %v1393 = vmul.f32 %v1358, %v1386
        %v1394 = vmul.f32 %v1361, %v1386
        %v1395 = vmul.f32 %v1364, %v1386
        %v1396 = vmul.f32 %v1367, %v1386
        %v1397 = vmul.f32 %v1370, %v1386
        %v1398 = vmul.f32 %v1373, %v1386
        %v1399 = vmul.f32 %v1376, %v1386
        %v1400 = vmul.f32 %v1379, %v1386
        %v1401 = vmul.f32 %v1382, %v1386
        %v1402 = vmul.f32 %v1385, %v1386
        %v1403 = vsub.f32 %v1322, %v1387
        %v1404 = vsub.f32 %v1323, %v1388
        %v1405 = vsub.f32 %v1324, %v1389
        %v1406 = vsub.f32 %v1325, %v1390
        %v1407 = vsub.f32 %v1326, %v1391
        %v1408 = vsub.f32 %v1327, %v1392
        %v1409 = vsub.f32 %v1328, %v1393
        %v1410 = vsub.f32 %v1329, %v1394
        %v1411 = vsub.f32 %v1330, %v1395
        %v1412 = vsub.f32 %v1331, %v1396
        %v1413 = vsub.f32 %v1332, %v1397
        %v1414 = vsub.f32 %v1333, %v1398
        %v1415 = vsub.f32 %v1334, %v1399
        %v1416 = vsub.f32 %v1335, %v1400
        %v1417 = vsub.f32 %v1336, %v1401
        %v1418 = vsub.f32 %v1337, %v1402
        %v1419 = vmul.f32 %v1403, %v1403
        %v1420 = vmul.f32 %v1404, %v1404
        %v1421 = vmul.f32 %v1405, %v1405
        %v1422 = vmul.f32 %v1406, %v1406
        %v1423 = vmul.f32 %v1407, %v1407
        %v1424 = vmul.f32 %v1408, %v1408
        %v1425 = vmul.f32 %v1409, %v1409
        %v1426 = vmul.f32 %v1410, %v1410
        %v1427 = vmul.f32 %v1411, %v1411
        %v1428 = vmul.f32 %v1412, %v1412
        %v1429 = vmul.f32 %v1413, %v1413
        %v1430 = vmul.f32 %v1414, %v1414
        %v1431 = vmul.f32 %v1415, %v1415
        %v1432 = vmul.f32 %v1416, %v1416
        %v1433 = vmul.f32 %v1417, %v1417
        %v1434 = vmul.f32 %v1418, %v1418
        %v1435 = vsel %vm278, %v1419, 0.0
        %1436 = vadd.xlane.f32.xlu0 %v1435
        %v1437 = vpop.xlane.xlu0 %1436
        %v1438 = vsel %vm278, %v1420, 0.0
        %1439 = vadd.xlane.f32.xlu0 %v1438
        %v1440 = vpop.xlane.xlu0 %1439
        %v1441 = vsel %vm278, %v1421, 0.0
        %1442 = vadd.xlane.f32.xlu0 %v1441
        %v1443 = vpop.xlane.xlu0 %1442
        %v1444 = vsel %vm278, %v1422, 0.0
        %1445 = vadd.xlane.f32.xlu0 %v1444
        %v1446 = vpop.xlane.xlu0 %1445
        %v1447 = vsel %vm278, %v1423, 0.0
        %1448 = vadd.xlane.f32.xlu0 %v1447
        %v1449 = vpop.xlane.xlu0 %1448
        %v1450 = vsel %vm278, %v1424, 0.0
        %1451 = vadd.xlane.f32.xlu0 %v1450
        %v1452 = vpop.xlane.xlu0 %1451
        %v1453 = vsel %vm278, %v1425, 0.0
        %1454 = vadd.xlane.f32.xlu0 %v1453
        %v1455 = vpop.xlane.xlu0 %1454
        %v1456 = vsel %vm278, %v1426, 0.0
        %1457 = vadd.xlane.f32.xlu0 %v1456
        %v1458 = vpop.xlane.xlu0 %1457
        %v1459 = vsel %vm278, %v1427, 0.0
        %1460 = vadd.xlane.f32.xlu0 %v1459
        %v1461 = vpop.xlane.xlu0 %1460
        %v1462 = vsel %vm278, %v1428, 0.0
        %1463 = vadd.xlane.f32.xlu0 %v1462
        %v1464 = vpop.xlane.xlu0 %1463
        %v1465 = vsel %vm278, %v1429, 0.0
        %1466 = vadd.xlane.f32.xlu0 %v1465
        %v1467 = vpop.xlane.xlu0 %1466
        %v1468 = vsel %vm278, %v1430, 0.0
        %1469 = vadd.xlane.f32.xlu0 %v1468
        %v1470 = vpop.xlane.xlu0 %1469
        %v1471 = vsel %vm278, %v1431, 0.0
        %1472 = vadd.xlane.f32.xlu0 %v1471
        %v1473 = vpop.xlane.xlu0 %1472
        %v1474 = vsel %vm278, %v1432, 0.0
        %1475 = vadd.xlane.f32.xlu0 %v1474
        %v1476 = vpop.xlane.xlu0 %1475
        %v1477 = vsel %vm278, %v1433, 0.0
        %1478 = vadd.xlane.f32.xlu0 %v1477
        %v1479 = vpop.xlane.xlu0 %1478
        %v1480 = vsel %vm278, %v1434, 0.0
        %1481 = vadd.xlane.f32.xlu0 %v1480
        %v1482 = vpop.xlane.xlu0 %1481
        %v1483 = vmul.f32 %v1437, %v1386
        %v1484 = vmul.f32 %v1440, %v1386
        %v1485 = vmul.f32 %v1443, %v1386
        %v1486 = vmul.f32 %v1446, %v1386
        %v1487 = vmul.f32 %v1449, %v1386
        %v1488 = vmul.f32 %v1452, %v1386
        %v1489 = vmul.f32 %v1455, %v1386
        %v1490 = vmul.f32 %v1458, %v1386
        %v1491 = vmul.f32 %v1461, %v1386
        %v1492 = vmul.f32 %v1464, %v1386
        %v1493 = vmul.f32 %v1467, %v1386
        %v1494 = vmul.f32 %v1470, %v1386
        %v1495 = vmul.f32 %v1473, %v1386
        %v1496 = vmul.f32 %v1476, %v1386
        %v1497 = vmul.f32 %v1479, %v1386
        %v1498 = vmul.f32 %v1482, %v1386
        %v1499 = vadd.f32 %v1483, 1e-06
        %v1500 = vadd.f32 %v1484, 1e-06
        %v1501 = vadd.f32 %v1485, 1e-06
        %v1502 = vadd.f32 %v1486, 1e-06
        %v1503 = vadd.f32 %v1487, 1e-06
        %v1504 = vadd.f32 %v1488, 1e-06
        %v1505 = vadd.f32 %v1489, 1e-06
        %v1506 = vadd.f32 %v1490, 1e-06
        %v1507 = vadd.f32 %v1491, 1e-06
        %v1508 = vadd.f32 %v1492, 1e-06
        %v1509 = vadd.f32 %v1493, 1e-06
        %v1510 = vadd.f32 %v1494, 1e-06
        %v1511 = vadd.f32 %v1495, 1e-06
        %v1512 = vadd.f32 %v1496, 1e-06
        %v1513 = vadd.f32 %v1497, 1e-06
        %v1514 = vadd.f32 %v1498, 1e-06
        %v1515 = vrsqrt.pop %v1499
        %v1516 = vrsqrt.pop %v1500
        %v1517 = vrsqrt.pop %v1501
        %v1518 = vrsqrt.pop %v1502
        %v1519 = vrsqrt.pop %v1503
        %v1520 = vrsqrt.pop %v1504
        %v1521 = vrsqrt.pop %v1505
        %v1522 = vrsqrt.pop %v1506
        %v1523 = vrsqrt.pop %v1507
        %v1524 = vrsqrt.pop %v1508
        %v1525 = vrsqrt.pop %v1509
        %v1526 = vrsqrt.pop %v1510
        %v1527 = vrsqrt.pop %v1511
        %v1528 = vrsqrt.pop %v1512
        %v1529 = vrsqrt.pop %v1513
        %v1530 = vrsqrt.pop %v1514
        %v1531 = vmul.f32 %v1403, %v1515
        %v1532 = vmul.f32 %v1404, %v1516
        %v1533 = vmul.f32 %v1405, %v1517
        %v1534 = vmul.f32 %v1406, %v1518
        %v1535 = vmul.f32 %v1407, %v1519
        %v1536 = vmul.f32 %v1408, %v1520
        %v1537 = vmul.f32 %v1409, %v1521
        %v1538 = vmul.f32 %v1410, %v1522
        %v1539 = vmul.f32 %v1411, %v1523
        %v1540 = vmul.f32 %v1412, %v1524
        %v1541 = vmul.f32 %v1413, %v1525
        %v1542 = vmul.f32 %v1414, %v1526
        %v1543 = vmul.f32 %v1415, %v1527
        %v1544 = vmul.f32 %v1416, %v1528
        %v1545 = vmul.f32 %v1417, %v1529
        %v1546 = vmul.f32 %v1418, %v1530
        %v1547 = vld [vmem:[#allocation7] sm:$0x1]
        %v1549 = vlaneseq
        %v1550 = vshrl.u32 %v1549, 7
        %v1551 = vsub.s32 0, %v1550
        %v1552 = vrot.slane %v1547, %v1551
        %v1554 = vmul.f32 %v1531, %v1552
        %v1555 = vmul.f32 %v1532, %v1552
        %v1556 = vmul.f32 %v1533, %v1552
        %v1557 = vmul.f32 %v1534, %v1552
        %v1558 = vmul.f32 %v1535, %v1552
        %v1559 = vmul.f32 %v1536, %v1552
        %v1560 = vmul.f32 %v1537, %v1552
        %v1561 = vmul.f32 %v1538, %v1552
        %v1562 = vmul.f32 %v1539, %v1552
        %v1563 = vmul.f32 %v1540, %v1552
        %v1564 = vmul.f32 %v1541, %v1552
        %v1565 = vmul.f32 %v1542, %v1552
        %v1566 = vmul.f32 %v1543, %v1552
        %v1567 = vmul.f32 %v1544, %v1552
        %v1568 = vmul.f32 %v1545, %v1552
        %v1569 = vmul.f32 %v1546, %v1552
        %v1570 = vld [vmem:[#allocation8] sm:$0x1]
        %v1572 = vlaneseq
        %v1573 = vshrl.u32 %v1572, 7
        %v1574 = vsub.s32 0, %v1573
        %v1575 = vrot.slane %v1570, %v1574
        %v1577 = vadd.f32 %v1554, %v1575
        %v1578 = vadd.f32 %v1555, %v1575
        %v1579 = vadd.f32 %v1556, %v1575
        %v1580 = vadd.f32 %v1557, %v1575
        %v1581 = vadd.f32 %v1558, %v1575
        %v1582 = vadd.f32 %v1559, %v1575
        %v1583 = vadd.f32 %v1560, %v1575
        %v1584 = vadd.f32 %v1561, %v1575
        %v1585 = vadd.f32 %v1562, %v1575
        %v1586 = vadd.f32 %v1563, %v1575
        %v1587 = vadd.f32 %v1564, %v1575
        %v1588 = vadd.f32 %v1565, %v1575
        %v1589 = vadd.f32 %v1566, %v1575
        %v1590 = vadd.f32 %v1567, %v1575
        %v1591 = vadd.f32 %v1568, %v1575
        %v1592 = vadd.f32 %v1569, %v1575
        %v1593 = vmul.f32 %v1577, 0.5
        %v1594 = vmul.f32 %v1578, 0.5
        %v1595 = vmul.f32 %v1579, 0.5
        %v1596 = vmul.f32 %v1580, 0.5
        %v1597 = vmul.f32 %v1581, 0.5
        %v1598 = vmul.f32 %v1582, 0.5
        %v1599 = vmul.f32 %v1583, 0.5
        %v1600 = vmul.f32 %v1584, 0.5
        %v1601 = vmul.f32 %v1585, 0.5
        %v1602 = vmul.f32 %v1586, 0.5
        %v1603 = vmul.f32 %v1587, 0.5
        %v1604 = vmul.f32 %v1588, 0.5
        %v1605 = vmul.f32 %v1589, 0.5
        %v1606 = vmul.f32 %v1590, 0.5
        %v1607 = vmul.f32 %v1591, 0.5
        %v1608 = vmul.f32 %v1592, 0.5
        %v1609 = vmul.f32 %v1577, 0.044715
        %v1610 = vmul.f32 %v1578, 0.044715
        %v1611 = vmul.f32 %v1579, 0.044715
        %v1612 = vmul.f32 %v1580, 0.044715
        %v1613 = vmul.f32 %v1581, 0.044715
        %v1614 = vmul.f32 %v1582, 0.044715
        %v1615 = vmul.f32 %v1583, 0.044715
        %v1616 = vmul.f32 %v1584, 0.044715
        %v1617 = vmul.f32 %v1585, 0.044715
        %v1618 = vmul.f32 %v1586, 0.044715
        %v1619 = vmul.f32 %v1587, 0.044715
        %v1620 = vmul.f32 %v1588, 0.044715
        %v1621 = vmul.f32 %v1589, 0.044715
        %v1622 = vmul.f32 %v1590, 0.044715
        %v1623 = vmul.f32 %v1591, 0.044715
        %v1624 = vmul.f32 %v1592, 0.044715
        %v1625 = vmul.f32 %v1609, %v1577
        %v1626 = vmul.f32 %v1610, %v1578
        %v1627 = vmul.f32 %v1611, %v1579
        %v1628 = vmul.f32 %v1612, %v1580
        %v1629 = vmul.f32 %v1613, %v1581
        %v1630 = vmul.f32 %v1614, %v1582
        %v1631 = vmul.f32 %v1615, %v1583
        %v1632 = vmul.f32 %v1616, %v1584
        %v1633 = vmul.f32 %v1617, %v1585
        %v1634 = vmul.f32 %v1618, %v1586
        %v1635 = vmul.f32 %v1619, %v1587
        %v1636 = vmul.f32 %v1620, %v1588
        %v1637 = vmul.f32 %v1621, %v1589
        %v1638 = vmul.f32 %v1622, %v1590
        %v1639 = vmul.f32 %v1623, %v1591
        %v1640 = vmul.f32 %v1624, %v1592
        %v1641 = vmul.f32 %v1625, %v1577
        %v1642 = vmul.f32 %v1626, %v1578
        %v1643 = vmul.f32 %v1627, %v1579
        %v1644 = vmul.f32 %v1628, %v1580
        %v1645 = vmul.f32 %v1629, %v1581
        %v1646 = vmul.f32 %v1630, %v1582
        %v1647 = vmul.f32 %v1631, %v1583
        %v1648 = vmul.f32 %v1632, %v1584
        %v1649 = vmul.f32 %v1633, %v1585
        %v1650 = vmul.f32 %v1634, %v1586
        %v1651 = vmul.f32 %v1635, %v1587
        %v1652 = vmul.f32 %v1636, %v1588
        %v1653 = vmul.f32 %v1637, %v1589
        %v1654 = vmul.f32 %v1638, %v1590
        %v1655 = vmul.f32 %v1639, %v1591
        %v1656 = vmul.f32 %v1640, %v1592
        %v1657 = vadd.f32 %v1577, %v1641
        %v1658 = vadd.f32 %v1578, %v1642
        %v1659 = vadd.f32 %v1579, %v1643
        %v1660 = vadd.f32 %v1580, %v1644
        %v1661 = vadd.f32 %v1581, %v1645
        %v1662 = vadd.f32 %v1582, %v1646
        %v1663 = vadd.f32 %v1583, %v1647
        %v1664 = vadd.f32 %v1584, %v1648
        %v1665 = vadd.f32 %v1585, %v1649
        %v1666 = vadd.f32 %v1586, %v1650
        %v1667 = vadd.f32 %v1587, %v1651
        %v1668 = vadd.f32 %v1588, %v1652
        %v1669 = vadd.f32 %v1589, %v1653
        %v1670 = vadd.f32 %v1590, %v1654
        %v1671 = vadd.f32 %v1591, %v1655
        %v1672 = vadd.f32 %v1592, %v1656
        %v1673 = vmul.f32 %v1657, 0.7978846
        %v1674 = vmul.f32 %v1658, 0.7978846
        %v1675 = vmul.f32 %v1659, 0.7978846
        %v1676 = vmul.f32 %v1660, 0.7978846
        %v1677 = vmul.f32 %v1661, 0.7978846
        %v1678 = vmul.f32 %v1662, 0.7978846
        %v1679 = vmul.f32 %v1663, 0.7978846
        %v1680 = vmul.f32 %v1664, 0.7978846
        %v1681 = vmul.f32 %v1665, 0.7978846
        %v1682 = vmul.f32 %v1666, 0.7978846
        %v1683 = vmul.f32 %v1667, 0.7978846
        %v1684 = vmul.f32 %v1668, 0.7978846
        %v1685 = vmul.f32 %v1669, 0.7978846
        %v1686 = vmul.f32 %v1670, 0.7978846
        %v1687 = vmul.f32 %v1671, 0.7978846
        %v1688 = vmul.f32 %v1672, 0.7978846
        %v1689 = vtanh.pop %v1673
        %v1690 = vtanh.pop %v1674
        %v1691 = vtanh.pop %v1675
        %v1692 = vtanh.pop %v1676
        %v1693 = vtanh.pop %v1677
        %v1694 = vtanh.pop %v1678
        %v1695 = vtanh.pop %v1679
        %v1696 = vtanh.pop %v1680
        %v1697 = vtanh.pop %v1681
        %v1698 = vtanh.pop %v1682
        %v1699 = vtanh.pop %v1683
        %v1700 = vtanh.pop %v1684
        %v1701 = vtanh.pop %v1685
        %v1702 = vtanh.pop %v1686
        %v1703 = vtanh.pop %v1687
        %v1704 = vtanh.pop %v1688
        %v1705 = vadd.f32 %v1689, 1.0
        %v1706 = vadd.f32 %v1690, 1.0
        %v1707 = vadd.f32 %v1691, 1.0
        %v1708 = vadd.f32 %v1692, 1.0
        %v1709 = vadd.f32 %v1693, 1.0
        %v1710 = vadd.f32 %v1694, 1.0
        %v1711 = vadd.f32 %v1695, 1.0
        %v1712 = vadd.f32 %v1696, 1.0
        %v1713 = vadd.f32 %v1697, 1.0
        %v1714 = vadd.f32 %v1698, 1.0
        %v1715 = vadd.f32 %v1699, 1.0
        %v1716 = vadd.f32 %v1700, 1.0
        %v1717 = vadd.f32 %v1701, 1.0
        %v1718 = vadd.f32 %v1702, 1.0
        %v1719 = vadd.f32 %v1703, 1.0
        %v1720 = vadd.f32 %v1704, 1.0
        %v1721 = vmul.f32 %v1593, %v1705
        %v1722 = vmul.f32 %v1594, %v1706
        %v1723 = vmul.f32 %v1595, %v1707
        %v1724 = vmul.f32 %v1596, %v1708
        %v1725 = vmul.f32 %v1597, %v1709
        %v1726 = vmul.f32 %v1598, %v1710
        %v1727 = vmul.f32 %v1599, %v1711
        %v1728 = vmul.f32 %v1600, %v1712
        %v1729 = vmul.f32 %v1601, %v1713
        %v1730 = vmul.f32 %v1602, %v1714
        %v1731 = vmul.f32 %v1603, %v1715
        %v1732 = vmul.f32 %v1604, %v1716
        %v1733 = vmul.f32 %v1605, %v1717
        %v1734 = vmul.f32 %v1606, %v1718
        %v1735 = vmul.f32 %v1607, %v1719
        %v1736 = vmul.f32 %v1608, %v1720
        %1737 = vst.msk [vmem:[%s277] sm:$0xff] %vm278, %v1721
        %1738 = vst.msk [vmem:[%s277 + $0x8] sm:$0xff] %vm278, %v1722
        %1739 = vst.msk [vmem:[%s277 + $0x10] sm:$0xff] %vm278, %v1723
        %1740 = vst.msk [vmem:[%s277 + $0x18] sm:$0xff] %vm278, %v1724
        %1741 = vst.msk [vmem:[%s277 + $0x20] sm:$0xff] %vm278, %v1725
        %1742 = vst.msk [vmem:[%s277 + $0x28] sm:$0xff] %vm278, %v1726
        %1743 = vst.msk [vmem:[%s277 + $0x30] sm:$0xff] %vm278, %v1727
        %1744 = vst.msk [vmem:[%s277 + $0x38] sm:$0xff] %vm278, %v1728
        %1745 = vst.msk [vmem:[%s277 + $0x40] sm:$0xff] %vm278, %v1729
        %1746 = vst.msk [vmem:[%s277 + $0x48] sm:$0xff] %vm278, %v1730
        %1747 = vst.msk [vmem:[%s277 + $0x50] sm:$0xff] %vm278, %v1731
        %1748 = vst.msk [vmem:[%s277 + $0x58] sm:$0xff] %vm278, %v1732
        %1749 = vst.msk [vmem:[%s277 + $0x60] sm:$0xff] %vm278, %v1733
        %1750 = vst.msk [vmem:[%s277 + $0x68] sm:$0xff] %vm278, %v1734
        %1751 = vst.msk [vmem:[%s277 + $0x70] sm:$0xff] %vm278, %v1735
        %1752 = vst.msk [vmem:[%s277 + $0x78] sm:$0xff] %vm278, %v1736
        %s1753 = scalar_lea.vmem [#allocation2], 192
        %v1754 = vld [vmem:[%s1753] sm:$0xff]
        %v1755 = vld [vmem:[%s1753 + $0x8] sm:$0xff]
        %v1756 = vld [vmem:[%s1753 + $0x10] sm:$0x3]
        %v1757 = vld [vmem:[%s1753 + $0x18] sm:$0xff]
        %v1758 = vld [vmem:[%s1753 + $0x20] sm:$0xff]
        %v1759 = vld [vmem:[%s1753 + $0x28] sm:$0x3]
        %v1760 = vld [vmem:[%s1753 + $0x30] sm:$0xff]
        %v1761 = vld [vmem:[%s1753 + $0x38] sm:$0xff]
        %v1762 = vld [vmem:[%s1753 + $0x40] sm:$0x3]
        %v1763 = vld [vmem:[%s1753 + $0x48] sm:$0xff]
        %v1764 = vld [vmem:[%s1753 + $0x50] sm:$0xff]
        %v1765 = vld [vmem:[%s1753 + $0x58] sm:$0x3]
        %v1766 = vld [vmem:[%s1753 + $0x60] sm:$0xff]
        %v1767 = vld [vmem:[%s1753 + $0x68] sm:$0xff]
        %v1768 = vld [vmem:[%s1753 + $0x70] sm:$0x3]
        %v1769 = vld [vmem:[%s1753 + $0x78] sm:$0xff]
        %v1770 = vld [vmem:[%s1753 + $0x80] sm:$0xff]
        %v1771 = vld [vmem:[%s1753 + $0x88] sm:$0x3]
        %v1772 = vld [vmem:[%s1753 + $0x90] sm:$0xff]
        %v1773 = vld [vmem:[%s1753 + $0x98] sm:$0xff]
        %v1774 = vld [vmem:[%s1753 + $0xa0] sm:$0x3]
        %v1775 = vld [vmem:[%s1753 + $0xa8] sm:$0xff]
        %v1776 = vld [vmem:[%s1753 + $0xb0] sm:$0xff]
        %v1777 = vld [vmem:[%s1753 + $0xb8] sm:$0x3]
        %v1778 = vmul.f32 %v1754, %v416
        %v1779 = vmul.f32 %v1755, %v416
        %v1780 = vmul.f32 %v1757, %v416
        %v1781 = vmul.f32 %v1758, %v416
        %v1782 = vmul.f32 %v1760, %v416
        %v1783 = vmul.f32 %v1761, %v416
        %v1784 = vmul.f32 %v1763, %v416
        %v1785 = vmul.f32 %v1764, %v416
        %v1786 = vmul.f32 %v1766, %v416
        %v1787 = vmul.f32 %v1767, %v416
        %v1788 = vmul.f32 %v1769, %v416
        %v1789 = vmul.f32 %v1770, %v416
        %v1790 = vmul.f32 %v1772, %v416
        %v1791 = vmul.f32 %v1773, %v416
        %v1792 = vmul.f32 %v1775, %v416
        %v1793 = vmul.f32 %v1776, %v416
        %v1794 = vadd.f32 %v1778, 0.0
        %v1795 = vadd.f32 %v1779, 0.0
        %v1796 = vadd.f32 %v1780, 0.0
        %v1797 = vadd.f32 %v1781, 0.0
        %v1798 = vadd.f32 %v1782, 0.0
        %v1799 = vadd.f32 %v1783, 0.0
        %v1800 = vadd.f32 %v1784, 0.0
        %v1801 = vadd.f32 %v1785, 0.0
        %v1802 = vadd.f32 %v1786, 0.0
        %v1803 = vadd.f32 %v1787, 0.0
        %v1804 = vadd.f32 %v1788, 0.0
        %v1805 = vadd.f32 %v1789, 0.0
        %v1806 = vadd.f32 %v1790, 0.0
        %v1807 = vadd.f32 %v1791, 0.0
        %v1808 = vadd.f32 %v1792, 0.0
        %v1809 = vadd.f32 %v1793, 0.0
        %v1810 = vmul.f32 %v1754, %v452
        %v1811 = vmul.f32 %v1755, %v452
        %v1812 = vmul.f32 %v1756, %v452
        %v1813 = vmul.f32 %v1757, %v452
        %v1814 = vmul.f32 %v1758, %v452
        %v1815 = vmul.f32 %v1759, %v452
        %v1816 = vmul.f32 %v1760, %v452
        %v1817 = vmul.f32 %v1761, %v452
        %v1818 = vmul.f32 %v1762, %v452
        %v1819 = vmul.f32 %v1763, %v452
        %v1820 = vmul.f32 %v1764, %v452
        %v1821 = vmul.f32 %v1765, %v452
        %v1822 = vmul.f32 %v1766, %v452
        %v1823 = vmul.f32 %v1767, %v452
        %v1824 = vmul.f32 %v1768, %v452
        %v1825 = vmul.f32 %v1769, %v452
        %v1826 = vmul.f32 %v1770, %v452
        %v1827 = vmul.f32 %v1771, %v452
        %v1828 = vmul.f32 %v1772, %v452
        %v1829 = vmul.f32 %v1773, %v452
        %v1830 = vmul.f32 %v1774, %v452
        %v1831 = vmul.f32 %v1775, %v452
        %v1832 = vmul.f32 %v1776, %v452
        %v1833 = vmul.f32 %v1777, %v452
        %v1858 = vrot.slane %v1810, 1
        %v1859 = vrot.slane %v1811, 1
        %v1860 = vsel %vm501, %v1858, %v1859
        %v1861 = vrot.slane %v1812, 1
        %v1862 = vsel %vm501, %v1859, %v1861
        %v1863 = vrot.slane %v1813, 1
        %v1864 = vrot.slane %v1814, 1
        %v1865 = vsel %vm501, %v1863, %v1864
        %v1866 = vrot.slane %v1815, 1
        %v1867 = vsel %vm501, %v1864, %v1866
        %v1868 = vrot.slane %v1816, 1
        %v1869 = vrot.slane %v1817, 1
        %v1870 = vsel %vm501, %v1868, %v1869
        %v1871 = vrot.slane %v1818, 1
        %v1872 = vsel %vm501, %v1869, %v1871
        %v1873 = vrot.slane %v1819, 1
        %v1874 = vrot.slane %v1820, 1
        %v1875 = vsel %vm501, %v1873, %v1874
        %v1876 = vrot.slane %v1821, 1
        %v1877 = vsel %vm501, %v1874, %v1876
        %v1878 = vrot.slane %v1822, 1
        %v1879 = vrot.slane %v1823, 1
        %v1880 = vsel %vm501, %v1878, %v1879
        %v1881 = vrot.slane %v1824, 1
        %v1882 = vsel %vm501, %v1879, %v1881
        %v1883 = vrot.slane %v1825, 1
        %v1884 = vrot.slane %v1826, 1
        %v1885 = vsel %vm501, %v1883, %v1884
        %v1886 = vrot.slane %v1827, 1
        %v1887 = vsel %vm501, %v1884, %v1886
        %v1888 = vrot.slane %v1828, 1
        %v1889 = vrot.slane %v1829, 1
        %v1890 = vsel %vm501, %v1888, %v1889
        %v1891 = vrot.slane %v1830, 1
        %v1892 = vsel %vm501, %v1889, %v1891
        %v1893 = vrot.slane %v1831, 1
        %v1894 = vrot.slane %v1832, 1
        %v1895 = vsel %vm501, %v1893, %v1894
        %v1896 = vrot.slane %v1833, 1
        %v1897 = vsel %vm501, %v1894, %v1896
        %v1914 = vadd.f32 %v1794, %v1860
        %v1915 = vadd.f32 %v1795, %v1862
        %v1916 = vadd.f32 %v1796, %v1865
        %v1917 = vadd.f32 %v1797, %v1867
        %v1918 = vadd.f32 %v1798, %v1870
        %v1919 = vadd.f32 %v1799, %v1872
        %v1920 = vadd.f32 %v1800, %v1875
        %v1921 = vadd.f32 %v1801, %v1877
        %v1922 = vadd.f32 %v1802, %v1880
        %v1923 = vadd.f32 %v1803, %v1882
        %v1924 = vadd.f32 %v1804, %v1885
        %v1925 = vadd.f32 %v1805, %v1887
        %v1926 = vadd.f32 %v1806, %v1890
        %v1927 = vadd.f32 %v1807, %v1892
        %v1928 = vadd.f32 %v1808, %v1895
        %v1929 = vadd.f32 %v1809, %v1897
        %v1930 = vmul.f32 %v1754, %v577
        %v1931 = vmul.f32 %v1755, %v577
        %v1932 = vmul.f32 %v1756, %v577
        %v1933 = vmul.f32 %v1757, %v577
        %v1934 = vmul.f32 %v1758, %v577
        %v1935 = vmul.f32 %v1759, %v577
        %v1936 = vmul.f32 %v1760, %v577
        %v1937 = vmul.f32 %v1761, %v577
        %v1938 = vmul.f32 %v1762, %v577
        %v1939 = vmul.f32 %v1763, %v577
        %v1940 = vmul.f32 %v1764, %v577
        %v1941 = vmul.f32 %v1765, %v577
        %v1942 = vmul.f32 %v1766, %v577
        %v1943 = vmul.f32 %v1767, %v577
        %v1944 = vmul.f32 %v1768, %v577
        %v1945 = vmul.f32 %v1769, %v577
        %v1946 = vmul.f32 %v1770, %v577
        %v1947 = vmul.f32 %v1771, %v577
        %v1948 = vmul.f32 %v1772, %v577
        %v1949 = vmul.f32 %v1773, %v577
        %v1950 = vmul.f32 %v1774, %v577
        %v1951 = vmul.f32 %v1775, %v577
        %v1952 = vmul.f32 %v1776, %v577
        %v1953 = vmul.f32 %v1777, %v577
        %v1978 = vrot.slane %v1930, 2
        %v1979 = vrot.slane %v1931, 2
        %v1980 = vsel %vm626, %v1978, %v1979
        %v1981 = vrot.slane %v1932, 2
        %v1982 = vsel %vm626, %v1979, %v1981
        %v1983 = vrot.slane %v1933, 2
        %v1984 = vrot.slane %v1934, 2
        %v1985 = vsel %vm626, %v1983, %v1984
        %v1986 = vrot.slane %v1935, 2
        %v1987 = vsel %vm626, %v1984, %v1986
        %v1988 = vrot.slane %v1936, 2
        %v1989 = vrot.slane %v1937, 2
        %v1990 = vsel %vm626, %v1988, %v1989
        %v1991 = vrot.slane %v1938, 2
        %v1992 = vsel %vm626, %v1989, %v1991
        %v1993 = vrot.slane %v1939, 2
        %v1994 = vrot.slane %v1940, 2
        %v1995 = vsel %vm626, %v1993, %v1994
        %v1996 = vrot.slane %v1941, 2
        %v1997 = vsel %vm626, %v1994, %v1996
        %v1998 = vrot.slane %v1942, 2
        %v1999 = vrot.slane %v1943, 2
        %v2000 = vsel %vm626, %v1998, %v1999
        %v2001 = vrot.slane %v1944, 2
        %v2002 = vsel %vm626, %v1999, %v2001
        %v2003 = vrot.slane %v1945, 2
        %v2004 = vrot.slane %v1946, 2
        %v2005 = vsel %vm626, %v2003, %v2004
        %v2006 = vrot.slane %v1947, 2
        %v2007 = vsel %vm626, %v2004, %v2006
        %v2008 = vrot.slane %v1948, 2
        %v2009 = vrot.slane %v1949, 2
        %v2010 = vsel %vm626, %v2008, %v2009
        %v2011 = vrot.slane %v1950, 2
        %v2012 = vsel %vm626, %v2009, %v2011
        %v2013 = vrot.slane %v1951, 2
        %v2014 = vrot.slane %v1952, 2
        %v2015 = vsel %vm626, %v2013, %v2014
        %v2016 = vrot.slane %v1953, 2
        %v2017 = vsel %vm626, %v2014, %v2016
        %v2034 = vadd.f32 %v1914, %v1980
        %v2035 = vadd.f32 %v1915, %v1982
        %v2036 = vadd.f32 %v1916, %v1985
        %v2037 = vadd.f32 %v1917, %v1987
        %v2038 = vadd.f32 %v1918, %v1990
        %v2039 = vadd.f32 %v1919, %v1992
        %v2040 = vadd.f32 %v1920, %v1995
        %v2041 = vadd.f32 %v1921, %v1997
        %v2042 = vadd.f32 %v1922, %v2000
        %v2043 = vadd.f32 %v1923, %v2002
        %v2044 = vadd.f32 %v1924, %v2005
        %v2045 = vadd.f32 %v1925, %v2007
        %v2046 = vadd.f32 %v1926, %v2010
        %v2047 = vadd.f32 %v1927, %v2012
        %v2048 = vadd.f32 %v1928, %v2015
        %v2049 = vadd.f32 %v1929, %v2017
        %s2050 = scalar_lea.vmem [#allocation2], 216
        %v2051 = vld [vmem:[%s2050] sm:$0xff]
        %v2052 = vld [vmem:[%s2050 + $0x8] sm:$0xff]
        %v2053 = vld [vmem:[%s2050 + $0x10] sm:$0x3]
        %v2054 = vld [vmem:[%s2050 + $0x18] sm:$0xff]
        %v2055 = vld [vmem:[%s2050 + $0x20] sm:$0xff]
        %v2056 = vld [vmem:[%s2050 + $0x28] sm:$0x3]
        %v2057 = vld [vmem:[%s2050 + $0x30] sm:$0xff]
        %v2058 = vld [vmem:[%s2050 + $0x38] sm:$0xff]
        %v2059 = vld [vmem:[%s2050 + $0x40] sm:$0x3]
        %v2060 = vld [vmem:[%s2050 + $0x48] sm:$0xff]
        %v2061 = vld [vmem:[%s2050 + $0x50] sm:$0xff]
        %v2062 = vld [vmem:[%s2050 + $0x58] sm:$0x3]
        %v2063 = vld [vmem:[%s2050 + $0x60] sm:$0xff]
        %v2064 = vld [vmem:[%s2050 + $0x68] sm:$0xff]
        %v2065 = vld [vmem:[%s2050 + $0x70] sm:$0x3]
        %v2066 = vld [vmem:[%s2050 + $0x78] sm:$0xff]
        %v2067 = vld [vmem:[%s2050 + $0x80] sm:$0xff]
        %v2068 = vld [vmem:[%s2050 + $0x88] sm:$0x3]
        %v2069 = vld [vmem:[%s2050 + $0x90] sm:$0xff]
        %v2070 = vld [vmem:[%s2050 + $0x98] sm:$0xff]
        %v2071 = vld [vmem:[%s2050 + $0xa0] sm:$0x3]
        %v2072 = vld [vmem:[%s2050 + $0xa8] sm:$0xff]
        %v2073 = vld [vmem:[%s2050 + $0xb0] sm:$0xff]
        %v2074 = vld [vmem:[%s2050 + $0xb8] sm:$0x3]
        %v2075 = vmul.f32 %v2051, %v726
        %v2076 = vmul.f32 %v2052, %v726
        %v2077 = vmul.f32 %v2054, %v726
        %v2078 = vmul.f32 %v2055, %v726
        %v2079 = vmul.f32 %v2057, %v726
        %v2080 = vmul.f32 %v2058, %v726
        %v2081 = vmul.f32 %v2060, %v726
        %v2082 = vmul.f32 %v2061, %v726
        %v2083 = vmul.f32 %v2063, %v726
        %v2084 = vmul.f32 %v2064, %v726
        %v2085 = vmul.f32 %v2066, %v726
        %v2086 = vmul.f32 %v2067, %v726
        %v2087 = vmul.f32 %v2069, %v726
        %v2088 = vmul.f32 %v2070, %v726
        %v2089 = vmul.f32 %v2072, %v726
        %v2090 = vmul.f32 %v2073, %v726
        %v2091 = vadd.f32 %v2034, %v2075
        %v2092 = vadd.f32 %v2035, %v2076
        %v2093 = vadd.f32 %v2036, %v2077
        %v2094 = vadd.f32 %v2037, %v2078
        %v2095 = vadd.f32 %v2038, %v2079
        %v2096 = vadd.f32 %v2039, %v2080
        %v2097 = vadd.f32 %v2040, %v2081
        %v2098 = vadd.f32 %v2041, %v2082
        %v2099 = vadd.f32 %v2042, %v2083
        %v2100 = vadd.f32 %v2043, %v2084
        %v2101 = vadd.f32 %v2044, %v2085
        %v2102 = vadd.f32 %v2045, %v2086
        %v2103 = vadd.f32 %v2046, %v2087
        %v2104 = vadd.f32 %v2047, %v2088
        %v2105 = vadd.f32 %v2048, %v2089
        %v2106 = vadd.f32 %v2049, %v2090
        %v2107 = vmul.f32 %v2051, %v762
        %v2108 = vmul.f32 %v2052, %v762
        %v2109 = vmul.f32 %v2053, %v762
        %v2110 = vmul.f32 %v2054, %v762
        %v2111 = vmul.f32 %v2055, %v762
        %v2112 = vmul.f32 %v2056, %v762
        %v2113 = vmul.f32 %v2057, %v762
        %v2114 = vmul.f32 %v2058, %v762
        %v2115 = vmul.f32 %v2059, %v762
        %v2116 = vmul.f32 %v2060, %v762
        %v2117 = vmul.f32 %v2061, %v762
        %v2118 = vmul.f32 %v2062, %v762
        %v2119 = vmul.f32 %v2063, %v762
        %v2120 = vmul.f32 %v2064, %v762
        %v2121 = vmul.f32 %v2065, %v762
        %v2122 = vmul.f32 %v2066, %v762
        %v2123 = vmul.f32 %v2067, %v762
        %v2124 = vmul.f32 %v2068, %v762
        %v2125 = vmul.f32 %v2069, %v762
        %v2126 = vmul.f32 %v2070, %v762
        %v2127 = vmul.f32 %v2071, %v762
        %v2128 = vmul.f32 %v2072, %v762
        %v2129 = vmul.f32 %v2073, %v762
        %v2130 = vmul.f32 %v2074, %v762
        %v2155 = vrot.slane %v2107, 1
        %v2156 = vrot.slane %v2108, 1
        %v2157 = vsel %vm501, %v2155, %v2156
        %v2158 = vrot.slane %v2109, 1
        %v2159 = vsel %vm501, %v2156, %v2158
        %v2160 = vrot.slane %v2110, 1
        %v2161 = vrot.slane %v2111, 1
        %v2162 = vsel %vm501, %v2160, %v2161
        %v2163 = vrot.slane %v2112, 1
        %v2164 = vsel %vm501, %v2161, %v2163
        %v2165 = vrot.slane %v2113, 1
        %v2166 = vrot.slane %v2114, 1
        %v2167 = vsel %vm501, %v2165, %v2166
        %v2168 = vrot.slane %v2115, 1
        %v2169 = vsel %vm501, %v2166, %v2168
        %v2170 = vrot.slane %v2116, 1
        %v2171 = vrot.slane %v2117, 1
        %v2172 = vsel %vm501, %v2170, %v2171
        %v2173 = vrot.slane %v2118, 1
        %v2174 = vsel %vm501, %v2171, %v2173
        %v2175 = vrot.slane %v2119, 1
        %v2176 = vrot.slane %v2120, 1
        %v2177 = vsel %vm501, %v2175, %v2176
        %v2178 = vrot.slane %v2121, 1
        %v2179 = vsel %vm501, %v2176, %v2178
        %v2180 = vrot.slane %v2122, 1
        %v2181 = vrot.slane %v2123, 1
        %v2182 = vsel %vm501, %v2180, %v2181
        %v2183 = vrot.slane %v2124, 1
        %v2184 = vsel %vm501, %v2181, %v2183
        %v2185 = vrot.slane %v2125, 1
        %v2186 = vrot.slane %v2126, 1
        %v2187 = vsel %vm501, %v2185, %v2186
        %v2188 = vrot.slane %v2127, 1
        %v2189 = vsel %vm501, %v2186, %v2188
        %v2190 = vrot.slane %v2128, 1
        %v2191 = vrot.slane %v2129, 1
        %v2192 = vsel %vm501, %v2190, %v2191
        %v2193 = vrot.slane %v2130, 1
        %v2194 = vsel %vm501, %v2191, %v2193
        %v2211 = vadd.f32 %v2091, %v2157
        %v2212 = vadd.f32 %v2092, %v2159
        %v2213 = vadd.f32 %v2093, %v2162
        %v2214 = vadd.f32 %v2094, %v2164
        %v2215 = vadd.f32 %v2095, %v2167
        %v2216 = vadd.f32 %v2096, %v2169
        %v2217 = vadd.f32 %v2097, %v2172
        %v2218 = vadd.f32 %v2098, %v2174
        %v2219 = vadd.f32 %v2099, %v2177
        %v2220 = vadd.f32 %v2100, %v2179
        %v2221 = vadd.f32 %v2101, %v2182
        %v2222 = vadd.f32 %v2102, %v2184
        %v2223 = vadd.f32 %v2103, %v2187
        %v2224 = vadd.f32 %v2104, %v2189
        %v2225 = vadd.f32 %v2105, %v2192
        %v2226 = vadd.f32 %v2106, %v2194
        %v2227 = vmul.f32 %v2051, %v886
        %v2228 = vmul.f32 %v2052, %v886
        %v2229 = vmul.f32 %v2053, %v886
        %v2230 = vmul.f32 %v2054, %v886
        %v2231 = vmul.f32 %v2055, %v886
        %v2232 = vmul.f32 %v2056, %v886
        %v2233 = vmul.f32 %v2057, %v886
        %v2234 = vmul.f32 %v2058, %v886
        %v2235 = vmul.f32 %v2059, %v886
        %v2236 = vmul.f32 %v2060, %v886
        %v2237 = vmul.f32 %v2061, %v886
        %v2238 = vmul.f32 %v2062, %v886
        %v2239 = vmul.f32 %v2063, %v886
        %v2240 = vmul.f32 %v2064, %v886
        %v2241 = vmul.f32 %v2065, %v886
        %v2242 = vmul.f32 %v2066, %v886
        %v2243 = vmul.f32 %v2067, %v886
        %v2244 = vmul.f32 %v2068, %v886
        %v2245 = vmul.f32 %v2069, %v886
        %v2246 = vmul.f32 %v2070, %v886
        %v2247 = vmul.f32 %v2071, %v886
        %v2248 = vmul.f32 %v2072, %v886
        %v2249 = vmul.f32 %v2073, %v886
        %v2250 = vmul.f32 %v2074, %v886
        %v2275 = vrot.slane %v2227, 2
        %v2276 = vrot.slane %v2228, 2
        %v2277 = vsel %vm626, %v2275, %v2276
        %v2278 = vrot.slane %v2229, 2
        %v2279 = vsel %vm626, %v2276, %v2278
        %v2280 = vrot.slane %v2230, 2
        %v2281 = vrot.slane %v2231, 2
        %v2282 = vsel %vm626, %v2280, %v2281
        %v2283 = vrot.slane %v2232, 2
        %v2284 = vsel %vm626, %v2281, %v2283
        %v2285 = vrot.slane %v2233, 2
        %v2286 = vrot.slane %v2234, 2
        %v2287 = vsel %vm626, %v2285, %v2286
        %v2288 = vrot.slane %v2235, 2
        %v2289 = vsel %vm626, %v2286, %v2288
        %v2290 = vrot.slane %v2236, 2
        %v2291 = vrot.slane %v2237, 2
        %v2292 = vsel %vm626, %v2290, %v2291
        %v2293 = vrot.slane %v2238, 2
        %v2294 = vsel %vm626, %v2291, %v2293
        %v2295 = vrot.slane %v2239, 2
        %v2296 = vrot.slane %v2240, 2
        %v2297 = vsel %vm626, %v2295, %v2296
        %v2298 = vrot.slane %v2241, 2
        %v2299 = vsel %vm626, %v2296, %v2298
        %v2300 = vrot.slane %v2242, 2
        %v2301 = vrot.slane %v2243, 2
        %v2302 = vsel %vm626, %v2300, %v2301
        %v2303 = vrot.slane %v2244, 2
        %v2304 = vsel %vm626, %v2301, %v2303
        %v2305 = vrot.slane %v2245, 2
        %v2306 = vrot.slane %v2246, 2
        %v2307 = vsel %vm626, %v2305, %v2306
        %v2308 = vrot.slane %v2247, 2
        %v2309 = vsel %vm626, %v2306, %v2308
        %v2310 = vrot.slane %v2248, 2
        %v2311 = vrot.slane %v2249, 2
        %v2312 = vsel %vm626, %v2310, %v2311
        %v2313 = vrot.slane %v2250, 2
        %v2314 = vsel %vm626, %v2311, %v2313
        %v2331 = vadd.f32 %v2211, %v2277
        %v2332 = vadd.f32 %v2212, %v2279
        %v2333 = vadd.f32 %v2213, %v2282
        %v2334 = vadd.f32 %v2214, %v2284
        %v2335 = vadd.f32 %v2215, %v2287
        %v2336 = vadd.f32 %v2216, %v2289
        %v2337 = vadd.f32 %v2217, %v2292
        %v2338 = vadd.f32 %v2218, %v2294
        %v2339 = vadd.f32 %v2219, %v2297
        %v2340 = vadd.f32 %v2220, %v2299
        %v2341 = vadd.f32 %v2221, %v2302
        %v2342 = vadd.f32 %v2222, %v2304
        %v2343 = vadd.f32 %v2223, %v2307
        %v2344 = vadd.f32 %v2224, %v2309
        %v2345 = vadd.f32 %v2225, %v2312
        %v2346 = vadd.f32 %v2226, %v2314
        %s2347 = scalar_lea.vmem [#allocation2], 240
        %v2348 = vld [vmem:[%s2347] sm:$0xff]
        %v2349 = vld [vmem:[%s2347 + $0x8] sm:$0xff]
        %v2350 = vld [vmem:[%s2347 + $0x10] sm:$0x3]
        %v2351 = vld [vmem:[%s2347 + $0x18] sm:$0xff]
        %v2352 = vld [vmem:[%s2347 + $0x20] sm:$0xff]
        %v2353 = vld [vmem:[%s2347 + $0x28] sm:$0x3]
        %v2354 = vld [vmem:[%s2347 + $0x30] sm:$0xff]
        %v2355 = vld [vmem:[%s2347 + $0x38] sm:$0xff]
        %v2356 = vld [vmem:[%s2347 + $0x40] sm:$0x3]
        %v2357 = vld [vmem:[%s2347 + $0x48] sm:$0xff]
        %v2358 = vld [vmem:[%s2347 + $0x50] sm:$0xff]
        %v2359 = vld [vmem:[%s2347 + $0x58] sm:$0x3]
        %v2360 = vld [vmem:[%s2347 + $0x60] sm:$0xff]
        %v2361 = vld [vmem:[%s2347 + $0x68] sm:$0xff]
        %v2362 = vld [vmem:[%s2347 + $0x70] sm:$0x3]
        %v2363 = vld [vmem:[%s2347 + $0x78] sm:$0xff]
        %v2364 = vld [vmem:[%s2347 + $0x80] sm:$0xff]
        %v2365 = vld [vmem:[%s2347 + $0x88] sm:$0x3]
        %v2366 = vld [vmem:[%s2347 + $0x90] sm:$0xff]
        %v2367 = vld [vmem:[%s2347 + $0x98] sm:$0xff]
        %v2368 = vld [vmem:[%s2347 + $0xa0] sm:$0x3]
        %v2369 = vld [vmem:[%s2347 + $0xa8] sm:$0xff]
        %v2370 = vld [vmem:[%s2347 + $0xb0] sm:$0xff]
        %v2371 = vld [vmem:[%s2347 + $0xb8] sm:$0x3]
        %v2372 = vmul.f32 %v2348, %v1035
        %v2373 = vmul.f32 %v2349, %v1035
        %v2374 = vmul.f32 %v2351, %v1035
        %v2375 = vmul.f32 %v2352, %v1035
        %v2376 = vmul.f32 %v2354, %v1035
        %v2377 = vmul.f32 %v2355, %v1035
        %v2378 = vmul.f32 %v2357, %v1035
        %v2379 = vmul.f32 %v2358, %v1035
        %v2380 = vmul.f32 %v2360, %v1035
        %v2381 = vmul.f32 %v2361, %v1035
        %v2382 = vmul.f32 %v2363, %v1035
        %v2383 = vmul.f32 %v2364, %v1035
        %v2384 = vmul.f32 %v2366, %v1035
        %v2385 = vmul.f32 %v2367, %v1035
        %v2386 = vmul.f32 %v2369, %v1035
        %v2387 = vmul.f32 %v2370, %v1035
        %v2388 = vadd.f32 %v2331, %v2372
        %v2389 = vadd.f32 %v2332, %v2373
        %v2390 = vadd.f32 %v2333, %v2374
        %v2391 = vadd.f32 %v2334, %v2375
        %v2392 = vadd.f32 %v2335, %v2376
        %v2393 = vadd.f32 %v2336, %v2377
        %v2394 = vadd.f32 %v2337, %v2378
        %v2395 = vadd.f32 %v2338, %v2379
        %v2396 = vadd.f32 %v2339, %v2380
        %v2397 = vadd.f32 %v2340, %v2381
        %v2398 = vadd.f32 %v2341, %v2382
        %v2399 = vadd.f32 %v2342, %v2383
        %v2400 = vadd.f32 %v2343, %v2384
        %v2401 = vadd.f32 %v2344, %v2385
        %v2402 = vadd.f32 %v2345, %v2386
        %v2403 = vadd.f32 %v2346, %v2387
        %v2404 = vmul.f32 %v2348, %v1071
        %v2405 = vmul.f32 %v2349, %v1071
        %v2406 = vmul.f32 %v2350, %v1071
        %v2407 = vmul.f32 %v2351, %v1071
        %v2408 = vmul.f32 %v2352, %v1071
        %v2409 = vmul.f32 %v2353, %v1071
        %v2410 = vmul.f32 %v2354, %v1071
        %v2411 = vmul.f32 %v2355, %v1071
        %v2412 = vmul.f32 %v2356, %v1071
        %v2413 = vmul.f32 %v2357, %v1071
        %v2414 = vmul.f32 %v2358, %v1071
        %v2415 = vmul.f32 %v2359, %v1071
        %v2416 = vmul.f32 %v2360, %v1071
        %v2417 = vmul.f32 %v2361, %v1071
        %v2418 = vmul.f32 %v2362, %v1071
        %v2419 = vmul.f32 %v2363, %v1071
        %v2420 = vmul.f32 %v2364, %v1071
        %v2421 = vmul.f32 %v2365, %v1071
        %v2422 = vmul.f32 %v2366, %v1071
        %v2423 = vmul.f32 %v2367, %v1071
        %v2424 = vmul.f32 %v2368, %v1071
        %v2425 = vmul.f32 %v2369, %v1071
        %v2426 = vmul.f32 %v2370, %v1071
        %v2427 = vmul.f32 %v2371, %v1071
        %v2452 = vrot.slane %v2404, 1
        %v2453 = vrot.slane %v2405, 1
        %v2454 = vsel %vm501, %v2452, %v2453
        %v2455 = vrot.slane %v2406, 1
        %v2456 = vsel %vm501, %v2453, %v2455
        %v2457 = vrot.slane %v2407, 1
        %v2458 = vrot.slane %v2408, 1
        %v2459 = vsel %vm501, %v2457, %v2458
        %v2460 = vrot.slane %v2409, 1
        %v2461 = vsel %vm501, %v2458, %v2460
        %v2462 = vrot.slane %v2410, 1
        %v2463 = vrot.slane %v2411, 1
        %v2464 = vsel %vm501, %v2462, %v2463
        %v2465 = vrot.slane %v2412, 1
        %v2466 = vsel %vm501, %v2463, %v2465
        %v2467 = vrot.slane %v2413, 1
        %v2468 = vrot.slane %v2414, 1
        %v2469 = vsel %vm501, %v2467, %v2468
        %v2470 = vrot.slane %v2415, 1
        %v2471 = vsel %vm501, %v2468, %v2470
        %v2472 = vrot.slane %v2416, 1
        %v2473 = vrot.slane %v2417, 1
        %v2474 = vsel %vm501, %v2472, %v2473
        %v2475 = vrot.slane %v2418, 1
        %v2476 = vsel %vm501, %v2473, %v2475
        %v2477 = vrot.slane %v2419, 1
        %v2478 = vrot.slane %v2420, 1
        %v2479 = vsel %vm501, %v2477, %v2478
        %v2480 = vrot.slane %v2421, 1
        %v2481 = vsel %vm501, %v2478, %v2480
        %v2482 = vrot.slane %v2422, 1
        %v2483 = vrot.slane %v2423, 1
        %v2484 = vsel %vm501, %v2482, %v2483
        %v2485 = vrot.slane %v2424, 1
        %v2486 = vsel %vm501, %v2483, %v2485
        %v2487 = vrot.slane %v2425, 1
        %v2488 = vrot.slane %v2426, 1
        %v2489 = vsel %vm501, %v2487, %v2488
        %v2490 = vrot.slane %v2427, 1
        %v2491 = vsel %vm501, %v2488, %v2490
        %v2508 = vadd.f32 %v2388, %v2454
        %v2509 = vadd.f32 %v2389, %v2456
        %v2510 = vadd.f32 %v2390, %v2459
        %v2511 = vadd.f32 %v2391, %v2461
        %v2512 = vadd.f32 %v2392, %v2464
        %v2513 = vadd.f32 %v2393, %v2466
        %v2514 = vadd.f32 %v2394, %v2469
        %v2515 = vadd.f32 %v2395, %v2471
        %v2516 = vadd.f32 %v2396, %v2474
        %v2517 = vadd.f32 %v2397, %v2476
        %v2518 = vadd.f32 %v2398, %v2479
        %v2519 = vadd.f32 %v2399, %v2481
        %v2520 = vadd.f32 %v2400, %v2484
        %v2521 = vadd.f32 %v2401, %v2486
        %v2522 = vadd.f32 %v2402, %v2489
        %v2523 = vadd.f32 %v2403, %v2491
        %v2524 = vmul.f32 %v2348, %v1195
        %v2525 = vmul.f32 %v2349, %v1195
        %v2526 = vmul.f32 %v2350, %v1195
        %v2527 = vmul.f32 %v2351, %v1195
        %v2528 = vmul.f32 %v2352, %v1195
        %v2529 = vmul.f32 %v2353, %v1195
        %v2530 = vmul.f32 %v2354, %v1195
        %v2531 = vmul.f32 %v2355, %v1195
        %v2532 = vmul.f32 %v2356, %v1195
        %v2533 = vmul.f32 %v2357, %v1195
        %v2534 = vmul.f32 %v2358, %v1195
        %v2535 = vmul.f32 %v2359, %v1195
        %v2536 = vmul.f32 %v2360, %v1195
        %v2537 = vmul.f32 %v2361, %v1195
        %v2538 = vmul.f32 %v2362, %v1195
        %v2539 = vmul.f32 %v2363, %v1195
        %v2540 = vmul.f32 %v2364, %v1195
        %v2541 = vmul.f32 %v2365, %v1195
        %v2542 = vmul.f32 %v2366, %v1195
        %v2543 = vmul.f32 %v2367, %v1195
        %v2544 = vmul.f32 %v2368, %v1195
        %v2545 = vmul.f32 %v2369, %v1195
        %v2546 = vmul.f32 %v2370, %v1195
        %v2547 = vmul.f32 %v2371, %v1195
        %v2572 = vrot.slane %v2524, 2
        %v2573 = vrot.slane %v2525, 2
        %v2574 = vsel %vm626, %v2572, %v2573
        %v2575 = vrot.slane %v2526, 2
        %v2576 = vsel %vm626, %v2573, %v2575
        %v2577 = vrot.slane %v2527, 2
        %v2578 = vrot.slane %v2528, 2
        %v2579 = vsel %vm626, %v2577, %v2578
        %v2580 = vrot.slane %v2529, 2
        %v2581 = vsel %vm626, %v2578, %v2580
        %v2582 = vrot.slane %v2530, 2
        %v2583 = vrot.slane %v2531, 2
        %v2584 = vsel %vm626, %v2582, %v2583
        %v2585 = vrot.slane %v2532, 2
        %v2586 = vsel %vm626, %v2583, %v2585
        %v2587 = vrot.slane %v2533, 2
        %v2588 = vrot.slane %v2534, 2
        %v2589 = vsel %vm626, %v2587, %v2588
        %v2590 = vrot.slane %v2535, 2
        %v2591 = vsel %vm626, %v2588, %v2590
        %v2592 = vrot.slane %v2536, 2
        %v2593 = vrot.slane %v2537, 2
        %v2594 = vsel %vm626, %v2592, %v2593
        %v2595 = vrot.slane %v2538, 2
        %v2596 = vsel %vm626, %v2593, %v2595
        %v2597 = vrot.slane %v2539, 2
        %v2598 = vrot.slane %v2540, 2
        %v2599 = vsel %vm626, %v2597, %v2598
        %v2600 = vrot.slane %v2541, 2
        %v2601 = vsel %vm626, %v2598, %v2600
        %v2602 = vrot.slane %v2542, 2
        %v2603 = vrot.slane %v2543, 2
        %v2604 = vsel %vm626, %v2602, %v2603
        %v2605 = vrot.slane %v2544, 2
        %v2606 = vsel %vm626, %v2603, %v2605
        %v2607 = vrot.slane %v2545, 2
        %v2608 = vrot.slane %v2546, 2
        %v2609 = vsel %vm626, %v2607, %v2608
        %v2610 = vrot.slane %v2547, 2
        %v2611 = vsel %vm626, %v2608, %v2610
        %v2628 = vadd.f32 %v2508, %v2574
        %v2629 = vadd.f32 %v2509, %v2576
        %v2630 = vadd.f32 %v2510, %v2579
        %v2631 = vadd.f32 %v2511, %v2581
        %v2632 = vadd.f32 %v2512, %v2584
        %v2633 = vadd.f32 %v2513, %v2586
        %v2634 = vadd.f32 %v2514, %v2589
        %v2635 = vadd.f32 %v2515, %v2591
        %v2636 = vadd.f32 %v2516, %v2594
        %v2637 = vadd.f32 %v2517, %v2596
        %v2638 = vadd.f32 %v2518, %v2599
        %v2639 = vadd.f32 %v2519, %v2601
        %v2640 = vadd.f32 %v2520, %v2604
        %v2641 = vadd.f32 %v2521, %v2606
        %v2642 = vadd.f32 %v2522, %v2609
        %v2643 = vadd.f32 %v2523, %v2611
        %v2644 = vadd.f32 %v2628, %v1320
        %v2645 = vadd.f32 %v2629, %v1320
        %v2646 = vadd.f32 %v2630, %v1320
        %v2647 = vadd.f32 %v2631, %v1320
        %v2648 = vadd.f32 %v2632, %v1320
        %v2649 = vadd.f32 %v2633, %v1320
        %v2650 = vadd.f32 %v2634, %v1320
        %v2651 = vadd.f32 %v2635, %v1320
        %v2652 = vadd.f32 %v2636, %v1320
        %v2653 = vadd.f32 %v2637, %v1320
        %v2654 = vadd.f32 %v2638, %v1320
        %v2655 = vadd.f32 %v2639, %v1320
        %v2656 = vadd.f32 %v2640, %v1320
        %v2657 = vadd.f32 %v2641, %v1320
        %v2658 = vadd.f32 %v2642, %v1320
        %v2659 = vadd.f32 %v2643, %v1320
        %v2660 = vsel %vm278, %v2644, 0.0
        %2661 = vadd.xlane.f32.xlu0 %v2660
        %v2662 = vpop.xlane.xlu0 %2661
        %v2663 = vsel %vm278, %v2645, 0.0
        %2664 = vadd.xlane.f32.xlu0 %v2663
        %v2665 = vpop.xlane.xlu0 %2664
        %v2666 = vsel %vm278, %v2646, 0.0
        %2667 = vadd.xlane.f32.xlu0 %v2666
        %v2668 = vpop.xlane.xlu0 %2667
        %v2669 = vsel %vm278, %v2647, 0.0
        %2670 = vadd.xlane.f32.xlu0 %v2669
        %v2671 = vpop.xlane.xlu0 %2670
        %v2672 = vsel %vm278, %v2648, 0.0
        %2673 = vadd.xlane.f32.xlu0 %v2672
        %v2674 = vpop.xlane.xlu0 %2673
        %v2675 = vsel %vm278, %v2649, 0.0
        %2676 = vadd.xlane.f32.xlu0 %v2675
        %v2677 = vpop.xlane.xlu0 %2676
        %v2678 = vsel %vm278, %v2650, 0.0
        %2679 = vadd.xlane.f32.xlu0 %v2678
        %v2680 = vpop.xlane.xlu0 %2679
        %v2681 = vsel %vm278, %v2651, 0.0
        %2682 = vadd.xlane.f32.xlu0 %v2681
        %v2683 = vpop.xlane.xlu0 %2682
        %v2684 = vsel %vm278, %v2652, 0.0
        %2685 = vadd.xlane.f32.xlu0 %v2684
        %v2686 = vpop.xlane.xlu0 %2685
        %v2687 = vsel %vm278, %v2653, 0.0
        %2688 = vadd.xlane.f32.xlu0 %v2687
        %v2689 = vpop.xlane.xlu0 %2688
        %v2690 = vsel %vm278, %v2654, 0.0
        %2691 = vadd.xlane.f32.xlu0 %v2690
        %v2692 = vpop.xlane.xlu0 %2691
        %v2693 = vsel %vm278, %v2655, 0.0
        %2694 = vadd.xlane.f32.xlu0 %v2693
        %v2695 = vpop.xlane.xlu0 %2694
        %v2696 = vsel %vm278, %v2656, 0.0
        %2697 = vadd.xlane.f32.xlu0 %v2696
        %v2698 = vpop.xlane.xlu0 %2697
        %v2699 = vsel %vm278, %v2657, 0.0
        %2700 = vadd.xlane.f32.xlu0 %v2699
        %v2701 = vpop.xlane.xlu0 %2700
        %v2702 = vsel %vm278, %v2658, 0.0
        %2703 = vadd.xlane.f32.xlu0 %v2702
        %v2704 = vpop.xlane.xlu0 %2703
        %v2705 = vsel %vm278, %v2659, 0.0
        %2706 = vadd.xlane.f32.xlu0 %v2705
        %v2707 = vpop.xlane.xlu0 %2706
        %v2708 = vmul.f32 %v2662, %v1386
        %v2709 = vmul.f32 %v2665, %v1386
        %v2710 = vmul.f32 %v2668, %v1386
        %v2711 = vmul.f32 %v2671, %v1386
        %v2712 = vmul.f32 %v2674, %v1386
        %v2713 = vmul.f32 %v2677, %v1386
        %v2714 = vmul.f32 %v2680, %v1386
        %v2715 = vmul.f32 %v2683, %v1386
        %v2716 = vmul.f32 %v2686, %v1386
        %v2717 = vmul.f32 %v2689, %v1386
        %v2718 = vmul.f32 %v2692, %v1386
        %v2719 = vmul.f32 %v2695, %v1386
        %v2720 = vmul.f32 %v2698, %v1386
        %v2721 = vmul.f32 %v2701, %v1386
        %v2722 = vmul.f32 %v2704, %v1386
        %v2723 = vmul.f32 %v2707, %v1386
        %v2724 = vsub.f32 %v2644, %v2708
        %v2725 = vsub.f32 %v2645, %v2709
        %v2726 = vsub.f32 %v2646, %v2710
        %v2727 = vsub.f32 %v2647, %v2711
        %v2728 = vsub.f32 %v2648, %v2712
        %v2729 = vsub.f32 %v2649, %v2713
        %v2730 = vsub.f32 %v2650, %v2714
        %v2731 = vsub.f32 %v2651, %v2715
        %v2732 = vsub.f32 %v2652, %v2716
        %v2733 = vsub.f32 %v2653, %v2717
        %v2734 = vsub.f32 %v2654, %v2718
        %v2735 = vsub.f32 %v2655, %v2719
        %v2736 = vsub.f32 %v2656, %v2720
        %v2737 = vsub.f32 %v2657, %v2721
        %v2738 = vsub.f32 %v2658, %v2722
        %v2739 = vsub.f32 %v2659, %v2723
        %v2740 = vmul.f32 %v2724, %v2724
        %v2741 = vmul.f32 %v2725, %v2725
        %v2742 = vmul.f32 %v2726, %v2726
        %v2743 = vmul.f32 %v2727, %v2727
        %v2744 = vmul.f32 %v2728, %v2728
        %v2745 = vmul.f32 %v2729, %v2729
        %v2746 = vmul.f32 %v2730, %v2730
        %v2747 = vmul.f32 %v2731, %v2731
        %v2748 = vmul.f32 %v2732, %v2732
        %v2749 = vmul.f32 %v2733, %v2733
        %v2750 = vmul.f32 %v2734, %v2734
        %v2751 = vmul.f32 %v2735, %v2735
        %v2752 = vmul.f32 %v2736, %v2736
        %v2753 = vmul.f32 %v2737, %v2737
        %v2754 = vmul.f32 %v2738, %v2738
        %v2755 = vmul.f32 %v2739, %v2739
        %v2756 = vsel %vm278, %v2740, 0.0
        %2757 = vadd.xlane.f32.xlu0 %v2756
        %v2758 = vpop.xlane.xlu0 %2757
        %v2759 = vsel %vm278, %v2741, 0.0
        %2760 = vadd.xlane.f32.xlu0 %v2759
        %v2761 = vpop.xlane.xlu0 %2760
        %v2762 = vsel %vm278, %v2742, 0.0
        %2763 = vadd.xlane.f32.xlu0 %v2762
        %v2764 = vpop.xlane.xlu0 %2763
        %v2765 = vsel %vm278, %v2743, 0.0
        %2766 = vadd.xlane.f32.xlu0 %v2765
        %v2767 = vpop.xlane.xlu0 %2766
        %v2768 = vsel %vm278, %v2744, 0.0
        %2769 = vadd.xlane.f32.xlu0 %v2768
        %v2770 = vpop.xlane.xlu0 %2769
        %v2771 = vsel %vm278, %v2745, 0.0
        %2772 = vadd.xlane.f32.xlu0 %v2771
        %v2773 = vpop.xlane.xlu0 %2772
        %v2774 = vsel %vm278, %v2746, 0.0
        %2775 = vadd.xlane.f32.xlu0 %v2774
        %v2776 = vpop.xlane.xlu0 %2775
        %v2777 = vsel %vm278, %v2747, 0.0
        %2778 = vadd.xlane.f32.xlu0 %v2777
        %v2779 = vpop.xlane.xlu0 %2778
        %v2780 = vsel %vm278, %v2748, 0.0
        %2781 = vadd.xlane.f32.xlu0 %v2780
        %v2782 = vpop.xlane.xlu0 %2781
        %v2783 = vsel %vm278, %v2749, 0.0
        %2784 = vadd.xlane.f32.xlu0 %v2783
        %v2785 = vpop.xlane.xlu0 %2784
        %v2786 = vsel %vm278, %v2750, 0.0
        %2787 = vadd.xlane.f32.xlu0 %v2786
        %v2788 = vpop.xlane.xlu0 %2787
        %v2789 = vsel %vm278, %v2751, 0.0
        %2790 = vadd.xlane.f32.xlu0 %v2789
        %v2791 = vpop.xlane.xlu0 %2790
        %v2792 = vsel %vm278, %v2752, 0.0
        %2793 = vadd.xlane.f32.xlu0 %v2792
        %v2794 = vpop.xlane.xlu0 %2793
        %v2795 = vsel %vm278, %v2753, 0.0
        %2796 = vadd.xlane.f32.xlu0 %v2795
        %v2797 = vpop.xlane.xlu0 %2796
        %v2798 = vsel %vm278, %v2754, 0.0
        %2799 = vadd.xlane.f32.xlu0 %v2798
        %v2800 = vpop.xlane.xlu0 %2799
        %v2801 = vsel %vm278, %v2755, 0.0
        %2802 = vadd.xlane.f32.xlu0 %v2801
        %v2803 = vpop.xlane.xlu0 %2802
        %v2804 = vmul.f32 %v2758, %v1386
        %v2805 = vmul.f32 %v2761, %v1386
        %v2806 = vmul.f32 %v2764, %v1386
        %v2807 = vmul.f32 %v2767, %v1386
        %v2808 = vmul.f32 %v2770, %v1386
        %v2809 = vmul.f32 %v2773, %v1386
        %v2810 = vmul.f32 %v2776, %v1386
        %v2811 = vmul.f32 %v2779, %v1386
        %v2812 = vmul.f32 %v2782, %v1386
        %v2813 = vmul.f32 %v2785, %v1386
        %v2814 = vmul.f32 %v2788, %v1386
        %v2815 = vmul.f32 %v2791, %v1386
        %v2816 = vmul.f32 %v2794, %v1386
        %v2817 = vmul.f32 %v2797, %v1386
        %v2818 = vmul.f32 %v2800, %v1386
        %v2819 = vmul.f32 %v2803, %v1386
        %v2820 = vadd.f32 %v2804, 1e-06
        %v2821 = vadd.f32 %v2805, 1e-06
        %v2822 = vadd.f32 %v2806, 1e-06
        %v2823 = vadd.f32 %v2807, 1e-06
        %v2824 = vadd.f32 %v2808, 1e-06
        %v2825 = vadd.f32 %v2809, 1e-06
        %v2826 = vadd.f32 %v2810, 1e-06
        %v2827 = vadd.f32 %v2811, 1e-06
        %v2828 = vadd.f32 %v2812, 1e-06
        %v2829 = vadd.f32 %v2813, 1e-06
        %v2830 = vadd.f32 %v2814, 1e-06
        %v2831 = vadd.f32 %v2815, 1e-06
        %v2832 = vadd.f32 %v2816, 1e-06
        %v2833 = vadd.f32 %v2817, 1e-06
        %v2834 = vadd.f32 %v2818, 1e-06
        %v2835 = vadd.f32 %v2819, 1e-06
        %v2836 = vrsqrt.pop %v2820
        %v2837 = vrsqrt.pop %v2821
        %v2838 = vrsqrt.pop %v2822
        %v2839 = vrsqrt.pop %v2823
        %v2840 = vrsqrt.pop %v2824
        %v2841 = vrsqrt.pop %v2825
        %v2842 = vrsqrt.pop %v2826
        %v2843 = vrsqrt.pop %v2827
        %v2844 = vrsqrt.pop %v2828
        %v2845 = vrsqrt.pop %v2829
        %v2846 = vrsqrt.pop %v2830
        %v2847 = vrsqrt.pop %v2831
        %v2848 = vrsqrt.pop %v2832
        %v2849 = vrsqrt.pop %v2833
        %v2850 = vrsqrt.pop %v2834
        %v2851 = vrsqrt.pop %v2835
        %v2852 = vmul.f32 %v2724, %v2836
        %v2853 = vmul.f32 %v2725, %v2837
        %v2854 = vmul.f32 %v2726, %v2838
        %v2855 = vmul.f32 %v2727, %v2839
        %v2856 = vmul.f32 %v2728, %v2840
        %v2857 = vmul.f32 %v2729, %v2841
        %v2858 = vmul.f32 %v2730, %v2842
        %v2859 = vmul.f32 %v2731, %v2843
        %v2860 = vmul.f32 %v2732, %v2844
        %v2861 = vmul.f32 %v2733, %v2845
        %v2862 = vmul.f32 %v2734, %v2846
        %v2863 = vmul.f32 %v2735, %v2847
        %v2864 = vmul.f32 %v2736, %v2848
        %v2865 = vmul.f32 %v2737, %v2849
        %v2866 = vmul.f32 %v2738, %v2850
        %v2867 = vmul.f32 %v2739, %v2851
        %v2868 = vld [vmem:[#allocation7] sm:$0x1]
        %v2870 = vlaneseq
        %v2871 = vshrl.u32 %v2870, 7
        %v2872 = vsub.s32 0, %v2871
        %v2873 = vrot.slane %v2868, %v2872
        %v2875 = vmul.f32 %v2852, %v2873
        %v2876 = vmul.f32 %v2853, %v2873
        %v2877 = vmul.f32 %v2854, %v2873
        %v2878 = vmul.f32 %v2855, %v2873
        %v2879 = vmul.f32 %v2856, %v2873
        %v2880 = vmul.f32 %v2857, %v2873
        %v2881 = vmul.f32 %v2858, %v2873
        %v2882 = vmul.f32 %v2859, %v2873
        %v2883 = vmul.f32 %v2860, %v2873
        %v2884 = vmul.f32 %v2861, %v2873
        %v2885 = vmul.f32 %v2862, %v2873
        %v2886 = vmul.f32 %v2863, %v2873
        %v2887 = vmul.f32 %v2864, %v2873
        %v2888 = vmul.f32 %v2865, %v2873
        %v2889 = vmul.f32 %v2866, %v2873
        %v2890 = vmul.f32 %v2867, %v2873
        %v2891 = vld [vmem:[#allocation8] sm:$0x1]
        %v2893 = vlaneseq
        %v2894 = vshrl.u32 %v2893, 7
        %v2895 = vsub.s32 0, %v2894
        %v2896 = vrot.slane %v2891, %v2895
        %v2898 = vadd.f32 %v2875, %v2896
        %v2899 = vadd.f32 %v2876, %v2896
        %v2900 = vadd.f32 %v2877, %v2896
        %v2901 = vadd.f32 %v2878, %v2896
        %v2902 = vadd.f32 %v2879, %v2896
        %v2903 = vadd.f32 %v2880, %v2896
        %v2904 = vadd.f32 %v2881, %v2896
        %v2905 = vadd.f32 %v2882, %v2896
        %v2906 = vadd.f32 %v2883, %v2896
        %v2907 = vadd.f32 %v2884, %v2896
        %v2908 = vadd.f32 %v2885, %v2896
        %v2909 = vadd.f32 %v2886, %v2896
        %v2910 = vadd.f32 %v2887, %v2896
        %v2911 = vadd.f32 %v2888, %v2896
        %v2912 = vadd.f32 %v2889, %v2896
        %v2913 = vadd.f32 %v2890, %v2896
        %v2914 = vmul.f32 %v2898, 0.5
        %v2915 = vmul.f32 %v2899, 0.5
        %v2916 = vmul.f32 %v2900, 0.5
        %v2917 = vmul.f32 %v2901, 0.5
        %v2918 = vmul.f32 %v2902, 0.5
        %v2919 = vmul.f32 %v2903, 0.5
        %v2920 = vmul.f32 %v2904, 0.5
        %v2921 = vmul.f32 %v2905, 0.5
        %v2922 = vmul.f32 %v2906, 0.5
        %v2923 = vmul.f32 %v2907, 0.5
        %v2924 = vmul.f32 %v2908, 0.5
        %v2925 = vmul.f32 %v2909, 0.5
        %v2926 = vmul.f32 %v2910, 0.5
        %v2927 = vmul.f32 %v2911, 0.5
        %v2928 = vmul.f32 %v2912, 0.5
        %v2929 = vmul.f32 %v2913, 0.5
        %v2930 = vmul.f32 %v2898, 0.044715
        %v2931 = vmul.f32 %v2899, 0.044715
        %v2932 = vmul.f32 %v2900, 0.044715
        %v2933 = vmul.f32 %v2901, 0.044715
        %v2934 = vmul.f32 %v2902, 0.044715
        %v2935 = vmul.f32 %v2903, 0.044715
        %v2936 = vmul.f32 %v2904, 0.044715
        %v2937 = vmul.f32 %v2905, 0.044715
        %v2938 = vmul.f32 %v2906, 0.044715
        %v2939 = vmul.f32 %v2907, 0.044715
        %v2940 = vmul.f32 %v2908, 0.044715
        %v2941 = vmul.f32 %v2909, 0.044715
        %v2942 = vmul.f32 %v2910, 0.044715
        %v2943 = vmul.f32 %v2911, 0.044715
        %v2944 = vmul.f32 %v2912, 0.044715
        %v2945 = vmul.f32 %v2913, 0.044715
        %v2946 = vmul.f32 %v2930, %v2898
        %v2947 = vmul.f32 %v2931, %v2899
        %v2948 = vmul.f32 %v2932, %v2900
        %v2949 = vmul.f32 %v2933, %v2901
        %v2950 = vmul.f32 %v2934, %v2902
        %v2951 = vmul.f32 %v2935, %v2903
        %v2952 = vmul.f32 %v2936, %v2904
        %v2953 = vmul.f32 %v2937, %v2905
        %v2954 = vmul.f32 %v2938, %v2906
        %v2955 = vmul.f32 %v2939, %v2907
        %v2956 = vmul.f32 %v2940, %v2908
        %v2957 = vmul.f32 %v2941, %v2909
        %v2958 = vmul.f32 %v2942, %v2910
        %v2959 = vmul.f32 %v2943, %v2911
        %v2960 = vmul.f32 %v2944, %v2912
        %v2961 = vmul.f32 %v2945, %v2913
        %v2962 = vmul.f32 %v2946, %v2898
        %v2963 = vmul.f32 %v2947, %v2899
        %v2964 = vmul.f32 %v2948, %v2900
        %v2965 = vmul.f32 %v2949, %v2901
        %v2966 = vmul.f32 %v2950, %v2902
        %v2967 = vmul.f32 %v2951, %v2903
        %v2968 = vmul.f32 %v2952, %v2904
        %v2969 = vmul.f32 %v2953, %v2905
        %v2970 = vmul.f32 %v2954, %v2906
        %v2971 = vmul.f32 %v2955, %v2907
        %v2972 = vmul.f32 %v2956, %v2908
        %v2973 = vmul.f32 %v2957, %v2909
        %v2974 = vmul.f32 %v2958, %v2910
        %v2975 = vmul.f32 %v2959, %v2911
        %v2976 = vmul.f32 %v2960, %v2912
        %v2977 = vmul.f32 %v2961, %v2913
        %v2978 = vadd.f32 %v2898, %v2962
        %v2979 = vadd.f32 %v2899, %v2963
        %v2980 = vadd.f32 %v2900, %v2964
        %v2981 = vadd.f32 %v2901, %v2965
        %v2982 = vadd.f32 %v2902, %v2966
        %v2983 = vadd.f32 %v2903, %v2967
        %v2984 = vadd.f32 %v2904, %v2968
        %v2985 = vadd.f32 %v2905, %v2969
        %v2986 = vadd.f32 %v2906, %v2970
        %v2987 = vadd.f32 %v2907, %v2971
        %v2988 = vadd.f32 %v2908, %v2972
        %v2989 = vadd.f32 %v2909, %v2973
        %v2990 = vadd.f32 %v2910, %v2974
        %v2991 = vadd.f32 %v2911, %v2975
        %v2992 = vadd.f32 %v2912, %v2976
        %v2993 = vadd.f32 %v2913, %v2977
        %v2994 = vmul.f32 %v2978, 0.7978846
        %v2995 = vmul.f32 %v2979, 0.7978846
        %v2996 = vmul.f32 %v2980, 0.7978846
        %v2997 = vmul.f32 %v2981, 0.7978846
        %v2998 = vmul.f32 %v2982, 0.7978846
        %v2999 = vmul.f32 %v2983, 0.7978846
        %v3000 = vmul.f32 %v2984, 0.7978846
        %v3001 = vmul.f32 %v2985, 0.7978846
        %v3002 = vmul.f32 %v2986, 0.7978846
        %v3003 = vmul.f32 %v2987, 0.7978846
        %v3004 = vmul.f32 %v2988, 0.7978846
        %v3005 = vmul.f32 %v2989, 0.7978846
        %v3006 = vmul.f32 %v2990, 0.7978846
        %v3007 = vmul.f32 %v2991, 0.7978846
        %v3008 = vmul.f32 %v2992, 0.7978846
        %v3009 = vmul.f32 %v2993, 0.7978846
        %v3010 = vtanh.pop %v2994
        %v3011 = vtanh.pop %v2995
        %v3012 = vtanh.pop %v2996
        %v3013 = vtanh.pop %v2997
        %v3014 = vtanh.pop %v2998
        %v3015 = vtanh.pop %v2999
        %v3016 = vtanh.pop %v3000
        %v3017 = vtanh.pop %v3001
        %v3018 = vtanh.pop %v3002
        %v3019 = vtanh.pop %v3003
        %v3020 = vtanh.pop %v3004
        %v3021 = vtanh.pop %v3005
        %v3022 = vtanh.pop %v3006
        %v3023 = vtanh.pop %v3007
        %v3024 = vtanh.pop %v3008
        %v3025 = vtanh.pop %v3009
        %v3026 = vadd.f32 %v3010, 1.0
        %v3027 = vadd.f32 %v3011, 1.0
        %v3028 = vadd.f32 %v3012, 1.0
        %v3029 = vadd.f32 %v3013, 1.0
        %v3030 = vadd.f32 %v3014, 1.0
        %v3031 = vadd.f32 %v3015, 1.0
        %v3032 = vadd.f32 %v3016, 1.0
        %v3033 = vadd.f32 %v3017, 1.0
        %v3034 = vadd.f32 %v3018, 1.0
        %v3035 = vadd.f32 %v3019, 1.0
        %v3036 = vadd.f32 %v3020, 1.0
        %v3037 = vadd.f32 %v3021, 1.0
        %v3038 = vadd.f32 %v3022, 1.0
        %v3039 = vadd.f32 %v3023, 1.0
        %v3040 = vadd.f32 %v3024, 1.0
        %v3041 = vadd.f32 %v3025, 1.0
        %v3042 = vmul.f32 %v2914, %v3026
        %v3043 = vmul.f32 %v2915, %v3027
        %v3044 = vmul.f32 %v2916, %v3028
        %v3045 = vmul.f32 %v2917, %v3029
        %v3046 = vmul.f32 %v2918, %v3030
        %v3047 = vmul.f32 %v2919, %v3031
        %v3048 = vmul.f32 %v2920, %v3032
        %v3049 = vmul.f32 %v2921, %v3033
        %v3050 = vmul.f32 %v2922, %v3034
        %v3051 = vmul.f32 %v2923, %v3035
        %v3052 = vmul.f32 %v2924, %v3036
        %v3053 = vmul.f32 %v2925, %v3037
        %v3054 = vmul.f32 %v2926, %v3038
        %v3055 = vmul.f32 %v2927, %v3039
        %v3056 = vmul.f32 %v2928, %v3040
        %v3057 = vmul.f32 %v2929, %v3041
        %s3058 = scalar_lea.vmem %s277, 128
        %3059 = vst.msk [vmem:[%s3058] sm:$0xff] %vm278, %v3042
        %3060 = vst.msk [vmem:[%s3058 + $0x8] sm:$0xff] %vm278, %v3043
        %3061 = vst.msk [vmem:[%s3058 + $0x10] sm:$0xff] %vm278, %v3044
        %3062 = vst.msk [vmem:[%s3058 + $0x18] sm:$0xff] %vm278, %v3045
        %3063 = vst.msk [vmem:[%s3058 + $0x20] sm:$0xff] %vm278, %v3046
        %3064 = vst.msk [vmem:[%s3058 + $0x28] sm:$0xff] %vm278, %v3047
        %3065 = vst.msk [vmem:[%s3058 + $0x30] sm:$0xff] %vm278, %v3048
        %3066 = vst.msk [vmem:[%s3058 + $0x38] sm:$0xff] %vm278, %v3049
        %3067 = vst.msk [vmem:[%s3058 + $0x40] sm:$0xff] %vm278, %v3050
        %3068 = vst.msk [vmem:[%s3058 + $0x48] sm:$0xff] %vm278, %v3051
        %3069 = vst.msk [vmem:[%s3058 + $0x50] sm:$0xff] %vm278, %v3052
        %3070 = vst.msk [vmem:[%s3058 + $0x58] sm:$0xff] %vm278, %v3053
        %3071 = vst.msk [vmem:[%s3058 + $0x60] sm:$0xff] %vm278, %v3054
        %3072 = vst.msk [vmem:[%s3058 + $0x68] sm:$0xff] %vm278, %v3055
        %3073 = vst.msk [vmem:[%s3058 + $0x70] sm:$0xff] %vm278, %v3056
        %3074 = vst.msk [vmem:[%s3058 + $0x78] sm:$0xff] %vm278, %v3057
        %p3075 = scmp.lt.s32.totalorder %s19, 1
        %s3076 = scalar_select %p3075, %s19, 1
        %s3077 = smul.addr %s3076, 32
        %s3078 = smul.addr %s3077, 8
        %s3079 = scalar_lea.vmem %s5, %s3078
        // Predicated region
        $region57: #{_lambda_.8} parent=39 // pred_check
          %p3080 = pneg %p147
        $region58: #{_lambda_.8} parent=39 // pred_check_branch
          %3082 = sbr.rel (%p3080) target = $region60
        $region59: #{_lambda_.8} parent=39 // pred_region
          _
        $region60: #{_lambda_.8} parent=39 // pred_fallthru
          _
      $region40: #{_lambda_.8} parent=5 // pred_fallthru
        _
      %p3083 = scmp.le.s32.totalorder 2, %s14
      // Predicated region
      $region61: #{_lambda_.8} parent=5 // pred_check
        %p3084 = pneg %p3083
      $region62: #{_lambda_.8} parent=5 // pred_check_branch
        %3086 = sbr.rel (%p3084) target = $region64
      $region63: #{_lambda_.8} parent=5 // pred_region
        %s3087 = ssub.s32 %s14, 2
        // Predicated region
        $region65: #{_lambda_.8} parent=63 // pred_check
          %p3088 = pneg %p153
        $region66: #{_lambda_.8} parent=63 // pred_check_branch
          %3090 = sbr.rel (%p3088) target = $region68
        $region67: #{_lambda_.8} parent=63 // pred_region
          %p3091 = scmp.lt.s32.totalorder %s20, 1
          %s3092 = scalar_select %p3091, %s20, 1
          %s3093 = smul.addr %s3092, 32
          %s3094 = smul.addr %s3093, 8
          %s3095 = scalar_lea.vmem %s5, %s3094
        $region68: #{_lambda_.8} parent=63 // pred_fallthru
          _
      $region64: #{_lambda_.8} parent=5 // pred_fallthru
        _
    $region6: #{_lambda_.8} parent=1 // loop_footer
      %s18 = sadd.s32 1, %s14
    $region7: #{_lambda_.8} parent=1 // loop_footer_branch
      %13 = sbr.rel target = $region3
    $region8: #{_lambda_.8} parent=1 // loop_exit
      _
    %3096 = vsyncpa [#allocation4], 1
    %s3097 = scalar_lea.sflag [#allocation4], 1
    %3098 = vsyncpa %s3097, 1
    %3099 = vsyncpa [#allocation6], 1
    %3100 = vsyncpa [#allocation9], 1

// kernel: _lambda_.10
$region0: #{_lambda_.10}
  #allocation0 [shape = 'u32[]', space=smem, size = 0x4, offset = 0x4, fixed_abs, tag = 'smem constant byte address 0x4 - core index']
  #allocation1 [shape = 'u32[144,128]{1,0:T(1,128)}', space=vmem, size = 0x12000, scoped, tag = 'internal scratch']
  %s0 = inlined_call_operand.vmem [shape: f32[512,32], index: 0, kind: input, shape index: {}]
  %s1 = inlined_call_operand.vmem [shape: bf16[32,32], index: 1, kind: input, shape index: {}]
  %s2 = inlined_call_operand.vmem [shape: f32[1,32], index: 2, kind: input, shape index: {}]
  %s3 = inlined_call_operand.vmem [shape: f32[512,32], index: 3, kind: input, shape index: {}]
  %s4 = inlined_call_operand.vmem [shape: f32[512,32], index: 4, kind: output, shape index: {}]
  %s5 = sld [smem:[#allocation0]]
  $region49: #{_lambda_.10} parent=0
    _
  %s7 = ssub.s32 1, %s5
  %s8 = scalar_select 0, %s7, %s5
  loop: start=0, step=1, limit=6
  $region2: #{_lambda_.10} parent=0 // loop_pre_header
    _
  $region3: #{_lambda_.10} parent=0 // loop_header
    %s10 = sphi 0, %s14
    %p11 = scmp.ge.s32.totalorder %s10, 6
    %s20 = sphi 0, %s22
    %s23 = sphi 0, %s20
    %s24 = sphi 0, %s23
    %s40 = sphi 0, %s24
    %s44 = sphi 0, %s44
    %s46 = sphi 0, %s44
    %s47 = sphi 0, %s46
    %s61 = sphi 0, %s47
    %s65 = sphi 0, %s65
    %s67 = sphi 0, %s65
    %s68 = sphi 0, %s67
    %s82 = sphi 0, %s68
    %s88 = sphi 0, %s90
    %s91 = sphi 0, %s88
    %s92 = sphi 0, %s91
    %s108 = sphi 0, %s92
    %s114 = sphi 0, %s116
    %s117 = sphi 0, %s114
    %s118 = sphi 0, %s117
    %s134 = sphi 0, %s118
  $region4: #{_lambda_.10} parent=0 // loop_header_branch
    %13 = sbr.rel (%p11) target = $region8
  $region5: #{_lambda_.10} parent=0 // loop_body
    %s15 = ssub.s32 %s10, 1
    %s16 = ssub.s32 %s10, 2
    %s17 = sadd.s32 %s10, 1
    %s18 = ssub.s32 %s10, %s17
    %p19 = scmp.eq.s32.totalorder %s18, 0
    %s21 = sadd.s32 %s20, 1
    %s22 = scalar_select %p19, %s20, %s21
    %p25 = pneg %p19
    %p26 = scmp.eq.s32.totalorder %s10, 3
    %p27 = por %p25, %p26
    %p28 = scmp.ne.s32.totalorder %s20, %s23
    %p29 = scmp.eq.s32.totalorder %s10, 0
    %p30 = por %p28, %p29
    %p31 = scmp.ne.s32.totalorder %s20, %s23
    %p32 = scmp.eq.s32.totalorder %s15, 3
    %p33 = por %p31, %p32
    %p34 = scmp.ne.s32.totalorder %s23, %s24
    %p35 = scmp.eq.s32.totalorder %s15, 0
    %p36 = por %p34, %p35
    %p37 = scmp.ne.s32.totalorder %s23, %s24
    %p38 = scmp.eq.s32.totalorder %s16, 3
    %p39 = por %p37, %p38
    %p41 = scmp.ne.s32.totalorder %s24, %s40
    %p42 = scmp.eq.s32.totalorder %s16, 0
    %p43 = por %p41, %p42
    %s45 = sadd.s32 %s44, 1
    %p48 = scmp.eq.s32.totalorder %s10, 3
    %p49 = scmp.ne.s32.totalorder %s44, %s46
    %p50 = scmp.eq.s32.totalorder %s10, 0
    %p51 = por %p49, %p50
    %p52 = scmp.ne.s32.totalorder %s44, %s46
    %p53 = scmp.eq.s32.totalorder %s15, 3
    %p54 = por %p52, %p53
    %p55 = scmp.ne.s32.totalorder %s46, %s47
    %p56 = scmp.eq.s32.totalorder %s15, 0
    %p57 = por %p55, %p56
    %p58 = scmp.ne.s32.totalorder %s46, %s47
    %p59 = scmp.eq.s32.totalorder %s16, 3
    %p60 = por %p58, %p59
    %p62 = scmp.ne.s32.totalorder %s47, %s61
    %p63 = scmp.eq.s32.totalorder %s16, 0
    %p64 = por %p62, %p63
    %s66 = sadd.s32 %s65, 1
    %p69 = scmp.eq.s32.totalorder %s10, 3
    %p70 = scmp.ne.s32.totalorder %s65, %s67
    %p71 = scmp.eq.s32.totalorder %s10, 0
    %p72 = por %p70, %p71
    %p73 = scmp.ne.s32.totalorder %s65, %s67
    %p74 = scmp.eq.s32.totalorder %s15, 3
    %p75 = por %p73, %p74
    %p76 = scmp.ne.s32.totalorder %s67, %s68
    %p77 = scmp.eq.s32.totalorder %s15, 0
    %p78 = por %p76, %p77
    %p79 = scmp.ne.s32.totalorder %s67, %s68
    %p80 = scmp.eq.s32.totalorder %s16, 3
    %p81 = por %p79, %p80
    %p83 = scmp.ne.s32.totalorder %s68, %s82
    %p84 = scmp.eq.s32.totalorder %s16, 0
    %p85 = por %p83, %p84
    %s86 = ssub.s32 %s10, %s17
    %p87 = scmp.eq.s32.totalorder %s86, 0
    %s89 = sadd.s32 %s88, 1
    %s90 = scalar_select %p87, %s88, %s89
    %p93 = pneg %p87
    %p94 = scmp.eq.s32.totalorder %s10, 3
    %p95 = por %p93, %p94
    %p96 = scmp.ne.s32.totalorder %s88, %s91
    %p97 = scmp.eq.s32.totalorder %s10, 0
    %p98 = por %p96, %p97
    %p99 = scmp.ne.s32.totalorder %s88, %s91
    %p100 = scmp.eq.s32.totalorder %s15, 3
    %p101 = por %p99, %p100
    %p102 = scmp.ne.s32.totalorder %s91, %s92
    %p103 = scmp.eq.s32.totalorder %s15, 0
    %p104 = por %p102, %p103
    %p105 = scmp.ne.s32.totalorder %s91, %s92
    %p106 = scmp.eq.s32.totalorder %s16, 3
    %p107 = por %p105, %p106
    %p109 = scmp.ne.s32.totalorder %s92, %s108
    %p110 = scmp.eq.s32.totalorder %s16, 0
    %p111 = por %p109, %p110
    %s112 = ssub.s32 %s10, %s17
    %p113 = scmp.eq.s32.totalorder %s112, 0
    %s115 = sadd.s32 %s114, 1
    %s116 = scalar_select %p113, %s114, %s115
    %p119 = pneg %p113
    %p120 = scmp.eq.s32.totalorder %s10, 3
    %p121 = por %p119, %p120
    %p122 = scmp.ne.s32.totalorder %s114, %s117
    %p123 = scmp.eq.s32.totalorder %s10, 0
    %p124 = por %p122, %p123
    %p125 = scmp.ne.s32.totalorder %s114, %s117
    %p126 = scmp.eq.s32.totalorder %s15, 3
    %p127 = por %p125, %p126
    %p128 = scmp.ne.s32.totalorder %s117, %s118
    %p129 = scmp.eq.s32.totalorder %s15, 0
    %p130 = por %p128, %p129
    %p131 = scmp.ne.s32.totalorder %s117, %s118
    %p132 = scmp.eq.s32.totalorder %s16, 3
    %p133 = por %p131, %p132
    %p135 = scmp.ne.s32.totalorder %s118, %s134
    %p136 = scmp.eq.s32.totalorder %s16, 0
    %p137 = por %p135, %p136
    %p138 = scmp.le.s32.totalorder 1, %s10
    %p139 = scmp.lt.s32.totalorder %s10, 5
    %p140 = pnand %p138, %p139
    %p141 = pneg %p140
    // Predicated region
    $region9: #{_lambda_.10} parent=5 // pred_check
      _
    $region10: #{_lambda_.10} parent=5 // pred_check_branch
      %143 = sbr.rel (%p140) target = $region12
    $region11: #{_lambda_.10} parent=5 // pred_region
      %s144 = ssub.s32 %s10, 1
      // Predicated region
      $region13: #{_lambda_.10} parent=11 // pred_check
        %p145 = pneg %p57
      $region14: #{_lambda_.10} parent=11 // pred_check_branch
        %147 = sbr.rel (%p145) target = $region16
      $region15: #{_lambda_.10} parent=11 // pred_region
        _
      $region16: #{_lambda_.10} parent=11 // pred_fallthru
        _
      // Predicated region
      $region17: #{_lambda_.10} parent=11 // pred_check
        %p148 = pneg %p78
      $region18: #{_lambda_.10} parent=11 // pred_check_branch
        %150 = sbr.rel (%p148) target = $region20
      $region19: #{_lambda_.10} parent=11 // pred_region
        _
      $region20: #{_lambda_.10} parent=11 // pred_fallthru
        _
    $region12: #{_lambda_.10} parent=5 // pred_fallthru
      _
    %p151 = scmp.lt.s32.totalorder %s10, 4
    // Predicated region
    $region21: #{_lambda_.10} parent=5 // pred_check
      %p152 = pneg %p151
    $region22: #{_lambda_.10} parent=5 // pred_check_branch
      %154 = sbr.rel (%p152) target = $region24
    $region23: #{_lambda_.10} parent=5 // pred_region
      // Predicated region
      $region25: #{_lambda_.10} parent=23 // pred_check
        %p155 = pneg %p30
      $region26: #{_lambda_.10} parent=23 // pred_check_branch
        %157 = sbr.rel (%p155) target = $region28
      $region27: #{_lambda_.10} parent=23 // pred_region
        %s158 = smul.u32 16, %s10
        %p159 = scmp.lt.s32.totalorder %s158, 63
        %s160 = scalar_select %p159, %s158, 63
        %s161 = smul.addr %s160, 8
        %s162 = scalar_lea.vmem %s0, %s161
        %s163 = smul.u32 16, %s10
      $region28: #{_lambda_.10} parent=23 // pred_fallthru
        _
      // Predicated region
      $region29: #{_lambda_.10} parent=23 // pred_check
        %p164 = pneg %p98
      $region30: #{_lambda_.10} parent=23 // pred_check_branch
        %166 = sbr.rel (%p164) target = $region32
      $region31: #{_lambda_.10} parent=23 // pred_region
        %s167 = smul.u32 16, %s10
        %p168 = scmp.lt.s32.totalorder %s167, 63
        %s169 = scalar_select %p168, %s167, 63
        %s170 = smul.addr %s169, 8
        %s171 = scalar_lea.vmem %s3, %s170
        %s172 = smul.u32 16, %s10
      $region32: #{_lambda_.10} parent=23 // pred_fallthru
        _
    $region24: #{_lambda_.10} parent=5 // pred_fallthru
      _
    %p173 = scmp.le.s32.totalorder 1, %s10
    %p174 = scmp.lt.s32.totalorder %s10, 5
    %p175 = pnand %p173, %p174
    %p176 = pneg %p175
    // Predicated region
    $region33: #{_lambda_.10} parent=5 // pred_check
      _
    $region34: #{_lambda_.10} parent=5 // pred_check_branch
      %178 = sbr.rel (%p175) target = $region36
    $region35: #{_lambda_.10} parent=5 // pred_region
      %s179 = ssub.s32 %s10, 1
      %s180 = smul.u32 16, %s15
      %p181 = scmp.lt.s32.totalorder %s180, 63
      %s182 = scalar_select %p181, %s180, 63
      %s183 = smul.addr %s182, 8
      %s184 = scalar_lea.vmem %s0, %s183
      %p185 = pneg %p36
      %p186 = pneg %p33
      %p187 = pneg %p57
      %p188 = pneg %p54
      %p189 = pneg %p78
      %p190 = pneg %p75
      %s191 = smul.u32 16, %s15
      %p192 = scmp.lt.s32.totalorder %s191, 63
      %s193 = scalar_select %p192, %s191, 63
      %s194 = smul.addr %s193, 8
      %s195 = scalar_lea.vmem %s3, %s194
      %p196 = pneg %p104
      %p197 = pneg %p101
      %p198 = pneg %p130
      %p199 = pneg %p127
      %s200 = smul.u32 16, %s15
      %p201 = scmp.lt.s32.totalorder %s200, 63
      %s202 = scalar_select %p201, %s200, 63
      %s203 = smul.addr %s202, 8
      %s204 = scalar_lea.vmem %s4, %s203
      %s205 = smul.u32 16, %s15
      %p206 = scmp.lt.s32.totalorder %s205, 63
      %s207 = scalar_select %p206, %s205, 63
      %s208 = smul.addr %s207, 8
      %s209 = scalar_lea.vmem %s0, %s208
      %s210 = smul.u32 16, %s15
      %s211 = smul.u32 16, %s15
      %p212 = scmp.lt.s32.totalorder %s211, 63
      %s213 = scalar_select %p212, %s211, 63
      %s214 = smul.addr %s213, 8
      %s215 = scalar_lea.vmem %s3, %s214
      %s216 = smul.u32 16, %s15
      %s217 = smul.u32 16, %s15
      %p218 = scmp.lt.s32.totalorder %s217, 63
      %s219 = scalar_select %p218, %s217, 63
      %s220 = smul.addr %s219, 8
      %s221 = scalar_lea.vmem %s4, %s220
      %s222 = smul.u32 16, %s15
      %v224 = vld [vmem:[%s209] sm:$0xff]
      %v225 = vld [vmem:[%s209 + $0x8] sm:$0xff]
      %v226 = vld [vmem:[%s209 + $0x10] sm:$0xff]
      %v227 = vld [vmem:[%s209 + $0x18] sm:$0xff]
      %v228 = vld [vmem:[%s209 + $0x20] sm:$0xff]
      %v229 = vld [vmem:[%s209 + $0x28] sm:$0xff]
      %v230 = vld [vmem:[%s209 + $0x30] sm:$0xff]
      %v231 = vld [vmem:[%s209 + $0x38] sm:$0xff]
      %v232 = vld [vmem:[%s209 + $0x40] sm:$0xff]
      %v233 = vld [vmem:[%s209 + $0x48] sm:$0xff]
      %v234 = vld [vmem:[%s209 + $0x50] sm:$0xff]
      %v235 = vld [vmem:[%s209 + $0x58] sm:$0xff]
      %v236 = vld [vmem:[%s209 + $0x60] sm:$0xff]
      %v237 = vld [vmem:[%s209 + $0x68] sm:$0xff]
      %v238 = vld [vmem:[%s209 + $0x70] sm:$0xff]
      %v239 = vld [vmem:[%s209 + $0x78] sm:$0xff]
      %v240 = vpack.c.bf16 %v225, %v224
      %v241 = vpack.c.bf16 %v227, %v226
      %v242 = vpack.c.bf16 %v229, %v228
      %v243 = vpack.c.bf16 %v231, %v230
      %v244 = vpack.c.bf16 %v233, %v232
      %v245 = vpack.c.bf16 %v235, %v234
      %v246 = vpack.c.bf16 %v237, %v236
      %v247 = vpack.c.bf16 %v239, %v238
      %v248 = vld [vmem:[%s1] sm:$0xf]
      %v249 = vld [vmem:[%s1 + $0x4] sm:$0xf]
      %v250 = vld [vmem:[%s1 + $0x8] sm:$0xf]
      %v251 = vld [vmem:[%s1 + $0xc] sm:$0xf]
      %v252 = vld [vmem:[%s2] sm:$0x1]
      %v254 = vlaneseq
      %v255 = vshrl.u32 %v254, 7
      %v256 = vsub.s32 0, %v255
      %v257 = vrot.slane %v252, %v256
      %v263 = vunpack.c.l.b16 %v248
      %v264 = vunpack.c.l.b16 %v249
      %v265 = vunpack.c.l.b16 %v250
      %v266 = vunpack.c.l.b16 %v251
      %v267 = vpack.c.b16 %v264, %v263
      %v268 = vpack.c.b16 %v266, %v265
      %vm271 = vcmask 261120
      %v273 = vsel %vm271, %v240, 0
      %v276 = vsel %vm271, %v241, 0
      %v279 = vsel %vm271, %v242, 0
      %v282 = vsel %vm271, %v243, 0
      %v285 = vsel %vm271, %v244, 0
      %v288 = vsel %vm271, %v245, 0
      %v291 = vsel %vm271, %v246, 0
      %v294 = vsel %vm271, %v247, 0
      %296 = vmatprep.subr.bf16.mxu0 0
      %297 = vmatpush1.bf16.msra.mxu0 0
      %298 = vmatprep.subr.bf16.mxu0 0
      %299 = vmatpush1.bf16.msra.mxu0 0
      %300 = vmatprep.subr.bf16.mxu0 0
      %301 = vmatpush1.bf16.msra.mxu0 0
      %302 = vmatprep.subr.bf16.mxu0 0
      %303 = vmatpush1.bf16.msra.mxu0 0
      %304 = vmatprep.subr.bf16.mxu0 0
      %305 = vmatpush1.bf16.msra.mxu0 0
      %306 = vmatprep.subr.bf16.mxu0 0
      %307 = vmatpush1.bf16.msra.mxu0 0
      %308 = vmatprep.subr.bf16.mxu0 0
      %309 = vmatpush1.bf16.msra.mxu0 %v268
      %310 = vmatprep.subr.bf16.mxu0 0
      %311 = vmatpush1.bf16.msra.mxu0 %v267
      %312 = vmatprep.subr.bf16.mxu0 0
      %313 = vmatpush2.bf16.msra.mxu0 0
      %314 = vmatprep.subr.bf16.mxu0 0
      %315 = vmatpush2.bf16.msra.mxu0 0
      %316 = vmatprep.subr.bf16.mxu0 0
      %317 = vmatpush2.bf16.msra.mxu0 0
      %318 = vmatprep.subr.bf16.mxu0 0
      %319 = vmatpush2.bf16.msra.mxu0 0
      %320 = vmatprep.subr.bf16.mxu0 0
      %321 = vmatpush2.bf16.msra.mxu0 0
      %322 = vmatprep.subr.bf16.mxu0 0
      %323 = vmatpush2.bf16.msra.mxu0 0
      %324 = vmatprep.subr.bf16.mxu0 0
      %325 = vmatpush2.bf16.msra.mxu0 0
      %326 = vmatprep.subr.bf16.mxu0 0
      %327 = vmatpush2.bf16.msra.mxu0 0
      %328 = vmatprep.mubr.bf16.mxu0 0
      %329 = vmatmul.mubr.bf16.gmra.mxu0 %v273
      %v330 = vpop.f32.mrf.mxu0
      %v331 = vadd.f32 %v257, %v330
      %v332 = vpop.f32.mrf.mxu0
      %v333 = vpop.f32.mrf.mxu0
      %v334 = vadd.f32 %v257, %v333
      %v335 = vpop.f32.mrf.mxu0
      %336 = vmatprep.mubr.bf16.mxu0 0
      %337 = vmatmul.mubr.bf16.gmra.mxu0 %v276
      %v338 = vpop.f32.mrf.mxu0
      %v339 = vadd.f32 %v257, %v338
      %v340 = vpop.f32.mrf.mxu0
      %v341 = vpop.f32.mrf.mxu0
      %v342 = vadd.f32 %v257, %v341
      %v343 = vpop.f32.mrf.mxu0
      %344 = vmatprep.mubr.bf16.mxu0 0
      %345 = vmatmul.mubr.bf16.gmra.mxu0 %v279
      %v346 = vpop.f32.mrf.mxu0
      %v347 = vadd.f32 %v257, %v346
      %v348 = vpop.f32.mrf.mxu0
      %v349 = vpop.f32.mrf.mxu0
      %v350 = vadd.f32 %v257, %v349
      %v351 = vpop.f32.mrf.mxu0
      %352 = vmatprep.mubr.bf16.mxu0 0
      %353 = vmatmul.mubr.bf16.gmra.mxu0 %v282
      %v354 = vpop.f32.mrf.mxu0
      %v355 = vadd.f32 %v257, %v354
      %v356 = vpop.f32.mrf.mxu0
      %v357 = vpop.f32.mrf.mxu0
      %v358 = vadd.f32 %v257, %v357
      %v359 = vpop.f32.mrf.mxu0
      %360 = vmatprep.mubr.bf16.mxu0 0
      %361 = vmatmul.mubr.bf16.gmra.mxu0 %v285
      %v362 = vpop.f32.mrf.mxu0
      %v363 = vadd.f32 %v257, %v362
      %v364 = vpop.f32.mrf.mxu0
      %v365 = vpop.f32.mrf.mxu0
      %v366 = vadd.f32 %v257, %v365
      %v367 = vpop.f32.mrf.mxu0
      %368 = vmatprep.mubr.bf16.mxu0 0
      %369 = vmatmul.mubr.bf16.gmra.mxu0 %v288
      %v370 = vpop.f32.mrf.mxu0
      %v371 = vadd.f32 %v257, %v370
      %v372 = vpop.f32.mrf.mxu0
      %v373 = vpop.f32.mrf.mxu0
      %v374 = vadd.f32 %v257, %v373
      %v375 = vpop.f32.mrf.mxu0
      %376 = vmatprep.mubr.bf16.mxu0 0
      %377 = vmatmul.mubr.bf16.gmra.mxu0 %v291
      %v378 = vpop.f32.mrf.mxu0
      %v379 = vadd.f32 %v257, %v378
      %v380 = vpop.f32.mrf.mxu0
      %v381 = vpop.f32.mrf.mxu0
      %v382 = vadd.f32 %v257, %v381
      %v383 = vpop.f32.mrf.mxu0
      %384 = vmatprep.mubr.bf16.mxu0 0
      %385 = vmatmul.mubr.bf16.gmra.mxu0 %v294
      %v386 = vpop.f32.mrf.mxu0
      %v387 = vadd.f32 %v257, %v386
      %v388 = vpop.f32.mrf.mxu0
      %v389 = vpop.f32.mrf.mxu0
      %v390 = vadd.f32 %v257, %v389
      %v391 = vpop.f32.mrf.mxu0
      %392 = vdwg.mxu0
      %v393 = vld [vmem:[%s215] sm:$0xff]
      %v394 = vld [vmem:[%s215 + $0x8] sm:$0xff]
      %v395 = vld [vmem:[%s215 + $0x10] sm:$0xff]
      %v396 = vld [vmem:[%s215 + $0x18] sm:$0xff]
      %v397 = vld [vmem:[%s215 + $0x20] sm:$0xff]
      %v398 = vld [vmem:[%s215 + $0x28] sm:$0xff]
      %v399 = vld [vmem:[%s215 + $0x30] sm:$0xff]
      %v400 = vld [vmem:[%s215 + $0x38] sm:$0xff]
      %v401 = vld [vmem:[%s215 + $0x40] sm:$0xff]
      %v402 = vld [vmem:[%s215 + $0x48] sm:$0xff]
      %v403 = vld [vmem:[%s215 + $0x50] sm:$0xff]
      %v404 = vld [vmem:[%s215 + $0x58] sm:$0xff]
      %v405 = vld [vmem:[%s215 + $0x60] sm:$0xff]
      %v406 = vld [vmem:[%s215 + $0x68] sm:$0xff]
      %v407 = vld [vmem:[%s215 + $0x70] sm:$0xff]
      %v408 = vld [vmem:[%s215 + $0x78] sm:$0xff]
      %v409 = vmul.f32 %v331, %v393
      %v410 = vmul.f32 %v334, %v394
      %v411 = vmul.f32 %v339, %v395
      %v412 = vmul.f32 %v342, %v396
      %v413 = vmul.f32 %v347, %v397
      %v414 = vmul.f32 %v350, %v398
      %v415 = vmul.f32 %v355, %v399
      %v416 = vmul.f32 %v358, %v400
      %v417 = vmul.f32 %v363, %v401
      %v418 = vmul.f32 %v366, %v402
      %v419 = vmul.f32 %v371, %v403
      %v420 = vmul.f32 %v374, %v404
      %v421 = vmul.f32 %v379, %v405
      %v422 = vmul.f32 %v382, %v406
      %v423 = vmul.f32 %v387, %v407
      %v424 = vmul.f32 %v390, %v408
      %425 = vst.msk [vmem:[%s221] sm:$0xff] %vm271, %v409
      %426 = vst.msk [vmem:[%s221 + $0x8] sm:$0xff] %vm271, %v410
      %427 = vst.msk [vmem:[%s221 + $0x10] sm:$0xff] %vm271, %v411
      %428 = vst.msk [vmem:[%s221 + $0x18] sm:$0xff] %vm271, %v412
      %429 = vst.msk [vmem:[%s221 + $0x20] sm:$0xff] %vm271, %v413
      %430 = vst.msk [vmem:[%s221 + $0x28] sm:$0xff] %vm271, %v414
      %431 = vst.msk [vmem:[%s221 + $0x30] sm:$0xff] %vm271, %v415
      %432 = vst.msk [vmem:[%s221 + $0x38] sm:$0xff] %vm271, %v416
      %433 = vst.msk [vmem:[%s221 + $0x40] sm:$0xff] %vm271, %v417
      %434 = vst.msk [vmem:[%s221 + $0x48] sm:$0xff] %vm271, %v418
      %435 = vst.msk [vmem:[%s221 + $0x50] sm:$0xff] %vm271, %v419
      %436 = vst.msk [vmem:[%s221 + $0x58] sm:$0xff] %vm271, %v420
      %437 = vst.msk [vmem:[%s221 + $0x60] sm:$0xff] %vm271, %v421
      %438 = vst.msk [vmem:[%s221 + $0x68] sm:$0xff] %vm271, %v422
      %439 = vst.msk [vmem:[%s221 + $0x70] sm:$0xff] %vm271, %v423
      %440 = vst.msk [vmem:[%s221 + $0x78] sm:$0xff] %vm271, %v424
      %s441 = smul.u32 16, %s15
      %p442 = scmp.lt.s32.totalorder %s441, 63
      %s443 = scalar_select %p442, %s441, 63
      %s444 = smul.addr %s443, 8
      %s445 = scalar_lea.vmem %s4, %s444
      // Predicated region
      $region37: #{_lambda_.10} parent=35 // pred_check
        %p446 = pneg %p127
      $region38: #{_lambda_.10} parent=35 // pred_check_branch
        %448 = sbr.rel (%p446) target = $region40
      $region39: #{_lambda_.10} parent=35 // pred_region
        %s449 = smul.u32 16, %s15
      $region40: #{_lambda_.10} parent=35 // pred_fallthru
        _
    $region36: #{_lambda_.10} parent=5 // pred_fallthru
      _
    %p450 = scmp.le.s32.totalorder 2, %s10
    // Predicated region
    $region41: #{_lambda_.10} parent=5 // pred_check
      %p451 = pneg %p450
    $region42: #{_lambda_.10} parent=5 // pred_check_branch
      %453 = sbr.rel (%p451) target = $region44
    $region43: #{_lambda_.10} parent=5 // pred_region
      %s454 = ssub.s32 %s10, 2
      // Predicated region
      $region45: #{_lambda_.10} parent=43 // pred_check
        %p455 = pneg %p133
      $region46: #{_lambda_.10} parent=43 // pred_check_branch
        %457 = sbr.rel (%p455) target = $region48
      $region47: #{_lambda_.10} parent=43 // pred_region
        %s458 = smul.u32 16, %s16
        %p459 = scmp.lt.s32.totalorder %s458, 63
        %s460 = scalar_select %p459, %s458, 63
        %s461 = smul.addr %s460, 8
        %s462 = scalar_lea.vmem %s4, %s461
      $region48: #{_lambda_.10} parent=43 // pred_fallthru
        _
    $region44: #{_lambda_.10} parent=5 // pred_fallthru
      _
  $region6: #{_lambda_.10} parent=0 // loop_footer
    %s14 = sadd.s32 1, %s10
  $region7: #{_lambda_.10} parent=0 // loop_footer_branch
    %9 = sbr.rel target = $region3
  $region8: #{_lambda_.10} parent=0 // loop_exit
    _

// kernel: _lambda_.11
$region0: #{_lambda_.11}
  #allocation0 [shape = 'u32[]', space=smem, size = 0x4, offset = 0x4, fixed_abs, tag = 'smem constant byte address 0x4 - core index']
  #allocation1 [shape = 'u32[144,128]{1,0:T(1,128)}', space=vmem, size = 0x12000, scoped, tag = 'internal scratch']
  %s0 = inlined_call_operand.vmem [shape: f32[512,32], index: 0, kind: input, shape index: {}]
  %s1 = inlined_call_operand.vmem [shape: bf16[32,32], index: 1, kind: input, shape index: {}]
  %s2 = inlined_call_operand.vmem [shape: f32[1,32], index: 2, kind: input, shape index: {}]
  %s3 = inlined_call_operand.vmem [shape: f32[512,32], index: 3, kind: input, shape index: {}]
  %s4 = inlined_call_operand.vmem [shape: f32[1,32], index: 4, kind: input, shape index: {}]
  %s5 = inlined_call_operand.vmem [shape: f32[1,32], index: 5, kind: input, shape index: {}]
  %s6 = inlined_call_operand.vmem [shape: bf16[32,128], index: 6, kind: input, shape index: {}]
  %s7 = inlined_call_operand.vmem [shape: f32[1,128], index: 7, kind: input, shape index: {}]
  %s8 = inlined_call_operand.vmem [shape: f32[512,32], index: 8, kind: output, shape index: {0}]
  %s9 = inlined_call_operand.vmem [shape: f32[512,128], index: 9, kind: output, shape index: {1}]
  %10 = xla_tuple %s8, %s9
  %s11 = sld [smem:[#allocation0]]
  $region73: #{_lambda_.11} parent=0
    _
  %s13 = ssub.s32 1, %s11
  %s14 = scalar_select 0, %s13, %s11
  loop: start=0, step=1, limit=6
  $region2: #{_lambda_.11} parent=0 // loop_pre_header
    _
  $region3: #{_lambda_.11} parent=0 // loop_header
    %s16 = sphi 0, %s20
    %p17 = scmp.ge.s32.totalorder %s16, 6
    %s26 = sphi 0, %s28
    %s29 = sphi 0, %s26
    %s30 = sphi 0, %s29
    %s46 = sphi 0, %s30
    %s50 = sphi 0, %s50
    %s52 = sphi 0, %s50
    %s53 = sphi 0, %s52
    %s67 = sphi 0, %s53
    %s71 = sphi 0, %s71
    %s73 = sphi 0, %s71
    %s74 = sphi 0, %s73
    %s88 = sphi 0, %s74
    %s94 = sphi 0, %s96
    %s97 = sphi 0, %s94
    %s98 = sphi 0, %s97
    %s114 = sphi 0, %s98
    %s118 = sphi 0, %s118
    %s120 = sphi 0, %s118
    %s121 = sphi 0, %s120
    %s135 = sphi 0, %s121
    %s139 = sphi 0, %s139
    %s141 = sphi 0, %s139
    %s142 = sphi 0, %s141
    %s156 = sphi 0, %s142
    %s160 = sphi 0, %s160
    %s162 = sphi 0, %s160
    %s163 = sphi 0, %s162
    %s177 = sphi 0, %s163
    %s181 = sphi 0, %s181
    %s183 = sphi 0, %s181
    %s184 = sphi 0, %s183
    %s198 = sphi 0, %s184
    %s204 = sphi 0, %s206
    %s207 = sphi 0, %s204
    %s208 = sphi 0, %s207
    %s224 = sphi 0, %s208
    %s230 = sphi 0, %s232
    %s233 = sphi 0, %s230
    %s234 = sphi 0, %s233
    %s250 = sphi 0, %s234
  $region4: #{_lambda_.11} parent=0 // loop_header_branch
    %19 = sbr.rel (%p17) target = $region8
  $region5: #{_lambda_.11} parent=0 // loop_body
    %s21 = ssub.s32 %s16, 1
    %s22 = ssub.s32 %s16, 2
    %s23 = sadd.s32 %s16, 1
    %s24 = ssub.s32 %s16, %s23
    %p25 = scmp.eq.s32.totalorder %s24, 0
    %s27 = sadd.s32 %s26, 1
    %s28 = scalar_select %p25, %s26, %s27
    %p31 = pneg %p25
    %p32 = scmp.eq.s32.totalorder %s16, 3
    %p33 = por %p31, %p32
    %p34 = scmp.ne.s32.totalorder %s26, %s29
    %p35 = scmp.eq.s32.totalorder %s16, 0
    %p36 = por %p34, %p35
    %p37 = scmp.ne.s32.totalorder %s26, %s29
    %p38 = scmp.eq.s32.totalorder %s21, 3
    %p39 = por %p37, %p38
    %p40 = scmp.ne.s32.totalorder %s29, %s30
    %p41 = scmp.eq.s32.totalorder %s21, 0
    %p42 = por %p40, %p41
    %p43 = scmp.ne.s32.totalorder %s29, %s30
    %p44 = scmp.eq.s32.totalorder %s22, 3
    %p45 = por %p43, %p44
    %p47 = scmp.ne.s32.totalorder %s30, %s46
    %p48 = scmp.eq.s32.totalorder %s22, 0
    %p49 = por %p47, %p48
    %s51 = sadd.s32 %s50, 1
    %p54 = scmp.eq.s32.totalorder %s16, 3
    %p55 = scmp.ne.s32.totalorder %s50, %s52
    %p56 = scmp.eq.s32.totalorder %s16, 0
    %p57 = por %p55, %p56
    %p58 = scmp.ne.s32.totalorder %s50, %s52
    %p59 = scmp.eq.s32.totalorder %s21, 3
    %p60 = por %p58, %p59
    %p61 = scmp.ne.s32.totalorder %s52, %s53
    %p62 = scmp.eq.s32.totalorder %s21, 0
    %p63 = por %p61, %p62
    %p64 = scmp.ne.s32.totalorder %s52, %s53
    %p65 = scmp.eq.s32.totalorder %s22, 3
    %p66 = por %p64, %p65
    %p68 = scmp.ne.s32.totalorder %s53, %s67
    %p69 = scmp.eq.s32.totalorder %s22, 0
    %p70 = por %p68, %p69
    %s72 = sadd.s32 %s71, 1
    %p75 = scmp.eq.s32.totalorder %s16, 3
    %p76 = scmp.ne.s32.totalorder %s71, %s73
    %p77 = scmp.eq.s32.totalorder %s16, 0
    %p78 = por %p76, %p77
    %p79 = scmp.ne.s32.totalorder %s71, %s73
    %p80 = scmp.eq.s32.totalorder %s21, 3
    %p81 = por %p79, %p80
    %p82 = scmp.ne.s32.totalorder %s73, %s74
    %p83 = scmp.eq.s32.totalorder %s21, 0
    %p84 = por %p82, %p83
    %p85 = scmp.ne.s32.totalorder %s73, %s74
    %p86 = scmp.eq.s32.totalorder %s22, 3
    %p87 = por %p85, %p86
    %p89 = scmp.ne.s32.totalorder %s74, %s88
    %p90 = scmp.eq.s32.totalorder %s22, 0
    %p91 = por %p89, %p90
    %s92 = ssub.s32 %s16, %s23
    %p93 = scmp.eq.s32.totalorder %s92, 0
    %s95 = sadd.s32 %s94, 1
    %s96 = scalar_select %p93, %s94, %s95
    %p99 = pneg %p93
    %p100 = scmp.eq.s32.totalorder %s16, 3
    %p101 = por %p99, %p100
    %p102 = scmp.ne.s32.totalorder %s94, %s97
    %p103 = scmp.eq.s32.totalorder %s16, 0
    %p104 = por %p102, %p103
    %p105 = scmp.ne.s32.totalorder %s94, %s97
    %p106 = scmp.eq.s32.totalorder %s21, 3
    %p107 = por %p105, %p106
    %p108 = scmp.ne.s32.totalorder %s97, %s98
    %p109 = scmp.eq.s32.totalorder %s21, 0
    %p110 = por %p108, %p109
    %p111 = scmp.ne.s32.totalorder %s97, %s98
    %p112 = scmp.eq.s32.totalorder %s22, 3
    %p113 = por %p111, %p112
    %p115 = scmp.ne.s32.totalorder %s98, %s114
    %p116 = scmp.eq.s32.totalorder %s22, 0
    %p117 = por %p115, %p116
    %s119 = sadd.s32 %s118, 1
    %p122 = scmp.eq.s32.totalorder %s16, 3
    %p123 = scmp.ne.s32.totalorder %s118, %s120
    %p124 = scmp.eq.s32.totalorder %s16, 0
    %p125 = por %p123, %p124
    %p126 = scmp.ne.s32.totalorder %s118, %s120
    %p127 = scmp.eq.s32.totalorder %s21, 3
    %p128 = por %p126, %p127
    %p129 = scmp.ne.s32.totalorder %s120, %s121
    %p130 = scmp.eq.s32.totalorder %s21, 0
    %p131 = por %p129, %p130
    %p132 = scmp.ne.s32.totalorder %s120, %s121
    %p133 = scmp.eq.s32.totalorder %s22, 3
    %p134 = por %p132, %p133
    %p136 = scmp.ne.s32.totalorder %s121, %s135
    %p137 = scmp.eq.s32.totalorder %s22, 0
    %p138 = por %p136, %p137
    %s140 = sadd.s32 %s139, 1
    %p143 = scmp.eq.s32.totalorder %s16, 3
    %p144 = scmp.ne.s32.totalorder %s139, %s141
    %p145 = scmp.eq.s32.totalorder %s16, 0
    %p146 = por %p144, %p145
    %p147 = scmp.ne.s32.totalorder %s139, %s141
    %p148 = scmp.eq.s32.totalorder %s21, 3
    %p149 = por %p147, %p148
    %p150 = scmp.ne.s32.totalorder %s141, %s142
    %p151 = scmp.eq.s32.totalorder %s21, 0
    %p152 = por %p150, %p151
    %p153 = scmp.ne.s32.totalorder %s141, %s142
    %p154 = scmp.eq.s32.totalorder %s22, 3
    %p155 = por %p153, %p154
    %p157 = scmp.ne.s32.totalorder %s142, %s156
    %p158 = scmp.eq.s32.totalorder %s22, 0
    %p159 = por %p157, %p158
    %s161 = sadd.s32 %s160, 1
    %p164 = scmp.eq.s32.totalorder %s16, 3
    %p165 = scmp.ne.s32.totalorder %s160, %s162
    %p166 = scmp.eq.s32.totalorder %s16, 0
    %p167 = por %p165, %p166
    %p168 = scmp.ne.s32.totalorder %s160, %s162
    %p169 = scmp.eq.s32.totalorder %s21, 3
    %p170 = por %p168, %p169
    %p171 = scmp.ne.s32.totalorder %s162, %s163
    %p172 = scmp.eq.s32.totalorder %s21, 0
    %p173 = por %p171, %p172
    %p174 = scmp.ne.s32.totalorder %s162, %s163
    %p175 = scmp.eq.s32.totalorder %s22, 3
    %p176 = por %p174, %p175
    %p178 = scmp.ne.s32.totalorder %s163, %s177
    %p179 = scmp.eq.s32.totalorder %s22, 0
    %p180 = por %p178, %p179
    %s182 = sadd.s32 %s181, 1
    %p185 = scmp.eq.s32.totalorder %s16, 3
    %p186 = scmp.ne.s32.totalorder %s181, %s183
    %p187 = scmp.eq.s32.totalorder %s16, 0
    %p188 = por %p186, %p187
    %p189 = scmp.ne.s32.totalorder %s181, %s183
    %p190 = scmp.eq.s32.totalorder %s21, 3
    %p191 = por %p189, %p190
    %p192 = scmp.ne.s32.totalorder %s183, %s184
    %p193 = scmp.eq.s32.totalorder %s21, 0
    %p194 = por %p192, %p193
    %p195 = scmp.ne.s32.totalorder %s183, %s184
    %p196 = scmp.eq.s32.totalorder %s22, 3
    %p197 = por %p195, %p196
    %p199 = scmp.ne.s32.totalorder %s184, %s198
    %p200 = scmp.eq.s32.totalorder %s22, 0
    %p201 = por %p199, %p200
    %s202 = ssub.s32 %s16, %s23
    %p203 = scmp.eq.s32.totalorder %s202, 0
    %s205 = sadd.s32 %s204, 1
    %s206 = scalar_select %p203, %s204, %s205
    %p209 = pneg %p203
    %p210 = scmp.eq.s32.totalorder %s16, 3
    %p211 = por %p209, %p210
    %p212 = scmp.ne.s32.totalorder %s204, %s207
    %p213 = scmp.eq.s32.totalorder %s16, 0
    %p214 = por %p212, %p213
    %p215 = scmp.ne.s32.totalorder %s204, %s207
    %p216 = scmp.eq.s32.totalorder %s21, 3
    %p217 = por %p215, %p216
    %p218 = scmp.ne.s32.totalorder %s207, %s208
    %p219 = scmp.eq.s32.totalorder %s21, 0
    %p220 = por %p218, %p219
    %p221 = scmp.ne.s32.totalorder %s207, %s208
    %p222 = scmp.eq.s32.totalorder %s22, 3
    %p223 = por %p221, %p222
    %p225 = scmp.ne.s32.totalorder %s208, %s224
    %p226 = scmp.eq.s32.totalorder %s22, 0
    %p227 = por %p225, %p226
    %s228 = ssub.s32 %s16, %s23
    %p229 = scmp.eq.s32.totalorder %s228, 0
    %s231 = sadd.s32 %s230, 1
    %s232 = scalar_select %p229, %s230, %s231
    %p235 = pneg %p229
    %p236 = scmp.eq.s32.totalorder %s16, 3
    %p237 = por %p235, %p236
    %p238 = scmp.ne.s32.totalorder %s230, %s233
    %p239 = scmp.eq.s32.totalorder %s16, 0
    %p240 = por %p238, %p239
    %p241 = scmp.ne.s32.totalorder %s230, %s233
    %p242 = scmp.eq.s32.totalorder %s21, 3
    %p243 = por %p241, %p242
    %p244 = scmp.ne.s32.totalorder %s233, %s234
    %p245 = scmp.eq.s32.totalorder %s21, 0
    %p246 = por %p244, %p245
    %p247 = scmp.ne.s32.totalorder %s233, %s234
    %p248 = scmp.eq.s32.totalorder %s22, 3
    %p249 = por %p247, %p248
    %p251 = scmp.ne.s32.totalorder %s234, %s250
    %p252 = scmp.eq.s32.totalorder %s22, 0
    %p253 = por %p251, %p252
    %p254 = scmp.le.s32.totalorder 1, %s16
    %p255 = scmp.lt.s32.totalorder %s16, 5
    %p256 = pnand %p254, %p255
    %p257 = pneg %p256
    // Predicated region
    $region9: #{_lambda_.11} parent=5 // pred_check
      _
    $region10: #{_lambda_.11} parent=5 // pred_check_branch
      %259 = sbr.rel (%p256) target = $region12
    $region11: #{_lambda_.11} parent=5 // pred_region
      %s260 = ssub.s32 %s16, 1
      // Predicated region
      $region13: #{_lambda_.11} parent=11 // pred_check
        %p261 = pneg %p63
      $region14: #{_lambda_.11} parent=11 // pred_check_branch
        %263 = sbr.rel (%p261) target = $region16
      $region15: #{_lambda_.11} parent=11 // pred_region
        _
      $region16: #{_lambda_.11} parent=11 // pred_fallthru
        _
      // Predicated region
      $region17: #{_lambda_.11} parent=11 // pred_check
        %p264 = pneg %p84
      $region18: #{_lambda_.11} parent=11 // pred_check_branch
        %266 = sbr.rel (%p264) target = $region20
      $region19: #{_lambda_.11} parent=11 // pred_region
        _
      $region20: #{_lambda_.11} parent=11 // pred_fallthru
        _
      // Predicated region
      $region21: #{_lambda_.11} parent=11 // pred_check
        %p267 = pneg %p131
      $region22: #{_lambda_.11} parent=11 // pred_check_branch
        %269 = sbr.rel (%p267) target = $region24
      $region23: #{_lambda_.11} parent=11 // pred_region
        _
      $region24: #{_lambda_.11} parent=11 // pred_fallthru
        _
      // Predicated region
      $region25: #{_lambda_.11} parent=11 // pred_check
        %p270 = pneg %p152
      $region26: #{_lambda_.11} parent=11 // pred_check_branch
        %272 = sbr.rel (%p270) target = $region28
      $region27: #{_lambda_.11} parent=11 // pred_region
        _
      $region28: #{_lambda_.11} parent=11 // pred_fallthru
        _
      // Predicated region
      $region29: #{_lambda_.11} parent=11 // pred_check
        %p273 = pneg %p173
      $region30: #{_lambda_.11} parent=11 // pred_check_branch
        %275 = sbr.rel (%p273) target = $region32
      $region31: #{_lambda_.11} parent=11 // pred_region
        _
      $region32: #{_lambda_.11} parent=11 // pred_fallthru
        _
      // Predicated region
      $region33: #{_lambda_.11} parent=11 // pred_check
        %p276 = pneg %p194
      $region34: #{_lambda_.11} parent=11 // pred_check_branch
        %278 = sbr.rel (%p276) target = $region36
      $region35: #{_lambda_.11} parent=11 // pred_region
        _
      $region36: #{_lambda_.11} parent=11 // pred_fallthru
        _
    $region12: #{_lambda_.11} parent=5 // pred_fallthru
      _
    %p279 = scmp.lt.s32.totalorder %s16, 4
    // Predicated region
    $region37: #{_lambda_.11} parent=5 // pred_check
      %p280 = pneg %p279
    $region38: #{_lambda_.11} parent=5 // pred_check_branch
      %282 = sbr.rel (%p280) target = $region40
    $region39: #{_lambda_.11} parent=5 // pred_region
      // Predicated region
      $region41: #{_lambda_.11} parent=39 // pred_check
        %p283 = pneg %p36
      $region42: #{_lambda_.11} parent=39 // pred_check_branch
        %285 = sbr.rel (%p283) target = $region44
      $region43: #{_lambda_.11} parent=39 // pred_region
        %s286 = smul.u32 16, %s16
        %p287 = scmp.lt.s32.totalorder %s286, 63
        %s288 = scalar_select %p287, %s286, 63
        %s289 = smul.addr %s288, 8
        %s290 = scalar_lea.vmem %s0, %s289
        %s291 = smul.u32 16, %s16
      $region44: #{_lambda_.11} parent=39 // pred_fallthru
        _
      // Predicated region
      $region45: #{_lambda_.11} parent=39 // pred_check
        %p292 = pneg %p104
      $region46: #{_lambda_.11} parent=39 // pred_check_branch
        %294 = sbr.rel (%p292) target = $region48
      $region47: #{_lambda_.11} parent=39 // pred_region
        %s295 = smul.u32 16, %s16
        %p296 = scmp.lt.s32.totalorder %s295, 63
        %s297 = scalar_select %p296, %s295, 63
        %s298 = smul.addr %s297, 8
        %s299 = scalar_lea.vmem %s3, %s298
        %s300 = smul.u32 16, %s16
      $region48: #{_lambda_.11} parent=39 // pred_fallthru
        _
    $region40: #{_lambda_.11} parent=5 // pred_fallthru
      _
    %p301 = scmp.le.s32.totalorder 1, %s16
    %p302 = scmp.lt.s32.totalorder %s16, 5
    %p303 = pnand %p301, %p302
    %p304 = pneg %p303
    // Predicated region
    $region49: #{_lambda_.11} parent=5 // pred_check
      _
    $region50: #{_lambda_.11} parent=5 // pred_check_branch
      %306 = sbr.rel (%p303) target = $region52
    $region51: #{_lambda_.11} parent=5 // pred_region
      %s307 = ssub.s32 %s16, 1
      %s308 = smul.u32 16, %s21
      %p309 = scmp.lt.s32.totalorder %s308, 63
      %s310 = scalar_select %p309, %s308, 63
      %s311 = smul.addr %s310, 8
      %s312 = scalar_lea.vmem %s0, %s311
      %p313 = pneg %p42
      %p314 = pneg %p39
      %p315 = pneg %p63
      %p316 = pneg %p60
      %p317 = pneg %p84
      %p318 = pneg %p81
      %s319 = smul.u32 16, %s21
      %p320 = scmp.lt.s32.totalorder %s319, 63
      %s321 = scalar_select %p320, %s319, 63
      %s322 = smul.addr %s321, 8
      %s323 = scalar_lea.vmem %s3, %s322
      %p324 = pneg %p110
      %p325 = pneg %p107
      %p326 = pneg %p131
      %p327 = pneg %p128
      %p328 = pneg %p152
      %p329 = pneg %p149
      %p330 = pneg %p173
      %p331 = pneg %p170
      %p332 = pneg %p194
      %p333 = pneg %p191
      %p334 = pneg %p220
      %p335 = pneg %p217
      %s336 = smul.u32 16, %s21
      %p337 = scmp.lt.s32.totalorder %s336, 63
      %s338 = scalar_select %p337, %s336, 63
      %s339 = smul.addr %s338, 8
      %s340 = scalar_lea.vmem %s8, %s339
      %p341 = pneg %p246
      %p342 = pneg %p243
      %s343 = smul.u32 16, %s21
      %p344 = scmp.lt.s32.totalorder %s343, 63
      %s345 = scalar_select %p344, %s343, 63
      %s346 = smul.addr %s345, 8
      %s347 = scalar_lea.vmem %s9, %s346
      %s348 = smul.u32 16, %s21
      %p349 = scmp.lt.s32.totalorder %s348, 63
      %s350 = scalar_select %p349, %s348, 63
      %s351 = smul.addr %s350, 8
      %s352 = scalar_lea.vmem %s0, %s351
      %s353 = smul.u32 16, %s21
      %s354 = smul.u32 16, %s21
      %p355 = scmp.lt.s32.totalorder %s354, 63
      %s356 = scalar_select %p355, %s354, 63
      %s357 = smul.addr %s356, 8
      %s358 = scalar_lea.vmem %s3, %s357
      %s359 = smul.u32 16, %s21
      %s360 = smul.u32 16, %s21
      %p361 = scmp.lt.s32.totalorder %s360, 63
      %s362 = scalar_select %p361, %s360, 63
      %s363 = smul.addr %s362, 8
      %s364 = scalar_lea.vmem %s8, %s363
      %s365 = smul.u32 16, %s21
      %s366 = smul.u32 16, %s21
      %p367 = scmp.lt.s32.totalorder %s366, 63
      %s368 = scalar_select %p367, %s366, 63
      %s369 = smul.addr %s368, 8
      %s370 = scalar_lea.vmem %s9, %s369
      %s371 = smul.u32 16, %s21
      %v373 = vld [vmem:[%s352] sm:$0xff]
      %v374 = vld [vmem:[%s352 + $0x8] sm:$0xff]
      %v375 = vld [vmem:[%s352 + $0x10] sm:$0xff]
      %v376 = vld [vmem:[%s352 + $0x18] sm:$0xff]
      %v377 = vld [vmem:[%s352 + $0x20] sm:$0xff]
      %v378 = vld [vmem:[%s352 + $0x28] sm:$0xff]
      %v379 = vld [vmem:[%s352 + $0x30] sm:$0xff]
      %v380 = vld [vmem:[%s352 + $0x38] sm:$0xff]
      %v381 = vld [vmem:[%s352 + $0x40] sm:$0xff]
      %v382 = vld [vmem:[%s352 + $0x48] sm:$0xff]
      %v383 = vld [vmem:[%s352 + $0x50] sm:$0xff]
      %v384 = vld [vmem:[%s352 + $0x58] sm:$0xff]
      %v385 = vld [vmem:[%s352 + $0x60] sm:$0xff]
      %v386 = vld [vmem:[%s352 + $0x68] sm:$0xff]
      %v387 = vld [vmem:[%s352 + $0x70] sm:$0xff]
      %v388 = vld [vmem:[%s352 + $0x78] sm:$0xff]
      %v389 = vpack.c.bf16 %v374, %v373
      %v390 = vpack.c.bf16 %v376, %v375
      %v391 = vpack.c.bf16 %v378, %v377
      %v392 = vpack.c.bf16 %v380, %v379
      %v393 = vpack.c.bf16 %v382, %v381
      %v394 = vpack.c.bf16 %v384, %v383
      %v395 = vpack.c.bf16 %v386, %v385
      %v396 = vpack.c.bf16 %v388, %v387
      %v397 = vld [vmem:[%s1] sm:$0xf]
      %v398 = vld [vmem:[%s1 + $0x4] sm:$0xf]
      %v399 = vld [vmem:[%s1 + $0x8] sm:$0xf]
      %v400 = vld [vmem:[%s1 + $0xc] sm:$0xf]
      %v401 = vld [vmem:[%s2] sm:$0x1]
      %v403 = vlaneseq
      %v404 = vshrl.u32 %v403, 7
      %v405 = vsub.s32 0, %v404
      %v406 = vrot.slane %v401, %v405
      %v412 = vunpack.c.l.b16 %v397
      %v413 = vunpack.c.l.b16 %v398
      %v414 = vunpack.c.l.b16 %v399
      %v415 = vunpack.c.l.b16 %v400
      %v416 = vpack.c.b16 %v413, %v412
      %v417 = vpack.c.b16 %v415, %v414
      %vm420 = vcmask 261120
      %v422 = vsel %vm420, %v389, 0
      %v425 = vsel %vm420, %v390, 0
      %v428 = vsel %vm420, %v391, 0
      %v431 = vsel %vm420, %v392, 0
      %v434 = vsel %vm420, %v393, 0
      %v437 = vsel %vm420, %v394, 0
      %v440 = vsel %vm420, %v395, 0
      %v443 = vsel %vm420, %v396, 0
      %445 = vmatprep.subr.bf16.mxu0 0
      %446 = vmatpush1.bf16.msra.mxu0 0
      %447 = vmatprep.subr.bf16.mxu0 0
      %448 = vmatpush1.bf16.msra.mxu0 0
      %449 = vmatprep.subr.bf16.mxu0 0
      %450 = vmatpush1.bf16.msra.mxu0 0
      %451 = vmatprep.subr.bf16.mxu0 0
      %452 = vmatpush1.bf16.msra.mxu0 0
      %453 = vmatprep.subr.bf16.mxu0 0
      %454 = vmatpush1.bf16.msra.mxu0 0
      %455 = vmatprep.subr.bf16.mxu0 0
      %456 = vmatpush1.bf16.msra.mxu0 0
      %457 = vmatprep.subr.bf16.mxu0 0
      %458 = vmatpush1.bf16.msra.mxu0 %v417
      %459 = vmatprep.subr.bf16.mxu0 0
      %460 = vmatpush1.bf16.msra.mxu0 %v416
      %461 = vmatprep.subr.bf16.mxu0 0
      %462 = vmatpush2.bf16.msra.mxu0 0
      %463 = vmatprep.subr.bf16.mxu0 0
      %464 = vmatpush2.bf16.msra.mxu0 0
      %465 = vmatprep.subr.bf16.mxu0 0
      %466 = vmatpush2.bf16.msra.mxu0 0
      %467 = vmatprep.subr.bf16.mxu0 0
      %468 = vmatpush2.bf16.msra.mxu0 0
      %469 = vmatprep.subr.bf16.mxu0 0
      %470 = vmatpush2.bf16.msra.mxu0 0
      %471 = vmatprep.subr.bf16.mxu0 0
      %472 = vmatpush2.bf16.msra.mxu0 0
      %473 = vmatprep.subr.bf16.mxu0 0
      %474 = vmatpush2.bf16.msra.mxu0 0
      %475 = vmatprep.subr.bf16.mxu0 0
      %476 = vmatpush2.bf16.msra.mxu0 0
      %477 = vmatprep.mubr.bf16.mxu0 0
      %478 = vmatmul.mubr.bf16.gmra.mxu0 %v422
      %v479 = vpop.f32.mrf.mxu0
      %v480 = vadd.f32 %v406, %v479
      %v481 = vpop.f32.mrf.mxu0
      %v482 = vpop.f32.mrf.mxu0
      %v483 = vadd.f32 %v406, %v482
      %v484 = vpop.f32.mrf.mxu0
      %485 = vmatprep.mubr.bf16.mxu0 0
      %486 = vmatmul.mubr.bf16.gmra.mxu0 %v425
      %v487 = vpop.f32.mrf.mxu0
      %v488 = vadd.f32 %v406, %v487
      %v489 = vpop.f32.mrf.mxu0
      %v490 = vpop.f32.mrf.mxu0
      %v491 = vadd.f32 %v406, %v490
      %v492 = vpop.f32.mrf.mxu0
      %493 = vmatprep.mubr.bf16.mxu0 0
      %494 = vmatmul.mubr.bf16.gmra.mxu0 %v428
      %v495 = vpop.f32.mrf.mxu0
      %v496 = vadd.f32 %v406, %v495
      %v497 = vpop.f32.mrf.mxu0
      %v498 = vpop.f32.mrf.mxu0
      %v499 = vadd.f32 %v406, %v498
      %v500 = vpop.f32.mrf.mxu0
      %501 = vmatprep.mubr.bf16.mxu0 0
      %502 = vmatmul.mubr.bf16.gmra.mxu0 %v431
      %v503 = vpop.f32.mrf.mxu0
      %v504 = vadd.f32 %v406, %v503
      %v505 = vpop.f32.mrf.mxu0
      %v506 = vpop.f32.mrf.mxu0
      %v507 = vadd.f32 %v406, %v506
      %v508 = vpop.f32.mrf.mxu0
      %509 = vmatprep.mubr.bf16.mxu0 0
      %510 = vmatmul.mubr.bf16.gmra.mxu0 %v434
      %v511 = vpop.f32.mrf.mxu0
      %v512 = vadd.f32 %v406, %v511
      %v513 = vpop.f32.mrf.mxu0
      %v514 = vpop.f32.mrf.mxu0
      %v515 = vadd.f32 %v406, %v514
      %v516 = vpop.f32.mrf.mxu0
      %517 = vmatprep.mubr.bf16.mxu0 0
      %518 = vmatmul.mubr.bf16.gmra.mxu0 %v437
      %v519 = vpop.f32.mrf.mxu0
      %v520 = vadd.f32 %v406, %v519
      %v521 = vpop.f32.mrf.mxu0
      %v522 = vpop.f32.mrf.mxu0
      %v523 = vadd.f32 %v406, %v522
      %v524 = vpop.f32.mrf.mxu0
      %525 = vmatprep.mubr.bf16.mxu0 0
      %526 = vmatmul.mubr.bf16.gmra.mxu0 %v440
      %v527 = vpop.f32.mrf.mxu0
      %v528 = vadd.f32 %v406, %v527
      %v529 = vpop.f32.mrf.mxu0
      %v530 = vpop.f32.mrf.mxu0
      %v531 = vadd.f32 %v406, %v530
      %v532 = vpop.f32.mrf.mxu0
      %533 = vmatprep.mubr.bf16.mxu0 0
      %534 = vmatmul.mubr.bf16.gmra.mxu0 %v443
      %v535 = vpop.f32.mrf.mxu0
      %v536 = vadd.f32 %v406, %v535
      %v537 = vpop.f32.mrf.mxu0
      %v538 = vpop.f32.mrf.mxu0
      %v539 = vadd.f32 %v406, %v538
      %v540 = vpop.f32.mrf.mxu0
      %541 = vdwg.mxu0
      %v542 = vld [vmem:[%s358] sm:$0xff]
      %v543 = vld [vmem:[%s358 + $0x8] sm:$0xff]
      %v544 = vld [vmem:[%s358 + $0x10] sm:$0xff]
      %v545 = vld [vmem:[%s358 + $0x18] sm:$0xff]
      %v546 = vld [vmem:[%s358 + $0x20] sm:$0xff]
      %v547 = vld [vmem:[%s358 + $0x28] sm:$0xff]
      %v548 = vld [vmem:[%s358 + $0x30] sm:$0xff]
      %v549 = vld [vmem:[%s358 + $0x38] sm:$0xff]
      %v550 = vld [vmem:[%s358 + $0x40] sm:$0xff]
      %v551 = vld [vmem:[%s358 + $0x48] sm:$0xff]
      %v552 = vld [vmem:[%s358 + $0x50] sm:$0xff]
      %v553 = vld [vmem:[%s358 + $0x58] sm:$0xff]
      %v554 = vld [vmem:[%s358 + $0x60] sm:$0xff]
      %v555 = vld [vmem:[%s358 + $0x68] sm:$0xff]
      %v556 = vld [vmem:[%s358 + $0x70] sm:$0xff]
      %v557 = vld [vmem:[%s358 + $0x78] sm:$0xff]
      %v558 = vld [vmem:[%s5] sm:$0x1]
      %v560 = vlaneseq
      %v561 = vshrl.u32 %v560, 7
      %v562 = vsub.s32 0, %v561
      %v563 = vrot.slane %v558, %v562
      %v565 = vmul.f32 %v542, %v563
      %v566 = vmul.f32 %v543, %v563
      %v567 = vmul.f32 %v544, %v563
      %v568 = vmul.f32 %v545, %v563
      %v569 = vmul.f32 %v546, %v563
      %v570 = vmul.f32 %v547, %v563
      %v571 = vmul.f32 %v548, %v563
      %v572 = vmul.f32 %v549, %v563
      %v573 = vmul.f32 %v550, %v563
      %v574 = vmul.f32 %v551, %v563
      %v575 = vmul.f32 %v552, %v563
      %v576 = vmul.f32 %v553, %v563
      %v577 = vmul.f32 %v554, %v563
      %v578 = vmul.f32 %v555, %v563
      %v579 = vmul.f32 %v556, %v563
      %v580 = vmul.f32 %v557, %v563
      %v581 = vld [vmem:[%s4] sm:$0x1]
      %v583 = vlaneseq
      %v584 = vshrl.u32 %v583, 7
      %v585 = vsub.s32 0, %v584
      %v586 = vrot.slane %v581, %v585
      %v588 = vmul.f32 %v586, %v480
      %v589 = vmul.f32 %v586, %v483
      %v590 = vmul.f32 %v586, %v488
      %v591 = vmul.f32 %v586, %v491
      %v592 = vmul.f32 %v586, %v496
      %v593 = vmul.f32 %v586, %v499
      %v594 = vmul.f32 %v586, %v504
      %v595 = vmul.f32 %v586, %v507
      %v596 = vmul.f32 %v586, %v512
      %v597 = vmul.f32 %v586, %v515
      %v598 = vmul.f32 %v586, %v520
      %v599 = vmul.f32 %v586, %v523
      %v600 = vmul.f32 %v586, %v528
      %v601 = vmul.f32 %v586, %v531
      %v602 = vmul.f32 %v586, %v536
      %v603 = vmul.f32 %v586, %v539
      %v604 = vadd.f32 %v565, %v588
      %v605 = vadd.f32 %v566, %v589
      %v606 = vadd.f32 %v567, %v590
      %v607 = vadd.f32 %v568, %v591
      %v608 = vadd.f32 %v569, %v592
      %v609 = vadd.f32 %v570, %v593
      %v610 = vadd.f32 %v571, %v594
      %v611 = vadd.f32 %v572, %v595
      %v612 = vadd.f32 %v573, %v596
      %v613 = vadd.f32 %v574, %v597
      %v614 = vadd.f32 %v575, %v598
      %v615 = vadd.f32 %v576, %v599
      %v616 = vadd.f32 %v577, %v600
      %v617 = vadd.f32 %v578, %v601
      %v618 = vadd.f32 %v579, %v602
      %v619 = vadd.f32 %v580, %v603
      %620 = vst.msk [vmem:[%s364] sm:$0xff] %vm420, %v604
      %621 = vst.msk [vmem:[%s364 + $0x8] sm:$0xff] %vm420, %v605
      %622 = vst.msk [vmem:[%s364 + $0x10] sm:$0xff] %vm420, %v606
      %623 = vst.msk [vmem:[%s364 + $0x18] sm:$0xff] %vm420, %v607
      %624 = vst.msk [vmem:[%s364 + $0x20] sm:$0xff] %vm420, %v608
      %625 = vst.msk [vmem:[%s364 + $0x28] sm:$0xff] %vm420, %v609
      %626 = vst.msk [vmem:[%s364 + $0x30] sm:$0xff] %vm420, %v610
      %627 = vst.msk [vmem:[%s364 + $0x38] sm:$0xff] %vm420, %v611
      %628 = vst.msk [vmem:[%s364 + $0x40] sm:$0xff] %vm420, %v612
      %629 = vst.msk [vmem:[%s364 + $0x48] sm:$0xff] %vm420, %v613
      %630 = vst.msk [vmem:[%s364 + $0x50] sm:$0xff] %vm420, %v614
      %631 = vst.msk [vmem:[%s364 + $0x58] sm:$0xff] %vm420, %v615
      %632 = vst.msk [vmem:[%s364 + $0x60] sm:$0xff] %vm420, %v616
      %633 = vst.msk [vmem:[%s364 + $0x68] sm:$0xff] %vm420, %v617
      %634 = vst.msk [vmem:[%s364 + $0x70] sm:$0xff] %vm420, %v618
      %635 = vst.msk [vmem:[%s364 + $0x78] sm:$0xff] %vm420, %v619
      %v636 = vpack.c.bf16 %v605, %v604
      %v637 = vpack.c.bf16 %v607, %v606
      %v638 = vpack.c.bf16 %v609, %v608
      %v639 = vpack.c.bf16 %v611, %v610
      %v640 = vpack.c.bf16 %v613, %v612
      %v641 = vpack.c.bf16 %v615, %v614
      %v642 = vpack.c.bf16 %v617, %v616
      %v643 = vpack.c.bf16 %v619, %v618
      %v644 = vld [vmem:[%s6] sm:$0xf]
      %v645 = vld [vmem:[%s6 + $0x4] sm:$0xf]
      %v646 = vld [vmem:[%s6 + $0x8] sm:$0xf]
      %v647 = vld [vmem:[%s6 + $0xc] sm:$0xf]
      %v648 = vld [vmem:[%s7] sm:$0x1]
      %v650 = vlaneseq
      %v651 = vshrl.u32 %v650, 7
      %v652 = vsub.s32 0, %v651
      %v653 = vrot.slane %v648, %v652
      %v659 = vunpack.c.l.b16 %v644
      %v660 = vunpack.c.l.b16 %v645
      %v661 = vunpack.c.l.b16 %v646
      %v662 = vunpack.c.l.b16 %v647
      %v663 = vpack.c.b16 %v660, %v659
      %v664 = vpack.c.b16 %v662, %v661
      %v668 = vsel %vm420, %v636, 0
      %v671 = vsel %vm420, %v637, 0
      %v674 = vsel %vm420, %v638, 0
      %v677 = vsel %vm420, %v639, 0
      %v680 = vsel %vm420, %v640, 0
      %v683 = vsel %vm420, %v641, 0
      %v686 = vsel %vm420, %v642, 0
      %v689 = vsel %vm420, %v643, 0
      %691 = vmatprep.subr.bf16.mxu0 0
      %692 = vmatpush1.bf16.msra.mxu0 0
      %693 = vmatprep.subr.bf16.mxu0 0
      %694 = vmatpush1.bf16.msra.mxu0 0
      %695 = vmatprep.subr.bf16.mxu0 0
      %696 = vmatpush1.bf16.msra.mxu0 0
      %697 = vmatprep.subr.bf16.mxu0 0
      %698 = vmatpush1.bf16.msra.mxu0 0
      %699 = vmatprep.subr.bf16.mxu0 0
      %700 = vmatpush1.bf16.msra.mxu0 0
      %701 = vmatprep.subr.bf16.mxu0 0
      %702 = vmatpush1.bf16.msra.mxu0 0
      %703 = vmatprep.subr.bf16.mxu0 0
      %704 = vmatpush1.bf16.msra.mxu0 %v664
      %705 = vmatprep.subr.bf16.mxu0 0
      %706 = vmatpush1.bf16.msra.mxu0 %v663
      %707 = vmatprep.subr.bf16.mxu0 0
      %708 = vmatpush2.bf16.msra.mxu0 0
      %709 = vmatprep.subr.bf16.mxu0 0
      %710 = vmatpush2.bf16.msra.mxu0 0
      %711 = vmatprep.subr.bf16.mxu0 0
      %712 = vmatpush2.bf16.msra.mxu0 0
      %713 = vmatprep.subr.bf16.mxu0 0
      %714 = vmatpush2.bf16.msra.mxu0 0
      %715 = vmatprep.subr.bf16.mxu0 0
      %716 = vmatpush2.bf16.msra.mxu0 0
      %717 = vmatprep.subr.bf16.mxu0 0
      %718 = vmatpush2.bf16.msra.mxu0 0
      %719 = vmatprep.subr.bf16.mxu0 0
      %720 = vmatpush2.bf16.msra.mxu0 0
      %721 = vmatprep.subr.bf16.mxu0 0
      %722 = vmatpush2.bf16.msra.mxu0 0
      %723 = vmatprep.mubr.bf16.mxu0 0
      %724 = vmatmul.mubr.bf16.gmra.mxu0 %v668
      %v725 = vpop.f32.mrf.mxu0
      %v726 = vadd.f32 %v653, %v725
      %v727 = vpop.f32.mrf.mxu0
      %v728 = vpop.f32.mrf.mxu0
      %v729 = vadd.f32 %v653, %v728
      %v730 = vpop.f32.mrf.mxu0
      %731 = vmatprep.mubr.bf16.mxu0 0
      %732 = vmatmul.mubr.bf16.gmra.mxu0 %v671
      %v733 = vpop.f32.mrf.mxu0
      %v734 = vadd.f32 %v653, %v733
      %v735 = vpop.f32.mrf.mxu0
      %v736 = vpop.f32.mrf.mxu0
      %v737 = vadd.f32 %v653, %v736
      %v738 = vpop.f32.mrf.mxu0
      %739 = vmatprep.mubr.bf16.mxu0 0
      %740 = vmatmul.mubr.bf16.gmra.mxu0 %v674
      %v741 = vpop.f32.mrf.mxu0
      %v742 = vadd.f32 %v653, %v741
      %v743 = vpop.f32.mrf.mxu0
      %v744 = vpop.f32.mrf.mxu0
      %v745 = vadd.f32 %v653, %v744
      %v746 = vpop.f32.mrf.mxu0
      %747 = vmatprep.mubr.bf16.mxu0 0
      %748 = vmatmul.mubr.bf16.gmra.mxu0 %v677
      %v749 = vpop.f32.mrf.mxu0
      %v750 = vadd.f32 %v653, %v749
      %v751 = vpop.f32.mrf.mxu0
      %v752 = vpop.f32.mrf.mxu0
      %v753 = vadd.f32 %v653, %v752
      %v754 = vpop.f32.mrf.mxu0
      %755 = vmatprep.mubr.bf16.mxu0 0
      %756 = vmatmul.mubr.bf16.gmra.mxu0 %v680
      %v757 = vpop.f32.mrf.mxu0
      %v758 = vadd.f32 %v653, %v757
      %v759 = vpop.f32.mrf.mxu0
      %v760 = vpop.f32.mrf.mxu0
      %v761 = vadd.f32 %v653, %v760
      %v762 = vpop.f32.mrf.mxu0
      %763 = vmatprep.mubr.bf16.mxu0 0
      %764 = vmatmul.mubr.bf16.gmra.mxu0 %v683
      %v765 = vpop.f32.mrf.mxu0
      %v766 = vadd.f32 %v653, %v765
      %v767 = vpop.f32.mrf.mxu0
      %v768 = vpop.f32.mrf.mxu0
      %v769 = vadd.f32 %v653, %v768
      %v770 = vpop.f32.mrf.mxu0
      %771 = vmatprep.mubr.bf16.mxu0 0
      %772 = vmatmul.mubr.bf16.gmra.mxu0 %v686
      %v773 = vpop.f32.mrf.mxu0
      %v774 = vadd.f32 %v653, %v773
      %v775 = vpop.f32.mrf.mxu0
      %v776 = vpop.f32.mrf.mxu0
      %v777 = vadd.f32 %v653, %v776
      %v778 = vpop.f32.mrf.mxu0
      %779 = vmatprep.mubr.bf16.mxu0 0
      %780 = vmatmul.mubr.bf16.gmra.mxu0 %v689
      %v781 = vpop.f32.mrf.mxu0
      %v782 = vadd.f32 %v653, %v781
      %v783 = vpop.f32.mrf.mxu0
      %v784 = vpop.f32.mrf.mxu0
      %v785 = vadd.f32 %v653, %v784
      %v786 = vpop.f32.mrf.mxu0
      %787 = vdwg.mxu0
      %788 = vst [vmem:[%s370] sm:$0xff] %v726
      %789 = vst [vmem:[%s370 + $0x8] sm:$0xff] %v729
      %790 = vst [vmem:[%s370 + $0x10] sm:$0xff] %v734
      %791 = vst [vmem:[%s370 + $0x18] sm:$0xff] %v737
      %792 = vst [vmem:[%s370 + $0x20] sm:$0xff] %v742
      %793 = vst [vmem:[%s370 + $0x28] sm:$0xff] %v745
      %794 = vst [vmem:[%s370 + $0x30] sm:$0xff] %v750
      %795 = vst [vmem:[%s370 + $0x38] sm:$0xff] %v753
      %796 = vst [vmem:[%s370 + $0x40] sm:$0xff] %v758
      %797 = vst [vmem:[%s370 + $0x48] sm:$0xff] %v761
      %798 = vst [vmem:[%s370 + $0x50] sm:$0xff] %v766
      %799 = vst [vmem:[%s370 + $0x58] sm:$0xff] %v769
      %800 = vst [vmem:[%s370 + $0x60] sm:$0xff] %v774
      %801 = vst [vmem:[%s370 + $0x68] sm:$0xff] %v777
      %802 = vst [vmem:[%s370 + $0x70] sm:$0xff] %v782
      %803 = vst [vmem:[%s370 + $0x78] sm:$0xff] %v785
      %s804 = smul.u32 16, %s21
      %p805 = scmp.lt.s32.totalorder %s804, 63
      %s806 = scalar_select %p805, %s804, 63
      %s807 = smul.addr %s806, 8
      %s808 = scalar_lea.vmem %s8, %s807
      %s809 = smul.u32 16, %s21
      %p810 = scmp.lt.s32.totalorder %s809, 63
      %s811 = scalar_select %p810, %s809, 63
      %s812 = smul.addr %s811, 8
      %s813 = scalar_lea.vmem %s9, %s812
      // Predicated region
      $region53: #{_lambda_.11} parent=51 // pred_check
        %p814 = pneg %p217
      $region54: #{_lambda_.11} parent=51 // pred_check_branch
        %816 = sbr.rel (%p814) target = $region56
      $region55: #{_lambda_.11} parent=51 // pred_region
        %s817 = smul.u32 16, %s21
      $region56: #{_lambda_.11} parent=51 // pred_fallthru
        _
      // Predicated region
      $region57: #{_lambda_.11} parent=51 // pred_check
        %p818 = pneg %p243
      $region58: #{_lambda_.11} parent=51 // pred_check_branch
        %820 = sbr.rel (%p818) target = $region60
      $region59: #{_lambda_.11} parent=51 // pred_region
        %s821 = smul.u32 16, %s21
      $region60: #{_lambda_.11} parent=51 // pred_fallthru
        _
    $region52: #{_lambda_.11} parent=5 // pred_fallthru
      _
    %p822 = scmp.le.s32.totalorder 2, %s16
    // Predicated region
    $region61: #{_lambda_.11} parent=5 // pred_check
      %p823 = pneg %p822
    $region62: #{_lambda_.11} parent=5 // pred_check_branch
      %825 = sbr.rel (%p823) target = $region64
    $region63: #{_lambda_.11} parent=5 // pred_region
      %s826 = ssub.s32 %s16, 2
      // Predicated region
      $region65: #{_lambda_.11} parent=63 // pred_check
        %p827 = pneg %p223
      $region66: #{_lambda_.11} parent=63 // pred_check_branch
        %829 = sbr.rel (%p827) target = $region68
      $region67: #{_lambda_.11} parent=63 // pred_region
        %s830 = smul.u32 16, %s22
        %p831 = scmp.lt.s32.totalorder %s830, 63
        %s832 = scalar_select %p831, %s830, 63
        %s833 = smul.addr %s832, 8
        %s834 = scalar_lea.vmem %s8, %s833
      $region68: #{_lambda_.11} parent=63 // pred_fallthru
        _
      // Predicated region
      $region69: #{_lambda_.11} parent=63 // pred_check
        %p835 = pneg %p249
      $region70: #{_lambda_.11} parent=63 // pred_check_branch
        %837 = sbr.rel (%p835) target = $region72
      $region71: #{_lambda_.11} parent=63 // pred_region
        %s838 = smul.u32 16, %s22
        %p839 = scmp.lt.s32.totalorder %s838, 63
        %s840 = scalar_select %p839, %s838, 63
        %s841 = smul.addr %s840, 8
        %s842 = scalar_lea.vmem %s9, %s841
      $region72: #{_lambda_.11} parent=63 // pred_fallthru
        _
    $region64: #{_lambda_.11} parent=5 // pred_fallthru
      _
  $region6: #{_lambda_.11} parent=0 // loop_footer
    %s20 = sadd.s32 1, %s16
  $region7: #{_lambda_.11} parent=0 // loop_footer_branch
    %15 = sbr.rel target = $region3
  $region8: #{_lambda_.11} parent=0 // loop_exit
    _

// kernel: _lambda_.13
$region0: #{_lambda_.13}
  #allocation0 [shape = 'u32[]', space=smem, size = 0x4, offset = 0x4, fixed_abs, tag = 'smem constant byte address 0x4 - core index']
  #allocation1 [shape = 'u32[144,128]{1,0:T(1,128)}', space=vmem, size = 0x12000, scoped, tag = 'internal scratch']
  %s0 = inlined_call_operand.vmem [shape: f32[512,128], index: 0, kind: input, shape index: {}]
  %s1 = inlined_call_operand.vmem [shape: bf16[128,32], index: 1, kind: input, shape index: {}]
  %s2 = inlined_call_operand.vmem [shape: f32[1,32], index: 2, kind: input, shape index: {}]
  %s3 = inlined_call_operand.vmem [shape: f32[512,32], index: 3, kind: input, shape index: {}]
  %s4 = inlined_call_operand.vmem [shape: f32[1,32], index: 4, kind: input, shape index: {}]
  %s5 = inlined_call_operand.hbm [shape: f32[512,32], index: 5, kind: output, shape index: {}]
  %s6 = sld [smem:[#allocation0]]
  $region53: #{_lambda_.13} parent=0
    _
  %s8 = ssub.s32 1, %s6
  %s9 = scalar_select 0, %s8, %s6
  $region1: #{_lambda_.13} parent=0
    #allocation2 [shape = 'u8[131072]{0}', space=vmem, size = 0x20000, scoped, tag = 'output window, operand 0']
    #allocation3 [shape = 's32[2]{0}', space=sflag, size = 0x8, scoped, tag = 'scoped memory for _lambda_.13']
    %10 = vsyncpa [#allocation3], 0
    %s11 = scalar_lea.sflag [#allocation3], 1
    %12 = vsyncpa %s11, 0
    loop: start=0, step=1, limit=6
    $region2: #{_lambda_.13} parent=1 // loop_pre_header
      _
    $region3: #{_lambda_.13} parent=1 // loop_header
      %s14 = sphi 0, %s18
      %p15 = scmp.ge.s32.totalorder %s14, 6
      %s24 = sphi 0, %s26
      %s27 = sphi 0, %s24
      %s28 = sphi 0, %s27
      %s44 = sphi 0, %s28
      %s48 = sphi 0, %s48
      %s50 = sphi 0, %s48
      %s51 = sphi 0, %s50
      %s65 = sphi 0, %s51
      %s69 = sphi 0, %s69
      %s71 = sphi 0, %s69
      %s72 = sphi 0, %s71
      %s86 = sphi 0, %s72
      %s92 = sphi 0, %s94
      %s95 = sphi 0, %s92
      %s96 = sphi 0, %s95
      %s112 = sphi 0, %s96
      %s116 = sphi 0, %s116
      %s118 = sphi 0, %s116
      %s119 = sphi 0, %s118
      %s133 = sphi 0, %s119
      %s139 = sphi 0, %s141
      %s142 = sphi 0, %s139
      %s143 = sphi 0, %s142
      %s159 = sphi 0, %s143
    $region4: #{_lambda_.13} parent=1 // loop_header_branch
      %17 = sbr.rel (%p15) target = $region8
    $region5: #{_lambda_.13} parent=1 // loop_body
      %s19 = ssub.s32 %s14, 1
      %s20 = ssub.s32 %s14, 2
      %s21 = sadd.s32 %s14, 1
      %s22 = ssub.s32 %s14, %s21
      %p23 = scmp.eq.s32.totalorder %s22, 0
      %s25 = sadd.s32 %s24, 1
      %s26 = scalar_select %p23, %s24, %s25
      %p29 = pneg %p23
      %p30 = scmp.eq.s32.totalorder %s14, 3
      %p31 = por %p29, %p30
      %p32 = scmp.ne.s32.totalorder %s24, %s27
      %p33 = scmp.eq.s32.totalorder %s14, 0
      %p34 = por %p32, %p33
      %p35 = scmp.ne.s32.totalorder %s24, %s27
      %p36 = scmp.eq.s32.totalorder %s19, 3
      %p37 = por %p35, %p36
      %p38 = scmp.ne.s32.totalorder %s27, %s28
      %p39 = scmp.eq.s32.totalorder %s19, 0
      %p40 = por %p38, %p39
      %p41 = scmp.ne.s32.totalorder %s27, %s28
      %p42 = scmp.eq.s32.totalorder %s20, 3
      %p43 = por %p41, %p42
      %p45 = scmp.ne.s32.totalorder %s28, %s44
      %p46 = scmp.eq.s32.totalorder %s20, 0
      %p47 = por %p45, %p46
      %s49 = sadd.s32 %s48, 1
      %p52 = scmp.eq.s32.totalorder %s14, 3
      %p53 = scmp.ne.s32.totalorder %s48, %s50
      %p54 = scmp.eq.s32.totalorder %s14, 0
      %p55 = por %p53, %p54
      %p56 = scmp.ne.s32.totalorder %s48, %s50
      %p57 = scmp.eq.s32.totalorder %s19, 3
      %p58 = por %p56, %p57
      %p59 = scmp.ne.s32.totalorder %s50, %s51
      %p60 = scmp.eq.s32.totalorder %s19, 0
      %p61 = por %p59, %p60
      %p62 = scmp.ne.s32.totalorder %s50, %s51
      %p63 = scmp.eq.s32.totalorder %s20, 3
      %p64 = por %p62, %p63
      %p66 = scmp.ne.s32.totalorder %s51, %s65
      %p67 = scmp.eq.s32.totalorder %s20, 0
      %p68 = por %p66, %p67
      %s70 = sadd.s32 %s69, 1
      %p73 = scmp.eq.s32.totalorder %s14, 3
      %p74 = scmp.ne.s32.totalorder %s69, %s71
      %p75 = scmp.eq.s32.totalorder %s14, 0
      %p76 = por %p74, %p75
      %p77 = scmp.ne.s32.totalorder %s69, %s71
      %p78 = scmp.eq.s32.totalorder %s19, 3
      %p79 = por %p77, %p78
      %p80 = scmp.ne.s32.totalorder %s71, %s72
      %p81 = scmp.eq.s32.totalorder %s19, 0
      %p82 = por %p80, %p81
      %p83 = scmp.ne.s32.totalorder %s71, %s72
      %p84 = scmp.eq.s32.totalorder %s20, 3
      %p85 = por %p83, %p84
      %p87 = scmp.ne.s32.totalorder %s72, %s86
      %p88 = scmp.eq.s32.totalorder %s20, 0
      %p89 = por %p87, %p88
      %s90 = ssub.s32 %s14, %s21
      %p91 = scmp.eq.s32.totalorder %s90, 0
      %s93 = sadd.s32 %s92, 1
      %s94 = scalar_select %p91, %s92, %s93
      %p97 = pneg %p91
      %p98 = scmp.eq.s32.totalorder %s14, 3
      %p99 = por %p97, %p98
      %p100 = scmp.ne.s32.totalorder %s92, %s95
      %p101 = scmp.eq.s32.totalorder %s14, 0
      %p102 = por %p100, %p101
      %p103 = scmp.ne.s32.totalorder %s92, %s95
      %p104 = scmp.eq.s32.totalorder %s19, 3
      %p105 = por %p103, %p104
      %p106 = scmp.ne.s32.totalorder %s95, %s96
      %p107 = scmp.eq.s32.totalorder %s19, 0
      %p108 = por %p106, %p107
      %p109 = scmp.ne.s32.totalorder %s95, %s96
      %p110 = scmp.eq.s32.totalorder %s20, 3
      %p111 = por %p109, %p110
      %p113 = scmp.ne.s32.totalorder %s96, %s112
      %p114 = scmp.eq.s32.totalorder %s20, 0
      %p115 = por %p113, %p114
      %s117 = sadd.s32 %s116, 1
      %p120 = scmp.eq.s32.totalorder %s14, 3
      %p121 = scmp.ne.s32.totalorder %s116, %s118
      %p122 = scmp.eq.s32.totalorder %s14, 0
      %p123 = por %p121, %p122
      %p124 = scmp.ne.s32.totalorder %s116, %s118
      %p125 = scmp.eq.s32.totalorder %s19, 3
      %p126 = por %p124, %p125
      %p127 = scmp.ne.s32.totalorder %s118, %s119
      %p128 = scmp.eq.s32.totalorder %s19, 0
      %p129 = por %p127, %p128
      %p130 = scmp.ne.s32.totalorder %s118, %s119
      %p131 = scmp.eq.s32.totalorder %s20, 3
      %p132 = por %p130, %p131
      %p134 = scmp.ne.s32.totalorder %s119, %s133
      %p135 = scmp.eq.s32.totalorder %s20, 0
      %p136 = por %p134, %p135
      %s137 = ssub.s32 %s14, %s21
      %p138 = scmp.eq.s32.totalorder %s137, 0
      %s140 = sadd.s32 %s139, 1
      %s141 = scalar_select %p138, %s139, %s140
      %p144 = pneg %p138
      %p145 = scmp.eq.s32.totalorder %s14, 3
      %p146 = por %p144, %p145
      %p147 = scmp.ne.s32.totalorder %s139, %s142
      %p148 = scmp.eq.s32.totalorder %s14, 0
      %p149 = por %p147, %p148
      %p150 = scmp.ne.s32.totalorder %s139, %s142
      %p151 = scmp.eq.s32.totalorder %s19, 3
      %p152 = por %p150, %p151
      %p153 = scmp.ne.s32.totalorder %s142, %s143
      %p154 = scmp.eq.s32.totalorder %s19, 0
      %p155 = por %p153, %p154
      %p156 = scmp.ne.s32.totalorder %s142, %s143
      %p157 = scmp.eq.s32.totalorder %s20, 3
      %p158 = por %p156, %p157
      %p160 = scmp.ne.s32.totalorder %s143, %s159
      %p161 = scmp.eq.s32.totalorder %s20, 0
      %p162 = por %p160, %p161
      %p163 = scmp.le.s32.totalorder 1, %s14
      %p164 = scmp.lt.s32.totalorder %s14, 5
      %p165 = pnand %p163, %p164
      %p166 = pneg %p165
      // Predicated region
      $region9: #{_lambda_.13} parent=5 // pred_check
        _
      $region10: #{_lambda_.13} parent=5 // pred_check_branch
        %168 = sbr.rel (%p165) target = $region12
      $region11: #{_lambda_.13} parent=5 // pred_region
        %s169 = ssub.s32 %s14, 1
        // Predicated region
        $region13: #{_lambda_.13} parent=11 // pred_check
          %p170 = pneg %p61
        $region14: #{_lambda_.13} parent=11 // pred_check_branch
          %172 = sbr.rel (%p170) target = $region16
        $region15: #{_lambda_.13} parent=11 // pred_region
          _
        $region16: #{_lambda_.13} parent=11 // pred_fallthru
          _
        // Predicated region
        $region17: #{_lambda_.13} parent=11 // pred_check
          %p173 = pneg %p82
        $region18: #{_lambda_.13} parent=11 // pred_check_branch
          %175 = sbr.rel (%p173) target = $region20
        $region19: #{_lambda_.13} parent=11 // pred_region
          _
        $region20: #{_lambda_.13} parent=11 // pred_fallthru
          _
        // Predicated region
        $region21: #{_lambda_.13} parent=11 // pred_check
          %p176 = pneg %p129
        $region22: #{_lambda_.13} parent=11 // pred_check_branch
          %178 = sbr.rel (%p176) target = $region24
        $region23: #{_lambda_.13} parent=11 // pred_region
          _
        $region24: #{_lambda_.13} parent=11 // pred_fallthru
          _
      $region12: #{_lambda_.13} parent=5 // pred_fallthru
        _
      %p179 = scmp.lt.s32.totalorder %s14, 4
      // Predicated region
      $region25: #{_lambda_.13} parent=5 // pred_check
        %p180 = pneg %p179
      $region26: #{_lambda_.13} parent=5 // pred_check_branch
        %182 = sbr.rel (%p180) target = $region28
      $region27: #{_lambda_.13} parent=5 // pred_region
        // Predicated region
        $region29: #{_lambda_.13} parent=27 // pred_check
          %p183 = pneg %p34
        $region30: #{_lambda_.13} parent=27 // pred_check_branch
          %185 = sbr.rel (%p183) target = $region32
        $region31: #{_lambda_.13} parent=27 // pred_region
          %s186 = smul.u32 16, %s14
          %p187 = scmp.lt.s32.totalorder %s186, 63
          %s188 = scalar_select %p187, %s186, 63
          %s189 = smul.addr %s188, 8
          %s190 = scalar_lea.vmem %s0, %s189
          %s191 = smul.u32 16, %s14
        $region32: #{_lambda_.13} parent=27 // pred_fallthru
          _
        // Predicated region
        $region33: #{_lambda_.13} parent=27 // pred_check
          %p192 = pneg %p102
        $region34: #{_lambda_.13} parent=27 // pred_check_branch
          %194 = sbr.rel (%p192) target = $region36
        $region35: #{_lambda_.13} parent=27 // pred_region
          %s195 = smul.u32 16, %s14
          %p196 = scmp.lt.s32.totalorder %s195, 63
          %s197 = scalar_select %p196, %s195, 63
          %s198 = smul.addr %s197, 8
          %s199 = scalar_lea.vmem %s3, %s198
          %s200 = smul.u32 16, %s14
        $region36: #{_lambda_.13} parent=27 // pred_fallthru
          _
      $region28: #{_lambda_.13} parent=5 // pred_fallthru
        _
      %p201 = scmp.le.s32.totalorder 1, %s14
      %p202 = scmp.lt.s32.totalorder %s14, 5
      %p203 = pnand %p201, %p202
      %p204 = pneg %p203
      // Predicated region
      $region37: #{_lambda_.13} parent=5 // pred_check
        _
      $region38: #{_lambda_.13} parent=5 // pred_check_branch
        %206 = sbr.rel (%p203) target = $region40
      $region39: #{_lambda_.13} parent=5 // pred_region
        %s207 = ssub.s32 %s14, 1
        %s208 = smul.u32 16, %s19
        %p209 = scmp.lt.s32.totalorder %s208, 63
        %s210 = scalar_select %p209, %s208, 63
        %s211 = smul.addr %s210, 8
        %s212 = scalar_lea.vmem %s0, %s211
        %p213 = pneg %p40
        %p214 = pneg %p37
        %p215 = pneg %p61
        %p216 = pneg %p58
        %p217 = pneg %p82
        %p218 = pneg %p79
        %s219 = smul.u32 16, %s19
        %p220 = scmp.lt.s32.totalorder %s219, 63
        %s221 = scalar_select %p220, %s219, 63
        %s222 = smul.addr %s221, 8
        %s223 = scalar_lea.vmem %s3, %s222
        %p224 = pneg %p108
        %p225 = pneg %p105
        %p226 = pneg %p129
        %p227 = pneg %p126
        %p228 = pneg %p155
        %p229 = pneg %p152
        %s230 = sand.u32 %s142, 1
        %s231 = scalar_lea.sflag [#allocation3], %s230
        %s232 = sand.u32 %s142, 1
        %s233 = smul.addr %s232, 128
        %s234 = scalar_lea.vmem [#allocation2], %s233
        %s235 = smul.u32 16, %s19
        %p236 = scmp.lt.s32.totalorder %s235, 63
        %s237 = scalar_select %p236, %s235, 63
        %s238 = smul.addr %s237, 8
        %s239 = scalar_lea.vmem %s0, %s238
        %s240 = smul.u32 16, %s19
        %s241 = smul.u32 16, %s19
        %p242 = scmp.lt.s32.totalorder %s241, 63
        %s243 = scalar_select %p242, %s241, 63
        %s244 = smul.addr %s243, 8
        %s245 = scalar_lea.vmem %s3, %s244
        %s246 = smul.u32 16, %s19
        %s247 = smul.u32 16, %s19
        %v249 = vld [vmem:[%s239] sm:$0xff]
        %v250 = vld [vmem:[%s239 + $0x8] sm:$0xff]
        %v251 = vld [vmem:[%s239 + $0x10] sm:$0xff]
        %v252 = vld [vmem:[%s239 + $0x18] sm:$0xff]
        %v253 = vld [vmem:[%s239 + $0x20] sm:$0xff]
        %v254 = vld [vmem:[%s239 + $0x28] sm:$0xff]
        %v255 = vld [vmem:[%s239 + $0x30] sm:$0xff]
        %v256 = vld [vmem:[%s239 + $0x38] sm:$0xff]
        %v257 = vld [vmem:[%s239 + $0x40] sm:$0xff]
        %v258 = vld [vmem:[%s239 + $0x48] sm:$0xff]
        %v259 = vld [vmem:[%s239 + $0x50] sm:$0xff]
        %v260 = vld [vmem:[%s239 + $0x58] sm:$0xff]
        %v261 = vld [vmem:[%s239 + $0x60] sm:$0xff]
        %v262 = vld [vmem:[%s239 + $0x68] sm:$0xff]
        %v263 = vld [vmem:[%s239 + $0x70] sm:$0xff]
        %v264 = vld [vmem:[%s239 + $0x78] sm:$0xff]
        %v265 = vpack.c.bf16 %v250, %v249
        %v266 = vpack.c.bf16 %v252, %v251
        %v267 = vpack.c.bf16 %v254, %v253
        %v268 = vpack.c.bf16 %v256, %v255
        %v269 = vpack.c.bf16 %v258, %v257
        %v270 = vpack.c.bf16 %v260, %v259
        %v271 = vpack.c.bf16 %v262, %v261
        %v272 = vpack.c.bf16 %v264, %v263
        %v273 = vld [vmem:[%s1] sm:$0xf]
        %v274 = vld [vmem:[%s1 + $0x4] sm:$0xf]
        %v275 = vld [vmem:[%s1 + $0x8] sm:$0xf]
        %v276 = vld [vmem:[%s1 + $0xc] sm:$0xf]
        %v277 = vld [vmem:[%s1 + $0x10] sm:$0xf]
        %v278 = vld [vmem:[%s1 + $0x14] sm:$0xf]
        %v279 = vld [vmem:[%s1 + $0x18] sm:$0xf]
        %v280 = vld [vmem:[%s1 + $0x1c] sm:$0xf]
        %v281 = vld [vmem:[%s1 + $0x20] sm:$0xf]
        %v282 = vld [vmem:[%s1 + $0x24] sm:$0xf]
        %v283 = vld [vmem:[%s1 + $0x28] sm:$0xf]
        %v284 = vld [vmem:[%s1 + $0x2c] sm:$0xf]
        %v285 = vld [vmem:[%s1 + $0x30] sm:$0xf]
        %v286 = vld [vmem:[%s1 + $0x34] sm:$0xf]
        %v287 = vld [vmem:[%s1 + $0x38] sm:$0xf]
        %v288 = vld [vmem:[%s1 + $0x3c] sm:$0xf]
        %v289 = vld [vmem:[%s2] sm:$0x1]
        %v291 = vlaneseq
        %v292 = vshrl.u32 %v291, 7
        %v293 = vsub.s32 0, %v292
        %v294 = vrot.slane %v289, %v293
        %v312 = vunpack.c.l.b16 %v273
        %v313 = vunpack.c.l.b16 %v274
        %v314 = vunpack.c.l.b16 %v275
        %v315 = vunpack.c.l.b16 %v276
        %v316 = vunpack.c.l.b16 %v277
        %v317 = vunpack.c.l.b16 %v278
        %v318 = vunpack.c.l.b16 %v279
        %v319 = vunpack.c.l.b16 %v280
        %v320 = vunpack.c.l.b16 %v281
        %v321 = vunpack.c.l.b16 %v282
        %v322 = vunpack.c.l.b16 %v283
        %v323 = vunpack.c.l.b16 %v284
        %v324 = vunpack.c.l.b16 %v285
        %v325 = vunpack.c.l.b16 %v286
        %v326 = vunpack.c.l.b16 %v287
        %v327 = vunpack.c.l.b16 %v288
        %v328 = vpack.c.b16 %v313, %v312
        %v329 = vpack.c.b16 %v315, %v314
        %v330 = vpack.c.b16 %v317, %v316
        %v331 = vpack.c.b16 %v319, %v318
        %v332 = vpack.c.b16 %v321, %v320
        %v333 = vpack.c.b16 %v323, %v322
        %v334 = vpack.c.b16 %v325, %v324
        %v335 = vpack.c.b16 %v327, %v326
        %344 = vmatprep.subr.bf16.mxu0 0
        %345 = vmatpush1.bf16.msra.mxu0 %v335
        %346 = vmatprep.subr.bf16.mxu0 0
        %347 = vmatpush1.bf16.msra.mxu0 %v334
        %348 = vmatprep.subr.bf16.mxu0 0
        %349 = vmatpush1.bf16.msra.mxu0 %v333
        %350 = vmatprep.subr.bf16.mxu0 0
        %351 = vmatpush1.bf16.msra.mxu0 %v332
        %352 = vmatprep.subr.bf16.mxu0 0
        %353 = vmatpush1.bf16.msra.mxu0 %v331
        %354 = vmatprep.subr.bf16.mxu0 0
        %355 = vmatpush1.bf16.msra.mxu0 %v330
        %356 = vmatprep.subr.bf16.mxu0 0
        %357 = vmatpush1.bf16.msra.mxu0 %v329
        %358 = vmatprep.subr.bf16.mxu0 0
        %359 = vmatpush1.bf16.msra.mxu0 %v328
        %360 = vmatprep.subr.bf16.mxu0 0
        %361 = vmatpush2.bf16.msra.mxu0 0
        %362 = vmatprep.subr.bf16.mxu0 0
        %363 = vmatpush2.bf16.msra.mxu0 0
        %364 = vmatprep.subr.bf16.mxu0 0
        %365 = vmatpush2.bf16.msra.mxu0 0
        %366 = vmatprep.subr.bf16.mxu0 0
        %367 = vmatpush2.bf16.msra.mxu0 0
        %368 = vmatprep.subr.bf16.mxu0 0
        %369 = vmatpush2.bf16.msra.mxu0 0
        %370 = vmatprep.subr.bf16.mxu0 0
        %371 = vmatpush2.bf16.msra.mxu0 0
        %372 = vmatprep.subr.bf16.mxu0 0
        %373 = vmatpush2.bf16.msra.mxu0 0
        %374 = vmatprep.subr.bf16.mxu0 0
        %375 = vmatpush2.bf16.msra.mxu0 0
        %376 = vmatprep.mubr.bf16.mxu0 0
        %377 = vmatmul.mubr.bf16.gmra.mxu0 %v265
        %v378 = vpop.f32.mrf.mxu0
        %v379 = vadd.f32 %v294, %v378
        %v380 = vpop.f32.mrf.mxu0
        %v381 = vpop.f32.mrf.mxu0
        %v382 = vadd.f32 %v294, %v381
        %v383 = vpop.f32.mrf.mxu0
        %384 = vmatprep.mubr.bf16.mxu0 0
        %385 = vmatmul.mubr.bf16.gmra.mxu0 %v266
        %v386 = vpop.f32.mrf.mxu0
        %v387 = vadd.f32 %v294, %v386
        %v388 = vpop.f32.mrf.mxu0
        %v389 = vpop.f32.mrf.mxu0
        %v390 = vadd.f32 %v294, %v389
        %v391 = vpop.f32.mrf.mxu0
        %392 = vmatprep.mubr.bf16.mxu0 0
        %393 = vmatmul.mubr.bf16.gmra.mxu0 %v267
        %v394 = vpop.f32.mrf.mxu0
        %v395 = vadd.f32 %v294, %v394
        %v396 = vpop.f32.mrf.mxu0
        %v397 = vpop.f32.mrf.mxu0
        %v398 = vadd.f32 %v294, %v397
        %v399 = vpop.f32.mrf.mxu0
        %400 = vmatprep.mubr.bf16.mxu0 0
        %401 = vmatmul.mubr.bf16.gmra.mxu0 %v268
        %v402 = vpop.f32.mrf.mxu0
        %v403 = vadd.f32 %v294, %v402
        %v404 = vpop.f32.mrf.mxu0
        %v405 = vpop.f32.mrf.mxu0
        %v406 = vadd.f32 %v294, %v405
        %v407 = vpop.f32.mrf.mxu0
        %408 = vmatprep.mubr.bf16.mxu0 0
        %409 = vmatmul.mubr.bf16.gmra.mxu0 %v269
        %v410 = vpop.f32.mrf.mxu0
        %v411 = vadd.f32 %v294, %v410
        %v412 = vpop.f32.mrf.mxu0
        %v413 = vpop.f32.mrf.mxu0
        %v414 = vadd.f32 %v294, %v413
        %v415 = vpop.f32.mrf.mxu0
        %416 = vmatprep.mubr.bf16.mxu0 0
        %417 = vmatmul.mubr.bf16.gmra.mxu0 %v270
        %v418 = vpop.f32.mrf.mxu0
        %v419 = vadd.f32 %v294, %v418
        %v420 = vpop.f32.mrf.mxu0
        %v421 = vpop.f32.mrf.mxu0
        %v422 = vadd.f32 %v294, %v421
        %v423 = vpop.f32.mrf.mxu0
        %424 = vmatprep.mubr.bf16.mxu0 0
        %425 = vmatmul.mubr.bf16.gmra.mxu0 %v271
        %v426 = vpop.f32.mrf.mxu0
        %v427 = vadd.f32 %v294, %v426
        %v428 = vpop.f32.mrf.mxu0
        %v429 = vpop.f32.mrf.mxu0
        %v430 = vadd.f32 %v294, %v429
        %v431 = vpop.f32.mrf.mxu0
        %432 = vmatprep.mubr.bf16.mxu0 0
        %433 = vmatmul.mubr.bf16.gmra.mxu0 %v272
        %v434 = vpop.f32.mrf.mxu0
        %v435 = vadd.f32 %v294, %v434
        %v436 = vpop.f32.mrf.mxu0
        %v437 = vpop.f32.mrf.mxu0
        %v438 = vadd.f32 %v294, %v437
        %v439 = vpop.f32.mrf.mxu0
        %440 = vdwg.mxu0
        %v441 = vld [vmem:[%s245] sm:$0xff]
        %v442 = vld [vmem:[%s245 + $0x8] sm:$0xff]
        %v443 = vld [vmem:[%s245 + $0x10] sm:$0xff]
        %v444 = vld [vmem:[%s245 + $0x18] sm:$0xff]
        %v445 = vld [vmem:[%s245 + $0x20] sm:$0xff]
        %v446 = vld [vmem:[%s245 + $0x28] sm:$0xff]
        %v447 = vld [vmem:[%s245 + $0x30] sm:$0xff]
        %v448 = vld [vmem:[%s245 + $0x38] sm:$0xff]
        %v449 = vld [vmem:[%s245 + $0x40] sm:$0xff]
        %v450 = vld [vmem:[%s245 + $0x48] sm:$0xff]
        %v451 = vld [vmem:[%s245 + $0x50] sm:$0xff]
        %v452 = vld [vmem:[%s245 + $0x58] sm:$0xff]
        %v453 = vld [vmem:[%s245 + $0x60] sm:$0xff]
        %v454 = vld [vmem:[%s245 + $0x68] sm:$0xff]
        %v455 = vld [vmem:[%s245 + $0x70] sm:$0xff]
        %v456 = vld [vmem:[%s245 + $0x78] sm:$0xff]
        %v457 = vld [vmem:[%s4] sm:$0x1]
        %v459 = vlaneseq
        %v460 = vshrl.u32 %v459, 7
        %v461 = vsub.s32 0, %v460
        %v462 = vrot.slane %v457, %v461
        %v464 = vmul.f32 %v462, %v379
        %v465 = vmul.f32 %v462, %v382
        %v466 = vmul.f32 %v462, %v387
        %v467 = vmul.f32 %v462, %v390
        %v468 = vmul.f32 %v462, %v395
        %v469 = vmul.f32 %v462, %v398
        %v470 = vmul.f32 %v462, %v403
        %v471 = vmul.f32 %v462, %v406
        %v472 = vmul.f32 %v462, %v411
        %v473 = vmul.f32 %v462, %v414
        %v474 = vmul.f32 %v462, %v419
        %v475 = vmul.f32 %v462, %v422
        %v476 = vmul.f32 %v462, %v427
        %v477 = vmul.f32 %v462, %v430
        %v478 = vmul.f32 %v462, %v435
        %v479 = vmul.f32 %v462, %v438
        %v480 = vadd.f32 %v441, %v464
        %v481 = vadd.f32 %v442, %v465
        %v482 = vadd.f32 %v443, %v466
        %v483 = vadd.f32 %v444, %v467
        %v484 = vadd.f32 %v445, %v468
        %v485 = vadd.f32 %v446, %v469
        %v486 = vadd.f32 %v447, %v470
        %v487 = vadd.f32 %v448, %v471
        %v488 = vadd.f32 %v449, %v472
        %v489 = vadd.f32 %v450, %v473
        %v490 = vadd.f32 %v451, %v474
        %v491 = vadd.f32 %v452, %v475
        %v492 = vadd.f32 %v453, %v476
        %v493 = vadd.f32 %v454, %v477
        %v494 = vadd.f32 %v455, %v478
        %v495 = vadd.f32 %v456, %v479
        %vm496 = vcmask 261120
        %497 = vst.msk [vmem:[%s234] sm:$0xff] %vm496, %v480
        %498 = vst.msk [vmem:[%s234 + $0x8] sm:$0xff] %vm496, %v481
        %499 = vst.msk [vmem:[%s234 + $0x10] sm:$0xff] %vm496, %v482
        %500 = vst.msk [vmem:[%s234 + $0x18] sm:$0xff] %vm496, %v483
        %501 = vst.msk [vmem:[%s234 + $0x20] sm:$0xff] %vm496, %v484
        %502 = vst.msk [vmem:[%s234 + $0x28] sm:$0xff] %vm496, %v485
        %503 = vst.msk [vmem:[%s234 + $0x30] sm:$0xff] %vm496, %v486
        %504 = vst.msk [vmem:[%s234 + $0x38] sm:$0xff] %vm496, %v487
        %505 = vst.msk [vmem:[%s234 + $0x40] sm:$0xff] %vm496, %v488
        %506 = vst.msk [vmem:[%s234 + $0x48] sm:$0xff] %vm496, %v489
        %507 = vst.msk [vmem:[%s234 + $0x50] sm:$0xff] %vm496, %v490
        %508 = vst.msk [vmem:[%s234 + $0x58] sm:$0xff] %vm496, %v491
        %509 = vst.msk [vmem:[%s234 + $0x60] sm:$0xff] %vm496, %v492
        %510 = vst.msk [vmem:[%s234 + $0x68] sm:$0xff] %vm496, %v493
        %511 = vst.msk [vmem:[%s234 + $0x70] sm:$0xff] %vm496, %v494
        %512 = vst.msk [vmem:[%s234 + $0x78] sm:$0xff] %vm496, %v495
        %s513 = sand.u32 %s142, 1
        %s514 = scalar_lea.sflag [#allocation3], %s513
        %s515 = sand.u32 %s142, 1
        %s516 = smul.addr %s515, 128
        %s517 = scalar_lea.vmem [#allocation2], %s516
        // Predicated region
        $region41: #{_lambda_.13} parent=39 // pred_check
          %p518 = pneg %p152
        $region42: #{_lambda_.13} parent=39 // pred_check_branch
          %520 = sbr.rel (%p518) target = $region44
        $region43: #{_lambda_.13} parent=39 // pred_region
          %s521 = smul.u32 16, %s19
          %s523 = ssub.s32 2048, 2048
          %524 = vsyncadd %s514, %s523
          %s525 = smul.addr %s521, 128
          %s526 = scalar_lea.hbm %s5, %s525
          %s527 = sshll.u32 %s517, 4
          %s528 = int_to_ptr.vmem [resolvable:$true] %s527
          %533 = dma.vmem_to_hbm [thread:$0]  %s528, 2048, %s526, %s514, 128, 128, 8
        $region44: #{_lambda_.13} parent=39 // pred_fallthru
          _
      $region40: #{_lambda_.13} parent=5 // pred_fallthru
        _
      %p534 = scmp.le.s32.totalorder 2, %s14
      // Predicated region
      $region45: #{_lambda_.13} parent=5 // pred_check
        %p535 = pneg %p534
      $region46: #{_lambda_.13} parent=5 // pred_check_branch
        %537 = sbr.rel (%p535) target = $region48
      $region47: #{_lambda_.13} parent=5 // pred_region
        %s538 = ssub.s32 %s14, 2
        // Predicated region
        $region49: #{_lambda_.13} parent=47 // pred_check
          %p539 = pneg %p158
        $region50: #{_lambda_.13} parent=47 // pred_check_branch
          %541 = sbr.rel (%p539) target = $region52
        $region51: #{_lambda_.13} parent=47 // pred_region
          %s542 = sand.u32 %s143, 1
          %s543 = scalar_lea.sflag [#allocation3], %s542
          %s544 = sand.u32 %s143, 1
          %s545 = smul.addr %s544, 128
          %s546 = scalar_lea.vmem [#allocation2], %s545
          %547 = dma.done %s543, 2048
        $region52: #{_lambda_.13} parent=47 // pred_fallthru
          _
      $region48: #{_lambda_.13} parent=5 // pred_fallthru
        _
    $region6: #{_lambda_.13} parent=1 // loop_footer
      %s18 = sadd.s32 1, %s14
    $region7: #{_lambda_.13} parent=1 // loop_footer_branch
      %13 = sbr.rel target = $region3
    $region8: #{_lambda_.13} parent=1 // loop_exit
      _
    %548 = vsyncpa [#allocation3], 1
    %s549 = scalar_lea.sflag [#allocation3], 1
    %550 = vsyncpa %s549, 1

// kernel: _lambda_.12
$region0: #{_lambda_.12}
  #allocation0 [shape = 'u32[]', space=smem, size = 0x4, offset = 0x4, fixed_abs, tag = 'smem constant byte address 0x4 - core index']
  #allocation1 [shape = 'u32[144,128]{1,0:T(1,128)}', space=vmem, size = 0x12000, scoped, tag = 'internal scratch']
  #allocation2 [shape = 'f32[18,18,128]{2,1,0:T(8,128)}', space=vmem, size = 0x36000, scoped, tag = 'scratch operand']
  %s0 = inlined_call_operand.vmem [shape: f32[2,16,16,128], index: 0, kind: input, shape index: {}]
  %s1 = inlined_call_operand.vmem [shape: f32[3,3,128], index: 1, kind: input, shape index: {}]
  %s2 = inlined_call_operand.vmem [shape: f32[1,128], index: 2, kind: input, shape index: {}]
  %s3 = inlined_call_operand.vmem [shape: f32[2,16,16,128], index: 3, kind: output, shape index: {}]
  %s4 = sld [smem:[#allocation0]]
  $region45: #{_lambda_.12} parent=0
    _
  %s6 = ssub.s32 1, %s4
  %s7 = scalar_select 0, %s6, %s4
  loop: start=0, step=1, limit=4
  $region2: #{_lambda_.12} parent=0 // loop_pre_header
    _
  $region3: #{_lambda_.12} parent=0 // loop_header
    %s9 = sphi 0, %s13
    %p10 = scmp.ge.s32.totalorder %s9, 4
    %s19 = sphi 0, %s21
    %s22 = sphi 0, %s19
    %s23 = sphi 0, %s22
    %s39 = sphi 0, %s23
    %s43 = sphi 0, %s43
    %s45 = sphi 0, %s43
    %s46 = sphi 0, %s45
    %s60 = sphi 0, %s46
    %s64 = sphi 0, %s64
    %s66 = sphi 0, %s64
    %s67 = sphi 0, %s66
    %s81 = sphi 0, %s67
    %s87 = sphi 0, %s89
    %s90 = sphi 0, %s87
    %s91 = sphi 0, %s90
    %s107 = sphi 0, %s91
  $region4: #{_lambda_.12} parent=0 // loop_header_branch
    %12 = sbr.rel (%p10) target = $region8
  $region5: #{_lambda_.12} parent=0 // loop_body
    %s14 = ssub.s32 %s9, 1
    %s15 = ssub.s32 %s9, 2
    %s16 = sadd.s32 %s9, 1
    %s17 = ssub.s32 %s9, %s16
    %p18 = scmp.eq.s32.totalorder %s17, 0
    %s20 = sadd.s32 %s19, 1
    %s21 = scalar_select %p18, %s19, %s20
    %p24 = pneg %p18
    %p25 = scmp.eq.s32.totalorder %s9, 1
    %p26 = por %p24, %p25
    %p27 = scmp.ne.s32.totalorder %s19, %s22
    %p28 = scmp.eq.s32.totalorder %s9, 0
    %p29 = por %p27, %p28
    %p30 = scmp.ne.s32.totalorder %s19, %s22
    %p31 = scmp.eq.s32.totalorder %s14, 1
    %p32 = por %p30, %p31
    %p33 = scmp.ne.s32.totalorder %s22, %s23
    %p34 = scmp.eq.s32.totalorder %s14, 0
    %p35 = por %p33, %p34
    %p36 = scmp.ne.s32.totalorder %s22, %s23
    %p37 = scmp.eq.s32.totalorder %s15, 1
    %p38 = por %p36, %p37
    %p40 = scmp.ne.s32.totalorder %s23, %s39
    %p41 = scmp.eq.s32.totalorder %s15, 0
    %p42 = por %p40, %p41
    %s44 = sadd.s32 %s43, 1
    %p47 = scmp.eq.s32.totalorder %s9, 1
    %p48 = scmp.ne.s32.totalorder %s43, %s45
    %p49 = scmp.eq.s32.totalorder %s9, 0
    %p50 = por %p48, %p49
    %p51 = scmp.ne.s32.totalorder %s43, %s45
    %p52 = scmp.eq.s32.totalorder %s14, 1
    %p53 = por %p51, %p52
    %p54 = scmp.ne.s32.totalorder %s45, %s46
    %p55 = scmp.eq.s32.totalorder %s14, 0
    %p56 = por %p54, %p55
    %p57 = scmp.ne.s32.totalorder %s45, %s46
    %p58 = scmp.eq.s32.totalorder %s15, 1
    %p59 = por %p57, %p58
    %p61 = scmp.ne.s32.totalorder %s46, %s60
    %p62 = scmp.eq.s32.totalorder %s15, 0
    %p63 = por %p61, %p62
    %s65 = sadd.s32 %s64, 1
    %p68 = scmp.eq.s32.totalorder %s9, 1
    %p69 = scmp.ne.s32.totalorder %s64, %s66
    %p70 = scmp.eq.s32.totalorder %s9, 0
    %p71 = por %p69, %p70
    %p72 = scmp.ne.s32.totalorder %s64, %s66
    %p73 = scmp.eq.s32.totalorder %s14, 1
    %p74 = por %p72, %p73
    %p75 = scmp.ne.s32.totalorder %s66, %s67
    %p76 = scmp.eq.s32.totalorder %s14, 0
    %p77 = por %p75, %p76
    %p78 = scmp.ne.s32.totalorder %s66, %s67
    %p79 = scmp.eq.s32.totalorder %s15, 1
    %p80 = por %p78, %p79
    %p82 = scmp.ne.s32.totalorder %s67, %s81
    %p83 = scmp.eq.s32.totalorder %s15, 0
    %p84 = por %p82, %p83
    %s85 = ssub.s32 %s9, %s16
    %p86 = scmp.eq.s32.totalorder %s85, 0
    %s88 = sadd.s32 %s87, 1
    %s89 = scalar_select %p86, %s87, %s88
    %p92 = pneg %p86
    %p93 = scmp.eq.s32.totalorder %s9, 1
    %p94 = por %p92, %p93
    %p95 = scmp.ne.s32.totalorder %s87, %s90
    %p96 = scmp.eq.s32.totalorder %s9, 0
    %p97 = por %p95, %p96
    %p98 = scmp.ne.s32.totalorder %s87, %s90
    %p99 = scmp.eq.s32.totalorder %s14, 1
    %p100 = por %p98, %p99
    %p101 = scmp.ne.s32.totalorder %s90, %s91
    %p102 = scmp.eq.s32.totalorder %s14, 0
    %p103 = por %p101, %p102
    %p104 = scmp.ne.s32.totalorder %s90, %s91
    %p105 = scmp.eq.s32.totalorder %s15, 1
    %p106 = por %p104, %p105
    %p108 = scmp.ne.s32.totalorder %s91, %s107
    %p109 = scmp.eq.s32.totalorder %s15, 0
    %p110 = por %p108, %p109
    %p111 = scmp.le.s32.totalorder 1, %s9
    %p112 = scmp.lt.s32.totalorder %s9, 3
    %p113 = pnand %p111, %p112
    %p114 = pneg %p113
    // Predicated region
    $region9: #{_lambda_.12} parent=5 // pred_check
      _
    $region10: #{_lambda_.12} parent=5 // pred_check_branch
      %116 = sbr.rel (%p113) target = $region12
    $region11: #{_lambda_.12} parent=5 // pred_region
      %s117 = ssub.s32 %s9, 1
      // Predicated region
      $region13: #{_lambda_.12} parent=11 // pred_check
        %p118 = pneg %p56
      $region14: #{_lambda_.12} parent=11 // pred_check_branch
        %120 = sbr.rel (%p118) target = $region16
      $region15: #{_lambda_.12} parent=11 // pred_region
        _
      $region16: #{_lambda_.12} parent=11 // pred_fallthru
        _
      // Predicated region
      $region17: #{_lambda_.12} parent=11 // pred_check
        %p121 = pneg %p77
      $region18: #{_lambda_.12} parent=11 // pred_check_branch
        %123 = sbr.rel (%p121) target = $region20
      $region19: #{_lambda_.12} parent=11 // pred_region
        _
      $region20: #{_lambda_.12} parent=11 // pred_fallthru
        _
    $region12: #{_lambda_.12} parent=5 // pred_fallthru
      _
    %p124 = scmp.lt.s32.totalorder %s9, 2
    // Predicated region
    $region21: #{_lambda_.12} parent=5 // pred_check
      %p125 = pneg %p124
    $region22: #{_lambda_.12} parent=5 // pred_check_branch
      %127 = sbr.rel (%p125) target = $region24
    $region23: #{_lambda_.12} parent=5 // pred_region
      // Predicated region
      $region25: #{_lambda_.12} parent=23 // pred_check
        %p128 = pneg %p29
      $region26: #{_lambda_.12} parent=23 // pred_check_branch
        %130 = sbr.rel (%p128) target = $region28
      $region27: #{_lambda_.12} parent=23 // pred_region
        %p131 = scmp.lt.s32.totalorder %s9, 1
        %s132 = scalar_select %p131, %s9, 1
        %s133 = smul.addr %s132, 32
        %s134 = smul.addr %s133, 8
        %s135 = scalar_lea.vmem %s0, %s134
      $region28: #{_lambda_.12} parent=23 // pred_fallthru
        _
    $region24: #{_lambda_.12} parent=5 // pred_fallthru
      _
    %p136 = scmp.le.s32.totalorder 1, %s9
    %p137 = scmp.lt.s32.totalorder %s9, 3
    %p138 = pnand %p136, %p137
    %p139 = pneg %p138
    // Predicated region
    $region29: #{_lambda_.12} parent=5 // pred_check
      _
    $region30: #{_lambda_.12} parent=5 // pred_check_branch
      %141 = sbr.rel (%p138) target = $region32
    $region31: #{_lambda_.12} parent=5 // pred_region
      %s142 = ssub.s32 %s9, 1
      %p143 = scmp.lt.s32.totalorder %s14, 1
      %s144 = scalar_select %p143, %s14, 1
      %s145 = smul.addr %s144, 32
      %s146 = smul.addr %s145, 8
      %s147 = scalar_lea.vmem %s0, %s146
      %p148 = pneg %p35
      %p149 = pneg %p32
      %p150 = pneg %p56
      %p151 = pneg %p53
      %p152 = pneg %p77
      %p153 = pneg %p74
      %p154 = pneg %p103
      %p155 = pneg %p100
      %p156 = scmp.lt.s32.totalorder %s14, 1
      %s157 = scalar_select %p156, %s14, 1
      %s158 = smul.addr %s157, 32
      %s159 = smul.addr %s158, 8
      %s160 = scalar_lea.vmem %s3, %s159
      %p161 = scmp.lt.s32.totalorder %s14, 1
      %s162 = scalar_select %p161, %s14, 1
      %s163 = smul.addr %s162, 32
      %s164 = smul.addr %s163, 8
      %s165 = scalar_lea.vmem %s0, %s164
      %p166 = scmp.lt.s32.totalorder %s14, 1
      %s167 = scalar_select %p166, %s14, 1
      %s168 = smul.addr %s167, 32
      %s169 = smul.addr %s168, 8
      %s170 = scalar_lea.vmem %s3, %s169
      %171 = vst [vmem:[#allocation2] sm:$0xff] 0.0
      %172 = vst [vmem:[#allocation2 + $0x8] sm:$0xff] 0.0
      %173 = vst [vmem:[#allocation2 + $0x10] sm:$0x3] 0.0
      %s174 = scalar_lea.vmem [#allocation2], 408
      %175 = vst [vmem:[%s174] sm:$0xff] 0.0
      %176 = vst [vmem:[%s174 + $0x8] sm:$0xff] 0.0
      %177 = vst [vmem:[%s174 + $0x10] sm:$0x3] 0.0
      %s178 = scalar_lea.vmem [#allocation2], 24
      %179 = vst [vmem:[%s178] sm:$0x1] 0.0
      %180 = vst [vmem:[%s178 + $0x18] sm:$0x1] 0.0
      %181 = vst [vmem:[%s178 + $0x30] sm:$0x1] 0.0
      %182 = vst [vmem:[%s178 + $0x48] sm:$0x1] 0.0
      %183 = vst [vmem:[%s178 + $0x60] sm:$0x1] 0.0
      %184 = vst [vmem:[%s178 + $0x78] sm:$0x1] 0.0
      %185 = vst [vmem:[%s178 + $0x90] sm:$0x1] 0.0
      %186 = vst [vmem:[%s178 + $0xa8] sm:$0x1] 0.0
      %187 = vst [vmem:[%s178 + $0xc0] sm:$0x1] 0.0
      %188 = vst [vmem:[%s178 + $0xd8] sm:$0x1] 0.0
      %189 = vst [vmem:[%s178 + $0xf0] sm:$0x1] 0.0
      %190 = vst [vmem:[%s178 + $0x108] sm:$0x1] 0.0
      %191 = vst [vmem:[%s178 + $0x120] sm:$0x1] 0.0
      %192 = vst [vmem:[%s178 + $0x138] sm:$0x1] 0.0
      %193 = vst [vmem:[%s178 + $0x150] sm:$0x1] 0.0
      %194 = vst [vmem:[%s178 + $0x168] sm:$0x1] 0.0
      %195 = vst [vmem:[%s178 + $0x11] sm:$0x1] 0.0
      %196 = vst [vmem:[%s178 + $0x29] sm:$0x1] 0.0
      %197 = vst [vmem:[%s178 + $0x41] sm:$0x1] 0.0
      %198 = vst [vmem:[%s178 + $0x59] sm:$0x1] 0.0
      %199 = vst [vmem:[%s178 + $0x71] sm:$0x1] 0.0
      %200 = vst [vmem:[%s178 + $0x89] sm:$0x1] 0.0
      %201 = vst [vmem:[%s178 + $0xa1] sm:$0x1] 0.0
      %202 = vst [vmem:[%s178 + $0xb9] sm:$0x1] 0.0
      %203 = vst [vmem:[%s178 + $0xd1] sm:$0x1] 0.0
      %204 = vst [vmem:[%s178 + $0xe9] sm:$0x1] 0.0
      %205 = vst [vmem:[%s178 + $0x101] sm:$0x1] 0.0
      %206 = vst [vmem:[%s178 + $0x119] sm:$0x1] 0.0
      %207 = vst [vmem:[%s178 + $0x131] sm:$0x1] 0.0
      %208 = vst [vmem:[%s178 + $0x149] sm:$0x1] 0.0
      %209 = vst [vmem:[%s178 + $0x161] sm:$0x1] 0.0
      %210 = vst [vmem:[%s178 + $0x179] sm:$0x1] 0.0
      %v211 = vld [vmem:[%s165] sm:$0xff]
      %v212 = vld [vmem:[%s165 + $0x8] sm:$0xff]
      %v213 = vld [vmem:[%s165 + $0x10] sm:$0xff]
      %v214 = vld [vmem:[%s165 + $0x18] sm:$0xff]
      %v215 = vld [vmem:[%s165 + $0x20] sm:$0xff]
      %v216 = vld [vmem:[%s165 + $0x28] sm:$0xff]
      %v217 = vld [vmem:[%s165 + $0x30] sm:$0xff]
      %v218 = vld [vmem:[%s165 + $0x38] sm:$0xff]
      %v219 = vld [vmem:[%s165 + $0x40] sm:$0xff]
      %v220 = vld [vmem:[%s165 + $0x48] sm:$0xff]
      %v221 = vld [vmem:[%s165 + $0x50] sm:$0xff]
      %v222 = vld [vmem:[%s165 + $0x58] sm:$0xff]
      %v223 = vld [vmem:[%s165 + $0x60] sm:$0xff]
      %v224 = vld [vmem:[%s165 + $0x68] sm:$0xff]
      %v225 = vld [vmem:[%s165 + $0x70] sm:$0xff]
      %v226 = vld [vmem:[%s165 + $0x78] sm:$0xff]
      %v227 = vld [vmem:[%s165 + $0x80] sm:$0xff]
      %v228 = vld [vmem:[%s165 + $0x88] sm:$0xff]
      %v229 = vld [vmem:[%s165 + $0x90] sm:$0xff]
      %v230 = vld [vmem:[%s165 + $0x98] sm:$0xff]
      %v231 = vld [vmem:[%s165 + $0xa0] sm:$0xff]
      %v232 = vld [vmem:[%s165 + $0xa8] sm:$0xff]
      %v233 = vld [vmem:[%s165 + $0xb0] sm:$0xff]
      %v234 = vld [vmem:[%s165 + $0xb8] sm:$0xff]
      %v235 = vld [vmem:[%s165 + $0xc0] sm:$0xff]
      %v236 = vld [vmem:[%s165 + $0xc8] sm:$0xff]
      %v237 = vld [vmem:[%s165 + $0xd0] sm:$0xff]
      %v238 = vld [vmem:[%s165 + $0xd8] sm:$0xff]
      %v239 = vld [vmem:[%s165 + $0xe0] sm:$0xff]
      %v240 = vld [vmem:[%s165 + $0xe8] sm:$0xff]
      %v241 = vld [vmem:[%s165 + $0xf0] sm:$0xff]
      %v242 = vld [vmem:[%s165 + $0xf8] sm:$0xff]
      %243 = vst [vmem:[%s178 + $0x1] sm:$0xff] %v211
      %244 = vst [vmem:[%s178 + $0x9] sm:$0xff] %v212
      %245 = vst [vmem:[%s178 + $0x19] sm:$0xff] %v213
      %246 = vst [vmem:[%s178 + $0x21] sm:$0xff] %v214
      %247 = vst [vmem:[%s178 + $0x31] sm:$0xff] %v215
      %248 = vst [vmem:[%s178 + $0x39] sm:$0xff] %v216
      %249 = vst [vmem:[%s178 + $0x49] sm:$0xff] %v217
      %250 = vst [vmem:[%s178 + $0x51] sm:$0xff] %v218
      %251 = vst [vmem:[%s178 + $0x61] sm:$0xff] %v219
      %252 = vst [vmem:[%s178 + $0x69] sm:$0xff] %v220
      %253 = vst [vmem:[%s178 + $0x79] sm:$0xff] %v221
      %254 = vst [vmem:[%s178 + $0x81] sm:$0xff] %v222
      %255 = vst [vmem:[%s178 + $0x91] sm:$0xff] %v223
      %256 = vst [vmem:[%s178 + $0x99] sm:$0xff] %v224
      %257 = vst [vmem:[%s178 + $0xa9] sm:$0xff] %v225
      %258 = vst [vmem:[%s178 + $0xb1] sm:$0xff] %v226
      %259 = vst [vmem:[%s178 + $0xc1] sm:$0xff] %v227
      %260 = vst [vmem:[%s178 + $0xc9] sm:$0xff] %v228
      %261 = vst [vmem:[%s178 + $0xd9] sm:$0xff] %v229
      %262 = vst [vmem:[%s178 + $0xe1] sm:$0xff] %v230
      %263 = vst [vmem:[%s178 + $0xf1] sm:$0xff] %v231
      %264 = vst [vmem:[%s178 + $0xf9] sm:$0xff] %v232
      %265 = vst [vmem:[%s178 + $0x109] sm:$0xff] %v233
      %266 = vst [vmem:[%s178 + $0x111] sm:$0xff] %v234
      %267 = vst [vmem:[%s178 + $0x121] sm:$0xff] %v235
      %268 = vst [vmem:[%s178 + $0x129] sm:$0xff] %v236
      %269 = vst [vmem:[%s178 + $0x139] sm:$0xff] %v237
      %270 = vst [vmem:[%s178 + $0x141] sm:$0xff] %v238
      %271 = vst [vmem:[%s178 + $0x151] sm:$0xff] %v239
      %272 = vst [vmem:[%s178 + $0x159] sm:$0xff] %v240
      %273 = vst [vmem:[%s178 + $0x169] sm:$0xff] %v241
      %274 = vst [vmem:[%s178 + $0x171] sm:$0xff] %v242
      %v275 = vld [vmem:[%s1] sm:$0x7]
      %v276 = vld [vmem:[%s1 + $0x4] sm:$0x7]
      %v277 = vld [vmem:[%s1 + $0x8] sm:$0x7]
      %v278 = vld [vmem:[%s2] sm:$0x1]
      %v279 = vld [vmem:[#allocation2] sm:$0xff]
      %v280 = vld [vmem:[#allocation2 + $0x8] sm:$0xff]
      %v281 = vld [vmem:[#allocation2 + $0x10] sm:$0x3]
      %v282 = vld [vmem:[#allocation2 + $0x18] sm:$0xff]
      %v283 = vld [vmem:[#allocation2 + $0x20] sm:$0xff]
      %v284 = vld [vmem:[#allocation2 + $0x28] sm:$0x3]
      %v285 = vld [vmem:[#allocation2 + $0x30] sm:$0xff]
      %v286 = vld [vmem:[#allocation2 + $0x38] sm:$0xff]
      %v287 = vld [vmem:[#allocation2 + $0x40] sm:$0x3]
      %v288 = vld [vmem:[#allocation2 + $0x48] sm:$0xff]
      %v289 = vld [vmem:[#allocation2 + $0x50] sm:$0xff]
      %v290 = vld [vmem:[#allocation2 + $0x58] sm:$0x3]
      %v291 = vld [vmem:[#allocation2 + $0x60] sm:$0xff]
      %v292 = vld [vmem:[#allocation2 + $0x68] sm:$0xff]
      %v293 = vld [vmem:[#allocation2 + $0x70] sm:$0x3]
      %v294 = vld [vmem:[#allocation2 + $0x78] sm:$0xff]
      %v295 = vld [vmem:[#allocation2 + $0x80] sm:$0xff]
      %v296 = vld [vmem:[#allocation2 + $0x88] sm:$0x3]
      %v297 = vld [vmem:[#allocation2 + $0x90] sm:$0xff]
      %v298 = vld [vmem:[#allocation2 + $0x98] sm:$0xff]
      %v299 = vld [vmem:[#allocation2 + $0xa0] sm:$0x3]
      %v300 = vld [vmem:[#allocation2 + $0xa8] sm:$0xff]
      %v301 = vld [vmem:[#allocation2 + $0xb0] sm:$0xff]
      %v302 = vld [vmem:[#allocation2 + $0xb8] sm:$0x3]
      %v303 = vlaneseq
      %v304 = vshrl.u32 %v303, 7
      %v305 = vsub.s32 0, %v304
      %v306 = vrot.slane %v275, %v305
      %v307 = vmul.f32 %v279, %v306
      %v308 = vmul.f32 %v280, %v306
      %v309 = vmul.f32 %v282, %v306
      %v310 = vmul.f32 %v283, %v306
      %v311 = vmul.f32 %v285, %v306
      %v312 = vmul.f32 %v286, %v306
      %v313 = vmul.f32 %v288, %v306
      %v314 = vmul.f32 %v289, %v306
      %v315 = vmul.f32 %v291, %v306
      %v316 = vmul.f32 %v292, %v306
      %v317 = vmul.f32 %v294, %v306
      %v318 = vmul.f32 %v295, %v306
      %v319 = vmul.f32 %v297, %v306
      %v320 = vmul.f32 %v298, %v306
      %v321 = vmul.f32 %v300, %v306
      %v322 = vmul.f32 %v301, %v306
      %v323 = vadd.f32 %v307, 0.0
      %v324 = vadd.f32 %v308, 0.0
      %v325 = vadd.f32 %v309, 0.0
      %v326 = vadd.f32 %v310, 0.0
      %v327 = vadd.f32 %v311, 0.0
      %v328 = vadd.f32 %v312, 0.0
      %v329 = vadd.f32 %v313, 0.0
      %v330 = vadd.f32 %v314, 0.0
      %v331 = vadd.f32 %v315, 0.0
      %v332 = vadd.f32 %v316, 0.0
      %v333 = vadd.f32 %v317, 0.0
      %v334 = vadd.f32 %v318, 0.0
      %v335 = vadd.f32 %v319, 0.0
      %v336 = vadd.f32 %v320, 0.0
      %v337 = vadd.f32 %v321, 0.0
      %v338 = vadd.f32 %v322, 0.0
      %v339 = vlaneseq
      %v340 = vshrl.u32 %v339, 7
      %v341 = vsub.s32 1, %v340
      %v342 = vrot.slane %v275, %v341
      %v343 = vmul.f32 %v279, %v342
      %v344 = vmul.f32 %v280, %v342
      %v345 = vmul.f32 %v281, %v342
      %v346 = vmul.f32 %v282, %v342
      %v347 = vmul.f32 %v283, %v342
      %v348 = vmul.f32 %v284, %v342
      %v349 = vmul.f32 %v285, %v342
      %v350 = vmul.f32 %v286, %v342
      %v351 = vmul.f32 %v287, %v342
      %v352 = vmul.f32 %v288, %v342
      %v353 = vmul.f32 %v289, %v342
      %v354 = vmul.f32 %v290, %v342
      %v355 = vmul.f32 %v291, %v342
      %v356 = vmul.f32 %v292, %v342
      %v357 = vmul.f32 %v293, %v342
      %v358 = vmul.f32 %v294, %v342
      %v359 = vmul.f32 %v295, %v342
      %v360 = vmul.f32 %v296, %v342
      %v361 = vmul.f32 %v297, %v342
      %v362 = vmul.f32 %v298, %v342
      %v363 = vmul.f32 %v299, %v342
      %v364 = vmul.f32 %v300, %v342
      %v365 = vmul.f32 %v301, %v342
      %v366 = vmul.f32 %v302, %v342
      %vm391 = vcmask 1046528
      %v392 = vrot.slane %v343, 1
      %v393 = vrot.slane %v344, 1
      %v394 = vsel %vm391, %v392, %v393
      %v395 = vrot.slane %v345, 1
      %v396 = vsel %vm391, %v393, %v395
      %v397 = vrot.slane %v346, 1
      %v398 = vrot.slane %v347, 1
      %v399 = vsel %vm391, %v397, %v398
      %v400 = vrot.slane %v348, 1
      %v401 = vsel %vm391, %v398, %v400
      %v402 = vrot.slane %v349, 1
      %v403 = vrot.slane %v350, 1
      %v404 = vsel %vm391, %v402, %v403
      %v405 = vrot.slane %v351, 1
      %v406 = vsel %vm391, %v403, %v405
      %v407 = vrot.slane %v352, 1
      %v408 = vrot.slane %v353, 1
      %v409 = vsel %vm391, %v407, %v408
      %v410 = vrot.slane %v354, 1
      %v411 = vsel %vm391, %v408, %v410
      %v412 = vrot.slane %v355, 1
      %v413 = vrot.slane %v356, 1
      %v414 = vsel %vm391, %v412, %v413
      %v415 = vrot.slane %v357, 1
      %v416 = vsel %vm391, %v413, %v415
      %v417 = vrot.slane %v358, 1
      %v418 = vrot.slane %v359, 1
      %v419 = vsel %vm391, %v417, %v418
      %v420 = vrot.slane %v360, 1
      %v421 = vsel %vm391, %v418, %v420
      %v422 = vrot.slane %v361, 1
      %v423 = vrot.slane %v362, 1
      %v424 = vsel %vm391, %v422, %v423
      %v425 = vrot.slane %v363, 1
      %v426 = vsel %vm391, %v423, %v425
      %v427 = vrot.slane %v364, 1
      %v428 = vrot.slane %v365, 1
      %v429 = vsel %vm391, %v427, %v428
      %v430 = vrot.slane %v366, 1
      %v431 = vsel %vm391, %v428, %v430
      %v448 = vadd.f32 %v323, %v394
      %v449 = vadd.f32 %v324, %v396
      %v450 = vadd.f32 %v325, %v399
      %v451 = vadd.f32 %v326, %v401
      %v452 = vadd.f32 %v327, %v404
      %v453 = vadd.f32 %v328, %v406
      %v454 = vadd.f32 %v329, %v409
      %v455 = vadd.f32 %v330, %v411
      %v456 = vadd.f32 %v331, %v414
      %v457 = vadd.f32 %v332, %v416
      %v458 = vadd.f32 %v333, %v419
      %v459 = vadd.f32 %v334, %v421
      %v460 = vadd.f32 %v335, %v424
      %v461 = vadd.f32 %v336, %v426
      %v462 = vadd.f32 %v337, %v429
      %v463 = vadd.f32 %v338, %v431
      %v464 = vlaneseq
      %v465 = vshrl.u32 %v464, 7
      %v466 = vsub.s32 2, %v465
      %v467 = vrot.slane %v275, %v466
      %v468 = vmul.f32 %v279, %v467
      %v469 = vmul.f32 %v280, %v467
      %v470 = vmul.f32 %v281, %v467
      %v471 = vmul.f32 %v282, %v467
      %v472 = vmul.f32 %v283, %v467
      %v473 = vmul.f32 %v284, %v467
      %v474 = vmul.f32 %v285, %v467
      %v475 = vmul.f32 %v286, %v467
      %v476 = vmul.f32 %v287, %v467
      %v477 = vmul.f32 %v288, %v467
      %v478 = vmul.f32 %v289, %v467
      %v479 = vmul.f32 %v290, %v467
      %v480 = vmul.f32 %v291, %v467
      %v481 = vmul.f32 %v292, %v467
      %v482 = vmul.f32 %v293, %v467
      %v483 = vmul.f32 %v294, %v467
      %v484 = vmul.f32 %v295, %v467
      %v485 = vmul.f32 %v296, %v467
      %v486 = vmul.f32 %v297, %v467
      %v487 = vmul.f32 %v298, %v467
      %v488 = vmul.f32 %v299, %v467
      %v489 = vmul.f32 %v300, %v467
      %v490 = vmul.f32 %v301, %v467
      %v491 = vmul.f32 %v302, %v467
      %vm516 = vcmask 1045504
      %v517 = vrot.slane %v468, 2
      %v518 = vrot.slane %v469, 2
      %v519 = vsel %vm516, %v517, %v518
      %v520 = vrot.slane %v470, 2
      %v521 = vsel %vm516, %v518, %v520
      %v522 = vrot.slane %v471, 2
      %v523 = vrot.slane %v472, 2
      %v524 = vsel %vm516, %v522, %v523
      %v525 = vrot.slane %v473, 2
      %v526 = vsel %vm516, %v523, %v525
      %v527 = vrot.slane %v474, 2
      %v528 = vrot.slane %v475, 2
      %v529 = vsel %vm516, %v527, %v528
      %v530 = vrot.slane %v476, 2
      %v531 = vsel %vm516, %v528, %v530
      %v532 = vrot.slane %v477, 2
      %v533 = vrot.slane %v478, 2
      %v534 = vsel %vm516, %v532, %v533
      %v535 = vrot.slane %v479, 2
      %v536 = vsel %vm516, %v533, %v535
      %v537 = vrot.slane %v480, 2
      %v538 = vrot.slane %v481, 2
      %v539 = vsel %vm516, %v537, %v538
      %v540 = vrot.slane %v482, 2
      %v541 = vsel %vm516, %v538, %v540
      %v542 = vrot.slane %v483, 2
      %v543 = vrot.slane %v484, 2
      %v544 = vsel %vm516, %v542, %v543
      %v545 = vrot.slane %v485, 2
      %v546 = vsel %vm516, %v543, %v545
      %v547 = vrot.slane %v486, 2
      %v548 = vrot.slane %v487, 2
      %v549 = vsel %vm516, %v547, %v548
      %v550 = vrot.slane %v488, 2
      %v551 = vsel %vm516, %v548, %v550
      %v552 = vrot.slane %v489, 2
      %v553 = vrot.slane %v490, 2
      %v554 = vsel %vm516, %v552, %v553
      %v555 = vrot.slane %v491, 2
      %v556 = vsel %vm516, %v553, %v555
      %v573 = vadd.f32 %v448, %v519
      %v574 = vadd.f32 %v449, %v521
      %v575 = vadd.f32 %v450, %v524
      %v576 = vadd.f32 %v451, %v526
      %v577 = vadd.f32 %v452, %v529
      %v578 = vadd.f32 %v453, %v531
      %v579 = vadd.f32 %v454, %v534
      %v580 = vadd.f32 %v455, %v536
      %v581 = vadd.f32 %v456, %v539
      %v582 = vadd.f32 %v457, %v541
      %v583 = vadd.f32 %v458, %v544
      %v584 = vadd.f32 %v459, %v546
      %v585 = vadd.f32 %v460, %v549
      %v586 = vadd.f32 %v461, %v551
      %v587 = vadd.f32 %v462, %v554
      %v588 = vadd.f32 %v463, %v556
      %v589 = vld [vmem:[%s178] sm:$0xff]
      %v590 = vld [vmem:[%s178 + $0x8] sm:$0xff]
      %v591 = vld [vmem:[%s178 + $0x10] sm:$0x3]
      %v592 = vld [vmem:[%s178 + $0x18] sm:$0xff]
      %v593 = vld [vmem:[%s178 + $0x20] sm:$0xff]
      %v594 = vld [vmem:[%s178 + $0x28] sm:$0x3]
      %v595 = vld [vmem:[%s178 + $0x30] sm:$0xff]
      %v596 = vld [vmem:[%s178 + $0x38] sm:$0xff]
      %v597 = vld [vmem:[%s178 + $0x40] sm:$0x3]
      %v598 = vld [vmem:[%s178 + $0x48] sm:$0xff]
      %v599 = vld [vmem:[%s178 + $0x50] sm:$0xff]
      %v600 = vld [vmem:[%s178 + $0x58] sm:$0x3]
      %v601 = vld [vmem:[%s178 + $0x60] sm:$0xff]
      %v602 = vld [vmem:[%s178 + $0x68] sm:$0xff]
      %v603 = vld [vmem:[%s178 + $0x70] sm:$0x3]
      %v604 = vld [vmem:[%s178 + $0x78] sm:$0xff]
      %v605 = vld [vmem:[%s178 + $0x80] sm:$0xff]
      %v606 = vld [vmem:[%s178 + $0x88] sm:$0x3]
      %v607 = vld [vmem:[%s178 + $0x90] sm:$0xff]
      %v608 = vld [vmem:[%s178 + $0x98] sm:$0xff]
      %v609 = vld [vmem:[%s178 + $0xa0] sm:$0x3]
      %v610 = vld [vmem:[%s178 + $0xa8] sm:$0xff]
      %v611 = vld [vmem:[%s178 + $0xb0] sm:$0xff]
      %v612 = vld [vmem:[%s178 + $0xb8] sm:$0x3]
      %v613 = vlaneseq
      %v614 = vshrl.u32 %v613, 7
      %v615 = vsub.s32 0, %v614
      %v616 = vrot.slane %v276, %v615
      %v617 = vmul.f32 %v589, %v616
      %v618 = vmul.f32 %v590, %v616
      %v619 = vmul.f32 %v592, %v616
      %v620 = vmul.f32 %v593, %v616
      %v621 = vmul.f32 %v595, %v616
      %v622 = vmul.f32 %v596, %v616
      %v623 = vmul.f32 %v598, %v616
      %v624 = vmul.f32 %v599, %v616
      %v625 = vmul.f32 %v601, %v616
      %v626 = vmul.f32 %v602, %v616
      %v627 = vmul.f32 %v604, %v616
      %v628 = vmul.f32 %v605, %v616
      %v629 = vmul.f32 %v607, %v616
      %v630 = vmul.f32 %v608, %v616
      %v631 = vmul.f32 %v610, %v616
      %v632 = vmul.f32 %v611, %v616
      %v633 = vadd.f32 %v573, %v617
      %v634 = vadd.f32 %v574, %v618
      %v635 = vadd.f32 %v575, %v619
      %v636 = vadd.f32 %v576, %v620
      %v637 = vadd.f32 %v577, %v621
      %v638 = vadd.f32 %v578, %v622
      %v639 = vadd.f32 %v579, %v623
      %v640 = vadd.f32 %v580, %v624
      %v641 = vadd.f32 %v581, %v625
      %v642 = vadd.f32 %v582, %v626
      %v643 = vadd.f32 %v583, %v627
      %v644 = vadd.f32 %v584, %v628
      %v645 = vadd.f32 %v585, %v629
      %v646 = vadd.f32 %v586, %v630
      %v647 = vadd.f32 %v587, %v631
      %v648 = vadd.f32 %v588, %v632
      %v649 = vlaneseq
      %v650 = vshrl.u32 %v649, 7
      %v651 = vsub.s32 1, %v650
      %v652 = vrot.slane %v276, %v651
      %v653 = vmul.f32 %v589, %v652
      %v654 = vmul.f32 %v590, %v652
      %v655 = vmul.f32 %v591, %v652
      %v656 = vmul.f32 %v592, %v652
      %v657 = vmul.f32 %v593, %v652
      %v658 = vmul.f32 %v594, %v652
      %v659 = vmul.f32 %v595, %v652
      %v660 = vmul.f32 %v596, %v652
      %v661 = vmul.f32 %v597, %v652
      %v662 = vmul.f32 %v598, %v652
      %v663 = vmul.f32 %v599, %v652
      %v664 = vmul.f32 %v600, %v652
      %v665 = vmul.f32 %v601, %v652
      %v666 = vmul.f32 %v602, %v652
      %v667 = vmul.f32 %v603, %v652
      %v668 = vmul.f32 %v604, %v652
      %v669 = vmul.f32 %v605, %v652
      %v670 = vmul.f32 %v606, %v652
      %v671 = vmul.f32 %v607, %v652
      %v672 = vmul.f32 %v608, %v652
      %v673 = vmul.f32 %v609, %v652
      %v674 = vmul.f32 %v610, %v652
      %v675 = vmul.f32 %v611, %v652
      %v676 = vmul.f32 %v612, %v652
      %v701 = vrot.slane %v653, 1
      %v702 = vrot.slane %v654, 1
      %v703 = vsel %vm391, %v701, %v702
      %v704 = vrot.slane %v655, 1
      %v705 = vsel %vm391, %v702, %v704
      %v706 = vrot.slane %v656, 1
      %v707 = vrot.slane %v657, 1
      %v708 = vsel %vm391, %v706, %v707
      %v709 = vrot.slane %v658, 1
      %v710 = vsel %vm391, %v707, %v709
      %v711 = vrot.slane %v659, 1
      %v712 = vrot.slane %v660, 1
      %v713 = vsel %vm391, %v711, %v712
      %v714 = vrot.slane %v661, 1
      %v715 = vsel %vm391, %v712, %v714
      %v716 = vrot.slane %v662, 1
      %v717 = vrot.slane %v663, 1
      %v718 = vsel %vm391, %v716, %v717
      %v719 = vrot.slane %v664, 1
      %v720 = vsel %vm391, %v717, %v719
      %v721 = vrot.slane %v665, 1
      %v722 = vrot.slane %v666, 1
      %v723 = vsel %vm391, %v721, %v722
      %v724 = vrot.slane %v667, 1
      %v725 = vsel %vm391, %v722, %v724
      %v726 = vrot.slane %v668, 1
      %v727 = vrot.slane %v669, 1
      %v728 = vsel %vm391, %v726, %v727
      %v729 = vrot.slane %v670, 1
      %v730 = vsel %vm391, %v727, %v729
      %v731 = vrot.slane %v671, 1
      %v732 = vrot.slane %v672, 1
      %v733 = vsel %vm391, %v731, %v732
      %v734 = vrot.slane %v673, 1
      %v735 = vsel %vm391, %v732, %v734
      %v736 = vrot.slane %v674, 1
      %v737 = vrot.slane %v675, 1
      %v738 = vsel %vm391, %v736, %v737
      %v739 = vrot.slane %v676, 1
      %v740 = vsel %vm391, %v737, %v739
      %v757 = vadd.f32 %v633, %v703
      %v758 = vadd.f32 %v634, %v705
      %v759 = vadd.f32 %v635, %v708
      %v760 = vadd.f32 %v636, %v710
      %v761 = vadd.f32 %v637, %v713
      %v762 = vadd.f32 %v638, %v715
      %v763 = vadd.f32 %v639, %v718
      %v764 = vadd.f32 %v640, %v720
      %v765 = vadd.f32 %v641, %v723
      %v766 = vadd.f32 %v642, %v725
      %v767 = vadd.f32 %v643, %v728
      %v768 = vadd.f32 %v644, %v730
      %v769 = vadd.f32 %v645, %v733
      %v770 = vadd.f32 %v646, %v735
      %v771 = vadd.f32 %v647, %v738
      %v772 = vadd.f32 %v648, %v740
      %v773 = vlaneseq
      %v774 = vshrl.u32 %v773, 7
      %v775 = vsub.s32 2, %v774
      %v776 = vrot.slane %v276, %v775
      %v777 = vmul.f32 %v589, %v776
      %v778 = vmul.f32 %v590, %v776
      %v779 = vmul.f32 %v591, %v776
      %v780 = vmul.f32 %v592, %v776
      %v781 = vmul.f32 %v593, %v776
      %v782 = vmul.f32 %v594, %v776
      %v783 = vmul.f32 %v595, %v776
      %v784 = vmul.f32 %v596, %v776
      %v785 = vmul.f32 %v597, %v776
      %v786 = vmul.f32 %v598, %v776
      %v787 = vmul.f32 %v599, %v776
      %v788 = vmul.f32 %v600, %v776
      %v789 = vmul.f32 %v601, %v776
      %v790 = vmul.f32 %v602, %v776
      %v791 = vmul.f32 %v603, %v776
      %v792 = vmul.f32 %v604, %v776
      %v793 = vmul.f32 %v605, %v776
      %v794 = vmul.f32 %v606, %v776
      %v795 = vmul.f32 %v607, %v776
      %v796 = vmul.f32 %v608, %v776
      %v797 = vmul.f32 %v609, %v776
      %v798 = vmul.f32 %v610, %v776
      %v799 = vmul.f32 %v611, %v776
      %v800 = vmul.f32 %v612, %v776
      %v825 = vrot.slane %v777, 2
      %v826 = vrot.slane %v778, 2
      %v827 = vsel %vm516, %v825, %v826
      %v828 = vrot.slane %v779, 2
      %v829 = vsel %vm516, %v826, %v828
      %v830 = vrot.slane %v780, 2
      %v831 = vrot.slane %v781, 2
      %v832 = vsel %vm516, %v830, %v831
      %v833 = vrot.slane %v782, 2
      %v834 = vsel %vm516, %v831, %v833
      %v835 = vrot.slane %v783, 2
      %v836 = vrot.slane %v784, 2
      %v837 = vsel %vm516, %v835, %v836
      %v838 = vrot.slane %v785, 2
      %v839 = vsel %vm516, %v836, %v838
      %v840 = vrot.slane %v786, 2
      %v841 = vrot.slane %v787, 2
      %v842 = vsel %vm516, %v840, %v841
      %v843 = vrot.slane %v788, 2
      %v844 = vsel %vm516, %v841, %v843
      %v845 = vrot.slane %v789, 2
      %v846 = vrot.slane %v790, 2
      %v847 = vsel %vm516, %v845, %v846
      %v848 = vrot.slane %v791, 2
      %v849 = vsel %vm516, %v846, %v848
      %v850 = vrot.slane %v792, 2
      %v851 = vrot.slane %v793, 2
      %v852 = vsel %vm516, %v850, %v851
      %v853 = vrot.slane %v794, 2
      %v854 = vsel %vm516, %v851, %v853
      %v855 = vrot.slane %v795, 2
      %v856 = vrot.slane %v796, 2
      %v857 = vsel %vm516, %v855, %v856
      %v858 = vrot.slane %v797, 2
      %v859 = vsel %vm516, %v856, %v858
      %v860 = vrot.slane %v798, 2
      %v861 = vrot.slane %v799, 2
      %v862 = vsel %vm516, %v860, %v861
      %v863 = vrot.slane %v800, 2
      %v864 = vsel %vm516, %v861, %v863
      %v881 = vadd.f32 %v757, %v827
      %v882 = vadd.f32 %v758, %v829
      %v883 = vadd.f32 %v759, %v832
      %v884 = vadd.f32 %v760, %v834
      %v885 = vadd.f32 %v761, %v837
      %v886 = vadd.f32 %v762, %v839
      %v887 = vadd.f32 %v763, %v842
      %v888 = vadd.f32 %v764, %v844
      %v889 = vadd.f32 %v765, %v847
      %v890 = vadd.f32 %v766, %v849
      %v891 = vadd.f32 %v767, %v852
      %v892 = vadd.f32 %v768, %v854
      %v893 = vadd.f32 %v769, %v857
      %v894 = vadd.f32 %v770, %v859
      %v895 = vadd.f32 %v771, %v862
      %v896 = vadd.f32 %v772, %v864
      %s897 = scalar_lea.vmem [#allocation2], 48
      %v898 = vld [vmem:[%s897] sm:$0xff]
      %v899 = vld [vmem:[%s897 + $0x8] sm:$0xff]
      %v900 = vld [vmem:[%s897 + $0x10] sm:$0x3]
      %v901 = vld [vmem:[%s897 + $0x18] sm:$0xff]
      %v902 = vld [vmem:[%s897 + $0x20] sm:$0xff]
      %v903 = vld [vmem:[%s897 + $0x28] sm:$0x3]
      %v904 = vld [vmem:[%s897 + $0x30] sm:$0xff]
      %v905 = vld [vmem:[%s897 + $0x38] sm:$0xff]
      %v906 = vld [vmem:[%s897 + $0x40] sm:$0x3]
      %v907 = vld [vmem:[%s897 + $0x48] sm:$0xff]
      %v908 = vld [vmem:[%s897 + $0x50] sm:$0xff]
      %v909 = vld [vmem:[%s897 + $0x58] sm:$0x3]
      %v910 = vld [vmem:[%s897 + $0x60] sm:$0xff]
      %v911 = vld [vmem:[%s897 + $0x68] sm:$0xff]
      %v912 = vld [vmem:[%s897 + $0x70] sm:$0x3]
      %v913 = vld [vmem:[%s897 + $0x78] sm:$0xff]
      %v914 = vld [vmem:[%s897 + $0x80] sm:$0xff]
      %v915 = vld [vmem:[%s897 + $0x88] sm:$0x3]
      %v916 = vld [vmem:[%s897 + $0x90] sm:$0xff]
      %v917 = vld [vmem:[%s897 + $0x98] sm:$0xff]
      %v918 = vld [vmem:[%s897 + $0xa0] sm:$0x3]
      %v919 = vld [vmem:[%s897 + $0xa8] sm:$0xff]
      %v920 = vld [vmem:[%s897 + $0xb0] sm:$0xff]
      %v921 = vld [vmem:[%s897 + $0xb8] sm:$0x3]
      %v922 = vlaneseq
      %v923 = vshrl.u32 %v922, 7
      %v924 = vsub.s32 0, %v923
      %v925 = vrot.slane %v277, %v924
      %v926 = vmul.f32 %v898, %v925
      %v927 = vmul.f32 %v899, %v925
      %v928 = vmul.f32 %v901, %v925
      %v929 = vmul.f32 %v902, %v925
      %v930 = vmul.f32 %v904, %v925
      %v931 = vmul.f32 %v905, %v925
      %v932 = vmul.f32 %v907, %v925
      %v933 = vmul.f32 %v908, %v925
      %v934 = vmul.f32 %v910, %v925
      %v935 = vmul.f32 %v911, %v925
      %v936 = vmul.f32 %v913, %v925
      %v937 = vmul.f32 %v914, %v925
      %v938 = vmul.f32 %v916, %v925
      %v939 = vmul.f32 %v917, %v925
      %v940 = vmul.f32 %v919, %v925
      %v941 = vmul.f32 %v920, %v925
      %v942 = vadd.f32 %v881, %v926
      %v943 = vadd.f32 %v882, %v927
      %v944 = vadd.f32 %v883, %v928
      %v945 = vadd.f32 %v884, %v929
      %v946 = vadd.f32 %v885, %v930
      %v947 = vadd.f32 %v886, %v931
      %v948 = vadd.f32 %v887, %v932
      %v949 = vadd.f32 %v888, %v933
      %v950 = vadd.f32 %v889, %v934
      %v951 = vadd.f32 %v890, %v935
      %v952 = vadd.f32 %v891, %v936
      %v953 = vadd.f32 %v892, %v937
      %v954 = vadd.f32 %v893, %v938
      %v955 = vadd.f32 %v894, %v939
      %v956 = vadd.f32 %v895, %v940
      %v957 = vadd.f32 %v896, %v941
      %v958 = vlaneseq
      %v959 = vshrl.u32 %v958, 7
      %v960 = vsub.s32 1, %v959
      %v961 = vrot.slane %v277, %v960
      %v962 = vmul.f32 %v898, %v961
      %v963 = vmul.f32 %v899, %v961
      %v964 = vmul.f32 %v900, %v961
      %v965 = vmul.f32 %v901, %v961
      %v966 = vmul.f32 %v902, %v961
      %v967 = vmul.f32 %v903, %v961
      %v968 = vmul.f32 %v904, %v961
      %v969 = vmul.f32 %v905, %v961
      %v970 = vmul.f32 %v906, %v961
      %v971 = vmul.f32 %v907, %v961
      %v972 = vmul.f32 %v908, %v961
      %v973 = vmul.f32 %v909, %v961
      %v974 = vmul.f32 %v910, %v961
      %v975 = vmul.f32 %v911, %v961
      %v976 = vmul.f32 %v912, %v961
      %v977 = vmul.f32 %v913, %v961
      %v978 = vmul.f32 %v914, %v961
      %v979 = vmul.f32 %v915, %v961
      %v980 = vmul.f32 %v916, %v961
      %v981 = vmul.f32 %v917, %v961
      %v982 = vmul.f32 %v918, %v961
      %v983 = vmul.f32 %v919, %v961
      %v984 = vmul.f32 %v920, %v961
      %v985 = vmul.f32 %v921, %v961
      %v1010 = vrot.slane %v962, 1
      %v1011 = vrot.slane %v963, 1
      %v1012 = vsel %vm391, %v1010, %v1011
      %v1013 = vrot.slane %v964, 1
      %v1014 = vsel %vm391, %v1011, %v1013
      %v1015 = vrot.slane %v965, 1
      %v1016 = vrot.slane %v966, 1
      %v1017 = vsel %vm391, %v1015, %v1016
      %v1018 = vrot.slane %v967, 1
      %v1019 = vsel %vm391, %v1016, %v1018
      %v1020 = vrot.slane %v968, 1
      %v1021 = vrot.slane %v969, 1
      %v1022 = vsel %vm391, %v1020, %v1021
      %v1023 = vrot.slane %v970, 1
      %v1024 = vsel %vm391, %v1021, %v1023
      %v1025 = vrot.slane %v971, 1
      %v1026 = vrot.slane %v972, 1
      %v1027 = vsel %vm391, %v1025, %v1026
      %v1028 = vrot.slane %v973, 1
      %v1029 = vsel %vm391, %v1026, %v1028
      %v1030 = vrot.slane %v974, 1
      %v1031 = vrot.slane %v975, 1
      %v1032 = vsel %vm391, %v1030, %v1031
      %v1033 = vrot.slane %v976, 1
      %v1034 = vsel %vm391, %v1031, %v1033
      %v1035 = vrot.slane %v977, 1
      %v1036 = vrot.slane %v978, 1
      %v1037 = vsel %vm391, %v1035, %v1036
      %v1038 = vrot.slane %v979, 1
      %v1039 = vsel %vm391, %v1036, %v1038
      %v1040 = vrot.slane %v980, 1
      %v1041 = vrot.slane %v981, 1
      %v1042 = vsel %vm391, %v1040, %v1041
      %v1043 = vrot.slane %v982, 1
      %v1044 = vsel %vm391, %v1041, %v1043
      %v1045 = vrot.slane %v983, 1
      %v1046 = vrot.slane %v984, 1
      %v1047 = vsel %vm391, %v1045, %v1046
      %v1048 = vrot.slane %v985, 1
      %v1049 = vsel %vm391, %v1046, %v1048
      %v1066 = vadd.f32 %v942, %v1012
      %v1067 = vadd.f32 %v943, %v1014
      %v1068 = vadd.f32 %v944, %v1017
      %v1069 = vadd.f32 %v945, %v1019
      %v1070 = vadd.f32 %v946, %v1022
      %v1071 = vadd.f32 %v947, %v1024
      %v1072 = vadd.f32 %v948, %v1027
      %v1073 = vadd.f32 %v949, %v1029
      %v1074 = vadd.f32 %v950, %v1032
      %v1075 = vadd.f32 %v951, %v1034
      %v1076 = vadd.f32 %v952, %v1037
      %v1077 = vadd.f32 %v953, %v1039
      %v1078 = vadd.f32 %v954, %v1042
      %v1079 = vadd.f32 %v955, %v1044
      %v1080 = vadd.f32 %v956, %v1047
      %v1081 = vadd.f32 %v957, %v1049
      %v1082 = vlaneseq
      %v1083 = vshrl.u32 %v1082, 7
      %v1084 = vsub.s32 2, %v1083
      %v1085 = vrot.slane %v277, %v1084
      %v1086 = vmul.f32 %v898, %v1085
      %v1087 = vmul.f32 %v899, %v1085
      %v1088 = vmul.f32 %v900, %v1085
      %v1089 = vmul.f32 %v901, %v1085
      %v1090 = vmul.f32 %v902, %v1085
      %v1091 = vmul.f32 %v903, %v1085
      %v1092 = vmul.f32 %v904, %v1085
      %v1093 = vmul.f32 %v905, %v1085
      %v1094 = vmul.f32 %v906, %v1085
      %v1095 = vmul.f32 %v907, %v1085
      %v1096 = vmul.f32 %v908, %v1085
      %v1097 = vmul.f32 %v909, %v1085
      %v1098 = vmul.f32 %v910, %v1085
      %v1099 = vmul.f32 %v911, %v1085
      %v1100 = vmul.f32 %v912, %v1085
      %v1101 = vmul.f32 %v913, %v1085
      %v1102 = vmul.f32 %v914, %v1085
      %v1103 = vmul.f32 %v915, %v1085
      %v1104 = vmul.f32 %v916, %v1085
      %v1105 = vmul.f32 %v917, %v1085
      %v1106 = vmul.f32 %v918, %v1085
      %v1107 = vmul.f32 %v919, %v1085
      %v1108 = vmul.f32 %v920, %v1085
      %v1109 = vmul.f32 %v921, %v1085
      %v1134 = vrot.slane %v1086, 2
      %v1135 = vrot.slane %v1087, 2
      %v1136 = vsel %vm516, %v1134, %v1135
      %v1137 = vrot.slane %v1088, 2
      %v1138 = vsel %vm516, %v1135, %v1137
      %v1139 = vrot.slane %v1089, 2
      %v1140 = vrot.slane %v1090, 2
      %v1141 = vsel %vm516, %v1139, %v1140
      %v1142 = vrot.slane %v1091, 2
      %v1143 = vsel %vm516, %v1140, %v1142
      %v1144 = vrot.slane %v1092, 2
      %v1145 = vrot.slane %v1093, 2
      %v1146 = vsel %vm516, %v1144, %v1145
      %v1147 = vrot.slane %v1094, 2
      %v1148 = vsel %vm516, %v1145, %v1147
      %v1149 = vrot.slane %v1095, 2
      %v1150 = vrot.slane %v1096, 2
      %v1151 = vsel %vm516, %v1149, %v1150
      %v1152 = vrot.slane %v1097, 2
      %v1153 = vsel %vm516, %v1150, %v1152
      %v1154 = vrot.slane %v1098, 2
      %v1155 = vrot.slane %v1099, 2
      %v1156 = vsel %vm516, %v1154, %v1155
      %v1157 = vrot.slane %v1100, 2
      %v1158 = vsel %vm516, %v1155, %v1157
      %v1159 = vrot.slane %v1101, 2
      %v1160 = vrot.slane %v1102, 2
      %v1161 = vsel %vm516, %v1159, %v1160
      %v1162 = vrot.slane %v1103, 2
      %v1163 = vsel %vm516, %v1160, %v1162
      %v1164 = vrot.slane %v1104, 2
      %v1165 = vrot.slane %v1105, 2
      %v1166 = vsel %vm516, %v1164, %v1165
      %v1167 = vrot.slane %v1106, 2
      %v1168 = vsel %vm516, %v1165, %v1167
      %v1169 = vrot.slane %v1107, 2
      %v1170 = vrot.slane %v1108, 2
      %v1171 = vsel %vm516, %v1169, %v1170
      %v1172 = vrot.slane %v1109, 2
      %v1173 = vsel %vm516, %v1170, %v1172
      %v1190 = vadd.f32 %v1066, %v1136
      %v1191 = vadd.f32 %v1067, %v1138
      %v1192 = vadd.f32 %v1068, %v1141
      %v1193 = vadd.f32 %v1069, %v1143
      %v1194 = vadd.f32 %v1070, %v1146
      %v1195 = vadd.f32 %v1071, %v1148
      %v1196 = vadd.f32 %v1072, %v1151
      %v1197 = vadd.f32 %v1073, %v1153
      %v1198 = vadd.f32 %v1074, %v1156
      %v1199 = vadd.f32 %v1075, %v1158
      %v1200 = vadd.f32 %v1076, %v1161
      %v1201 = vadd.f32 %v1077, %v1163
      %v1202 = vadd.f32 %v1078, %v1166
      %v1203 = vadd.f32 %v1079, %v1168
      %v1204 = vadd.f32 %v1080, %v1171
      %v1205 = vadd.f32 %v1081, %v1173
      %v1207 = vlaneseq
      %v1208 = vshrl.u32 %v1207, 7
      %v1209 = vsub.s32 0, %v1208
      %v1210 = vrot.slane %v278, %v1209
      %v1212 = vadd.f32 %v1190, %v1210
      %v1213 = vadd.f32 %v1191, %v1210
      %v1214 = vadd.f32 %v1192, %v1210
      %v1215 = vadd.f32 %v1193, %v1210
      %v1216 = vadd.f32 %v1194, %v1210
      %v1217 = vadd.f32 %v1195, %v1210
      %v1218 = vadd.f32 %v1196, %v1210
      %v1219 = vadd.f32 %v1197, %v1210
      %v1220 = vadd.f32 %v1198, %v1210
      %v1221 = vadd.f32 %v1199, %v1210
      %v1222 = vadd.f32 %v1200, %v1210
      %v1223 = vadd.f32 %v1201, %v1210
      %v1224 = vadd.f32 %v1202, %v1210
      %v1225 = vadd.f32 %v1203, %v1210
      %v1226 = vadd.f32 %v1204, %v1210
      %v1227 = vadd.f32 %v1205, %v1210
      %v1228 = vmul.f32 %v1212, 0.5
      %v1229 = vmul.f32 %v1213, 0.5
      %v1230 = vmul.f32 %v1214, 0.5
      %v1231 = vmul.f32 %v1215, 0.5
      %v1232 = vmul.f32 %v1216, 0.5
      %v1233 = vmul.f32 %v1217, 0.5
      %v1234 = vmul.f32 %v1218, 0.5
      %v1235 = vmul.f32 %v1219, 0.5
      %v1236 = vmul.f32 %v1220, 0.5
      %v1237 = vmul.f32 %v1221, 0.5
      %v1238 = vmul.f32 %v1222, 0.5
      %v1239 = vmul.f32 %v1223, 0.5
      %v1240 = vmul.f32 %v1224, 0.5
      %v1241 = vmul.f32 %v1225, 0.5
      %v1242 = vmul.f32 %v1226, 0.5
      %v1243 = vmul.f32 %v1227, 0.5
      %v1244 = vmul.f32 %v1212, 0.044715
      %v1245 = vmul.f32 %v1213, 0.044715
      %v1246 = vmul.f32 %v1214, 0.044715
      %v1247 = vmul.f32 %v1215, 0.044715
      %v1248 = vmul.f32 %v1216, 0.044715
      %v1249 = vmul.f32 %v1217, 0.044715
      %v1250 = vmul.f32 %v1218, 0.044715
      %v1251 = vmul.f32 %v1219, 0.044715
      %v1252 = vmul.f32 %v1220, 0.044715
      %v1253 = vmul.f32 %v1221, 0.044715
      %v1254 = vmul.f32 %v1222, 0.044715
      %v1255 = vmul.f32 %v1223, 0.044715
      %v1256 = vmul.f32 %v1224, 0.044715
      %v1257 = vmul.f32 %v1225, 0.044715
      %v1258 = vmul.f32 %v1226, 0.044715
      %v1259 = vmul.f32 %v1227, 0.044715
      %v1260 = vmul.f32 %v1244, %v1212
      %v1261 = vmul.f32 %v1245, %v1213
      %v1262 = vmul.f32 %v1246, %v1214
      %v1263 = vmul.f32 %v1247, %v1215
      %v1264 = vmul.f32 %v1248, %v1216
      %v1265 = vmul.f32 %v1249, %v1217
      %v1266 = vmul.f32 %v1250, %v1218
      %v1267 = vmul.f32 %v1251, %v1219
      %v1268 = vmul.f32 %v1252, %v1220
      %v1269 = vmul.f32 %v1253, %v1221
      %v1270 = vmul.f32 %v1254, %v1222
      %v1271 = vmul.f32 %v1255, %v1223
      %v1272 = vmul.f32 %v1256, %v1224
      %v1273 = vmul.f32 %v1257, %v1225
      %v1274 = vmul.f32 %v1258, %v1226
      %v1275 = vmul.f32 %v1259, %v1227
      %v1276 = vmul.f32 %v1260, %v1212
      %v1277 = vmul.f32 %v1261, %v1213
      %v1278 = vmul.f32 %v1262, %v1214
      %v1279 = vmul.f32 %v1263, %v1215
      %v1280 = vmul.f32 %v1264, %v1216
      %v1281 = vmul.f32 %v1265, %v1217
      %v1282 = vmul.f32 %v1266, %v1218
      %v1283 = vmul.f32 %v1267, %v1219
      %v1284 = vmul.f32 %v1268, %v1220
      %v1285 = vmul.f32 %v1269, %v1221
      %v1286 = vmul.f32 %v1270, %v1222
      %v1287 = vmul.f32 %v1271, %v1223
      %v1288 = vmul.f32 %v1272, %v1224
      %v1289 = vmul.f32 %v1273, %v1225
      %v1290 = vmul.f32 %v1274, %v1226
      %v1291 = vmul.f32 %v1275, %v1227
      %v1292 = vadd.f32 %v1212, %v1276
      %v1293 = vadd.f32 %v1213, %v1277
      %v1294 = vadd.f32 %v1214, %v1278
      %v1295 = vadd.f32 %v1215, %v1279
      %v1296 = vadd.f32 %v1216, %v1280
      %v1297 = vadd.f32 %v1217, %v1281
      %v1298 = vadd.f32 %v1218, %v1282
      %v1299 = vadd.f32 %v1219, %v1283
      %v1300 = vadd.f32 %v1220, %v1284
      %v1301 = vadd.f32 %v1221, %v1285
      %v1302 = vadd.f32 %v1222, %v1286
      %v1303 = vadd.f32 %v1223, %v1287
      %v1304 = vadd.f32 %v1224, %v1288
      %v1305 = vadd.f32 %v1225, %v1289
      %v1306 = vadd.f32 %v1226, %v1290
      %v1307 = vadd.f32 %v1227, %v1291
      %v1308 = vmul.f32 %v1292, 0.7978846
      %v1309 = vmul.f32 %v1293, 0.7978846
      %v1310 = vmul.f32 %v1294, 0.7978846
      %v1311 = vmul.f32 %v1295, 0.7978846
      %v1312 = vmul.f32 %v1296, 0.7978846
      %v1313 = vmul.f32 %v1297, 0.7978846
      %v1314 = vmul.f32 %v1298, 0.7978846
      %v1315 = vmul.f32 %v1299, 0.7978846
      %v1316 = vmul.f32 %v1300, 0.7978846
      %v1317 = vmul.f32 %v1301, 0.7978846
      %v1318 = vmul.f32 %v1302, 0.7978846
      %v1319 = vmul.f32 %v1303, 0.7978846
      %v1320 = vmul.f32 %v1304, 0.7978846
      %v1321 = vmul.f32 %v1305, 0.7978846
      %v1322 = vmul.f32 %v1306, 0.7978846
      %v1323 = vmul.f32 %v1307, 0.7978846
      %v1324 = vtanh.pop %v1308
      %v1325 = vtanh.pop %v1309
      %v1326 = vtanh.pop %v1310
      %v1327 = vtanh.pop %v1311
      %v1328 = vtanh.pop %v1312
      %v1329 = vtanh.pop %v1313
      %v1330 = vtanh.pop %v1314
      %v1331 = vtanh.pop %v1315
      %v1332 = vtanh.pop %v1316
      %v1333 = vtanh.pop %v1317
      %v1334 = vtanh.pop %v1318
      %v1335 = vtanh.pop %v1319
      %v1336 = vtanh.pop %v1320
      %v1337 = vtanh.pop %v1321
      %v1338 = vtanh.pop %v1322
      %v1339 = vtanh.pop %v1323
      %v1340 = vadd.f32 %v1324, 1.0
      %v1341 = vadd.f32 %v1325, 1.0
      %v1342 = vadd.f32 %v1326, 1.0
      %v1343 = vadd.f32 %v1327, 1.0
      %v1344 = vadd.f32 %v1328, 1.0
      %v1345 = vadd.f32 %v1329, 1.0
      %v1346 = vadd.f32 %v1330, 1.0
      %v1347 = vadd.f32 %v1331, 1.0
      %v1348 = vadd.f32 %v1332, 1.0
      %v1349 = vadd.f32 %v1333, 1.0
      %v1350 = vadd.f32 %v1334, 1.0
      %v1351 = vadd.f32 %v1335, 1.0
      %v1352 = vadd.f32 %v1336, 1.0
      %v1353 = vadd.f32 %v1337, 1.0
      %v1354 = vadd.f32 %v1338, 1.0
      %v1355 = vadd.f32 %v1339, 1.0
      %v1356 = vmul.f32 %v1228, %v1340
      %v1357 = vmul.f32 %v1229, %v1341
      %v1358 = vmul.f32 %v1230, %v1342
      %v1359 = vmul.f32 %v1231, %v1343
      %v1360 = vmul.f32 %v1232, %v1344
      %v1361 = vmul.f32 %v1233, %v1345
      %v1362 = vmul.f32 %v1234, %v1346
      %v1363 = vmul.f32 %v1235, %v1347
      %v1364 = vmul.f32 %v1236, %v1348
      %v1365 = vmul.f32 %v1237, %v1349
      %v1366 = vmul.f32 %v1238, %v1350
      %v1367 = vmul.f32 %v1239, %v1351
      %v1368 = vmul.f32 %v1240, %v1352
      %v1369 = vmul.f32 %v1241, %v1353
      %v1370 = vmul.f32 %v1242, %v1354
      %v1371 = vmul.f32 %v1243, %v1355
      %1372 = vst [vmem:[%s170] sm:$0xff] %v1356
      %1373 = vst [vmem:[%s170 + $0x8] sm:$0xff] %v1357
      %1374 = vst [vmem:[%s170 + $0x10] sm:$0xff] %v1358
      %1375 = vst [vmem:[%s170 + $0x18] sm:$0xff] %v1359
      %1376 = vst [vmem:[%s170 + $0x20] sm:$0xff] %v1360
      %1377 = vst [vmem:[%s170 + $0x28] sm:$0xff] %v1361
      %1378 = vst [vmem:[%s170 + $0x30] sm:$0xff] %v1362
      %1379 = vst [vmem:[%s170 + $0x38] sm:$0xff] %v1363
      %1380 = vst [vmem:[%s170 + $0x40] sm:$0xff] %v1364
      %1381 = vst [vmem:[%s170 + $0x48] sm:$0xff] %v1365
      %1382 = vst [vmem:[%s170 + $0x50] sm:$0xff] %v1366
      %1383 = vst [vmem:[%s170 + $0x58] sm:$0xff] %v1367
      %1384 = vst [vmem:[%s170 + $0x60] sm:$0xff] %v1368
      %1385 = vst [vmem:[%s170 + $0x68] sm:$0xff] %v1369
      %1386 = vst [vmem:[%s170 + $0x70] sm:$0xff] %v1370
      %1387 = vst [vmem:[%s170 + $0x78] sm:$0xff] %v1371
      %s1388 = scalar_lea.vmem [#allocation2], 192
      %v1389 = vld [vmem:[%s1388] sm:$0xff]
      %v1390 = vld [vmem:[%s1388 + $0x8] sm:$0xff]
      %v1391 = vld [vmem:[%s1388 + $0x10] sm:$0x3]
      %v1392 = vld [vmem:[%s1388 + $0x18] sm:$0xff]
      %v1393 = vld [vmem:[%s1388 + $0x20] sm:$0xff]
      %v1394 = vld [vmem:[%s1388 + $0x28] sm:$0x3]
      %v1395 = vld [vmem:[%s1388 + $0x30] sm:$0xff]
      %v1396 = vld [vmem:[%s1388 + $0x38] sm:$0xff]
      %v1397 = vld [vmem:[%s1388 + $0x40] sm:$0x3]
      %v1398 = vld [vmem:[%s1388 + $0x48] sm:$0xff]
      %v1399 = vld [vmem:[%s1388 + $0x50] sm:$0xff]
      %v1400 = vld [vmem:[%s1388 + $0x58] sm:$0x3]
      %v1401 = vld [vmem:[%s1388 + $0x60] sm:$0xff]
      %v1402 = vld [vmem:[%s1388 + $0x68] sm:$0xff]
      %v1403 = vld [vmem:[%s1388 + $0x70] sm:$0x3]
      %v1404 = vld [vmem:[%s1388 + $0x78] sm:$0xff]
      %v1405 = vld [vmem:[%s1388 + $0x80] sm:$0xff]
      %v1406 = vld [vmem:[%s1388 + $0x88] sm:$0x3]
      %v1407 = vld [vmem:[%s1388 + $0x90] sm:$0xff]
      %v1408 = vld [vmem:[%s1388 + $0x98] sm:$0xff]
      %v1409 = vld [vmem:[%s1388 + $0xa0] sm:$0x3]
      %v1410 = vld [vmem:[%s1388 + $0xa8] sm:$0xff]
      %v1411 = vld [vmem:[%s1388 + $0xb0] sm:$0xff]
      %v1412 = vld [vmem:[%s1388 + $0xb8] sm:$0x3]
      %v1413 = vmul.f32 %v1389, %v306
      %v1414 = vmul.f32 %v1390, %v306
      %v1415 = vmul.f32 %v1392, %v306
      %v1416 = vmul.f32 %v1393, %v306
      %v1417 = vmul.f32 %v1395, %v306
      %v1418 = vmul.f32 %v1396, %v306
      %v1419 = vmul.f32 %v1398, %v306
      %v1420 = vmul.f32 %v1399, %v306
      %v1421 = vmul.f32 %v1401, %v306
      %v1422 = vmul.f32 %v1402, %v306
      %v1423 = vmul.f32 %v1404, %v306
      %v1424 = vmul.f32 %v1405, %v306
      %v1425 = vmul.f32 %v1407, %v306
      %v1426 = vmul.f32 %v1408, %v306
      %v1427 = vmul.f32 %v1410, %v306
      %v1428 = vmul.f32 %v1411, %v306
      %v1429 = vadd.f32 %v1413, 0.0
      %v1430 = vadd.f32 %v1414, 0.0
      %v1431 = vadd.f32 %v1415, 0.0
      %v1432 = vadd.f32 %v1416, 0.0
      %v1433 = vadd.f32 %v1417, 0.0
      %v1434 = vadd.f32 %v1418, 0.0
      %v1435 = vadd.f32 %v1419, 0.0
      %v1436 = vadd.f32 %v1420, 0.0
      %v1437 = vadd.f32 %v1421, 0.0
      %v1438 = vadd.f32 %v1422, 0.0
      %v1439 = vadd.f32 %v1423, 0.0
      %v1440 = vadd.f32 %v1424, 0.0
      %v1441 = vadd.f32 %v1425, 0.0
      %v1442 = vadd.f32 %v1426, 0.0
      %v1443 = vadd.f32 %v1427, 0.0
      %v1444 = vadd.f32 %v1428, 0.0
      %v1445 = vmul.f32 %v1389, %v342
      %v1446 = vmul.f32 %v1390, %v342
      %v1447 = vmul.f32 %v1391, %v342
      %v1448 = vmul.f32 %v1392, %v342
      %v1449 = vmul.f32 %v1393, %v342
      %v1450 = vmul.f32 %v1394, %v342
      %v1451 = vmul.f32 %v1395, %v342
      %v1452 = vmul.f32 %v1396, %v342
      %v1453 = vmul.f32 %v1397, %v342
      %v1454 = vmul.f32 %v1398, %v342
      %v1455 = vmul.f32 %v1399, %v342
      %v1456 = vmul.f32 %v1400, %v342
      %v1457 = vmul.f32 %v1401, %v342
      %v1458 = vmul.f32 %v1402, %v342
      %v1459 = vmul.f32 %v1403, %v342
      %v1460 = vmul.f32 %v1404, %v342
      %v1461 = vmul.f32 %v1405, %v342
      %v1462 = vmul.f32 %v1406, %v342
      %v1463 = vmul.f32 %v1407, %v342
      %v1464 = vmul.f32 %v1408, %v342
      %v1465 = vmul.f32 %v1409, %v342
      %v1466 = vmul.f32 %v1410, %v342
      %v1467 = vmul.f32 %v1411, %v342
      %v1468 = vmul.f32 %v1412, %v342
      %v1493 = vrot.slane %v1445, 1
      %v1494 = vrot.slane %v1446, 1
      %v1495 = vsel %vm391, %v1493, %v1494
      %v1496 = vrot.slane %v1447, 1
      %v1497 = vsel %vm391, %v1494, %v1496
      %v1498 = vrot.slane %v1448, 1
      %v1499 = vrot.slane %v1449, 1
      %v1500 = vsel %vm391, %v1498, %v1499
      %v1501 = vrot.slane %v1450, 1
      %v1502 = vsel %vm391, %v1499, %v1501
      %v1503 = vrot.slane %v1451, 1
      %v1504 = vrot.slane %v1452, 1
      %v1505 = vsel %vm391, %v1503, %v1504
      %v1506 = vrot.slane %v1453, 1
      %v1507 = vsel %vm391, %v1504, %v1506
      %v1508 = vrot.slane %v1454, 1
      %v1509 = vrot.slane %v1455, 1
      %v1510 = vsel %vm391, %v1508, %v1509
      %v1511 = vrot.slane %v1456, 1
      %v1512 = vsel %vm391, %v1509, %v1511
      %v1513 = vrot.slane %v1457, 1
      %v1514 = vrot.slane %v1458, 1
      %v1515 = vsel %vm391, %v1513, %v1514
      %v1516 = vrot.slane %v1459, 1
      %v1517 = vsel %vm391, %v1514, %v1516
      %v1518 = vrot.slane %v1460, 1
      %v1519 = vrot.slane %v1461, 1
      %v1520 = vsel %vm391, %v1518, %v1519
      %v1521 = vrot.slane %v1462, 1
      %v1522 = vsel %vm391, %v1519, %v1521
      %v1523 = vrot.slane %v1463, 1
      %v1524 = vrot.slane %v1464, 1
      %v1525 = vsel %vm391, %v1523, %v1524
      %v1526 = vrot.slane %v1465, 1
      %v1527 = vsel %vm391, %v1524, %v1526
      %v1528 = vrot.slane %v1466, 1
      %v1529 = vrot.slane %v1467, 1
      %v1530 = vsel %vm391, %v1528, %v1529
      %v1531 = vrot.slane %v1468, 1
      %v1532 = vsel %vm391, %v1529, %v1531
      %v1549 = vadd.f32 %v1429, %v1495
      %v1550 = vadd.f32 %v1430, %v1497
      %v1551 = vadd.f32 %v1431, %v1500
      %v1552 = vadd.f32 %v1432, %v1502
      %v1553 = vadd.f32 %v1433, %v1505
      %v1554 = vadd.f32 %v1434, %v1507
      %v1555 = vadd.f32 %v1435, %v1510
      %v1556 = vadd.f32 %v1436, %v1512
      %v1557 = vadd.f32 %v1437, %v1515
      %v1558 = vadd.f32 %v1438, %v1517
      %v1559 = vadd.f32 %v1439, %v1520
      %v1560 = vadd.f32 %v1440, %v1522
      %v1561 = vadd.f32 %v1441, %v1525
      %v1562 = vadd.f32 %v1442, %v1527
      %v1563 = vadd.f32 %v1443, %v1530
      %v1564 = vadd.f32 %v1444, %v1532
      %v1565 = vmul.f32 %v1389, %v467
      %v1566 = vmul.f32 %v1390, %v467
      %v1567 = vmul.f32 %v1391, %v467
      %v1568 = vmul.f32 %v1392, %v467
      %v1569 = vmul.f32 %v1393, %v467
      %v1570 = vmul.f32 %v1394, %v467
      %v1571 = vmul.f32 %v1395, %v467
      %v1572 = vmul.f32 %v1396, %v467
      %v1573 = vmul.f32 %v1397, %v467
      %v1574 = vmul.f32 %v1398, %v467
      %v1575 = vmul.f32 %v1399, %v467
      %v1576 = vmul.f32 %v1400, %v467
      %v1577 = vmul.f32 %v1401, %v467
      %v1578 = vmul.f32 %v1402, %v467
      %v1579 = vmul.f32 %v1403, %v467
      %v1580 = vmul.f32 %v1404, %v467
      %v1581 = vmul.f32 %v1405, %v467
      %v1582 = vmul.f32 %v1406, %v467
      %v1583 = vmul.f32 %v1407, %v467
      %v1584 = vmul.f32 %v1408, %v467
      %v1585 = vmul.f32 %v1409, %v467
      %v1586 = vmul.f32 %v1410, %v467
      %v1587 = vmul.f32 %v1411, %v467
      %v1588 = vmul.f32 %v1412, %v467
      %v1613 = vrot.slane %v1565, 2
      %v1614 = vrot.slane %v1566, 2
      %v1615 = vsel %vm516, %v1613, %v1614
      %v1616 = vrot.slane %v1567, 2
      %v1617 = vsel %vm516, %v1614, %v1616
      %v1618 = vrot.slane %v1568, 2
      %v1619 = vrot.slane %v1569, 2
      %v1620 = vsel %vm516, %v1618, %v1619
      %v1621 = vrot.slane %v1570, 2
      %v1622 = vsel %vm516, %v1619, %v1621
      %v1623 = vrot.slane %v1571, 2
      %v1624 = vrot.slane %v1572, 2
      %v1625 = vsel %vm516, %v1623, %v1624
      %v1626 = vrot.slane %v1573, 2
      %v1627 = vsel %vm516, %v1624, %v1626
      %v1628 = vrot.slane %v1574, 2
      %v1629 = vrot.slane %v1575, 2
      %v1630 = vsel %vm516, %v1628, %v1629
      %v1631 = vrot.slane %v1576, 2
      %v1632 = vsel %vm516, %v1629, %v1631
      %v1633 = vrot.slane %v1577, 2
      %v1634 = vrot.slane %v1578, 2
      %v1635 = vsel %vm516, %v1633, %v1634
      %v1636 = vrot.slane %v1579, 2
      %v1637 = vsel %vm516, %v1634, %v1636
      %v1638 = vrot.slane %v1580, 2
      %v1639 = vrot.slane %v1581, 2
      %v1640 = vsel %vm516, %v1638, %v1639
      %v1641 = vrot.slane %v1582, 2
      %v1642 = vsel %vm516, %v1639, %v1641
      %v1643 = vrot.slane %v1583, 2
      %v1644 = vrot.slane %v1584, 2
      %v1645 = vsel %vm516, %v1643, %v1644
      %v1646 = vrot.slane %v1585, 2
      %v1647 = vsel %vm516, %v1644, %v1646
      %v1648 = vrot.slane %v1586, 2
      %v1649 = vrot.slane %v1587, 2
      %v1650 = vsel %vm516, %v1648, %v1649
      %v1651 = vrot.slane %v1588, 2
      %v1652 = vsel %vm516, %v1649, %v1651
      %v1669 = vadd.f32 %v1549, %v1615
      %v1670 = vadd.f32 %v1550, %v1617
      %v1671 = vadd.f32 %v1551, %v1620
      %v1672 = vadd.f32 %v1552, %v1622
      %v1673 = vadd.f32 %v1553, %v1625
      %v1674 = vadd.f32 %v1554, %v1627
      %v1675 = vadd.f32 %v1555, %v1630
      %v1676 = vadd.f32 %v1556, %v1632
      %v1677 = vadd.f32 %v1557, %v1635
      %v1678 = vadd.f32 %v1558, %v1637
      %v1679 = vadd.f32 %v1559, %v1640
      %v1680 = vadd.f32 %v1560, %v1642
      %v1681 = vadd.f32 %v1561, %v1645
      %v1682 = vadd.f32 %v1562, %v1647
      %v1683 = vadd.f32 %v1563, %v1650
      %v1684 = vadd.f32 %v1564, %v1652
      %s1685 = scalar_lea.vmem [#allocation2], 216
      %v1686 = vld [vmem:[%s1685] sm:$0xff]
      %v1687 = vld [vmem:[%s1685 + $0x8] sm:$0xff]
      %v1688 = vld [vmem:[%s1685 + $0x10] sm:$0x3]
      %v1689 = vld [vmem:[%s1685 + $0x18] sm:$0xff]
      %v1690 = vld [vmem:[%s1685 + $0x20] sm:$0xff]
      %v1691 = vld [vmem:[%s1685 + $0x28] sm:$0x3]
      %v1692 = vld [vmem:[%s1685 + $0x30] sm:$0xff]
      %v1693 = vld [vmem:[%s1685 + $0x38] sm:$0xff]
      %v1694 = vld [vmem:[%s1685 + $0x40] sm:$0x3]
      %v1695 = vld [vmem:[%s1685 + $0x48] sm:$0xff]
      %v1696 = vld [vmem:[%s1685 + $0x50] sm:$0xff]
      %v1697 = vld [vmem:[%s1685 + $0x58] sm:$0x3]
      %v1698 = vld [vmem:[%s1685 + $0x60] sm:$0xff]
      %v1699 = vld [vmem:[%s1685 + $0x68] sm:$0xff]
      %v1700 = vld [vmem:[%s1685 + $0x70] sm:$0x3]
      %v1701 = vld [vmem:[%s1685 + $0x78] sm:$0xff]
      %v1702 = vld [vmem:[%s1685 + $0x80] sm:$0xff]
      %v1703 = vld [vmem:[%s1685 + $0x88] sm:$0x3]
      %v1704 = vld [vmem:[%s1685 + $0x90] sm:$0xff]
      %v1705 = vld [vmem:[%s1685 + $0x98] sm:$0xff]
      %v1706 = vld [vmem:[%s1685 + $0xa0] sm:$0x3]
      %v1707 = vld [vmem:[%s1685 + $0xa8] sm:$0xff]
      %v1708 = vld [vmem:[%s1685 + $0xb0] sm:$0xff]
      %v1709 = vld [vmem:[%s1685 + $0xb8] sm:$0x3]
      %v1710 = vmul.f32 %v1686, %v616
      %v1711 = vmul.f32 %v1687, %v616
      %v1712 = vmul.f32 %v1689, %v616
      %v1713 = vmul.f32 %v1690, %v616
      %v1714 = vmul.f32 %v1692, %v616
      %v1715 = vmul.f32 %v1693, %v616
      %v1716 = vmul.f32 %v1695, %v616
      %v1717 = vmul.f32 %v1696, %v616
      %v1718 = vmul.f32 %v1698, %v616
      %v1719 = vmul.f32 %v1699, %v616
      %v1720 = vmul.f32 %v1701, %v616
      %v1721 = vmul.f32 %v1702, %v616
      %v1722 = vmul.f32 %v1704, %v616
      %v1723 = vmul.f32 %v1705, %v616
      %v1724 = vmul.f32 %v1707, %v616
      %v1725 = vmul.f32 %v1708, %v616
      %v1726 = vadd.f32 %v1669, %v1710
      %v1727 = vadd.f32 %v1670, %v1711
      %v1728 = vadd.f32 %v1671, %v1712
      %v1729 = vadd.f32 %v1672, %v1713
      %v1730 = vadd.f32 %v1673, %v1714
      %v1731 = vadd.f32 %v1674, %v1715
      %v1732 = vadd.f32 %v1675, %v1716
      %v1733 = vadd.f32 %v1676, %v1717
      %v1734 = vadd.f32 %v1677, %v1718
      %v1735 = vadd.f32 %v1678, %v1719
      %v1736 = vadd.f32 %v1679, %v1720
      %v1737 = vadd.f32 %v1680, %v1721
      %v1738 = vadd.f32 %v1681, %v1722
      %v1739 = vadd.f32 %v1682, %v1723
      %v1740 = vadd.f32 %v1683, %v1724
      %v1741 = vadd.f32 %v1684, %v1725
      %v1742 = vmul.f32 %v1686, %v652
      %v1743 = vmul.f32 %v1687, %v652
      %v1744 = vmul.f32 %v1688, %v652
      %v1745 = vmul.f32 %v1689, %v652
      %v1746 = vmul.f32 %v1690, %v652
      %v1747 = vmul.f32 %v1691, %v652
      %v1748 = vmul.f32 %v1692, %v652
      %v1749 = vmul.f32 %v1693, %v652
      %v1750 = vmul.f32 %v1694, %v652
      %v1751 = vmul.f32 %v1695, %v652
      %v1752 = vmul.f32 %v1696, %v652
      %v1753 = vmul.f32 %v1697, %v652
      %v1754 = vmul.f32 %v1698, %v652
      %v1755 = vmul.f32 %v1699, %v652
      %v1756 = vmul.f32 %v1700, %v652
      %v1757 = vmul.f32 %v1701, %v652
      %v1758 = vmul.f32 %v1702, %v652
      %v1759 = vmul.f32 %v1703, %v652
      %v1760 = vmul.f32 %v1704, %v652
      %v1761 = vmul.f32 %v1705, %v652
      %v1762 = vmul.f32 %v1706, %v652
      %v1763 = vmul.f32 %v1707, %v652
      %v1764 = vmul.f32 %v1708, %v652
      %v1765 = vmul.f32 %v1709, %v652
      %v1790 = vrot.slane %v1742, 1
      %v1791 = vrot.slane %v1743, 1
      %v1792 = vsel %vm391, %v1790, %v1791
      %v1793 = vrot.slane %v1744, 1
      %v1794 = vsel %vm391, %v1791, %v1793
      %v1795 = vrot.slane %v1745, 1
      %v1796 = vrot.slane %v1746, 1
      %v1797 = vsel %vm391, %v1795, %v1796
      %v1798 = vrot.slane %v1747, 1
      %v1799 = vsel %vm391, %v1796, %v1798
      %v1800 = vrot.slane %v1748, 1
      %v1801 = vrot.slane %v1749, 1
      %v1802 = vsel %vm391, %v1800, %v1801
      %v1803 = vrot.slane %v1750, 1
      %v1804 = vsel %vm391, %v1801, %v1803
      %v1805 = vrot.slane %v1751, 1
      %v1806 = vrot.slane %v1752, 1
      %v1807 = vsel %vm391, %v1805, %v1806
      %v1808 = vrot.slane %v1753, 1
      %v1809 = vsel %vm391, %v1806, %v1808
      %v1810 = vrot.slane %v1754, 1
      %v1811 = vrot.slane %v1755, 1
      %v1812 = vsel %vm391, %v1810, %v1811
      %v1813 = vrot.slane %v1756, 1
      %v1814 = vsel %vm391, %v1811, %v1813
      %v1815 = vrot.slane %v1757, 1
      %v1816 = vrot.slane %v1758, 1
      %v1817 = vsel %vm391, %v1815, %v1816
      %v1818 = vrot.slane %v1759, 1
      %v1819 = vsel %vm391, %v1816, %v1818
      %v1820 = vrot.slane %v1760, 1
      %v1821 = vrot.slane %v1761, 1
      %v1822 = vsel %vm391, %v1820, %v1821
      %v1823 = vrot.slane %v1762, 1
      %v1824 = vsel %vm391, %v1821, %v1823
      %v1825 = vrot.slane %v1763, 1
      %v1826 = vrot.slane %v1764, 1
      %v1827 = vsel %vm391, %v1825, %v1826
      %v1828 = vrot.slane %v1765, 1
      %v1829 = vsel %vm391, %v1826, %v1828
      %v1846 = vadd.f32 %v1726, %v1792
      %v1847 = vadd.f32 %v1727, %v1794
      %v1848 = vadd.f32 %v1728, %v1797
      %v1849 = vadd.f32 %v1729, %v1799
      %v1850 = vadd.f32 %v1730, %v1802
      %v1851 = vadd.f32 %v1731, %v1804
      %v1852 = vadd.f32 %v1732, %v1807
      %v1853 = vadd.f32 %v1733, %v1809
      %v1854 = vadd.f32 %v1734, %v1812
      %v1855 = vadd.f32 %v1735, %v1814
      %v1856 = vadd.f32 %v1736, %v1817
      %v1857 = vadd.f32 %v1737, %v1819
      %v1858 = vadd.f32 %v1738, %v1822
      %v1859 = vadd.f32 %v1739, %v1824
      %v1860 = vadd.f32 %v1740, %v1827
      %v1861 = vadd.f32 %v1741, %v1829
      %v1862 = vmul.f32 %v1686, %v776
      %v1863 = vmul.f32 %v1687, %v776
      %v1864 = vmul.f32 %v1688, %v776
      %v1865 = vmul.f32 %v1689, %v776
      %v1866 = vmul.f32 %v1690, %v776
      %v1867 = vmul.f32 %v1691, %v776
      %v1868 = vmul.f32 %v1692, %v776
      %v1869 = vmul.f32 %v1693, %v776
      %v1870 = vmul.f32 %v1694, %v776
      %v1871 = vmul.f32 %v1695, %v776
      %v1872 = vmul.f32 %v1696, %v776
      %v1873 = vmul.f32 %v1697, %v776
      %v1874 = vmul.f32 %v1698, %v776
      %v1875 = vmul.f32 %v1699, %v776
      %v1876 = vmul.f32 %v1700, %v776
      %v1877 = vmul.f32 %v1701, %v776
      %v1878 = vmul.f32 %v1702, %v776
      %v1879 = vmul.f32 %v1703, %v776
      %v1880 = vmul.f32 %v1704, %v776
      %v1881 = vmul.f32 %v1705, %v776
      %v1882 = vmul.f32 %v1706, %v776
      %v1883 = vmul.f32 %v1707, %v776
      %v1884 = vmul.f32 %v1708, %v776
      %v1885 = vmul.f32 %v1709, %v776
      %v1910 = vrot.slane %v1862, 2
      %v1911 = vrot.slane %v1863, 2
      %v1912 = vsel %vm516, %v1910, %v1911
      %v1913 = vrot.slane %v1864, 2
      %v1914 = vsel %vm516, %v1911, %v1913
      %v1915 = vrot.slane %v1865, 2
      %v1916 = vrot.slane %v1866, 2
      %v1917 = vsel %vm516, %v1915, %v1916
      %v1918 = vrot.slane %v1867, 2
      %v1919 = vsel %vm516, %v1916, %v1918
      %v1920 = vrot.slane %v1868, 2
      %v1921 = vrot.slane %v1869, 2
      %v1922 = vsel %vm516, %v1920, %v1921
      %v1923 = vrot.slane %v1870, 2
      %v1924 = vsel %vm516, %v1921, %v1923
      %v1925 = vrot.slane %v1871, 2
      %v1926 = vrot.slane %v1872, 2
      %v1927 = vsel %vm516, %v1925, %v1926
      %v1928 = vrot.slane %v1873, 2
      %v1929 = vsel %vm516, %v1926, %v1928
      %v1930 = vrot.slane %v1874, 2
      %v1931 = vrot.slane %v1875, 2
      %v1932 = vsel %vm516, %v1930, %v1931
      %v1933 = vrot.slane %v1876, 2
      %v1934 = vsel %vm516, %v1931, %v1933
      %v1935 = vrot.slane %v1877, 2
      %v1936 = vrot.slane %v1878, 2
      %v1937 = vsel %vm516, %v1935, %v1936
      %v1938 = vrot.slane %v1879, 2
      %v1939 = vsel %vm516, %v1936, %v1938
      %v1940 = vrot.slane %v1880, 2
      %v1941 = vrot.slane %v1881, 2
      %v1942 = vsel %vm516, %v1940, %v1941
      %v1943 = vrot.slane %v1882, 2
      %v1944 = vsel %vm516, %v1941, %v1943
      %v1945 = vrot.slane %v1883, 2
      %v1946 = vrot.slane %v1884, 2
      %v1947 = vsel %vm516, %v1945, %v1946
      %v1948 = vrot.slane %v1885, 2
      %v1949 = vsel %vm516, %v1946, %v1948
      %v1966 = vadd.f32 %v1846, %v1912
      %v1967 = vadd.f32 %v1847, %v1914
      %v1968 = vadd.f32 %v1848, %v1917
      %v1969 = vadd.f32 %v1849, %v1919
      %v1970 = vadd.f32 %v1850, %v1922
      %v1971 = vadd.f32 %v1851, %v1924
      %v1972 = vadd.f32 %v1852, %v1927
      %v1973 = vadd.f32 %v1853, %v1929
      %v1974 = vadd.f32 %v1854, %v1932
      %v1975 = vadd.f32 %v1855, %v1934
      %v1976 = vadd.f32 %v1856, %v1937
      %v1977 = vadd.f32 %v1857, %v1939
      %v1978 = vadd.f32 %v1858, %v1942
      %v1979 = vadd.f32 %v1859, %v1944
      %v1980 = vadd.f32 %v1860, %v1947
      %v1981 = vadd.f32 %v1861, %v1949
      %s1982 = scalar_lea.vmem [#allocation2], 240
      %v1983 = vld [vmem:[%s1982] sm:$0xff]
      %v1984 = vld [vmem:[%s1982 + $0x8] sm:$0xff]
      %v1985 = vld [vmem:[%s1982 + $0x10] sm:$0x3]
      %v1986 = vld [vmem:[%s1982 + $0x18] sm:$0xff]
      %v1987 = vld [vmem:[%s1982 + $0x20] sm:$0xff]
      %v1988 = vld [vmem:[%s1982 + $0x28] sm:$0x3]
      %v1989 = vld [vmem:[%s1982 + $0x30] sm:$0xff]
      %v1990 = vld [vmem:[%s1982 + $0x38] sm:$0xff]
      %v1991 = vld [vmem:[%s1982 + $0x40] sm:$0x3]
      %v1992 = vld [vmem:[%s1982 + $0x48] sm:$0xff]
      %v1993 = vld [vmem:[%s1982 + $0x50] sm:$0xff]
      %v1994 = vld [vmem:[%s1982 + $0x58] sm:$0x3]
      %v1995 = vld [vmem:[%s1982 + $0x60] sm:$0xff]
      %v1996 = vld [vmem:[%s1982 + $0x68] sm:$0xff]
      %v1997 = vld [vmem:[%s1982 + $0x70] sm:$0x3]
      %v1998 = vld [vmem:[%s1982 + $0x78] sm:$0xff]
      %v1999 = vld [vmem:[%s1982 + $0x80] sm:$0xff]
      %v2000 = vld [vmem:[%s1982 + $0x88] sm:$0x3]
      %v2001 = vld [vmem:[%s1982 + $0x90] sm:$0xff]
      %v2002 = vld [vmem:[%s1982 + $0x98] sm:$0xff]
      %v2003 = vld [vmem:[%s1982 + $0xa0] sm:$0x3]
      %v2004 = vld [vmem:[%s1982 + $0xa8] sm:$0xff]
      %v2005 = vld [vmem:[%s1982 + $0xb0] sm:$0xff]
      %v2006 = vld [vmem:[%s1982 + $0xb8] sm:$0x3]
      %v2007 = vmul.f32 %v1983, %v925
      %v2008 = vmul.f32 %v1984, %v925
      %v2009 = vmul.f32 %v1986, %v925
      %v2010 = vmul.f32 %v1987, %v925
      %v2011 = vmul.f32 %v1989, %v925
      %v2012 = vmul.f32 %v1990, %v925
      %v2013 = vmul.f32 %v1992, %v925
      %v2014 = vmul.f32 %v1993, %v925
      %v2015 = vmul.f32 %v1995, %v925
      %v2016 = vmul.f32 %v1996, %v925
      %v2017 = vmul.f32 %v1998, %v925
      %v2018 = vmul.f32 %v1999, %v925
      %v2019 = vmul.f32 %v2001, %v925
      %v2020 = vmul.f32 %v2002, %v925
      %v2021 = vmul.f32 %v2004, %v925
      %v2022 = vmul.f32 %v2005, %v925
      %v2023 = vadd.f32 %v1966, %v2007
      %v2024 = vadd.f32 %v1967, %v2008
      %v2025 = vadd.f32 %v1968, %v2009
      %v2026 = vadd.f32 %v1969, %v2010
      %v2027 = vadd.f32 %v1970, %v2011
      %v2028 = vadd.f32 %v1971, %v2012
      %v2029 = vadd.f32 %v1972, %v2013
      %v2030 = vadd.f32 %v1973, %v2014
      %v2031 = vadd.f32 %v1974, %v2015
      %v2032 = vadd.f32 %v1975, %v2016
      %v2033 = vadd.f32 %v1976, %v2017
      %v2034 = vadd.f32 %v1977, %v2018
      %v2035 = vadd.f32 %v1978, %v2019
      %v2036 = vadd.f32 %v1979, %v2020
      %v2037 = vadd.f32 %v1980, %v2021
      %v2038 = vadd.f32 %v1981, %v2022
      %v2039 = vmul.f32 %v1983, %v961
      %v2040 = vmul.f32 %v1984, %v961
      %v2041 = vmul.f32 %v1985, %v961
      %v2042 = vmul.f32 %v1986, %v961
      %v2043 = vmul.f32 %v1987, %v961
      %v2044 = vmul.f32 %v1988, %v961
      %v2045 = vmul.f32 %v1989, %v961
      %v2046 = vmul.f32 %v1990, %v961
      %v2047 = vmul.f32 %v1991, %v961
      %v2048 = vmul.f32 %v1992, %v961
      %v2049 = vmul.f32 %v1993, %v961
      %v2050 = vmul.f32 %v1994, %v961
      %v2051 = vmul.f32 %v1995, %v961
      %v2052 = vmul.f32 %v1996, %v961
      %v2053 = vmul.f32 %v1997, %v961
      %v2054 = vmul.f32 %v1998, %v961
      %v2055 = vmul.f32 %v1999, %v961
      %v2056 = vmul.f32 %v2000, %v961
      %v2057 = vmul.f32 %v2001, %v961
      %v2058 = vmul.f32 %v2002, %v961
      %v2059 = vmul.f32 %v2003, %v961
      %v2060 = vmul.f32 %v2004, %v961
      %v2061 = vmul.f32 %v2005, %v961
      %v2062 = vmul.f32 %v2006, %v961
      %v2087 = vrot.slane %v2039, 1
      %v2088 = vrot.slane %v2040, 1
      %v2089 = vsel %vm391, %v2087, %v2088
      %v2090 = vrot.slane %v2041, 1
      %v2091 = vsel %vm391, %v2088, %v2090
      %v2092 = vrot.slane %v2042, 1
      %v2093 = vrot.slane %v2043, 1
      %v2094 = vsel %vm391, %v2092, %v2093
      %v2095 = vrot.slane %v2044, 1
      %v2096 = vsel %vm391, %v2093, %v2095
      %v2097 = vrot.slane %v2045, 1
      %v2098 = vrot.slane %v2046, 1
      %v2099 = vsel %vm391, %v2097, %v2098
      %v2100 = vrot.slane %v2047, 1
      %v2101 = vsel %vm391, %v2098, %v2100
      %v2102 = vrot.slane %v2048, 1
      %v2103 = vrot.slane %v2049, 1
      %v2104 = vsel %vm391, %v2102, %v2103
      %v2105 = vrot.slane %v2050, 1
      %v2106 = vsel %vm391, %v2103, %v2105
      %v2107 = vrot.slane %v2051, 1
      %v2108 = vrot.slane %v2052, 1
      %v2109 = vsel %vm391, %v2107, %v2108
      %v2110 = vrot.slane %v2053, 1
      %v2111 = vsel %vm391, %v2108, %v2110
      %v2112 = vrot.slane %v2054, 1
      %v2113 = vrot.slane %v2055, 1
      %v2114 = vsel %vm391, %v2112, %v2113
      %v2115 = vrot.slane %v2056, 1
      %v2116 = vsel %vm391, %v2113, %v2115
      %v2117 = vrot.slane %v2057, 1
      %v2118 = vrot.slane %v2058, 1
      %v2119 = vsel %vm391, %v2117, %v2118
      %v2120 = vrot.slane %v2059, 1
      %v2121 = vsel %vm391, %v2118, %v2120
      %v2122 = vrot.slane %v2060, 1
      %v2123 = vrot.slane %v2061, 1
      %v2124 = vsel %vm391, %v2122, %v2123
      %v2125 = vrot.slane %v2062, 1
      %v2126 = vsel %vm391, %v2123, %v2125
      %v2143 = vadd.f32 %v2023, %v2089
      %v2144 = vadd.f32 %v2024, %v2091
      %v2145 = vadd.f32 %v2025, %v2094
      %v2146 = vadd.f32 %v2026, %v2096
      %v2147 = vadd.f32 %v2027, %v2099
      %v2148 = vadd.f32 %v2028, %v2101
      %v2149 = vadd.f32 %v2029, %v2104
      %v2150 = vadd.f32 %v2030, %v2106
      %v2151 = vadd.f32 %v2031, %v2109
      %v2152 = vadd.f32 %v2032, %v2111
      %v2153 = vadd.f32 %v2033, %v2114
      %v2154 = vadd.f32 %v2034, %v2116
      %v2155 = vadd.f32 %v2035, %v2119
      %v2156 = vadd.f32 %v2036, %v2121
      %v2157 = vadd.f32 %v2037, %v2124
      %v2158 = vadd.f32 %v2038, %v2126
      %v2159 = vmul.f32 %v1983, %v1085
      %v2160 = vmul.f32 %v1984, %v1085
      %v2161 = vmul.f32 %v1985, %v1085
      %v2162 = vmul.f32 %v1986, %v1085
      %v2163 = vmul.f32 %v1987, %v1085
      %v2164 = vmul.f32 %v1988, %v1085
      %v2165 = vmul.f32 %v1989, %v1085
      %v2166 = vmul.f32 %v1990, %v1085
      %v2167 = vmul.f32 %v1991, %v1085
      %v2168 = vmul.f32 %v1992, %v1085
      %v2169 = vmul.f32 %v1993, %v1085
      %v2170 = vmul.f32 %v1994, %v1085
      %v2171 = vmul.f32 %v1995, %v1085
      %v2172 = vmul.f32 %v1996, %v1085
      %v2173 = vmul.f32 %v1997, %v1085
      %v2174 = vmul.f32 %v1998, %v1085
      %v2175 = vmul.f32 %v1999, %v1085
      %v2176 = vmul.f32 %v2000, %v1085
      %v2177 = vmul.f32 %v2001, %v1085
      %v2178 = vmul.f32 %v2002, %v1085
      %v2179 = vmul.f32 %v2003, %v1085
      %v2180 = vmul.f32 %v2004, %v1085
      %v2181 = vmul.f32 %v2005, %v1085
      %v2182 = vmul.f32 %v2006, %v1085
      %v2207 = vrot.slane %v2159, 2
      %v2208 = vrot.slane %v2160, 2
      %v2209 = vsel %vm516, %v2207, %v2208
      %v2210 = vrot.slane %v2161, 2
      %v2211 = vsel %vm516, %v2208, %v2210
      %v2212 = vrot.slane %v2162, 2
      %v2213 = vrot.slane %v2163, 2
      %v2214 = vsel %vm516, %v2212, %v2213
      %v2215 = vrot.slane %v2164, 2
      %v2216 = vsel %vm516, %v2213, %v2215
      %v2217 = vrot.slane %v2165, 2
      %v2218 = vrot.slane %v2166, 2
      %v2219 = vsel %vm516, %v2217, %v2218
      %v2220 = vrot.slane %v2167, 2
      %v2221 = vsel %vm516, %v2218, %v2220
      %v2222 = vrot.slane %v2168, 2
      %v2223 = vrot.slane %v2169, 2
      %v2224 = vsel %vm516, %v2222, %v2223
      %v2225 = vrot.slane %v2170, 2
      %v2226 = vsel %vm516, %v2223, %v2225
      %v2227 = vrot.slane %v2171, 2
      %v2228 = vrot.slane %v2172, 2
      %v2229 = vsel %vm516, %v2227, %v2228
      %v2230 = vrot.slane %v2173, 2
      %v2231 = vsel %vm516, %v2228, %v2230
      %v2232 = vrot.slane %v2174, 2
      %v2233 = vrot.slane %v2175, 2
      %v2234 = vsel %vm516, %v2232, %v2233
      %v2235 = vrot.slane %v2176, 2
      %v2236 = vsel %vm516, %v2233, %v2235
      %v2237 = vrot.slane %v2177, 2
      %v2238 = vrot.slane %v2178, 2
      %v2239 = vsel %vm516, %v2237, %v2238
      %v2240 = vrot.slane %v2179, 2
      %v2241 = vsel %vm516, %v2238, %v2240
      %v2242 = vrot.slane %v2180, 2
      %v2243 = vrot.slane %v2181, 2
      %v2244 = vsel %vm516, %v2242, %v2243
      %v2245 = vrot.slane %v2182, 2
      %v2246 = vsel %vm516, %v2243, %v2245
      %v2263 = vadd.f32 %v2143, %v2209
      %v2264 = vadd.f32 %v2144, %v2211
      %v2265 = vadd.f32 %v2145, %v2214
      %v2266 = vadd.f32 %v2146, %v2216
      %v2267 = vadd.f32 %v2147, %v2219
      %v2268 = vadd.f32 %v2148, %v2221
      %v2269 = vadd.f32 %v2149, %v2224
      %v2270 = vadd.f32 %v2150, %v2226
      %v2271 = vadd.f32 %v2151, %v2229
      %v2272 = vadd.f32 %v2152, %v2231
      %v2273 = vadd.f32 %v2153, %v2234
      %v2274 = vadd.f32 %v2154, %v2236
      %v2275 = vadd.f32 %v2155, %v2239
      %v2276 = vadd.f32 %v2156, %v2241
      %v2277 = vadd.f32 %v2157, %v2244
      %v2278 = vadd.f32 %v2158, %v2246
      %v2279 = vadd.f32 %v2263, %v1210
      %v2280 = vadd.f32 %v2264, %v1210
      %v2281 = vadd.f32 %v2265, %v1210
      %v2282 = vadd.f32 %v2266, %v1210
      %v2283 = vadd.f32 %v2267, %v1210
      %v2284 = vadd.f32 %v2268, %v1210
      %v2285 = vadd.f32 %v2269, %v1210
      %v2286 = vadd.f32 %v2270, %v1210
      %v2287 = vadd.f32 %v2271, %v1210
      %v2288 = vadd.f32 %v2272, %v1210
      %v2289 = vadd.f32 %v2273, %v1210
      %v2290 = vadd.f32 %v2274, %v1210
      %v2291 = vadd.f32 %v2275, %v1210
      %v2292 = vadd.f32 %v2276, %v1210
      %v2293 = vadd.f32 %v2277, %v1210
      %v2294 = vadd.f32 %v2278, %v1210
      %v2295 = vmul.f32 %v2279, 0.5
      %v2296 = vmul.f32 %v2280, 0.5
      %v2297 = vmul.f32 %v2281, 0.5
      %v2298 = vmul.f32 %v2282, 0.5
      %v2299 = vmul.f32 %v2283, 0.5
      %v2300 = vmul.f32 %v2284, 0.5
      %v2301 = vmul.f32 %v2285, 0.5
      %v2302 = vmul.f32 %v2286, 0.5
      %v2303 = vmul.f32 %v2287, 0.5
      %v2304 = vmul.f32 %v2288, 0.5
      %v2305 = vmul.f32 %v2289, 0.5
      %v2306 = vmul.f32 %v2290, 0.5
      %v2307 = vmul.f32 %v2291, 0.5
      %v2308 = vmul.f32 %v2292, 0.5
      %v2309 = vmul.f32 %v2293, 0.5
      %v2310 = vmul.f32 %v2294, 0.5
      %v2311 = vmul.f32 %v2279, 0.044715
      %v2312 = vmul.f32 %v2280, 0.044715
      %v2313 = vmul.f32 %v2281, 0.044715
      %v2314 = vmul.f32 %v2282, 0.044715
      %v2315 = vmul.f32 %v2283, 0.044715
      %v2316 = vmul.f32 %v2284, 0.044715
      %v2317 = vmul.f32 %v2285, 0.044715
      %v2318 = vmul.f32 %v2286, 0.044715
      %v2319 = vmul.f32 %v2287, 0.044715
      %v2320 = vmul.f32 %v2288, 0.044715
      %v2321 = vmul.f32 %v2289, 0.044715
      %v2322 = vmul.f32 %v2290, 0.044715
      %v2323 = vmul.f32 %v2291, 0.044715
      %v2324 = vmul.f32 %v2292, 0.044715
      %v2325 = vmul.f32 %v2293, 0.044715
      %v2326 = vmul.f32 %v2294, 0.044715
      %v2327 = vmul.f32 %v2311, %v2279
      %v2328 = vmul.f32 %v2312, %v2280
      %v2329 = vmul.f32 %v2313, %v2281
      %v2330 = vmul.f32 %v2314, %v2282
      %v2331 = vmul.f32 %v2315, %v2283
      %v2332 = vmul.f32 %v2316, %v2284
      %v2333 = vmul.f32 %v2317, %v2285
      %v2334 = vmul.f32 %v2318, %v2286
      %v2335 = vmul.f32 %v2319, %v2287
      %v2336 = vmul.f32 %v2320, %v2288
      %v2337 = vmul.f32 %v2321, %v2289
      %v2338 = vmul.f32 %v2322, %v2290
      %v2339 = vmul.f32 %v2323, %v2291
      %v2340 = vmul.f32 %v2324, %v2292
      %v2341 = vmul.f32 %v2325, %v2293
      %v2342 = vmul.f32 %v2326, %v2294
      %v2343 = vmul.f32 %v2327, %v2279
      %v2344 = vmul.f32 %v2328, %v2280
      %v2345 = vmul.f32 %v2329, %v2281
      %v2346 = vmul.f32 %v2330, %v2282
      %v2347 = vmul.f32 %v2331, %v2283
      %v2348 = vmul.f32 %v2332, %v2284
      %v2349 = vmul.f32 %v2333, %v2285
      %v2350 = vmul.f32 %v2334, %v2286
      %v2351 = vmul.f32 %v2335, %v2287
      %v2352 = vmul.f32 %v2336, %v2288
      %v2353 = vmul.f32 %v2337, %v2289
      %v2354 = vmul.f32 %v2338, %v2290
      %v2355 = vmul.f32 %v2339, %v2291
      %v2356 = vmul.f32 %v2340, %v2292
      %v2357 = vmul.f32 %v2341, %v2293
      %v2358 = vmul.f32 %v2342, %v2294
      %v2359 = vadd.f32 %v2279, %v2343
      %v2360 = vadd.f32 %v2280, %v2344
      %v2361 = vadd.f32 %v2281, %v2345
      %v2362 = vadd.f32 %v2282, %v2346
      %v2363 = vadd.f32 %v2283, %v2347
      %v2364 = vadd.f32 %v2284, %v2348
      %v2365 = vadd.f32 %v2285, %v2349
      %v2366 = vadd.f32 %v2286, %v2350
      %v2367 = vadd.f32 %v2287, %v2351
      %v2368 = vadd.f32 %v2288, %v2352
      %v2369 = vadd.f32 %v2289, %v2353
      %v2370 = vadd.f32 %v2290, %v2354
      %v2371 = vadd.f32 %v2291, %v2355
      %v2372 = vadd.f32 %v2292, %v2356
      %v2373 = vadd.f32 %v2293, %v2357
      %v2374 = vadd.f32 %v2294, %v2358
      %v2375 = vmul.f32 %v2359, 0.7978846
      %v2376 = vmul.f32 %v2360, 0.7978846
      %v2377 = vmul.f32 %v2361, 0.7978846
      %v2378 = vmul.f32 %v2362, 0.7978846
      %v2379 = vmul.f32 %v2363, 0.7978846
      %v2380 = vmul.f32 %v2364, 0.7978846
      %v2381 = vmul.f32 %v2365, 0.7978846
      %v2382 = vmul.f32 %v2366, 0.7978846
      %v2383 = vmul.f32 %v2367, 0.7978846
      %v2384 = vmul.f32 %v2368, 0.7978846
      %v2385 = vmul.f32 %v2369, 0.7978846
      %v2386 = vmul.f32 %v2370, 0.7978846
      %v2387 = vmul.f32 %v2371, 0.7978846
      %v2388 = vmul.f32 %v2372, 0.7978846
      %v2389 = vmul.f32 %v2373, 0.7978846
      %v2390 = vmul.f32 %v2374, 0.7978846
      %v2391 = vtanh.pop %v2375
      %v2392 = vtanh.pop %v2376
      %v2393 = vtanh.pop %v2377
      %v2394 = vtanh.pop %v2378
      %v2395 = vtanh.pop %v2379
      %v2396 = vtanh.pop %v2380
      %v2397 = vtanh.pop %v2381
      %v2398 = vtanh.pop %v2382
      %v2399 = vtanh.pop %v2383
      %v2400 = vtanh.pop %v2384
      %v2401 = vtanh.pop %v2385
      %v2402 = vtanh.pop %v2386
      %v2403 = vtanh.pop %v2387
      %v2404 = vtanh.pop %v2388
      %v2405 = vtanh.pop %v2389
      %v2406 = vtanh.pop %v2390
      %v2407 = vadd.f32 %v2391, 1.0
      %v2408 = vadd.f32 %v2392, 1.0
      %v2409 = vadd.f32 %v2393, 1.0
      %v2410 = vadd.f32 %v2394, 1.0
      %v2411 = vadd.f32 %v2395, 1.0
      %v2412 = vadd.f32 %v2396, 1.0
      %v2413 = vadd.f32 %v2397, 1.0
      %v2414 = vadd.f32 %v2398, 1.0
      %v2415 = vadd.f32 %v2399, 1.0
      %v2416 = vadd.f32 %v2400, 1.0
      %v2417 = vadd.f32 %v2401, 1.0
      %v2418 = vadd.f32 %v2402, 1.0
      %v2419 = vadd.f32 %v2403, 1.0
      %v2420 = vadd.f32 %v2404, 1.0
      %v2421 = vadd.f32 %v2405, 1.0
      %v2422 = vadd.f32 %v2406, 1.0
      %v2423 = vmul.f32 %v2295, %v2407
      %v2424 = vmul.f32 %v2296, %v2408
      %v2425 = vmul.f32 %v2297, %v2409
      %v2426 = vmul.f32 %v2298, %v2410
      %v2427 = vmul.f32 %v2299, %v2411
      %v2428 = vmul.f32 %v2300, %v2412
      %v2429 = vmul.f32 %v2301, %v2413
      %v2430 = vmul.f32 %v2302, %v2414
      %v2431 = vmul.f32 %v2303, %v2415
      %v2432 = vmul.f32 %v2304, %v2416
      %v2433 = vmul.f32 %v2305, %v2417
      %v2434 = vmul.f32 %v2306, %v2418
      %v2435 = vmul.f32 %v2307, %v2419
      %v2436 = vmul.f32 %v2308, %v2420
      %v2437 = vmul.f32 %v2309, %v2421
      %v2438 = vmul.f32 %v2310, %v2422
      %s2439 = scalar_lea.vmem %s170, 128
      %2440 = vst [vmem:[%s2439] sm:$0xff] %v2423
      %2441 = vst [vmem:[%s2439 + $0x8] sm:$0xff] %v2424
      %2442 = vst [vmem:[%s2439 + $0x10] sm:$0xff] %v2425
      %2443 = vst [vmem:[%s2439 + $0x18] sm:$0xff] %v2426
      %2444 = vst [vmem:[%s2439 + $0x20] sm:$0xff] %v2427
      %2445 = vst [vmem:[%s2439 + $0x28] sm:$0xff] %v2428
      %2446 = vst [vmem:[%s2439 + $0x30] sm:$0xff] %v2429
      %2447 = vst [vmem:[%s2439 + $0x38] sm:$0xff] %v2430
      %2448 = vst [vmem:[%s2439 + $0x40] sm:$0xff] %v2431
      %2449 = vst [vmem:[%s2439 + $0x48] sm:$0xff] %v2432
      %2450 = vst [vmem:[%s2439 + $0x50] sm:$0xff] %v2433
      %2451 = vst [vmem:[%s2439 + $0x58] sm:$0xff] %v2434
      %2452 = vst [vmem:[%s2439 + $0x60] sm:$0xff] %v2435
      %2453 = vst [vmem:[%s2439 + $0x68] sm:$0xff] %v2436
      %2454 = vst [vmem:[%s2439 + $0x70] sm:$0xff] %v2437
      %2455 = vst [vmem:[%s2439 + $0x78] sm:$0xff] %v2438
      %p2456 = scmp.lt.s32.totalorder %s14, 1
      %s2457 = scalar_select %p2456, %s14, 1
      %s2458 = smul.addr %s2457, 32
      %s2459 = smul.addr %s2458, 8
      %s2460 = scalar_lea.vmem %s3, %s2459
      // Predicated region
      $region33: #{_lambda_.12} parent=31 // pred_check
        %p2461 = pneg %p100
      $region34: #{_lambda_.12} parent=31 // pred_check_branch
        %2463 = sbr.rel (%p2461) target = $region36
      $region35: #{_lambda_.12} parent=31 // pred_region
        _
      $region36: #{_lambda_.12} parent=31 // pred_fallthru
        _
    $region32: #{_lambda_.12} parent=5 // pred_fallthru
      _
    %p2464 = scmp.le.s32.totalorder 2, %s9
    // Predicated region
    $region37: #{_lambda_.12} parent=5 // pred_check
      %p2465 = pneg %p2464
    $region38: #{_lambda_.12} parent=5 // pred_check_branch
      %2467 = sbr.rel (%p2465) target = $region40
    $region39: #{_lambda_.12} parent=5 // pred_region
      %s2468 = ssub.s32 %s9, 2
      // Predicated region
      $region41: #{_lambda_.12} parent=39 // pred_check
        %p2469 = pneg %p106
      $region42: #{_lambda_.12} parent=39 // pred_check_branch
        %2471 = sbr.rel (%p2469) target = $region44
      $region43: #{_lambda_.12} parent=39 // pred_region
        %p2472 = scmp.lt.s32.totalorder %s15, 1
        %s2473 = scalar_select %p2472, %s15, 1
        %s2474 = smul.addr %s2473, 32
        %s2475 = smul.addr %s2474, 8
        %s2476 = scalar_lea.vmem %s3, %s2475
      $region44: #{_lambda_.12} parent=39 // pred_fallthru
        _
    $region40: #{_lambda_.12} parent=5 // pred_fallthru
      _
  $region6: #{_lambda_.12} parent=0 // loop_footer
    %s13 = sadd.s32 1, %s9
  $region7: #{_lambda_.12} parent=0 // loop_footer_branch
    %8 = sbr.rel target = $region3
  $region8: #{_lambda_.12} parent=0 // loop_exit
    _

</llo_original>
